<compile_context>
chip_gen: v7x
topology: tpu7x:2x2x1
jax: 0.10.0
libtpu: 0.0.40
codegen_flags: <defaults>
</compile_context>

<pallas_src>
import functools

import jax
import jax.numpy as jnp
from jax import lax
from jax.experimental import pallas as pl
from jax.experimental.pallas import tpu as pltpu

NEG_SLOPE = 0.2   # LeakyReLU negative slope
RES_SCALE = 0.2   # residual scale


def _skip_updown_kernel(x_ref, w1_ref, b1_ref, w2_ref, b2_ref, w3_ref, b3_ref,
                        o_ref, pad_x, pad_x1, *, H, W, C):
    f32 = jnp.float32
    bf16 = jnp.bfloat16
    M = H * W

    def zero_halo(p):
        # Only the 1-pixel ring needs clearing; the interior is fully overwritten
        # before every read.  Done per grid step so it stays correct when the
        # "parallel" batch axis is split across TensorCores.
        c = p.shape[-1]
        p[:, 0:1, :, :] = jnp.zeros((1, 1, W + 2, c), f32)
        p[:, H + 1:H + 2, :, :] = jnp.zeros((1, 1, W + 2, c), f32)
        p[:, :, 0:1, :] = jnp.zeros((1, H + 2, 1, c), f32)
        p[:, :, W + 1:W + 2, :] = jnp.zeros((1, H + 2, 1, c), f32)

    def conv3x3(srcs, w_ref, b_ref):
        # srcs: padded (1, H+2, W+2, c_i) refs.  The conv input channel order is the
        # concatenation of srcs, matching the fused weight layout built in the
        # wrapper: (3*3*cin_total, cout), tap-major / channel-minor.
        pieces = []
        for dy in range(3):
            for dx in range(3):
                for r in srcs:
                    c = r.shape[-1]
                    pieces.append(r[:, dy:dy + H, dx:dx + W, :].reshape(M, c))
        patch = jnp.concatenate(pieces, axis=-1).astype(bf16)        # (M, 9*cin)
        acc = jnp.dot(patch, w_ref[...],
                      preferred_element_type=f32) + b_ref[...]       # (M, cout) f32
        return jnp.maximum(acc, NEG_SLOPE * acc)                     # LeakyReLU

    zero_halo(pad_x)
    zero_halo(pad_x1)

    x = x_ref[...].astype(f32)                                       # (1, H, W, C)
    x2d = x.reshape(M, C)

    pad_x[:, 1:H + 1, 1:W + 1, :] = x
    x1 = conv3x3([pad_x], w1_ref, b1_ref)                            # (M, C)

    pad_x1[:, 1:H + 1, 1:W + 1, :] = x1.reshape(1, H, W, C)
    x2 = conv3x3([pad_x, pad_x1], w2_ref, b2_ref)                    # (M, 2C)

    # PixelShuffle(2) followed by MaxPool2d(2) collapses to: per pixel, max over
    # contiguous channel groups of 4 of cat(x, x1, x2).  Direct lane max (XLU),
    # no selection matmuls.
    cat = jnp.concatenate([x2d, x1, x2], axis=-1)                    # (M, 4C)
    pooled = jnp.concatenate(
        [jnp.max(cat[:, 4 * g:4 * g + 4], axis=-1, keepdims=True)
         for g in range(C)], axis=-1)                                # (M, C)

    # Reuse pad_x's interior for the pooled activation; x for the residual is
    # still held in x2d (loaded from x_ref above).  Halo ring stays zero.
    pad_x[:, 1:H + 1, 1:W + 1, :] = pooled.reshape(1, H, W, C)
    x3 = conv3x3([pad_x], w3_ref, b3_ref)                            # (M, C)

    out = RES_SCALE * x3 + x2d
    o_ref[...] = out.reshape(1, H, W, C).astype(o_ref.dtype)


def _taps(w):
    """PyTorch conv weight (cout, cin, 3, 3) -> fused (9*cin, cout) bf16,
    tap-major / channel-minor (matches the in-kernel im2col patch order)."""
    co, ci, kh, kw = w.shape
    return (jnp.transpose(w, (2, 3, 1, 0))
            .reshape(kh * kw * ci, co).astype(jnp.bfloat16))


def _bias(b):
    return b.reshape(1, -1).astype(jnp.float32)


def skip_up_down_block(x_nchw, params):
    """x_nchw: (N, nc, H, W) float32; params = (w1, b1, w2, b2, w3, b3), PyTorch layout."""
    w1, b1, w2, b2, w3, b3 = params
    N, C, H, W = x_nchw.shape
    x = jnp.transpose(x_nchw, (0, 2, 3, 1)).astype(jnp.float32)      # NCHW -> NHWC

    args = (x, _taps(w1), _bias(b1), _taps(w2), _bias(b2), _taps(w3), _bias(b3))

    def const_spec(a):
        zeros = (0,) * a.ndim
        return pl.BlockSpec(a.shape, lambda n, _z=zeros: _z)

    kernel = functools.partial(_skip_updown_kernel, H=H, W=W, C=C)
    out_nhwc = pl.pallas_call(
        kernel,
        out_shape=jax.ShapeDtypeStruct((N, H, W, C), jnp.float32),
        grid_spec=pltpu.PrefetchScalarGridSpec(
            num_scalar_prefetch=0,
            grid=(N,),                                  # one image per grid step
            in_specs=[pl.BlockSpec((1, H, W, C), lambda n: (n, 0, 0, 0))]
                    + [const_spec(a) for a in args[1:]],
            out_specs=pl.BlockSpec((1, H, W, C), lambda n: (n, 0, 0, 0)),
            scratch_shapes=[
                pltpu.VMEM((1, H + 2, W + 2, C), jnp.float32),   # padded x / pooled
                pltpu.VMEM((1, H + 2, W + 2, C), jnp.float32),   # padded x1
            ]),
        compiler_params=pltpu.CompilerParams(
            dimension_semantics=("parallel",),          # batch steps are independent
            vmem_limit_bytes=32 * 1024 * 1024),
    )(*args)
    return jnp.transpose(out_nhwc, (0, 3, 1, 2))        # NHWC -> NCHW


def ref_forward(x, w1, b1, w2, b2, w3, b3):
    """Pure-JAX f32 NCHW reference mirroring the PyTorch module."""
    def conv(v, w, b):
        y = lax.conv_general_dilated(v, w, window_strides=(1, 1),
                                     padding=((1, 1), (1, 1)),
                                     dimension_numbers=('NCHW', 'OIHW', 'NCHW'))
        return y + b[None, :, None, None]

    def lrelu(v):
        return jnp.where(v >= 0, v, NEG_SLOPE * v)

    x1 = lrelu(conv(x, w1, b1))
    x2 = lrelu(conv(jnp.concatenate([x, x1], axis=1), w2, b2))
    cat = jnp.concatenate([x, x1, x2], axis=1)                        # (N, 4C, H, W)
    N, C4, H, W = cat.shape
    C = C4 // 4
    ps = cat.reshape(N, C, 2, 2, H, W).transpose(0, 1, 4, 2, 5, 3).reshape(N, C, 2 * H, 2 * W)
    pooled = jnp.max(ps.reshape(N, C, H, 2, W, 2), axis=(3, 5))
    x3 = lrelu(conv(pooled, w3, b3))
    return x3 * RES_SCALE + x


if __name__ == "__main__":
    N, nc, H, W = 2, 4, 16, 16
    keys = jax.random.split(jax.random.PRNGKey(0), 7)
    x = jax.random.normal(keys[0], (N, nc, H, W), jnp.float32)
    w1 = jax.random.normal(keys[1], (nc, nc, 3, 3), jnp.float32) * 0.2
    b1 = jax.random.normal(keys[2], (nc,), jnp.float32) * 0.1
    w2 = jax.random.normal(keys[3], (2 * nc, 2 * nc, 3, 3), jnp.float32) * 0.2
    b2 = jax.random.normal(keys[4], (2 * nc,), jnp.float32) * 0.1
    w3 = jax.random.normal(keys[5], (nc, nc, 3, 3), jnp.float32) * 0.2
    b3 = jax.random.normal(keys[6], (nc,), jnp.float32) * 0.1

    out = skip_up_down_block(x, (w1, b1, w2, b2, w3, b3))
    out = jax.block_until_ready(out)

    ref = ref_forward(x, w1, b1, w2, b2, w3, b3)
    assert out.shape == x.shape, (out.shape, x.shape)
    # Kernel uses bf16 MXU operands (f32 accumulate) per the perf review, so the
    # tolerance vs. the pure-f32 reference is correspondingly looser.
    max_err = float(jnp.max(jnp.abs(out - ref)))
    assert max_err < 3e-2, f"max abs err = {max_err}"
    print("KERNEL_OK")
</pallas_src>

<mosaic_0001>
module attributes {stable_mosaic.version = 11 : i64} {
  func.func @_skip_updown_kernel(%arg0: i32, %arg1: memref<1x16x16x4xf32, #tpu.memory_space<vmem>>, %arg2: memref<36x4xbf16, #tpu.memory_space<vmem>>, %arg3: memref<1x4xf32, #tpu.memory_space<vmem>>, %arg4: memref<72x8xbf16, #tpu.memory_space<vmem>>, %arg5: memref<1x8xf32, #tpu.memory_space<vmem>>, %arg6: memref<36x4xbf16, #tpu.memory_space<vmem>>, %arg7: memref<1x4xf32, #tpu.memory_space<vmem>>, %arg8: memref<1x16x16x4xf32, #tpu.memory_space<vmem>>, %arg9: memref<1x18x18x4xf32, #tpu.memory_space<vmem>>, %arg10: memref<1x18x18x4xf32, #tpu.memory_space<vmem>>) attributes {dimension_semantics = [#tpu.dimension_semantics<parallel>], iteration_bounds = array<i64: 2>, scalar_prefetch = 0 : i64, scratch_operands = 2 : i64, tpu.core_type = #tpu.core_type<tc>, window_params = [{transform_indices = @transform_0, window_bounds = array<i64: 1, 16, 16, 4>}, {pipeline_mode = #tpu.pipeline_mode<synchronous>, transform_indices = @transform_1, window_bounds = array<i64: 36, 4>}, {pipeline_mode = #tpu.pipeline_mode<synchronous>, transform_indices = @transform_2, window_bounds = array<i64: 1, 4>}, {pipeline_mode = #tpu.pipeline_mode<synchronous>, transform_indices = @transform_3, window_bounds = array<i64: 72, 8>}, {pipeline_mode = #tpu.pipeline_mode<synchronous>, transform_indices = @transform_4, window_bounds = array<i64: 1, 8>}, {pipeline_mode = #tpu.pipeline_mode<synchronous>, transform_indices = @transform_5, window_bounds = array<i64: 36, 4>}, {pipeline_mode = #tpu.pipeline_mode<synchronous>, transform_indices = @transform_6, window_bounds = array<i64: 1, 4>}, {transform_indices = @transform_7, window_bounds = array<i64: 1, 16, 16, 4>}]} {
    %cst = arith.constant 0.000000e+00 : f32
    %0 = vector.broadcast %cst : f32 to vector<1x1x18x4xf32>
    %c0 = arith.constant 0 : index
    %c0_0 = arith.constant 0 : index
    %c0_1 = arith.constant 0 : index
    %c0_2 = arith.constant 0 : index
    %1 = vector.load %arg9[%c0, %c0_0, %c0_1, %c0_2] : memref<1x18x18x4xf32, #tpu.memory_space<vmem>>, vector<1x1x18x4xf32>
    tpu.vector_store %arg9[%c0, %c0_0, %c0_1, %c0_2], %0 {strides = array<i32>} : memref<1x18x18x4xf32, #tpu.memory_space<vmem>>, vector<1x1x18x4xf32>,
    %cst_3 = arith.constant 0.000000e+00 : f32
    %2 = vector.broadcast %cst_3 : f32 to vector<1x1x18x4xf32>
    %c0_4 = arith.constant 0 : index
    %c17 = arith.constant 17 : index
    %c0_5 = arith.constant 0 : index
    %c0_6 = arith.constant 0 : index
    %3 = vector.load %arg9[%c0_4, %c17, %c0_5, %c0_6] : memref<1x18x18x4xf32, #tpu.memory_space<vmem>>, vector<1x1x18x4xf32>
    tpu.vector_store %arg9[%c0_4, %c17, %c0_5, %c0_6], %2 {strides = array<i32>} : memref<1x18x18x4xf32, #tpu.memory_space<vmem>>, vector<1x1x18x4xf32>,
    %cst_7 = arith.constant 0.000000e+00 : f32
    %4 = vector.broadcast %cst_7 : f32 to vector<1x18x1x4xf32>
    %c0_8 = arith.constant 0 : index
    %c0_9 = arith.constant 0 : index
    %c0_10 = arith.constant 0 : index
    %c0_11 = arith.constant 0 : index
    %5 = vector.load %arg9[%c0_8, %c0_9, %c0_10, %c0_11] : memref<1x18x18x4xf32, #tpu.memory_space<vmem>>, vector<1x18x1x4xf32>
    tpu.vector_store %arg9[%c0_8, %c0_9, %c0_10, %c0_11], %4 {strides = array<i32>} : memref<1x18x18x4xf32, #tpu.memory_space<vmem>>, vector<1x18x1x4xf32>,
    %cst_12 = arith.constant 0.000000e+00 : f32
    %6 = vector.broadcast %cst_12 : f32 to vector<1x18x1x4xf32>
    %c0_13 = arith.constant 0 : index
    %c0_14 = arith.constant 0 : index
    %c17_15 = arith.constant 17 : index
    %c0_16 = arith.constant 0 : index
    %7 = vector.load %arg9[%c0_13, %c0_14, %c17_15, %c0_16] : memref<1x18x18x4xf32, #tpu.memory_space<vmem>>, vector<1x18x1x4xf32>
    tpu.vector_store %arg9[%c0_13, %c0_14, %c17_15, %c0_16], %6 {strides = array<i32>} : memref<1x18x18x4xf32, #tpu.memory_space<vmem>>, vector<1x18x1x4xf32>,
    %cst_17 = arith.constant 0.000000e+00 : f32
    %8 = vector.broadcast %cst_17 : f32 to vector<1x1x18x4xf32>
    %c0_18 = arith.constant 0 : index
    %c0_19 = arith.constant 0 : index
    %c0_20 = arith.constant 0 : index
    %c0_21 = arith.constant 0 : index
    %9 = vector.load %arg10[%c0_18, %c0_19, %c0_20, %c0_21] : memref<1x18x18x4xf32, #tpu.memory_space<vmem>>, vector<1x1x18x4xf32>
    tpu.vector_store %arg10[%c0_18, %c0_19, %c0_20, %c0_21], %8 {strides = array<i32>} : memref<1x18x18x4xf32, #tpu.memory_space<vmem>>, vector<1x1x18x4xf32>,
    %cst_22 = arith.constant 0.000000e+00 : f32
    %10 = vector.broadcast %cst_22 : f32 to vector<1x1x18x4xf32>
    %c0_23 = arith.constant 0 : index
    %c17_24 = arith.constant 17 : index
    %c0_25 = arith.constant 0 : index
    %c0_26 = arith.constant 0 : index
    %11 = vector.load %arg10[%c0_23, %c17_24, %c0_25, %c0_26] : memref<1x18x18x4xf32, #tpu.memory_space<vmem>>, vector<1x1x18x4xf32>
    tpu.vector_store %arg10[%c0_23, %c17_24, %c0_25, %c0_26], %10 {strides = array<i32>} : memref<1x18x18x4xf32, #tpu.memory_space<vmem>>, vector<1x1x18x4xf32>,
    %cst_27 = arith.constant 0.000000e+00 : f32
    %12 = vector.broadcast %cst_27 : f32 to vector<1x18x1x4xf32>
    %c0_28 = arith.constant 0 : index
    %c0_29 = arith.constant 0 : index
    %c0_30 = arith.constant 0 : index
    %c0_31 = arith.constant 0 : index
    %13 = vector.load %arg10[%c0_28, %c0_29, %c0_30, %c0_31] : memref<1x18x18x4xf32, #tpu.memory_space<vmem>>, vector<1x18x1x4xf32>
    tpu.vector_store %arg10[%c0_28, %c0_29, %c0_30, %c0_31], %12 {strides = array<i32>} : memref<1x18x18x4xf32, #tpu.memory_space<vmem>>, vector<1x18x1x4xf32>,
    %cst_32 = arith.constant 0.000000e+00 : f32
    %14 = vector.broadcast %cst_32 : f32 to vector<1x18x1x4xf32>
    %c0_33 = arith.constant 0 : index
    %c0_34 = arith.constant 0 : index
    %c17_35 = arith.constant 17 : index
    %c0_36 = arith.constant 0 : index
    %15 = vector.load %arg10[%c0_33, %c0_34, %c17_35, %c0_36] : memref<1x18x18x4xf32, #tpu.memory_space<vmem>>, vector<1x18x1x4xf32>
    tpu.vector_store %arg10[%c0_33, %c0_34, %c17_35, %c0_36], %14 {strides = array<i32>} : memref<1x18x18x4xf32, #tpu.memory_space<vmem>>, vector<1x18x1x4xf32>,
    %c0_37 = arith.constant 0 : index
    %c0_38 = arith.constant 0 : index
    %c0_39 = arith.constant 0 : index
    %c0_40 = arith.constant 0 : index
    %16 = vector.load %arg1[%c0_37, %c0_38, %c0_39, %c0_40] : memref<1x16x16x4xf32, #tpu.memory_space<vmem>>, vector<1x16x16x4xf32>
    %17 = vector.shape_cast %16 : vector<1x16x16x4xf32> to vector<256x4xf32>
    %c0_41 = arith.constant 0 : index
    %c1 = arith.constant 1 : index
    %c1_42 = arith.constant 1 : index
    %c0_43 = arith.constant 0 : index
    %18 = vector.load %arg9[%c0_41, %c1, %c1_42, %c0_43] : memref<1x18x18x4xf32, #tpu.memory_space<vmem>>, vector<1x16x16x4xf32>
    tpu.vector_store %arg9[%c0_41, %c1, %c1_42, %c0_43], %16 {strides = array<i32>} : memref<1x18x18x4xf32, #tpu.memory_space<vmem>>, vector<1x16x16x4xf32>,
    %c0_44 = arith.constant 0 : index
    %c0_45 = arith.constant 0 : index
    %c0_46 = arith.constant 0 : index
    %c0_47 = arith.constant 0 : index
    %19 = vector.load %arg9[%c0_44, %c0_45, %c0_46, %c0_47] : memref<1x18x18x4xf32, #tpu.memory_space<vmem>>, vector<1x16x16x4xf32>
    %20 = vector.shape_cast %19 : vector<1x16x16x4xf32> to vector<256x4xf32>
    %c0_48 = arith.constant 0 : index
    %c0_49 = arith.constant 0 : index
    %c1_50 = arith.constant 1 : index
    %c0_51 = arith.constant 0 : index
    %21 = vector.load %arg9[%c0_48, %c0_49, %c1_50, %c0_51] : memref<1x18x18x4xf32, #tpu.memory_space<vmem>>, vector<1x16x16x4xf32>
    %22 = vector.shape_cast %21 : vector<1x16x16x4xf32> to vector<256x4xf32>
    %c0_52 = arith.constant 0 : index
    %c0_53 = arith.constant 0 : index
    %c2 = arith.constant 2 : index
    %c0_54 = arith.constant 0 : index
    %23 = vector.load %arg9[%c0_52, %c0_53, %c2, %c0_54] : memref<1x18x18x4xf32, #tpu.memory_space<vmem>>, vector<1x16x16x4xf32>
    %24 = vector.shape_cast %23 : vector<1x16x16x4xf32> to vector<256x4xf32>
    %c0_55 = arith.constant 0 : index
    %c1_56 = arith.constant 1 : index
    %c0_57 = arith.constant 0 : index
    %c0_58 = arith.constant 0 : index
    %25 = vector.load %arg9[%c0_55, %c1_56, %c0_57, %c0_58] : memref<1x18x18x4xf32, #tpu.memory_space<vmem>>, vector<1x16x16x4xf32>
    %26 = vector.shape_cast %25 : vector<1x16x16x4xf32> to vector<256x4xf32>
    %c0_59 = arith.constant 0 : index
    %c1_60 = arith.constant 1 : index
    %c1_61 = arith.constant 1 : index
    %c0_62 = arith.constant 0 : index
    %27 = vector.load %arg9[%c0_59, %c1_60, %c1_61, %c0_62] : memref<1x18x18x4xf32, #tpu.memory_space<vmem>>, vector<1x16x16x4xf32>
    %28 = vector.shape_cast %27 : vector<1x16x16x4xf32> to vector<256x4xf32>
    %c0_63 = arith.constant 0 : index
    %c1_64 = arith.constant 1 : index
    %c2_65 = arith.constant 2 : index
    %c0_66 = arith.constant 0 : index
    %29 = vector.load %arg9[%c0_63, %c1_64, %c2_65, %c0_66] : memref<1x18x18x4xf32, #tpu.memory_space<vmem>>, vector<1x16x16x4xf32>
    %30 = vector.shape_cast %29 : vector<1x16x16x4xf32> to vector<256x4xf32>
    %c0_67 = arith.constant 0 : index
    %c2_68 = arith.constant 2 : index
    %c0_69 = arith.constant 0 : index
    %c0_70 = arith.constant 0 : index
    %31 = vector.load %arg9[%c0_67, %c2_68, %c0_69, %c0_70] : memref<1x18x18x4xf32, #tpu.memory_space<vmem>>, vector<1x16x16x4xf32>
    %32 = vector.shape_cast %31 : vector<1x16x16x4xf32> to vector<256x4xf32>
    %c0_71 = arith.constant 0 : index
    %c2_72 = arith.constant 2 : index
    %c1_73 = arith.constant 1 : index
    %c0_74 = arith.constant 0 : index
    %33 = vector.load %arg9[%c0_71, %c2_72, %c1_73, %c0_74] : memref<1x18x18x4xf32, #tpu.memory_space<vmem>>, vector<1x16x16x4xf32>
    %34 = vector.shape_cast %33 : vector<1x16x16x4xf32> to vector<256x4xf32>
    %c0_75 = arith.constant 0 : index
    %c2_76 = arith.constant 2 : index
    %c2_77 = arith.constant 2 : index
    %c0_78 = arith.constant 0 : index
    %35 = vector.load %arg9[%c0_75, %c2_76, %c2_77, %c0_78] : memref<1x18x18x4xf32, #tpu.memory_space<vmem>>, vector<1x16x16x4xf32>
    %36 = vector.shape_cast %35 : vector<1x16x16x4xf32> to vector<256x4xf32>
    %37 = tpu.concatenate %20, %22, %24, %26, %28, %30, %32, %34, %36 in 1 : vector<256x4xf32>, vector<256x4xf32>, vector<256x4xf32>, vector<256x4xf32>, vector<256x4xf32>, vector<256x4xf32>, vector<256x4xf32>, vector<256x4xf32>, vector<256x4xf32> -> vector<256x36xf32>
    %38 = arith.truncf %37 : vector<256x36xf32> to vector<256x36xbf16>
    %c0_79 = arith.constant 0 : index
    %c0_80 = arith.constant 0 : index
    %39 = vector.load %arg2[%c0_79, %c0_80] : memref<36x4xbf16, #tpu.memory_space<vmem>>, vector<36x4xbf16>
    %cst_81 = arith.constant dense<0.000000e+00> : vector<256x4xf32>
    %40 = tpu.matmul %38, %39, %cst_81 {dimension_numbers = #tpu.dot_dimension_numbers<[1], [0], [0], [1], [0, 0, 1, 1], [], []>} : vector<256x36xbf16>, vector<36x4xbf16>, vector<256x4xf32> -> vector<256x4xf32>
    %c0_82 = arith.constant 0 : index
    %c0_83 = arith.constant 0 : index
    %41 = vector.load %arg3[%c0_82, %c0_83] : memref<1x4xf32, #tpu.memory_space<vmem>>, vector<1x4xf32>
    %42 = vector.broadcast %41 : vector<1x4xf32> to vector<256x4xf32>
    %43 = arith.addf %40, %42 : vector<256x4xf32>
    %cst_84 = arith.constant 2.000000e-01 : f32
    %44 = vector.broadcast %cst_84 : f32 to vector<256x4xf32>
    %45 = arith.mulf %44, %43 : vector<256x4xf32>
    %46 = arith.maximumf %43, %45 : vector<256x4xf32>
    %47 = vector.shape_cast %46 : vector<256x4xf32> to vector<1x16x16x4xf32>
    %c0_85 = arith.constant 0 : index
    %c1_86 = arith.constant 1 : index
    %c1_87 = arith.constant 1 : index
    %c0_88 = arith.constant 0 : index
    %48 = vector.load %arg10[%c0_85, %c1_86, %c1_87, %c0_88] : memref<1x18x18x4xf32, #tpu.memory_space<vmem>>, vector<1x16x16x4xf32>
    tpu.vector_store %arg10[%c0_85, %c1_86, %c1_87, %c0_88], %47 {strides = array<i32>} : memref<1x18x18x4xf32, #tpu.memory_space<vmem>>, vector<1x16x16x4xf32>,
    %c0_89 = arith.constant 0 : index
    %c0_90 = arith.constant 0 : index
    %c0_91 = arith.constant 0 : index
    %c0_92 = arith.constant 0 : index
    %49 = vector.load %arg9[%c0_89, %c0_90, %c0_91, %c0_92] : memref<1x18x18x4xf32, #tpu.memory_space<vmem>>, vector<1x16x16x4xf32>
    %50 = vector.shape_cast %49 : vector<1x16x16x4xf32> to vector<256x4xf32>
    %c0_93 = arith.constant 0 : index
    %c0_94 = arith.constant 0 : index
    %c0_95 = arith.constant 0 : index
    %c0_96 = arith.constant 0 : index
    %51 = vector.load %arg10[%c0_93, %c0_94, %c0_95, %c0_96] : memref<1x18x18x4xf32, #tpu.memory_space<vmem>>, vector<1x16x16x4xf32>
    %52 = vector.shape_cast %51 : vector<1x16x16x4xf32> to vector<256x4xf32>
    %c0_97 = arith.constant 0 : index
    %c0_98 = arith.constant 0 : index
    %c1_99 = arith.constant 1 : index
    %c0_100 = arith.constant 0 : index
    %53 = vector.load %arg9[%c0_97, %c0_98, %c1_99, %c0_100] : memref<1x18x18x4xf32, #tpu.memory_space<vmem>>, vector<1x16x16x4xf32>
    %54 = vector.shape_cast %53 : vector<1x16x16x4xf32> to vector<256x4xf32>
    %c0_101 = arith.constant 0 : index
    %c0_102 = arith.constant 0 : index
    %c1_103 = arith.constant 1 : index
    %c0_104 = arith.constant 0 : index
    %55 = vector.load %arg10[%c0_101, %c0_102, %c1_103, %c0_104] : memref<1x18x18x4xf32, #tpu.memory_space<vmem>>, vector<1x16x16x4xf32>
    %56 = vector.shape_cast %55 : vector<1x16x16x4xf32> to vector<256x4xf32>
    %c0_105 = arith.constant 0 : index
    %c0_106 = arith.constant 0 : index
    %c2_107 = arith.constant 2 : index
    %c0_108 = arith.constant 0 : index
    %57 = vector.load %arg9[%c0_105, %c0_106, %c2_107, %c0_108] : memref<1x18x18x4xf32, #tpu.memory_space<vmem>>, vector<1x16x16x4xf32>
    %58 = vector.shape_cast %57 : vector<1x16x16x4xf32> to vector<256x4xf32>
    %c0_109 = arith.constant 0 : index
    %c0_110 = arith.constant 0 : index
    %c2_111 = arith.constant 2 : index
    %c0_112 = arith.constant 0 : index
    %59 = vector.load %arg10[%c0_109, %c0_110, %c2_111, %c0_112] : memref<1x18x18x4xf32, #tpu.memory_space<vmem>>, vector<1x16x16x4xf32>
    %60 = vector.shape_cast %59 : vector<1x16x16x4xf32> to vector<256x4xf32>
    %c0_113 = arith.constant 0 : index
    %c1_114 = arith.constant 1 : index
    %c0_115 = arith.constant 0 : index
    %c0_116 = arith.constant 0 : index
    %61 = vector.load %arg9[%c0_113, %c1_114, %c0_115, %c0_116] : memref<1x18x18x4xf32, #tpu.memory_space<vmem>>, vector<1x16x16x4xf32>
    %62 = vector.shape_cast %61 : vector<1x16x16x4xf32> to vector<256x4xf32>
    %c0_117 = arith.constant 0 : index
    %c1_118 = arith.constant 1 : index
    %c0_119 = arith.constant 0 : index
    %c0_120 = arith.constant 0 : index
    %63 = vector.load %arg10[%c0_117, %c1_118, %c0_119, %c0_120] : memref<1x18x18x4xf32, #tpu.memory_space<vmem>>, vector<1x16x16x4xf32>
    %64 = vector.shape_cast %63 : vector<1x16x16x4xf32> to vector<256x4xf32>
    %c0_121 = arith.constant 0 : index
    %c1_122 = arith.constant 1 : index
    %c1_123 = arith.constant 1 : index
    %c0_124 = arith.constant 0 : index
    %65 = vector.load %arg9[%c0_121, %c1_122, %c1_123, %c0_124] : memref<1x18x18x4xf32, #tpu.memory_space<vmem>>, vector<1x16x16x4xf32>
    %66 = vector.shape_cast %65 : vector<1x16x16x4xf32> to vector<256x4xf32>
    %c0_125 = arith.constant 0 : index
    %c1_126 = arith.constant 1 : index
    %c1_127 = arith.constant 1 : index
    %c0_128 = arith.constant 0 : index
    %67 = vector.load %arg10[%c0_125, %c1_126, %c1_127, %c0_128] : memref<1x18x18x4xf32, #tpu.memory_space<vmem>>, vector<1x16x16x4xf32>
    %68 = vector.shape_cast %67 : vector<1x16x16x4xf32> to vector<256x4xf32>
    %c0_129 = arith.constant 0 : index
    %c1_130 = arith.constant 1 : index
    %c2_131 = arith.constant 2 : index
    %c0_132 = arith.constant 0 : index
    %69 = vector.load %arg9[%c0_129, %c1_130, %c2_131, %c0_132] : memref<1x18x18x4xf32, #tpu.memory_space<vmem>>, vector<1x16x16x4xf32>
    %70 = vector.shape_cast %69 : vector<1x16x16x4xf32> to vector<256x4xf32>
    %c0_133 = arith.constant 0 : index
    %c1_134 = arith.constant 1 : index
    %c2_135 = arith.constant 2 : index
    %c0_136 = arith.constant 0 : index
    %71 = vector.load %arg10[%c0_133, %c1_134, %c2_135, %c0_136] : memref<1x18x18x4xf32, #tpu.memory_space<vmem>>, vector<1x16x16x4xf32>
    %72 = vector.shape_cast %71 : vector<1x16x16x4xf32> to vector<256x4xf32>
    %c0_137 = arith.constant 0 : index
    %c2_138 = arith.constant 2 : index
    %c0_139 = arith.constant 0 : index
    %c0_140 = arith.constant 0 : index
    %73 = vector.load %arg9[%c0_137, %c2_138, %c0_139, %c0_140] : memref<1x18x18x4xf32, #tpu.memory_space<vmem>>, vector<1x16x16x4xf32>
    %74 = vector.shape_cast %73 : vector<1x16x16x4xf32> to vector<256x4xf32>
    %c0_141 = arith.constant 0 : index
    %c2_142 = arith.constant 2 : index
    %c0_143 = arith.constant 0 : index
    %c0_144 = arith.constant 0 : index
    %75 = vector.load %arg10[%c0_141, %c2_142, %c0_143, %c0_144] : memref<1x18x18x4xf32, #tpu.memory_space<vmem>>, vector<1x16x16x4xf32>
    %76 = vector.shape_cast %75 : vector<1x16x16x4xf32> to vector<256x4xf32>
    %c0_145 = arith.constant 0 : index
    %c2_146 = arith.constant 2 : index
    %c1_147 = arith.constant 1 : index
    %c0_148 = arith.constant 0 : index
    %77 = vector.load %arg9[%c0_145, %c2_146, %c1_147, %c0_148] : memref<1x18x18x4xf32, #tpu.memory_space<vmem>>, vector<1x16x16x4xf32>
    %78 = vector.shape_cast %77 : vector<1x16x16x4xf32> to vector<256x4xf32>
    %c0_149 = arith.constant 0 : index
    %c2_150 = arith.constant 2 : index
    %c1_151 = arith.constant 1 : index
    %c0_152 = arith.constant 0 : index
    %79 = vector.load %arg10[%c0_149, %c2_150, %c1_151, %c0_152] : memref<1x18x18x4xf32, #tpu.memory_space<vmem>>, vector<1x16x16x4xf32>
    %80 = vector.shape_cast %79 : vector<1x16x16x4xf32> to vector<256x4xf32>
    %c0_153 = arith.constant 0 : index
    %c2_154 = arith.constant 2 : index
    %c2_155 = arith.constant 2 : index
    %c0_156 = arith.constant 0 : index
    %81 = vector.load %arg9[%c0_153, %c2_154, %c2_155, %c0_156] : memref<1x18x18x4xf32, #tpu.memory_space<vmem>>, vector<1x16x16x4xf32>
    %82 = vector.shape_cast %81 : vector<1x16x16x4xf32> to vector<256x4xf32>
    %c0_157 = arith.constant 0 : index
    %c2_158 = arith.constant 2 : index
    %c2_159 = arith.constant 2 : index
    %c0_160 = arith.constant 0 : index
    %83 = vector.load %arg10[%c0_157, %c2_158, %c2_159, %c0_160] : memref<1x18x18x4xf32, #tpu.memory_space<vmem>>, vector<1x16x16x4xf32>
    %84 = vector.shape_cast %83 : vector<1x16x16x4xf32> to vector<256x4xf32>
    %85 = tpu.concatenate %50, %52, %54, %56, %58, %60, %62, %64, %66, %68, %70, %72, %74, %76, %78, %80 in 1 : vector<256x4xf32>, vector<256x4xf32>, vector<256x4xf32>, vector<256x4xf32>, vector<256x4xf32>, vector<256x4xf32>, vector<256x4xf32>, vector<256x4xf32>, vector<256x4xf32>, vector<256x4xf32>, vector<256x4xf32>, vector<256x4xf32>, vector<256x4xf32>, vector<256x4xf32>, vector<256x4xf32>, vector<256x4xf32> -> vector<256x64xf32>
    %86 = tpu.concatenate %82, %84 in 1 : vector<256x4xf32>, vector<256x4xf32> -> vector<256x8xf32>
    %87 = tpu.concatenate %85, %86 in 1 : vector<256x64xf32>, vector<256x8xf32> -> vector<256x72xf32>
    %88 = arith.truncf %87 : vector<256x72xf32> to vector<256x72xbf16>
    %c0_161 = arith.constant 0 : index
    %c0_162 = arith.constant 0 : index
    %89 = vector.load %arg4[%c0_161, %c0_162] : memref<72x8xbf16, #tpu.memory_space<vmem>>, vector<72x8xbf16>
    %cst_163 = arith.constant dense<0.000000e+00> : vector<256x8xf32>
    %90 = tpu.matmul %88, %89, %cst_163 {dimension_numbers = #tpu.dot_dimension_numbers<[1], [0], [0], [1], [0, 0, 1, 1], [], []>} : vector<256x72xbf16>, vector<72x8xbf16>, vector<256x8xf32> -> vector<256x8xf32>
    %c0_164 = arith.constant 0 : index
    %c0_165 = arith.constant 0 : index
    %91 = vector.load %arg5[%c0_164, %c0_165] : memref<1x8xf32, #tpu.memory_space<vmem>>, vector<1x8xf32>
    %92 = vector.broadcast %91 : vector<1x8xf32> to vector<256x8xf32>
    %93 = arith.addf %90, %92 : vector<256x8xf32>
    %cst_166 = arith.constant 2.000000e-01 : f32
    %94 = vector.broadcast %cst_166 : f32 to vector<256x8xf32>
    %95 = arith.mulf %94, %93 : vector<256x8xf32>
    %96 = arith.maximumf %93, %95 : vector<256x8xf32>
    %97 = tpu.concatenate %17, %46, %96 in 1 : vector<256x4xf32>, vector<256x4xf32>, vector<256x8xf32> -> vector<256x16xf32>
    %98 = vector.extract_strided_slice %97 {offsets = [0, 0], sizes = [256, 4], strides = [1, 1]} : vector<256x16xf32> to vector<256x4xf32>
    %cst_167 = arith.constant dense<0xFF800000> : vector<256xf32>
    %99 = vector.multi_reduction <maximumf>, %98, %cst_167 [1] : vector<256x4xf32> to vector<256xf32>
    %100 = vector.shape_cast %99 : vector<256xf32> to vector<256x1xf32>
    %101 = vector.extract_strided_slice %97 {offsets = [0, 4], sizes = [256, 4], strides = [1, 1]} : vector<256x16xf32> to vector<256x4xf32>
    %cst_168 = arith.constant dense<0xFF800000> : vector<256xf32>
    %102 = vector.multi_reduction <maximumf>, %101, %cst_168 [1] : vector<256x4xf32> to vector<256xf32>
    %103 = vector.shape_cast %102 : vector<256xf32> to vector<256x1xf32>
    %104 = vector.extract_strided_slice %97 {offsets = [0, 8], sizes = [256, 4], strides = [1, 1]} : vector<256x16xf32> to vector<256x4xf32>
    %cst_169 = arith.constant dense<0xFF800000> : vector<256xf32>
    %105 = vector.multi_reduction <maximumf>, %104, %cst_169 [1] : vector<256x4xf32> to vector<256xf32>
    %106 = vector.shape_cast %105 : vector<256xf32> to vector<256x1xf32>
    %107 = vector.extract_strided_slice %97 {offsets = [0, 12], sizes = [256, 4], strides = [1, 1]} : vector<256x16xf32> to vector<256x4xf32>
    %cst_170 = arith.constant dense<0xFF800000> : vector<256xf32>
    %108 = vector.multi_reduction <maximumf>, %107, %cst_170 [1] : vector<256x4xf32> to vector<256xf32>
    %109 = vector.shape_cast %108 : vector<256xf32> to vector<256x1xf32>
    %110 = tpu.concatenate %100, %103, %106, %109 in 1 : vector<256x1xf32>, vector<256x1xf32>, vector<256x1xf32>, vector<256x1xf32> -> vector<256x4xf32>
    %111 = vector.shape_cast %110 : vector<256x4xf32> to vector<1x16x16x4xf32>
    %c0_171 = arith.constant 0 : index
    %c1_172 = arith.constant 1 : index
    %c1_173 = arith.constant 1 : index
    %c0_174 = arith.constant 0 : index
    %112 = vector.load %arg9[%c0_171, %c1_172, %c1_173, %c0_174] : memref<1x18x18x4xf32, #tpu.memory_space<vmem>>, vector<1x16x16x4xf32>
    tpu.vector_store %arg9[%c0_171, %c1_172, %c1_173, %c0_174], %111 {strides = array<i32>} : memref<1x18x18x4xf32, #tpu.memory_space<vmem>>, vector<1x16x16x4xf32>,
    %c0_175 = arith.constant 0 : index
    %c0_176 = arith.constant 0 : index
    %c0_177 = arith.constant 0 : index
    %c0_178 = arith.constant 0 : index
    %113 = vector.load %arg9[%c0_175, %c0_176, %c0_177, %c0_178] : memref<1x18x18x4xf32, #tpu.memory_space<vmem>>, vector<1x16x16x4xf32>
    %114 = vector.shape_cast %113 : vector<1x16x16x4xf32> to vector<256x4xf32>
    %c0_179 = arith.constant 0 : index
    %c0_180 = arith.constant 0 : index
    %c1_181 = arith.constant 1 : index
    %c0_182 = arith.constant 0 : index
    %115 = vector.load %arg9[%c0_179, %c0_180, %c1_181, %c0_182] : memref<1x18x18x4xf32, #tpu.memory_space<vmem>>, vector<1x16x16x4xf32>
    %116 = vector.shape_cast %115 : vector<1x16x16x4xf32> to vector<256x4xf32>
    %c0_183 = arith.constant 0 : index
    %c0_184 = arith.constant 0 : index
    %c2_185 = arith.constant 2 : index
    %c0_186 = arith.constant 0 : index
    %117 = vector.load %arg9[%c0_183, %c0_184, %c2_185, %c0_186] : memref<1x18x18x4xf32, #tpu.memory_space<vmem>>, vector<1x16x16x4xf32>
    %118 = vector.shape_cast %117 : vector<1x16x16x4xf32> to vector<256x4xf32>
    %c0_187 = arith.constant 0 : index
    %c1_188 = arith.constant 1 : index
    %c0_189 = arith.constant 0 : index
    %c0_190 = arith.constant 0 : index
    %119 = vector.load %arg9[%c0_187, %c1_188, %c0_189, %c0_190] : memref<1x18x18x4xf32, #tpu.memory_space<vmem>>, vector<1x16x16x4xf32>
    %120 = vector.shape_cast %119 : vector<1x16x16x4xf32> to vector<256x4xf32>
    %c0_191 = arith.constant 0 : index
    %c1_192 = arith.constant 1 : index
    %c1_193 = arith.constant 1 : index
    %c0_194 = arith.constant 0 : index
    %121 = vector.load %arg9[%c0_191, %c1_192, %c1_193, %c0_194] : memref<1x18x18x4xf32, #tpu.memory_space<vmem>>, vector<1x16x16x4xf32>
    %122 = vector.shape_cast %121 : vector<1x16x16x4xf32> to vector<256x4xf32>
    %c0_195 = arith.constant 0 : index
    %c1_196 = arith.constant 1 : index
    %c2_197 = arith.constant 2 : index
    %c0_198 = arith.constant 0 : index
    %123 = vector.load %arg9[%c0_195, %c1_196, %c2_197, %c0_198] : memref<1x18x18x4xf32, #tpu.memory_space<vmem>>, vector<1x16x16x4xf32>
    %124 = vector.shape_cast %123 : vector<1x16x16x4xf32> to vector<256x4xf32>
    %c0_199 = arith.constant 0 : index
    %c2_200 = arith.constant 2 : index
    %c0_201 = arith.constant 0 : index
    %c0_202 = arith.constant 0 : index
    %125 = vector.load %arg9[%c0_199, %c2_200, %c0_201, %c0_202] : memref<1x18x18x4xf32, #tpu.memory_space<vmem>>, vector<1x16x16x4xf32>
    %126 = vector.shape_cast %125 : vector<1x16x16x4xf32> to vector<256x4xf32>
    %c0_203 = arith.constant 0 : index
    %c2_204 = arith.constant 2 : index
    %c1_205 = arith.constant 1 : index
    %c0_206 = arith.constant 0 : index
    %127 = vector.load %arg9[%c0_203, %c2_204, %c1_205, %c0_206] : memref<1x18x18x4xf32, #tpu.memory_space<vmem>>, vector<1x16x16x4xf32>
    %128 = vector.shape_cast %127 : vector<1x16x16x4xf32> to vector<256x4xf32>
    %c0_207 = arith.constant 0 : index
    %c2_208 = arith.constant 2 : index
    %c2_209 = arith.constant 2 : index
    %c0_210 = arith.constant 0 : index
    %129 = vector.load %arg9[%c0_207, %c2_208, %c2_209, %c0_210] : memref<1x18x18x4xf32, #tpu.memory_space<vmem>>, vector<1x16x16x4xf32>
    %130 = vector.shape_cast %129 : vector<1x16x16x4xf32> to vector<256x4xf32>
    %131 = tpu.concatenate %114, %116, %118, %120, %122, %124, %126, %128, %130 in 1 : vector<256x4xf32>, vector<256x4xf32>, vector<256x4xf32>, vector<256x4xf32>, vector<256x4xf32>, vector<256x4xf32>, vector<256x4xf32>, vector<256x4xf32>, vector<256x4xf32> -> vector<256x36xf32>
    %132 = arith.truncf %131 : vector<256x36xf32> to vector<256x36xbf16>
    %c0_211 = arith.constant 0 : index
    %c0_212 = arith.constant 0 : index
    %133 = vector.load %arg6[%c0_211, %c0_212] : memref<36x4xbf16, #tpu.memory_space<vmem>>, vector<36x4xbf16>
    %cst_213 = arith.constant dense<0.000000e+00> : vector<256x4xf32>
    %134 = tpu.matmul %132, %133, %cst_213 {dimension_numbers = #tpu.dot_dimension_numbers<[1], [0], [0], [1], [0, 0, 1, 1], [], []>} : vector<256x36xbf16>, vector<36x4xbf16>, vector<256x4xf32> -> vector<256x4xf32>
    %c0_214 = arith.constant 0 : index
    %c0_215 = arith.constant 0 : index
    %135 = vector.load %arg7[%c0_214, %c0_215] : memref<1x4xf32, #tpu.memory_space<vmem>>, vector<1x4xf32>
    %136 = vector.broadcast %135 : vector<1x4xf32> to vector<256x4xf32>
    %137 = arith.addf %134, %136 : vector<256x4xf32>
    %cst_216 = arith.constant 2.000000e-01 : f32
    %138 = vector.broadcast %cst_216 : f32 to vector<256x4xf32>
    %139 = arith.mulf %138, %137 : vector<256x4xf32>
    %140 = arith.maximumf %137, %139 : vector<256x4xf32>
    %cst_217 = arith.constant 2.000000e-01 : f32
    %141 = vector.broadcast %cst_217 : f32 to vector<256x4xf32>
    %142 = arith.mulf %141, %140 : vector<256x4xf32>
    %143 = arith.addf %142, %17 : vector<256x4xf32>
    %144 = vector.shape_cast %143 : vector<256x4xf32> to vector<1x16x16x4xf32>
    %c0_218 = arith.constant 0 : index
    %c0_219 = arith.constant 0 : index
    %c0_220 = arith.constant 0 : index
    %c0_221 = arith.constant 0 : index
    %145 = vector.load %arg8[%c0_218, %c0_219, %c0_220, %c0_221] : memref<1x16x16x4xf32, #tpu.memory_space<vmem>>, vector<1x16x16x4xf32>
    tpu.vector_store %arg8[%c0_218, %c0_219, %c0_220, %c0_221], %144 {strides = array<i32>} : memref<1x16x16x4xf32, #tpu.memory_space<vmem>>, vector<1x16x16x4xf32>,
    return
  }
  func.func @transform_0(%arg0: i32) -> (i32, i32, i32, i32) {
    %c0_i32 = arith.constant 0 : i32
    %c0_i32_0 = arith.constant 0 : i32
    %c0_i32_1 = arith.constant 0 : i32
    %c0_i32_2 = arith.constant 0 : i32
    return %arg0, %c0_i32, %c0_i32_0, %c0_i32_1 : i32, i32, i32, i32
  }
  func.func @transform_1(%arg0: i32) -> (i32, i32) {
    %c0_i32 = arith.constant 0 : i32
    %c0_i32_0 = arith.constant 0 : i32
    %c0_i32_1 = arith.constant 0 : i32
    return %c0_i32, %c0_i32_0 : i32, i32
  }
  func.func @transform_2(%arg0: i32) -> (i32, i32) {
    %c0_i32 = arith.constant 0 : i32
    %c0_i32_0 = arith.constant 0 : i32
    %c0_i32_1 = arith.constant 0 : i32
    return %c0_i32, %c0_i32_0 : i32, i32
  }
  func.func @transform_3(%arg0: i32) -> (i32, i32) {
    %c0_i32 = arith.constant 0 : i32
    %c0_i32_0 = arith.constant 0 : i32
    %c0_i32_1 = arith.constant 0 : i32
    return %c0_i32, %c0_i32_0 : i32, i32
  }
  func.func @transform_4(%arg0: i32) -> (i32, i32) {
    %c0_i32 = arith.constant 0 : i32
    %c0_i32_0 = arith.constant 0 : i32
    %c0_i32_1 = arith.constant 0 : i32
    return %c0_i32, %c0_i32_0 : i32, i32
  }
  func.func @transform_5(%arg0: i32) -> (i32, i32) {
    %c0_i32 = arith.constant 0 : i32
    %c0_i32_0 = arith.constant 0 : i32
    %c0_i32_1 = arith.constant 0 : i32
    return %c0_i32, %c0_i32_0 : i32, i32
  }
  func.func @transform_6(%arg0: i32) -> (i32, i32) {
    %c0_i32 = arith.constant 0 : i32
    %c0_i32_0 = arith.constant 0 : i32
    %c0_i32_1 = arith.constant 0 : i32
    return %c0_i32, %c0_i32_0 : i32, i32
  }
  func.func @transform_7(%arg0: i32) -> (i32, i32, i32, i32) {
    %c0_i32 = arith.constant 0 : i32
    %c0_i32_0 = arith.constant 0 : i32
    %c0_i32_1 = arith.constant 0 : i32
    %c0_i32_2 = arith.constant 0 : i32
    return %arg0, %c0_i32, %c0_i32_0, %c0_i32_1 : i32, i32, i32, i32
  }
}

</mosaic_0001>

<llo_original>
// kernel: tpu_custom_call.1
$region0: #{tpu_custom_call.1}
  #allocation0 [shape = 'u32[]', space=smem, size = 0x4, offset = 0x4, fixed_abs, tag = 'smem constant byte address 0x4 - core index']
  #allocation1 [shape = 'u32[144,128]{1,0:T(1,128)}', space=vmem, size = 0x12000, scoped, tag = 'internal scratch']
  #allocation2 [shape = 'f32[1,18,18,4]{3,2,1,0:T(8,128)}', space=vmem, size = 0x36000, scoped, tag = 'scratch operand']
  #allocation3 [shape = 'f32[1,18,18,4]{3,2,1,0:T(8,128)}', space=vmem, size = 0x36000, scoped, tag = 'scratch operand']
  %s0 = inlined_call_operand.vmem [shape: f32[2,16,16,4], index: 0, kind: input, shape index: {}]
  %s1 = inlined_call_operand.vmem [shape: bf16[36,4], index: 1, kind: input, shape index: {}]
  %s2 = inlined_call_operand.vmem [shape: f32[1,4], index: 2, kind: input, shape index: {}]
  %s3 = inlined_call_operand.vmem [shape: bf16[72,8], index: 3, kind: input, shape index: {}]
  %s4 = inlined_call_operand.vmem [shape: f32[1,8], index: 4, kind: input, shape index: {}]
  %s5 = inlined_call_operand.vmem [shape: bf16[36,4], index: 5, kind: input, shape index: {}]
  %s6 = inlined_call_operand.vmem [shape: f32[1,4], index: 6, kind: input, shape index: {}]
  %s7 = inlined_call_operand.vmem [shape: f32[2,16,16,4], index: 7, kind: output, shape index: {}]
  %s8 = sld [smem:[#allocation0]]
  $region61: #{tpu_custom_call.1} parent=0
    _
  %s10 = ssub.s32 1, %s8
  %s11 = scalar_select 0, %s10, %s8
  loop: start=0, step=1, limit=4
  $region2: #{tpu_custom_call.1} parent=0 // loop_pre_header
    _
  $region3: #{tpu_custom_call.1} parent=0 // loop_header
    %s13 = sphi 0, %s17
    %p14 = scmp.ge.s32.totalorder %s13, 4
    %s23 = sphi 0, %s25
    %s26 = sphi 0, %s23
    %s27 = sphi 0, %s26
    %s43 = sphi 0, %s27
    %s47 = sphi 0, %s47
    %s49 = sphi 0, %s47
    %s50 = sphi 0, %s49
    %s64 = sphi 0, %s50
    %s68 = sphi 0, %s68
    %s70 = sphi 0, %s68
    %s71 = sphi 0, %s70
    %s85 = sphi 0, %s71
    %s89 = sphi 0, %s89
    %s91 = sphi 0, %s89
    %s92 = sphi 0, %s91
    %s106 = sphi 0, %s92
    %s110 = sphi 0, %s110
    %s112 = sphi 0, %s110
    %s113 = sphi 0, %s112
    %s127 = sphi 0, %s113
    %s131 = sphi 0, %s131
    %s133 = sphi 0, %s131
    %s134 = sphi 0, %s133
    %s148 = sphi 0, %s134
    %s152 = sphi 0, %s152
    %s154 = sphi 0, %s152
    %s155 = sphi 0, %s154
    %s169 = sphi 0, %s155
    %s175 = sphi 0, %s177
    %s178 = sphi 0, %s175
    %s179 = sphi 0, %s178
    %s195 = sphi 0, %s179
  $region4: #{tpu_custom_call.1} parent=0 // loop_header_branch
    %16 = sbr.rel (%p14) target = $region8
  $region5: #{tpu_custom_call.1} parent=0 // loop_body
    %s18 = ssub.s32 %s13, 1
    %s19 = ssub.s32 %s13, 2
    %s20 = sadd.s32 %s13, 1
    %s21 = ssub.s32 %s13, %s20
    %p22 = scmp.eq.s32.totalorder %s21, 0
    %s24 = sadd.s32 %s23, 1
    %s25 = scalar_select %p22, %s23, %s24
    %p28 = pneg %p22
    %p29 = scmp.eq.s32.totalorder %s13, 1
    %p30 = por %p28, %p29
    %p31 = scmp.ne.s32.totalorder %s23, %s26
    %p32 = scmp.eq.s32.totalorder %s13, 0
    %p33 = por %p31, %p32
    %p34 = scmp.ne.s32.totalorder %s23, %s26
    %p35 = scmp.eq.s32.totalorder %s18, 1
    %p36 = por %p34, %p35
    %p37 = scmp.ne.s32.totalorder %s26, %s27
    %p38 = scmp.eq.s32.totalorder %s18, 0
    %p39 = por %p37, %p38
    %p40 = scmp.ne.s32.totalorder %s26, %s27
    %p41 = scmp.eq.s32.totalorder %s19, 1
    %p42 = por %p40, %p41
    %p44 = scmp.ne.s32.totalorder %s27, %s43
    %p45 = scmp.eq.s32.totalorder %s19, 0
    %p46 = por %p44, %p45
    %s48 = sadd.s32 %s47, 1
    %p51 = scmp.eq.s32.totalorder %s13, 1
    %p52 = scmp.ne.s32.totalorder %s47, %s49
    %p53 = scmp.eq.s32.totalorder %s13, 0
    %p54 = por %p52, %p53
    %p55 = scmp.ne.s32.totalorder %s47, %s49
    %p56 = scmp.eq.s32.totalorder %s18, 1
    %p57 = por %p55, %p56
    %p58 = scmp.ne.s32.totalorder %s49, %s50
    %p59 = scmp.eq.s32.totalorder %s18, 0
    %p60 = por %p58, %p59
    %p61 = scmp.ne.s32.totalorder %s49, %s50
    %p62 = scmp.eq.s32.totalorder %s19, 1
    %p63 = por %p61, %p62
    %p65 = scmp.ne.s32.totalorder %s50, %s64
    %p66 = scmp.eq.s32.totalorder %s19, 0
    %p67 = por %p65, %p66
    %s69 = sadd.s32 %s68, 1
    %p72 = scmp.eq.s32.totalorder %s13, 1
    %p73 = scmp.ne.s32.totalorder %s68, %s70
    %p74 = scmp.eq.s32.totalorder %s13, 0
    %p75 = por %p73, %p74
    %p76 = scmp.ne.s32.totalorder %s68, %s70
    %p77 = scmp.eq.s32.totalorder %s18, 1
    %p78 = por %p76, %p77
    %p79 = scmp.ne.s32.totalorder %s70, %s71
    %p80 = scmp.eq.s32.totalorder %s18, 0
    %p81 = por %p79, %p80
    %p82 = scmp.ne.s32.totalorder %s70, %s71
    %p83 = scmp.eq.s32.totalorder %s19, 1
    %p84 = por %p82, %p83
    %p86 = scmp.ne.s32.totalorder %s71, %s85
    %p87 = scmp.eq.s32.totalorder %s19, 0
    %p88 = por %p86, %p87
    %s90 = sadd.s32 %s89, 1
    %p93 = scmp.eq.s32.totalorder %s13, 1
    %p94 = scmp.ne.s32.totalorder %s89, %s91
    %p95 = scmp.eq.s32.totalorder %s13, 0
    %p96 = por %p94, %p95
    %p97 = scmp.ne.s32.totalorder %s89, %s91
    %p98 = scmp.eq.s32.totalorder %s18, 1
    %p99 = por %p97, %p98
    %p100 = scmp.ne.s32.totalorder %s91, %s92
    %p101 = scmp.eq.s32.totalorder %s18, 0
    %p102 = por %p100, %p101
    %p103 = scmp.ne.s32.totalorder %s91, %s92
    %p104 = scmp.eq.s32.totalorder %s19, 1
    %p105 = por %p103, %p104
    %p107 = scmp.ne.s32.totalorder %s92, %s106
    %p108 = scmp.eq.s32.totalorder %s19, 0
    %p109 = por %p107, %p108
    %s111 = sadd.s32 %s110, 1
    %p114 = scmp.eq.s32.totalorder %s13, 1
    %p115 = scmp.ne.s32.totalorder %s110, %s112
    %p116 = scmp.eq.s32.totalorder %s13, 0
    %p117 = por %p115, %p116
    %p118 = scmp.ne.s32.totalorder %s110, %s112
    %p119 = scmp.eq.s32.totalorder %s18, 1
    %p120 = por %p118, %p119
    %p121 = scmp.ne.s32.totalorder %s112, %s113
    %p122 = scmp.eq.s32.totalorder %s18, 0
    %p123 = por %p121, %p122
    %p124 = scmp.ne.s32.totalorder %s112, %s113
    %p125 = scmp.eq.s32.totalorder %s19, 1
    %p126 = por %p124, %p125
    %p128 = scmp.ne.s32.totalorder %s113, %s127
    %p129 = scmp.eq.s32.totalorder %s19, 0
    %p130 = por %p128, %p129
    %s132 = sadd.s32 %s131, 1
    %p135 = scmp.eq.s32.totalorder %s13, 1
    %p136 = scmp.ne.s32.totalorder %s131, %s133
    %p137 = scmp.eq.s32.totalorder %s13, 0
    %p138 = por %p136, %p137
    %p139 = scmp.ne.s32.totalorder %s131, %s133
    %p140 = scmp.eq.s32.totalorder %s18, 1
    %p141 = por %p139, %p140
    %p142 = scmp.ne.s32.totalorder %s133, %s134
    %p143 = scmp.eq.s32.totalorder %s18, 0
    %p144 = por %p142, %p143
    %p145 = scmp.ne.s32.totalorder %s133, %s134
    %p146 = scmp.eq.s32.totalorder %s19, 1
    %p147 = por %p145, %p146
    %p149 = scmp.ne.s32.totalorder %s134, %s148
    %p150 = scmp.eq.s32.totalorder %s19, 0
    %p151 = por %p149, %p150
    %s153 = sadd.s32 %s152, 1
    %p156 = scmp.eq.s32.totalorder %s13, 1
    %p157 = scmp.ne.s32.totalorder %s152, %s154
    %p158 = scmp.eq.s32.totalorder %s13, 0
    %p159 = por %p157, %p158
    %p160 = scmp.ne.s32.totalorder %s152, %s154
    %p161 = scmp.eq.s32.totalorder %s18, 1
    %p162 = por %p160, %p161
    %p163 = scmp.ne.s32.totalorder %s154, %s155
    %p164 = scmp.eq.s32.totalorder %s18, 0
    %p165 = por %p163, %p164
    %p166 = scmp.ne.s32.totalorder %s154, %s155
    %p167 = scmp.eq.s32.totalorder %s19, 1
    %p168 = por %p166, %p167
    %p170 = scmp.ne.s32.totalorder %s155, %s169
    %p171 = scmp.eq.s32.totalorder %s19, 0
    %p172 = por %p170, %p171
    %s173 = ssub.s32 %s13, %s20
    %p174 = scmp.eq.s32.totalorder %s173, 0
    %s176 = sadd.s32 %s175, 1
    %s177 = scalar_select %p174, %s175, %s176
    %p180 = pneg %p174
    %p181 = scmp.eq.s32.totalorder %s13, 1
    %p182 = por %p180, %p181
    %p183 = scmp.ne.s32.totalorder %s175, %s178
    %p184 = scmp.eq.s32.totalorder %s13, 0
    %p185 = por %p183, %p184
    %p186 = scmp.ne.s32.totalorder %s175, %s178
    %p187 = scmp.eq.s32.totalorder %s18, 1
    %p188 = por %p186, %p187
    %p189 = scmp.ne.s32.totalorder %s178, %s179
    %p190 = scmp.eq.s32.totalorder %s18, 0
    %p191 = por %p189, %p190
    %p192 = scmp.ne.s32.totalorder %s178, %s179
    %p193 = scmp.eq.s32.totalorder %s19, 1
    %p194 = por %p192, %p193
    %p196 = scmp.ne.s32.totalorder %s179, %s195
    %p197 = scmp.eq.s32.totalorder %s19, 0
    %p198 = por %p196, %p197
    %p199 = scmp.le.s32.totalorder 1, %s13
    %p200 = scmp.lt.s32.totalorder %s13, 3
    %p201 = pnand %p199, %p200
    %p202 = pneg %p201
    // Predicated region
    $region9: #{tpu_custom_call.1} parent=5 // pred_check
      _
    $region10: #{tpu_custom_call.1} parent=5 // pred_check_branch
      %204 = sbr.rel (%p201) target = $region12
    $region11: #{tpu_custom_call.1} parent=5 // pred_region
      %s205 = ssub.s32 %s13, 1
      // Predicated region
      $region13: #{tpu_custom_call.1} parent=11 // pred_check
        %p206 = pneg %p60
      $region14: #{tpu_custom_call.1} parent=11 // pred_check_branch
        %208 = sbr.rel (%p206) target = $region16
      $region15: #{tpu_custom_call.1} parent=11 // pred_region
        _
      $region16: #{tpu_custom_call.1} parent=11 // pred_fallthru
        _
      // Predicated region
      $region17: #{tpu_custom_call.1} parent=11 // pred_check
        %p209 = pneg %p81
      $region18: #{tpu_custom_call.1} parent=11 // pred_check_branch
        %211 = sbr.rel (%p209) target = $region20
      $region19: #{tpu_custom_call.1} parent=11 // pred_region
        _
      $region20: #{tpu_custom_call.1} parent=11 // pred_fallthru
        _
      // Predicated region
      $region21: #{tpu_custom_call.1} parent=11 // pred_check
        %p212 = pneg %p102
      $region22: #{tpu_custom_call.1} parent=11 // pred_check_branch
        %214 = sbr.rel (%p212) target = $region24
      $region23: #{tpu_custom_call.1} parent=11 // pred_region
        _
      $region24: #{tpu_custom_call.1} parent=11 // pred_fallthru
        _
      // Predicated region
      $region25: #{tpu_custom_call.1} parent=11 // pred_check
        %p215 = pneg %p123
      $region26: #{tpu_custom_call.1} parent=11 // pred_check_branch
        %217 = sbr.rel (%p215) target = $region28
      $region27: #{tpu_custom_call.1} parent=11 // pred_region
        _
      $region28: #{tpu_custom_call.1} parent=11 // pred_fallthru
        _
      // Predicated region
      $region29: #{tpu_custom_call.1} parent=11 // pred_check
        %p218 = pneg %p144
      $region30: #{tpu_custom_call.1} parent=11 // pred_check_branch
        %220 = sbr.rel (%p218) target = $region32
      $region31: #{tpu_custom_call.1} parent=11 // pred_region
        _
      $region32: #{tpu_custom_call.1} parent=11 // pred_fallthru
        _
      // Predicated region
      $region33: #{tpu_custom_call.1} parent=11 // pred_check
        %p221 = pneg %p165
      $region34: #{tpu_custom_call.1} parent=11 // pred_check_branch
        %223 = sbr.rel (%p221) target = $region36
      $region35: #{tpu_custom_call.1} parent=11 // pred_region
        _
      $region36: #{tpu_custom_call.1} parent=11 // pred_fallthru
        _
    $region12: #{tpu_custom_call.1} parent=5 // pred_fallthru
      _
    %p224 = scmp.lt.s32.totalorder %s13, 2
    // Predicated region
    $region37: #{tpu_custom_call.1} parent=5 // pred_check
      %p225 = pneg %p224
    $region38: #{tpu_custom_call.1} parent=5 // pred_check_branch
      %227 = sbr.rel (%p225) target = $region40
    $region39: #{tpu_custom_call.1} parent=5 // pred_region
      // Predicated region
      $region41: #{tpu_custom_call.1} parent=39 // pred_check
        %p228 = pneg %p33
      $region42: #{tpu_custom_call.1} parent=39 // pred_check_branch
        %230 = sbr.rel (%p228) target = $region44
      $region43: #{tpu_custom_call.1} parent=39 // pred_region
        %p231 = scmp.lt.s32.totalorder %s13, 1
        %s232 = scalar_select %p231, %s13, 1
        %s233 = smul.addr %s232, 32
        %s234 = smul.addr %s233, 8
        %s235 = scalar_lea.vmem %s0, %s234
      $region44: #{tpu_custom_call.1} parent=39 // pred_fallthru
        _
    $region40: #{tpu_custom_call.1} parent=5 // pred_fallthru
      _
    %p236 = scmp.le.s32.totalorder 1, %s13
    %p237 = scmp.lt.s32.totalorder %s13, 3
    %p238 = pnand %p236, %p237
    %p239 = pneg %p238
    // Predicated region
    $region45: #{tpu_custom_call.1} parent=5 // pred_check
      _
    $region46: #{tpu_custom_call.1} parent=5 // pred_check_branch
      %241 = sbr.rel (%p238) target = $region48
    $region47: #{tpu_custom_call.1} parent=5 // pred_region
      %s242 = ssub.s32 %s13, 1
      %p243 = scmp.lt.s32.totalorder %s18, 1
      %s244 = scalar_select %p243, %s18, 1
      %s245 = smul.addr %s244, 32
      %s246 = smul.addr %s245, 8
      %s247 = scalar_lea.vmem %s0, %s246
      %p248 = pneg %p39
      %p249 = pneg %p36
      %p250 = pneg %p60
      %p251 = pneg %p57
      %p252 = pneg %p81
      %p253 = pneg %p78
      %p254 = pneg %p102
      %p255 = pneg %p99
      %p256 = pneg %p123
      %p257 = pneg %p120
      %p258 = pneg %p144
      %p259 = pneg %p141
      %p260 = pneg %p165
      %p261 = pneg %p162
      %p262 = pneg %p191
      %p263 = pneg %p188
      %p264 = scmp.lt.s32.totalorder %s18, 1
      %s265 = scalar_select %p264, %s18, 1
      %s266 = smul.addr %s265, 32
      %s267 = smul.addr %s266, 8
      %s268 = scalar_lea.vmem %s7, %s267
      %p269 = scmp.lt.s32.totalorder %s18, 1
      %s270 = scalar_select %p269, %s18, 1
      %s271 = smul.addr %s270, 32
      %s272 = smul.addr %s271, 8
      %s273 = scalar_lea.vmem %s0, %s272
      %p274 = scmp.lt.s32.totalorder %s18, 1
      %s275 = scalar_select %p274, %s18, 1
      %s276 = smul.addr %s275, 32
      %s277 = smul.addr %s276, 8
      %s278 = scalar_lea.vmem %s7, %s277
      %vm280 = vcmask 31744
      %281 = vst.msk [vmem:[#allocation2] sm:$0xff] %vm280, 0.0
      %282 = vst.msk [vmem:[#allocation2 + $0x8] sm:$0xff] %vm280, 0.0
      %vm283 = vcmask 25600
      %284 = vst.msk [vmem:[#allocation2 + $0x10] sm:$0x3] %vm283, 0.0
      %s285 = scalar_lea.vmem [#allocation2], 408
      %286 = vst.msk [vmem:[%s285] sm:$0xff] %vm280, 0.0
      %287 = vst.msk [vmem:[%s285 + $0x8] sm:$0xff] %vm280, 0.0
      %288 = vst.msk [vmem:[%s285 + $0x10] sm:$0x3] %vm283, 0.0
      %vm289 = vcmask 24576
      %290 = vst.msk [vmem:[#allocation2] sm:$0x1] %vm289, 0.0
      %291 = vst.msk [vmem:[#allocation2 + $0x18] sm:$0x1] %vm289, 0.0
      %292 = vst.msk [vmem:[#allocation2 + $0x30] sm:$0x1] %vm289, 0.0
      %293 = vst.msk [vmem:[#allocation2 + $0x48] sm:$0x1] %vm289, 0.0
      %294 = vst.msk [vmem:[#allocation2 + $0x60] sm:$0x1] %vm289, 0.0
      %295 = vst.msk [vmem:[#allocation2 + $0x78] sm:$0x1] %vm289, 0.0
      %296 = vst.msk [vmem:[#allocation2 + $0x90] sm:$0x1] %vm289, 0.0
      %297 = vst.msk [vmem:[#allocation2 + $0xa8] sm:$0x1] %vm289, 0.0
      %298 = vst.msk [vmem:[#allocation2 + $0xc0] sm:$0x1] %vm289, 0.0
      %299 = vst.msk [vmem:[#allocation2 + $0xd8] sm:$0x1] %vm289, 0.0
      %300 = vst.msk [vmem:[#allocation2 + $0xf0] sm:$0x1] %vm289, 0.0
      %301 = vst.msk [vmem:[#allocation2 + $0x108] sm:$0x1] %vm289, 0.0
      %302 = vst.msk [vmem:[#allocation2 + $0x120] sm:$0x1] %vm289, 0.0
      %303 = vst.msk [vmem:[#allocation2 + $0x138] sm:$0x1] %vm289, 0.0
      %304 = vst.msk [vmem:[#allocation2 + $0x150] sm:$0x1] %vm289, 0.0
      %305 = vst.msk [vmem:[#allocation2 + $0x168] sm:$0x1] %vm289, 0.0
      %306 = vst.msk [vmem:[#allocation2 + $0x180] sm:$0x1] %vm289, 0.0
      %307 = vst.msk [vmem:[#allocation2 + $0x198] sm:$0x1] %vm289, 0.0
      %308 = vst.msk [vmem:[#allocation2 + $0x11] sm:$0x1] %vm289, 0.0
      %309 = vst.msk [vmem:[#allocation2 + $0x29] sm:$0x1] %vm289, 0.0
      %310 = vst.msk [vmem:[#allocation2 + $0x41] sm:$0x1] %vm289, 0.0
      %311 = vst.msk [vmem:[#allocation2 + $0x59] sm:$0x1] %vm289, 0.0
      %312 = vst.msk [vmem:[#allocation2 + $0x71] sm:$0x1] %vm289, 0.0
      %313 = vst.msk [vmem:[#allocation2 + $0x89] sm:$0x1] %vm289, 0.0
      %314 = vst.msk [vmem:[#allocation2 + $0xa1] sm:$0x1] %vm289, 0.0
      %315 = vst.msk [vmem:[#allocation2 + $0xb9] sm:$0x1] %vm289, 0.0
      %316 = vst.msk [vmem:[#allocation2 + $0xd1] sm:$0x1] %vm289, 0.0
      %317 = vst.msk [vmem:[#allocation2 + $0xe9] sm:$0x1] %vm289, 0.0
      %318 = vst.msk [vmem:[#allocation2 + $0x101] sm:$0x1] %vm289, 0.0
      %319 = vst.msk [vmem:[#allocation2 + $0x119] sm:$0x1] %vm289, 0.0
      %320 = vst.msk [vmem:[#allocation2 + $0x131] sm:$0x1] %vm289, 0.0
      %321 = vst.msk [vmem:[#allocation2 + $0x149] sm:$0x1] %vm289, 0.0
      %322 = vst.msk [vmem:[#allocation2 + $0x161] sm:$0x1] %vm289, 0.0
      %323 = vst.msk [vmem:[#allocation2 + $0x179] sm:$0x1] %vm289, 0.0
      %324 = vst.msk [vmem:[#allocation2 + $0x191] sm:$0x1] %vm289, 0.0
      %325 = vst.msk [vmem:[#allocation2 + $0x1a9] sm:$0x1] %vm289, 0.0
      %326 = vst.msk [vmem:[#allocation3] sm:$0xff] %vm280, 0.0
      %327 = vst.msk [vmem:[#allocation3 + $0x8] sm:$0xff] %vm280, 0.0
      %328 = vst.msk [vmem:[#allocation3 + $0x10] sm:$0x3] %vm283, 0.0
      %s329 = scalar_lea.vmem [#allocation3], 408
      %330 = vst.msk [vmem:[%s329] sm:$0xff] %vm280, 0.0
      %331 = vst.msk [vmem:[%s329 + $0x8] sm:$0xff] %vm280, 0.0
      %332 = vst.msk [vmem:[%s329 + $0x10] sm:$0x3] %vm283, 0.0
      %333 = vst.msk [vmem:[#allocation3] sm:$0x1] %vm289, 0.0
      %334 = vst.msk [vmem:[#allocation3 + $0x18] sm:$0x1] %vm289, 0.0
      %335 = vst.msk [vmem:[#allocation3 + $0x30] sm:$0x1] %vm289, 0.0
      %336 = vst.msk [vmem:[#allocation3 + $0x48] sm:$0x1] %vm289, 0.0
      %337 = vst.msk [vmem:[#allocation3 + $0x60] sm:$0x1] %vm289, 0.0
      %338 = vst.msk [vmem:[#allocation3 + $0x78] sm:$0x1] %vm289, 0.0
      %339 = vst.msk [vmem:[#allocation3 + $0x90] sm:$0x1] %vm289, 0.0
      %340 = vst.msk [vmem:[#allocation3 + $0xa8] sm:$0x1] %vm289, 0.0
      %341 = vst.msk [vmem:[#allocation3 + $0xc0] sm:$0x1] %vm289, 0.0
      %342 = vst.msk [vmem:[#allocation3 + $0xd8] sm:$0x1] %vm289, 0.0
      %343 = vst.msk [vmem:[#allocation3 + $0xf0] sm:$0x1] %vm289, 0.0
      %344 = vst.msk [vmem:[#allocation3 + $0x108] sm:$0x1] %vm289, 0.0
      %345 = vst.msk [vmem:[#allocation3 + $0x120] sm:$0x1] %vm289, 0.0
      %346 = vst.msk [vmem:[#allocation3 + $0x138] sm:$0x1] %vm289, 0.0
      %347 = vst.msk [vmem:[#allocation3 + $0x150] sm:$0x1] %vm289, 0.0
      %348 = vst.msk [vmem:[#allocation3 + $0x168] sm:$0x1] %vm289, 0.0
      %349 = vst.msk [vmem:[#allocation3 + $0x180] sm:$0x1] %vm289, 0.0
      %350 = vst.msk [vmem:[#allocation3 + $0x198] sm:$0x1] %vm289, 0.0
      %351 = vst.msk [vmem:[#allocation3 + $0x11] sm:$0x1] %vm289, 0.0
      %352 = vst.msk [vmem:[#allocation3 + $0x29] sm:$0x1] %vm289, 0.0
      %353 = vst.msk [vmem:[#allocation3 + $0x41] sm:$0x1] %vm289, 0.0
      %354 = vst.msk [vmem:[#allocation3 + $0x59] sm:$0x1] %vm289, 0.0
      %355 = vst.msk [vmem:[#allocation3 + $0x71] sm:$0x1] %vm289, 0.0
      %356 = vst.msk [vmem:[#allocation3 + $0x89] sm:$0x1] %vm289, 0.0
      %357 = vst.msk [vmem:[#allocation3 + $0xa1] sm:$0x1] %vm289, 0.0
      %358 = vst.msk [vmem:[#allocation3 + $0xb9] sm:$0x1] %vm289, 0.0
      %359 = vst.msk [vmem:[#allocation3 + $0xd1] sm:$0x1] %vm289, 0.0
      %360 = vst.msk [vmem:[#allocation3 + $0xe9] sm:$0x1] %vm289, 0.0
      %361 = vst.msk [vmem:[#allocation3 + $0x101] sm:$0x1] %vm289, 0.0
      %362 = vst.msk [vmem:[#allocation3 + $0x119] sm:$0x1] %vm289, 0.0
      %363 = vst.msk [vmem:[#allocation3 + $0x131] sm:$0x1] %vm289, 0.0
      %364 = vst.msk [vmem:[#allocation3 + $0x149] sm:$0x1] %vm289, 0.0
      %365 = vst.msk [vmem:[#allocation3 + $0x161] sm:$0x1] %vm289, 0.0
      %366 = vst.msk [vmem:[#allocation3 + $0x179] sm:$0x1] %vm289, 0.0
      %367 = vst.msk [vmem:[#allocation3 + $0x191] sm:$0x1] %vm289, 0.0
      %368 = vst.msk [vmem:[#allocation3 + $0x1a9] sm:$0x1] %vm289, 0.0
      %v369 = vld [vmem:[%s273] sm:$0xff]
      %v370 = vld [vmem:[%s273 + $0x8] sm:$0xff]
      %v371 = vld [vmem:[%s273 + $0x10] sm:$0xff]
      %v372 = vld [vmem:[%s273 + $0x18] sm:$0xff]
      %v373 = vld [vmem:[%s273 + $0x20] sm:$0xff]
      %v374 = vld [vmem:[%s273 + $0x28] sm:$0xff]
      %v375 = vld [vmem:[%s273 + $0x30] sm:$0xff]
      %v376 = vld [vmem:[%s273 + $0x38] sm:$0xff]
      %v377 = vld [vmem:[%s273 + $0x40] sm:$0xff]
      %v378 = vld [vmem:[%s273 + $0x48] sm:$0xff]
      %v379 = vld [vmem:[%s273 + $0x50] sm:$0xff]
      %v380 = vld [vmem:[%s273 + $0x58] sm:$0xff]
      %v381 = vld [vmem:[%s273 + $0x60] sm:$0xff]
      %v382 = vld [vmem:[%s273 + $0x68] sm:$0xff]
      %v383 = vld [vmem:[%s273 + $0x70] sm:$0xff]
      %v384 = vld [vmem:[%s273 + $0x78] sm:$0xff]
      %v385 = vld [vmem:[%s273 + $0x80] sm:$0xff]
      %v386 = vld [vmem:[%s273 + $0x88] sm:$0xff]
      %v387 = vld [vmem:[%s273 + $0x90] sm:$0xff]
      %v388 = vld [vmem:[%s273 + $0x98] sm:$0xff]
      %v389 = vld [vmem:[%s273 + $0xa0] sm:$0xff]
      %v390 = vld [vmem:[%s273 + $0xa8] sm:$0xff]
      %v391 = vld [vmem:[%s273 + $0xb0] sm:$0xff]
      %v392 = vld [vmem:[%s273 + $0xb8] sm:$0xff]
      %v393 = vld [vmem:[%s273 + $0xc0] sm:$0xff]
      %v394 = vld [vmem:[%s273 + $0xc8] sm:$0xff]
      %v395 = vld [vmem:[%s273 + $0xd0] sm:$0xff]
      %v396 = vld [vmem:[%s273 + $0xd8] sm:$0xff]
      %v397 = vld [vmem:[%s273 + $0xe0] sm:$0xff]
      %v398 = vld [vmem:[%s273 + $0xe8] sm:$0xff]
      %v399 = vld [vmem:[%s273 + $0xf0] sm:$0xff]
      %v400 = vld [vmem:[%s273 + $0xf8] sm:$0xff]
      %s401 = scalar_lea.vmem [#allocation2], 24
      %402 = vst.msk [vmem:[%s401 + $0x1] sm:$0xff] %vm280, %v369
      %403 = vst.msk [vmem:[%s401 + $0x9] sm:$0xff] %vm280, %v370
      %404 = vst.msk [vmem:[%s401 + $0x19] sm:$0xff] %vm280, %v371
      %405 = vst.msk [vmem:[%s401 + $0x21] sm:$0xff] %vm280, %v372
      %406 = vst.msk [vmem:[%s401 + $0x31] sm:$0xff] %vm280, %v373
      %407 = vst.msk [vmem:[%s401 + $0x39] sm:$0xff] %vm280, %v374
      %408 = vst.msk [vmem:[%s401 + $0x49] sm:$0xff] %vm280, %v375
      %409 = vst.msk [vmem:[%s401 + $0x51] sm:$0xff] %vm280, %v376
      %410 = vst.msk [vmem:[%s401 + $0x61] sm:$0xff] %vm280, %v377
      %411 = vst.msk [vmem:[%s401 + $0x69] sm:$0xff] %vm280, %v378
      %412 = vst.msk [vmem:[%s401 + $0x79] sm:$0xff] %vm280, %v379
      %413 = vst.msk [vmem:[%s401 + $0x81] sm:$0xff] %vm280, %v380
      %414 = vst.msk [vmem:[%s401 + $0x91] sm:$0xff] %vm280, %v381
      %415 = vst.msk [vmem:[%s401 + $0x99] sm:$0xff] %vm280, %v382
      %416 = vst.msk [vmem:[%s401 + $0xa9] sm:$0xff] %vm280, %v383
      %417 = vst.msk [vmem:[%s401 + $0xb1] sm:$0xff] %vm280, %v384
      %418 = vst.msk [vmem:[%s401 + $0xc1] sm:$0xff] %vm280, %v385
      %419 = vst.msk [vmem:[%s401 + $0xc9] sm:$0xff] %vm280, %v386
      %420 = vst.msk [vmem:[%s401 + $0xd9] sm:$0xff] %vm280, %v387
      %421 = vst.msk [vmem:[%s401 + $0xe1] sm:$0xff] %vm280, %v388
      %422 = vst.msk [vmem:[%s401 + $0xf1] sm:$0xff] %vm280, %v389
      %423 = vst.msk [vmem:[%s401 + $0xf9] sm:$0xff] %vm280, %v390
      %424 = vst.msk [vmem:[%s401 + $0x109] sm:$0xff] %vm280, %v391
      %425 = vst.msk [vmem:[%s401 + $0x111] sm:$0xff] %vm280, %v392
      %426 = vst.msk [vmem:[%s401 + $0x121] sm:$0xff] %vm280, %v393
      %427 = vst.msk [vmem:[%s401 + $0x129] sm:$0xff] %vm280, %v394
      %428 = vst.msk [vmem:[%s401 + $0x139] sm:$0xff] %vm280, %v395
      %429 = vst.msk [vmem:[%s401 + $0x141] sm:$0xff] %vm280, %v396
      %430 = vst.msk [vmem:[%s401 + $0x151] sm:$0xff] %vm280, %v397
      %431 = vst.msk [vmem:[%s401 + $0x159] sm:$0xff] %vm280, %v398
      %432 = vst.msk [vmem:[%s401 + $0x169] sm:$0xff] %vm280, %v399
      %433 = vst.msk [vmem:[%s401 + $0x171] sm:$0xff] %vm280, %v400
      %v434 = vld [vmem:[#allocation2] sm:$0xff]
      %v435 = vld [vmem:[#allocation2 + $0x8] sm:$0xff]
      %v436 = vld [vmem:[#allocation2 + $0x18] sm:$0xff]
      %v437 = vld [vmem:[#allocation2 + $0x20] sm:$0xff]
      %v438 = vld [vmem:[#allocation2 + $0x30] sm:$0xff]
      %v439 = vld [vmem:[#allocation2 + $0x38] sm:$0xff]
      %v440 = vld [vmem:[#allocation2 + $0x48] sm:$0xff]
      %v441 = vld [vmem:[#allocation2 + $0x50] sm:$0xff]
      %v442 = vld [vmem:[#allocation2 + $0x60] sm:$0xff]
      %v443 = vld [vmem:[#allocation2 + $0x68] sm:$0xff]
      %v444 = vld [vmem:[#allocation2 + $0x78] sm:$0xff]
      %v445 = vld [vmem:[#allocation2 + $0x80] sm:$0xff]
      %v446 = vld [vmem:[#allocation2 + $0x90] sm:$0xff]
      %v447 = vld [vmem:[#allocation2 + $0x98] sm:$0xff]
      %v448 = vld [vmem:[#allocation2 + $0xa8] sm:$0xff]
      %v449 = vld [vmem:[#allocation2 + $0xb0] sm:$0xff]
      %v450 = vld [vmem:[#allocation2 + $0xc0] sm:$0xff]
      %v451 = vld [vmem:[#allocation2 + $0xc8] sm:$0xff]
      %v452 = vld [vmem:[#allocation2 + $0xd8] sm:$0xff]
      %v453 = vld [vmem:[#allocation2 + $0xe0] sm:$0xff]
      %v454 = vld [vmem:[#allocation2 + $0xf0] sm:$0xff]
      %v455 = vld [vmem:[#allocation2 + $0xf8] sm:$0xff]
      %v456 = vld [vmem:[#allocation2 + $0x108] sm:$0xff]
      %v457 = vld [vmem:[#allocation2 + $0x110] sm:$0xff]
      %v458 = vld [vmem:[#allocation2 + $0x120] sm:$0xff]
      %v459 = vld [vmem:[#allocation2 + $0x128] sm:$0xff]
      %v460 = vld [vmem:[#allocation2 + $0x138] sm:$0xff]
      %v461 = vld [vmem:[#allocation2 + $0x140] sm:$0xff]
      %v462 = vld [vmem:[#allocation2 + $0x150] sm:$0xff]
      %v463 = vld [vmem:[#allocation2 + $0x158] sm:$0xff]
      %v464 = vld [vmem:[#allocation2 + $0x168] sm:$0xff]
      %v465 = vld [vmem:[#allocation2 + $0x170] sm:$0xff]
      %v466 = vld [vmem:[#allocation2 + $0x1] sm:$0xff]
      %v467 = vld [vmem:[#allocation2 + $0x9] sm:$0xff]
      %v468 = vld [vmem:[#allocation2 + $0x19] sm:$0xff]
      %v469 = vld [vmem:[#allocation2 + $0x21] sm:$0xff]
      %v470 = vld [vmem:[#allocation2 + $0x31] sm:$0xff]
      %v471 = vld [vmem:[#allocation2 + $0x39] sm:$0xff]
      %v472 = vld [vmem:[#allocation2 + $0x49] sm:$0xff]
      %v473 = vld [vmem:[#allocation2 + $0x51] sm:$0xff]
      %v474 = vld [vmem:[#allocation2 + $0x61] sm:$0xff]
      %v475 = vld [vmem:[#allocation2 + $0x69] sm:$0xff]
      %v476 = vld [vmem:[#allocation2 + $0x79] sm:$0xff]
      %v477 = vld [vmem:[#allocation2 + $0x81] sm:$0xff]
      %v478 = vld [vmem:[#allocation2 + $0x91] sm:$0xff]
      %v479 = vld [vmem:[#allocation2 + $0x99] sm:$0xff]
      %v480 = vld [vmem:[#allocation2 + $0xa9] sm:$0xff]
      %v481 = vld [vmem:[#allocation2 + $0xb1] sm:$0xff]
      %v482 = vld [vmem:[#allocation2 + $0xc1] sm:$0xff]
      %v483 = vld [vmem:[#allocation2 + $0xc9] sm:$0xff]
      %v484 = vld [vmem:[#allocation2 + $0xd9] sm:$0xff]
      %v485 = vld [vmem:[#allocation2 + $0xe1] sm:$0xff]
      %v486 = vld [vmem:[#allocation2 + $0xf1] sm:$0xff]
      %v487 = vld [vmem:[#allocation2 + $0xf9] sm:$0xff]
      %v488 = vld [vmem:[#allocation2 + $0x109] sm:$0xff]
      %v489 = vld [vmem:[#allocation2 + $0x111] sm:$0xff]
      %v490 = vld [vmem:[#allocation2 + $0x121] sm:$0xff]
      %v491 = vld [vmem:[#allocation2 + $0x129] sm:$0xff]
      %v492 = vld [vmem:[#allocation2 + $0x139] sm:$0xff]
      %v493 = vld [vmem:[#allocation2 + $0x141] sm:$0xff]
      %v494 = vld [vmem:[#allocation2 + $0x151] sm:$0xff]
      %v495 = vld [vmem:[#allocation2 + $0x159] sm:$0xff]
      %v496 = vld [vmem:[#allocation2 + $0x169] sm:$0xff]
      %v497 = vld [vmem:[#allocation2 + $0x171] sm:$0xff]
      %v498 = vld [vmem:[#allocation2 + $0x2] sm:$0xff]
      %v499 = vld [vmem:[#allocation2 + $0xa] sm:$0xff]
      %v500 = vld [vmem:[#allocation2 + $0x1a] sm:$0xff]
      %v501 = vld [vmem:[#allocation2 + $0x22] sm:$0xff]
      %v502 = vld [vmem:[#allocation2 + $0x32] sm:$0xff]
      %v503 = vld [vmem:[#allocation2 + $0x3a] sm:$0xff]
      %v504 = vld [vmem:[#allocation2 + $0x4a] sm:$0xff]
      %v505 = vld [vmem:[#allocation2 + $0x52] sm:$0xff]
      %v506 = vld [vmem:[#allocation2 + $0x62] sm:$0xff]
      %v507 = vld [vmem:[#allocation2 + $0x6a] sm:$0xff]
      %v508 = vld [vmem:[#allocation2 + $0x7a] sm:$0xff]
      %v509 = vld [vmem:[#allocation2 + $0x82] sm:$0xff]
      %v510 = vld [vmem:[#allocation2 + $0x92] sm:$0xff]
      %v511 = vld [vmem:[#allocation2 + $0x9a] sm:$0xff]
      %v512 = vld [vmem:[#allocation2 + $0xaa] sm:$0xff]
      %v513 = vld [vmem:[#allocation2 + $0xb2] sm:$0xff]
      %v514 = vld [vmem:[#allocation2 + $0xc2] sm:$0xff]
      %v515 = vld [vmem:[#allocation2 + $0xca] sm:$0xff]
      %v516 = vld [vmem:[#allocation2 + $0xda] sm:$0xff]
      %v517 = vld [vmem:[#allocation2 + $0xe2] sm:$0xff]
      %v518 = vld [vmem:[#allocation2 + $0xf2] sm:$0xff]
      %v519 = vld [vmem:[#allocation2 + $0xfa] sm:$0xff]
      %v520 = vld [vmem:[#allocation2 + $0x10a] sm:$0xff]
      %v521 = vld [vmem:[#allocation2 + $0x112] sm:$0xff]
      %v522 = vld [vmem:[#allocation2 + $0x122] sm:$0xff]
      %v523 = vld [vmem:[#allocation2 + $0x12a] sm:$0xff]
      %v524 = vld [vmem:[#allocation2 + $0x13a] sm:$0xff]
      %v525 = vld [vmem:[#allocation2 + $0x142] sm:$0xff]
      %v526 = vld [vmem:[#allocation2 + $0x152] sm:$0xff]
      %v527 = vld [vmem:[#allocation2 + $0x15a] sm:$0xff]
      %v528 = vld [vmem:[#allocation2 + $0x16a] sm:$0xff]
      %v529 = vld [vmem:[#allocation2 + $0x172] sm:$0xff]
      %v530 = vld [vmem:[%s401] sm:$0xff]
      %v531 = vld [vmem:[%s401 + $0x8] sm:$0xff]
      %v532 = vld [vmem:[%s401 + $0x18] sm:$0xff]
      %v533 = vld [vmem:[%s401 + $0x20] sm:$0xff]
      %v534 = vld [vmem:[%s401 + $0x30] sm:$0xff]
      %v535 = vld [vmem:[%s401 + $0x38] sm:$0xff]
      %v536 = vld [vmem:[%s401 + $0x48] sm:$0xff]
      %v537 = vld [vmem:[%s401 + $0x50] sm:$0xff]
      %v538 = vld [vmem:[%s401 + $0x60] sm:$0xff]
      %v539 = vld [vmem:[%s401 + $0x68] sm:$0xff]
      %v540 = vld [vmem:[%s401 + $0x78] sm:$0xff]
      %v541 = vld [vmem:[%s401 + $0x80] sm:$0xff]
      %v542 = vld [vmem:[%s401 + $0x90] sm:$0xff]
      %v543 = vld [vmem:[%s401 + $0x98] sm:$0xff]
      %v544 = vld [vmem:[%s401 + $0xa8] sm:$0xff]
      %v545 = vld [vmem:[%s401 + $0xb0] sm:$0xff]
      %v546 = vld [vmem:[%s401 + $0xc0] sm:$0xff]
      %v547 = vld [vmem:[%s401 + $0xc8] sm:$0xff]
      %v548 = vld [vmem:[%s401 + $0xd8] sm:$0xff]
      %v549 = vld [vmem:[%s401 + $0xe0] sm:$0xff]
      %v550 = vld [vmem:[%s401 + $0xf0] sm:$0xff]
      %v551 = vld [vmem:[%s401 + $0xf8] sm:$0xff]
      %v552 = vld [vmem:[%s401 + $0x108] sm:$0xff]
      %v553 = vld [vmem:[%s401 + $0x110] sm:$0xff]
      %v554 = vld [vmem:[%s401 + $0x120] sm:$0xff]
      %v555 = vld [vmem:[%s401 + $0x128] sm:$0xff]
      %v556 = vld [vmem:[%s401 + $0x138] sm:$0xff]
      %v557 = vld [vmem:[%s401 + $0x140] sm:$0xff]
      %v558 = vld [vmem:[%s401 + $0x150] sm:$0xff]
      %v559 = vld [vmem:[%s401 + $0x158] sm:$0xff]
      %v560 = vld [vmem:[%s401 + $0x168] sm:$0xff]
      %v561 = vld [vmem:[%s401 + $0x170] sm:$0xff]
      %v562 = vld [vmem:[%s401 + $0x1] sm:$0xff]
      %v563 = vld [vmem:[%s401 + $0x9] sm:$0xff]
      %v564 = vld [vmem:[%s401 + $0x19] sm:$0xff]
      %v565 = vld [vmem:[%s401 + $0x21] sm:$0xff]
      %v566 = vld [vmem:[%s401 + $0x31] sm:$0xff]
      %v567 = vld [vmem:[%s401 + $0x39] sm:$0xff]
      %v568 = vld [vmem:[%s401 + $0x49] sm:$0xff]
      %v569 = vld [vmem:[%s401 + $0x51] sm:$0xff]
      %v570 = vld [vmem:[%s401 + $0x61] sm:$0xff]
      %v571 = vld [vmem:[%s401 + $0x69] sm:$0xff]
      %v572 = vld [vmem:[%s401 + $0x79] sm:$0xff]
      %v573 = vld [vmem:[%s401 + $0x81] sm:$0xff]
      %v574 = vld [vmem:[%s401 + $0x91] sm:$0xff]
      %v575 = vld [vmem:[%s401 + $0x99] sm:$0xff]
      %v576 = vld [vmem:[%s401 + $0xa9] sm:$0xff]
      %v577 = vld [vmem:[%s401 + $0xb1] sm:$0xff]
      %v578 = vld [vmem:[%s401 + $0xc1] sm:$0xff]
      %v579 = vld [vmem:[%s401 + $0xc9] sm:$0xff]
      %v580 = vld [vmem:[%s401 + $0xd9] sm:$0xff]
      %v581 = vld [vmem:[%s401 + $0xe1] sm:$0xff]
      %v582 = vld [vmem:[%s401 + $0xf1] sm:$0xff]
      %v583 = vld [vmem:[%s401 + $0xf9] sm:$0xff]
      %v584 = vld [vmem:[%s401 + $0x109] sm:$0xff]
      %v585 = vld [vmem:[%s401 + $0x111] sm:$0xff]
      %v586 = vld [vmem:[%s401 + $0x121] sm:$0xff]
      %v587 = vld [vmem:[%s401 + $0x129] sm:$0xff]
      %v588 = vld [vmem:[%s401 + $0x139] sm:$0xff]
      %v589 = vld [vmem:[%s401 + $0x141] sm:$0xff]
      %v590 = vld [vmem:[%s401 + $0x151] sm:$0xff]
      %v591 = vld [vmem:[%s401 + $0x159] sm:$0xff]
      %v592 = vld [vmem:[%s401 + $0x169] sm:$0xff]
      %v593 = vld [vmem:[%s401 + $0x171] sm:$0xff]
      %v594 = vld [vmem:[%s401 + $0x2] sm:$0xff]
      %v595 = vld [vmem:[%s401 + $0xa] sm:$0xff]
      %v596 = vld [vmem:[%s401 + $0x1a] sm:$0xff]
      %v597 = vld [vmem:[%s401 + $0x22] sm:$0xff]
      %v598 = vld [vmem:[%s401 + $0x32] sm:$0xff]
      %v599 = vld [vmem:[%s401 + $0x3a] sm:$0xff]
      %v600 = vld [vmem:[%s401 + $0x4a] sm:$0xff]
      %v601 = vld [vmem:[%s401 + $0x52] sm:$0xff]
      %v602 = vld [vmem:[%s401 + $0x62] sm:$0xff]
      %v603 = vld [vmem:[%s401 + $0x6a] sm:$0xff]
      %v604 = vld [vmem:[%s401 + $0x7a] sm:$0xff]
      %v605 = vld [vmem:[%s401 + $0x82] sm:$0xff]
      %v606 = vld [vmem:[%s401 + $0x92] sm:$0xff]
      %v607 = vld [vmem:[%s401 + $0x9a] sm:$0xff]
      %v608 = vld [vmem:[%s401 + $0xaa] sm:$0xff]
      %v609 = vld [vmem:[%s401 + $0xb2] sm:$0xff]
      %v610 = vld [vmem:[%s401 + $0xc2] sm:$0xff]
      %v611 = vld [vmem:[%s401 + $0xca] sm:$0xff]
      %v612 = vld [vmem:[%s401 + $0xda] sm:$0xff]
      %v613 = vld [vmem:[%s401 + $0xe2] sm:$0xff]
      %v614 = vld [vmem:[%s401 + $0xf2] sm:$0xff]
      %v615 = vld [vmem:[%s401 + $0xfa] sm:$0xff]
      %v616 = vld [vmem:[%s401 + $0x10a] sm:$0xff]
      %v617 = vld [vmem:[%s401 + $0x112] sm:$0xff]
      %v618 = vld [vmem:[%s401 + $0x122] sm:$0xff]
      %v619 = vld [vmem:[%s401 + $0x12a] sm:$0xff]
      %v620 = vld [vmem:[%s401 + $0x13a] sm:$0xff]
      %v621 = vld [vmem:[%s401 + $0x142] sm:$0xff]
      %v622 = vld [vmem:[%s401 + $0x152] sm:$0xff]
      %v623 = vld [vmem:[%s401 + $0x15a] sm:$0xff]
      %v624 = vld [vmem:[%s401 + $0x16a] sm:$0xff]
      %v625 = vld [vmem:[%s401 + $0x172] sm:$0xff]
      %s626 = scalar_lea.vmem [#allocation2], 48
      %v627 = vld [vmem:[%s626] sm:$0xff]
      %v628 = vld [vmem:[%s626 + $0x8] sm:$0xff]
      %v629 = vld [vmem:[%s626 + $0x18] sm:$0xff]
      %v630 = vld [vmem:[%s626 + $0x20] sm:$0xff]
      %v631 = vld [vmem:[%s626 + $0x30] sm:$0xff]
      %v632 = vld [vmem:[%s626 + $0x38] sm:$0xff]
      %v633 = vld [vmem:[%s626 + $0x48] sm:$0xff]
      %v634 = vld [vmem:[%s626 + $0x50] sm:$0xff]
      %v635 = vld [vmem:[%s626 + $0x60] sm:$0xff]
      %v636 = vld [vmem:[%s626 + $0x68] sm:$0xff]
      %v637 = vld [vmem:[%s626 + $0x78] sm:$0xff]
      %v638 = vld [vmem:[%s626 + $0x80] sm:$0xff]
      %v639 = vld [vmem:[%s626 + $0x90] sm:$0xff]
      %v640 = vld [vmem:[%s626 + $0x98] sm:$0xff]
      %v641 = vld [vmem:[%s626 + $0xa8] sm:$0xff]
      %v642 = vld [vmem:[%s626 + $0xb0] sm:$0xff]
      %v643 = vld [vmem:[%s626 + $0xc0] sm:$0xff]
      %v644 = vld [vmem:[%s626 + $0xc8] sm:$0xff]
      %v645 = vld [vmem:[%s626 + $0xd8] sm:$0xff]
      %v646 = vld [vmem:[%s626 + $0xe0] sm:$0xff]
      %v647 = vld [vmem:[%s626 + $0xf0] sm:$0xff]
      %v648 = vld [vmem:[%s626 + $0xf8] sm:$0xff]
      %v649 = vld [vmem:[%s626 + $0x108] sm:$0xff]
      %v650 = vld [vmem:[%s626 + $0x110] sm:$0xff]
      %v651 = vld [vmem:[%s626 + $0x120] sm:$0xff]
      %v652 = vld [vmem:[%s626 + $0x128] sm:$0xff]
      %v653 = vld [vmem:[%s626 + $0x138] sm:$0xff]
      %v654 = vld [vmem:[%s626 + $0x140] sm:$0xff]
      %v655 = vld [vmem:[%s626 + $0x150] sm:$0xff]
      %v656 = vld [vmem:[%s626 + $0x158] sm:$0xff]
      %v657 = vld [vmem:[%s626 + $0x168] sm:$0xff]
      %v658 = vld [vmem:[%s626 + $0x170] sm:$0xff]
      %v659 = vld [vmem:[%s626 + $0x1] sm:$0xff]
      %v660 = vld [vmem:[%s626 + $0x9] sm:$0xff]
      %v661 = vld [vmem:[%s626 + $0x19] sm:$0xff]
      %v662 = vld [vmem:[%s626 + $0x21] sm:$0xff]
      %v663 = vld [vmem:[%s626 + $0x31] sm:$0xff]
      %v664 = vld [vmem:[%s626 + $0x39] sm:$0xff]
      %v665 = vld [vmem:[%s626 + $0x49] sm:$0xff]
      %v666 = vld [vmem:[%s626 + $0x51] sm:$0xff]
      %v667 = vld [vmem:[%s626 + $0x61] sm:$0xff]
      %v668 = vld [vmem:[%s626 + $0x69] sm:$0xff]
      %v669 = vld [vmem:[%s626 + $0x79] sm:$0xff]
      %v670 = vld [vmem:[%s626 + $0x81] sm:$0xff]
      %v671 = vld [vmem:[%s626 + $0x91] sm:$0xff]
      %v672 = vld [vmem:[%s626 + $0x99] sm:$0xff]
      %v673 = vld [vmem:[%s626 + $0xa9] sm:$0xff]
      %v674 = vld [vmem:[%s626 + $0xb1] sm:$0xff]
      %v675 = vld [vmem:[%s626 + $0xc1] sm:$0xff]
      %v676 = vld [vmem:[%s626 + $0xc9] sm:$0xff]
      %v677 = vld [vmem:[%s626 + $0xd9] sm:$0xff]
      %v678 = vld [vmem:[%s626 + $0xe1] sm:$0xff]
      %v679 = vld [vmem:[%s626 + $0xf1] sm:$0xff]
      %v680 = vld [vmem:[%s626 + $0xf9] sm:$0xff]
      %v681 = vld [vmem:[%s626 + $0x109] sm:$0xff]
      %v682 = vld [vmem:[%s626 + $0x111] sm:$0xff]
      %v683 = vld [vmem:[%s626 + $0x121] sm:$0xff]
      %v684 = vld [vmem:[%s626 + $0x129] sm:$0xff]
      %v685 = vld [vmem:[%s626 + $0x139] sm:$0xff]
      %v686 = vld [vmem:[%s626 + $0x141] sm:$0xff]
      %v687 = vld [vmem:[%s626 + $0x151] sm:$0xff]
      %v688 = vld [vmem:[%s626 + $0x159] sm:$0xff]
      %v689 = vld [vmem:[%s626 + $0x169] sm:$0xff]
      %v690 = vld [vmem:[%s626 + $0x171] sm:$0xff]
      %v691 = vld [vmem:[%s626 + $0x2] sm:$0xff]
      %v692 = vld [vmem:[%s626 + $0xa] sm:$0xff]
      %v693 = vld [vmem:[%s626 + $0x1a] sm:$0xff]
      %v694 = vld [vmem:[%s626 + $0x22] sm:$0xff]
      %v695 = vld [vmem:[%s626 + $0x32] sm:$0xff]
      %v696 = vld [vmem:[%s626 + $0x3a] sm:$0xff]
      %v697 = vld [vmem:[%s626 + $0x4a] sm:$0xff]
      %v698 = vld [vmem:[%s626 + $0x52] sm:$0xff]
      %v699 = vld [vmem:[%s626 + $0x62] sm:$0xff]
      %v700 = vld [vmem:[%s626 + $0x6a] sm:$0xff]
      %v701 = vld [vmem:[%s626 + $0x7a] sm:$0xff]
      %v702 = vld [vmem:[%s626 + $0x82] sm:$0xff]
      %v703 = vld [vmem:[%s626 + $0x92] sm:$0xff]
      %v704 = vld [vmem:[%s626 + $0x9a] sm:$0xff]
      %v705 = vld [vmem:[%s626 + $0xaa] sm:$0xff]
      %v706 = vld [vmem:[%s626 + $0xb2] sm:$0xff]
      %v707 = vld [vmem:[%s626 + $0xc2] sm:$0xff]
      %v708 = vld [vmem:[%s626 + $0xca] sm:$0xff]
      %v709 = vld [vmem:[%s626 + $0xda] sm:$0xff]
      %v710 = vld [vmem:[%s626 + $0xe2] sm:$0xff]
      %v711 = vld [vmem:[%s626 + $0xf2] sm:$0xff]
      %v712 = vld [vmem:[%s626 + $0xfa] sm:$0xff]
      %v713 = vld [vmem:[%s626 + $0x10a] sm:$0xff]
      %v714 = vld [vmem:[%s626 + $0x112] sm:$0xff]
      %v715 = vld [vmem:[%s626 + $0x122] sm:$0xff]
      %v716 = vld [vmem:[%s626 + $0x12a] sm:$0xff]
      %v717 = vld [vmem:[%s626 + $0x13a] sm:$0xff]
      %v718 = vld [vmem:[%s626 + $0x142] sm:$0xff]
      %v719 = vld [vmem:[%s626 + $0x152] sm:$0xff]
      %v720 = vld [vmem:[%s626 + $0x15a] sm:$0xff]
      %v721 = vld [vmem:[%s626 + $0x16a] sm:$0xff]
      %v722 = vld [vmem:[%s626 + $0x172] sm:$0xff]
      %755 = vrot.lane.b32.xlu0 %v466, 4
      %v756 = vpop.permute.xlu0 %755
      %757 = vrot.lane.b32.xlu0 %v467, 4
      %v758 = vpop.permute.xlu0 %757
      %759 = vrot.lane.b32.xlu0 %v468, 4
      %v760 = vpop.permute.xlu0 %759
      %761 = vrot.lane.b32.xlu0 %v469, 4
      %v762 = vpop.permute.xlu0 %761
      %763 = vrot.lane.b32.xlu0 %v470, 4
      %v764 = vpop.permute.xlu0 %763
      %765 = vrot.lane.b32.xlu0 %v471, 4
      %v766 = vpop.permute.xlu0 %765
      %767 = vrot.lane.b32.xlu0 %v472, 4
      %v768 = vpop.permute.xlu0 %767
      %769 = vrot.lane.b32.xlu0 %v473, 4
      %v770 = vpop.permute.xlu0 %769
      %771 = vrot.lane.b32.xlu0 %v474, 4
      %v772 = vpop.permute.xlu0 %771
      %773 = vrot.lane.b32.xlu0 %v475, 4
      %v774 = vpop.permute.xlu0 %773
      %775 = vrot.lane.b32.xlu0 %v476, 4
      %v776 = vpop.permute.xlu0 %775
      %777 = vrot.lane.b32.xlu0 %v477, 4
      %v778 = vpop.permute.xlu0 %777
      %779 = vrot.lane.b32.xlu0 %v478, 4
      %v780 = vpop.permute.xlu0 %779
      %781 = vrot.lane.b32.xlu0 %v479, 4
      %v782 = vpop.permute.xlu0 %781
      %783 = vrot.lane.b32.xlu0 %v480, 4
      %v784 = vpop.permute.xlu0 %783
      %785 = vrot.lane.b32.xlu0 %v481, 4
      %v786 = vpop.permute.xlu0 %785
      %787 = vrot.lane.b32.xlu0 %v482, 4
      %v788 = vpop.permute.xlu0 %787
      %789 = vrot.lane.b32.xlu0 %v483, 4
      %v790 = vpop.permute.xlu0 %789
      %791 = vrot.lane.b32.xlu0 %v484, 4
      %v792 = vpop.permute.xlu0 %791
      %793 = vrot.lane.b32.xlu0 %v485, 4
      %v794 = vpop.permute.xlu0 %793
      %795 = vrot.lane.b32.xlu0 %v486, 4
      %v796 = vpop.permute.xlu0 %795
      %797 = vrot.lane.b32.xlu0 %v487, 4
      %v798 = vpop.permute.xlu0 %797
      %799 = vrot.lane.b32.xlu0 %v488, 4
      %v800 = vpop.permute.xlu0 %799
      %801 = vrot.lane.b32.xlu0 %v489, 4
      %v802 = vpop.permute.xlu0 %801
      %803 = vrot.lane.b32.xlu0 %v490, 4
      %v804 = vpop.permute.xlu0 %803
      %805 = vrot.lane.b32.xlu0 %v491, 4
      %v806 = vpop.permute.xlu0 %805
      %807 = vrot.lane.b32.xlu0 %v492, 4
      %v808 = vpop.permute.xlu0 %807
      %809 = vrot.lane.b32.xlu0 %v493, 4
      %v810 = vpop.permute.xlu0 %809
      %811 = vrot.lane.b32.xlu0 %v494, 4
      %v812 = vpop.permute.xlu0 %811
      %813 = vrot.lane.b32.xlu0 %v495, 4
      %v814 = vpop.permute.xlu0 %813
      %815 = vrot.lane.b32.xlu0 %v496, 4
      %v816 = vpop.permute.xlu0 %815
      %817 = vrot.lane.b32.xlu0 %v497, 4
      %v818 = vpop.permute.xlu0 %817
      %883 = vrot.lane.b32.xlu0 %v498, 8
      %v884 = vpop.permute.xlu0 %883
      %885 = vrot.lane.b32.xlu0 %v499, 8
      %v886 = vpop.permute.xlu0 %885
      %887 = vrot.lane.b32.xlu0 %v500, 8
      %v888 = vpop.permute.xlu0 %887
      %889 = vrot.lane.b32.xlu0 %v501, 8
      %v890 = vpop.permute.xlu0 %889
      %891 = vrot.lane.b32.xlu0 %v502, 8
      %v892 = vpop.permute.xlu0 %891
      %893 = vrot.lane.b32.xlu0 %v503, 8
      %v894 = vpop.permute.xlu0 %893
      %895 = vrot.lane.b32.xlu0 %v504, 8
      %v896 = vpop.permute.xlu0 %895
      %897 = vrot.lane.b32.xlu0 %v505, 8
      %v898 = vpop.permute.xlu0 %897
      %899 = vrot.lane.b32.xlu0 %v506, 8
      %v900 = vpop.permute.xlu0 %899
      %901 = vrot.lane.b32.xlu0 %v507, 8
      %v902 = vpop.permute.xlu0 %901
      %903 = vrot.lane.b32.xlu0 %v508, 8
      %v904 = vpop.permute.xlu0 %903
      %905 = vrot.lane.b32.xlu0 %v509, 8
      %v906 = vpop.permute.xlu0 %905
      %907 = vrot.lane.b32.xlu0 %v510, 8
      %v908 = vpop.permute.xlu0 %907
      %909 = vrot.lane.b32.xlu0 %v511, 8
      %v910 = vpop.permute.xlu0 %909
      %911 = vrot.lane.b32.xlu0 %v512, 8
      %v912 = vpop.permute.xlu0 %911
      %913 = vrot.lane.b32.xlu0 %v513, 8
      %v914 = vpop.permute.xlu0 %913
      %915 = vrot.lane.b32.xlu0 %v514, 8
      %v916 = vpop.permute.xlu0 %915
      %917 = vrot.lane.b32.xlu0 %v515, 8
      %v918 = vpop.permute.xlu0 %917
      %919 = vrot.lane.b32.xlu0 %v516, 8
      %v920 = vpop.permute.xlu0 %919
      %921 = vrot.lane.b32.xlu0 %v517, 8
      %v922 = vpop.permute.xlu0 %921
      %923 = vrot.lane.b32.xlu0 %v518, 8
      %v924 = vpop.permute.xlu0 %923
      %925 = vrot.lane.b32.xlu0 %v519, 8
      %v926 = vpop.permute.xlu0 %925
      %927 = vrot.lane.b32.xlu0 %v520, 8
      %v928 = vpop.permute.xlu0 %927
      %929 = vrot.lane.b32.xlu0 %v521, 8
      %v930 = vpop.permute.xlu0 %929
      %931 = vrot.lane.b32.xlu0 %v522, 8
      %v932 = vpop.permute.xlu0 %931
      %933 = vrot.lane.b32.xlu0 %v523, 8
      %v934 = vpop.permute.xlu0 %933
      %935 = vrot.lane.b32.xlu0 %v524, 8
      %v936 = vpop.permute.xlu0 %935
      %937 = vrot.lane.b32.xlu0 %v525, 8
      %v938 = vpop.permute.xlu0 %937
      %939 = vrot.lane.b32.xlu0 %v526, 8
      %v940 = vpop.permute.xlu0 %939
      %941 = vrot.lane.b32.xlu0 %v527, 8
      %v942 = vpop.permute.xlu0 %941
      %943 = vrot.lane.b32.xlu0 %v528, 8
      %v944 = vpop.permute.xlu0 %943
      %945 = vrot.lane.b32.xlu0 %v529, 8
      %v946 = vpop.permute.xlu0 %945
      %1011 = vrot.lane.b32.xlu0 %v530, 12
      %v1012 = vpop.permute.xlu0 %1011
      %1013 = vrot.lane.b32.xlu0 %v531, 12
      %v1014 = vpop.permute.xlu0 %1013
      %1015 = vrot.lane.b32.xlu0 %v532, 12
      %v1016 = vpop.permute.xlu0 %1015
      %1017 = vrot.lane.b32.xlu0 %v533, 12
      %v1018 = vpop.permute.xlu0 %1017
      %1019 = vrot.lane.b32.xlu0 %v534, 12
      %v1020 = vpop.permute.xlu0 %1019
      %1021 = vrot.lane.b32.xlu0 %v535, 12
      %v1022 = vpop.permute.xlu0 %1021
      %1023 = vrot.lane.b32.xlu0 %v536, 12
      %v1024 = vpop.permute.xlu0 %1023
      %1025 = vrot.lane.b32.xlu0 %v537, 12
      %v1026 = vpop.permute.xlu0 %1025
      %1027 = vrot.lane.b32.xlu0 %v538, 12
      %v1028 = vpop.permute.xlu0 %1027
      %1029 = vrot.lane.b32.xlu0 %v539, 12
      %v1030 = vpop.permute.xlu0 %1029
      %1031 = vrot.lane.b32.xlu0 %v540, 12
      %v1032 = vpop.permute.xlu0 %1031
      %1033 = vrot.lane.b32.xlu0 %v541, 12
      %v1034 = vpop.permute.xlu0 %1033
      %1035 = vrot.lane.b32.xlu0 %v542, 12
      %v1036 = vpop.permute.xlu0 %1035
      %1037 = vrot.lane.b32.xlu0 %v543, 12
      %v1038 = vpop.permute.xlu0 %1037
      %1039 = vrot.lane.b32.xlu0 %v544, 12
      %v1040 = vpop.permute.xlu0 %1039
      %1041 = vrot.lane.b32.xlu0 %v545, 12
      %v1042 = vpop.permute.xlu0 %1041
      %1043 = vrot.lane.b32.xlu0 %v546, 12
      %v1044 = vpop.permute.xlu0 %1043
      %1045 = vrot.lane.b32.xlu0 %v547, 12
      %v1046 = vpop.permute.xlu0 %1045
      %1047 = vrot.lane.b32.xlu0 %v548, 12
      %v1048 = vpop.permute.xlu0 %1047
      %1049 = vrot.lane.b32.xlu0 %v549, 12
      %v1050 = vpop.permute.xlu0 %1049
      %1051 = vrot.lane.b32.xlu0 %v550, 12
      %v1052 = vpop.permute.xlu0 %1051
      %1053 = vrot.lane.b32.xlu0 %v551, 12
      %v1054 = vpop.permute.xlu0 %1053
      %1055 = vrot.lane.b32.xlu0 %v552, 12
      %v1056 = vpop.permute.xlu0 %1055
      %1057 = vrot.lane.b32.xlu0 %v553, 12
      %v1058 = vpop.permute.xlu0 %1057
      %1059 = vrot.lane.b32.xlu0 %v554, 12
      %v1060 = vpop.permute.xlu0 %1059
      %1061 = vrot.lane.b32.xlu0 %v555, 12
      %v1062 = vpop.permute.xlu0 %1061
      %1063 = vrot.lane.b32.xlu0 %v556, 12
      %v1064 = vpop.permute.xlu0 %1063
      %1065 = vrot.lane.b32.xlu0 %v557, 12
      %v1066 = vpop.permute.xlu0 %1065
      %1067 = vrot.lane.b32.xlu0 %v558, 12
      %v1068 = vpop.permute.xlu0 %1067
      %1069 = vrot.lane.b32.xlu0 %v559, 12
      %v1070 = vpop.permute.xlu0 %1069
      %1071 = vrot.lane.b32.xlu0 %v560, 12
      %v1072 = vpop.permute.xlu0 %1071
      %1073 = vrot.lane.b32.xlu0 %v561, 12
      %v1074 = vpop.permute.xlu0 %1073
      %1139 = vrot.lane.b32.xlu0 %v562, 16
      %v1140 = vpop.permute.xlu0 %1139
      %1141 = vrot.lane.b32.xlu0 %v563, 16
      %v1142 = vpop.permute.xlu0 %1141
      %1143 = vrot.lane.b32.xlu0 %v564, 16
      %v1144 = vpop.permute.xlu0 %1143
      %1145 = vrot.lane.b32.xlu0 %v565, 16
      %v1146 = vpop.permute.xlu0 %1145
      %1147 = vrot.lane.b32.xlu0 %v566, 16
      %v1148 = vpop.permute.xlu0 %1147
      %1149 = vrot.lane.b32.xlu0 %v567, 16
      %v1150 = vpop.permute.xlu0 %1149
      %1151 = vrot.lane.b32.xlu0 %v568, 16
      %v1152 = vpop.permute.xlu0 %1151
      %1153 = vrot.lane.b32.xlu0 %v569, 16
      %v1154 = vpop.permute.xlu0 %1153
      %1155 = vrot.lane.b32.xlu0 %v570, 16
      %v1156 = vpop.permute.xlu0 %1155
      %1157 = vrot.lane.b32.xlu0 %v571, 16
      %v1158 = vpop.permute.xlu0 %1157
      %1159 = vrot.lane.b32.xlu0 %v572, 16
      %v1160 = vpop.permute.xlu0 %1159
      %1161 = vrot.lane.b32.xlu0 %v573, 16
      %v1162 = vpop.permute.xlu0 %1161
      %1163 = vrot.lane.b32.xlu0 %v574, 16
      %v1164 = vpop.permute.xlu0 %1163
      %1165 = vrot.lane.b32.xlu0 %v575, 16
      %v1166 = vpop.permute.xlu0 %1165
      %1167 = vrot.lane.b32.xlu0 %v576, 16
      %v1168 = vpop.permute.xlu0 %1167
      %1169 = vrot.lane.b32.xlu0 %v577, 16
      %v1170 = vpop.permute.xlu0 %1169
      %1171 = vrot.lane.b32.xlu0 %v578, 16
      %v1172 = vpop.permute.xlu0 %1171
      %1173 = vrot.lane.b32.xlu0 %v579, 16
      %v1174 = vpop.permute.xlu0 %1173
      %1175 = vrot.lane.b32.xlu0 %v580, 16
      %v1176 = vpop.permute.xlu0 %1175
      %1177 = vrot.lane.b32.xlu0 %v581, 16
      %v1178 = vpop.permute.xlu0 %1177
      %1179 = vrot.lane.b32.xlu0 %v582, 16
      %v1180 = vpop.permute.xlu0 %1179
      %1181 = vrot.lane.b32.xlu0 %v583, 16
      %v1182 = vpop.permute.xlu0 %1181
      %1183 = vrot.lane.b32.xlu0 %v584, 16
      %v1184 = vpop.permute.xlu0 %1183
      %1185 = vrot.lane.b32.xlu0 %v585, 16
      %v1186 = vpop.permute.xlu0 %1185
      %1187 = vrot.lane.b32.xlu0 %v586, 16
      %v1188 = vpop.permute.xlu0 %1187
      %1189 = vrot.lane.b32.xlu0 %v587, 16
      %v1190 = vpop.permute.xlu0 %1189
      %1191 = vrot.lane.b32.xlu0 %v588, 16
      %v1192 = vpop.permute.xlu0 %1191
      %1193 = vrot.lane.b32.xlu0 %v589, 16
      %v1194 = vpop.permute.xlu0 %1193
      %1195 = vrot.lane.b32.xlu0 %v590, 16
      %v1196 = vpop.permute.xlu0 %1195
      %1197 = vrot.lane.b32.xlu0 %v591, 16
      %v1198 = vpop.permute.xlu0 %1197
      %1199 = vrot.lane.b32.xlu0 %v592, 16
      %v1200 = vpop.permute.xlu0 %1199
      %1201 = vrot.lane.b32.xlu0 %v593, 16
      %v1202 = vpop.permute.xlu0 %1201
      %1267 = vrot.lane.b32.xlu0 %v594, 20
      %v1268 = vpop.permute.xlu0 %1267
      %1269 = vrot.lane.b32.xlu0 %v595, 20
      %v1270 = vpop.permute.xlu0 %1269
      %1271 = vrot.lane.b32.xlu0 %v596, 20
      %v1272 = vpop.permute.xlu0 %1271
      %1273 = vrot.lane.b32.xlu0 %v597, 20
      %v1274 = vpop.permute.xlu0 %1273
      %1275 = vrot.lane.b32.xlu0 %v598, 20
      %v1276 = vpop.permute.xlu0 %1275
      %1277 = vrot.lane.b32.xlu0 %v599, 20
      %v1278 = vpop.permute.xlu0 %1277
      %1279 = vrot.lane.b32.xlu0 %v600, 20
      %v1280 = vpop.permute.xlu0 %1279
      %1281 = vrot.lane.b32.xlu0 %v601, 20
      %v1282 = vpop.permute.xlu0 %1281
      %1283 = vrot.lane.b32.xlu0 %v602, 20
      %v1284 = vpop.permute.xlu0 %1283
      %1285 = vrot.lane.b32.xlu0 %v603, 20
      %v1286 = vpop.permute.xlu0 %1285
      %1287 = vrot.lane.b32.xlu0 %v604, 20
      %v1288 = vpop.permute.xlu0 %1287
      %1289 = vrot.lane.b32.xlu0 %v605, 20
      %v1290 = vpop.permute.xlu0 %1289
      %1291 = vrot.lane.b32.xlu0 %v606, 20
      %v1292 = vpop.permute.xlu0 %1291
      %1293 = vrot.lane.b32.xlu0 %v607, 20
      %v1294 = vpop.permute.xlu0 %1293
      %1295 = vrot.lane.b32.xlu0 %v608, 20
      %v1296 = vpop.permute.xlu0 %1295
      %1297 = vrot.lane.b32.xlu0 %v609, 20
      %v1298 = vpop.permute.xlu0 %1297
      %1299 = vrot.lane.b32.xlu0 %v610, 20
      %v1300 = vpop.permute.xlu0 %1299
      %1301 = vrot.lane.b32.xlu0 %v611, 20
      %v1302 = vpop.permute.xlu0 %1301
      %1303 = vrot.lane.b32.xlu0 %v612, 20
      %v1304 = vpop.permute.xlu0 %1303
      %1305 = vrot.lane.b32.xlu0 %v613, 20
      %v1306 = vpop.permute.xlu0 %1305
      %1307 = vrot.lane.b32.xlu0 %v614, 20
      %v1308 = vpop.permute.xlu0 %1307
      %1309 = vrot.lane.b32.xlu0 %v615, 20
      %v1310 = vpop.permute.xlu0 %1309
      %1311 = vrot.lane.b32.xlu0 %v616, 20
      %v1312 = vpop.permute.xlu0 %1311
      %1313 = vrot.lane.b32.xlu0 %v617, 20
      %v1314 = vpop.permute.xlu0 %1313
      %1315 = vrot.lane.b32.xlu0 %v618, 20
      %v1316 = vpop.permute.xlu0 %1315
      %1317 = vrot.lane.b32.xlu0 %v619, 20
      %v1318 = vpop.permute.xlu0 %1317
      %1319 = vrot.lane.b32.xlu0 %v620, 20
      %v1320 = vpop.permute.xlu0 %1319
      %1321 = vrot.lane.b32.xlu0 %v621, 20
      %v1322 = vpop.permute.xlu0 %1321
      %1323 = vrot.lane.b32.xlu0 %v622, 20
      %v1324 = vpop.permute.xlu0 %1323
      %1325 = vrot.lane.b32.xlu0 %v623, 20
      %v1326 = vpop.permute.xlu0 %1325
      %1327 = vrot.lane.b32.xlu0 %v624, 20
      %v1328 = vpop.permute.xlu0 %1327
      %1329 = vrot.lane.b32.xlu0 %v625, 20
      %v1330 = vpop.permute.xlu0 %1329
      %1395 = vrot.lane.b32.xlu0 %v627, 24
      %v1396 = vpop.permute.xlu0 %1395
      %1397 = vrot.lane.b32.xlu0 %v628, 24
      %v1398 = vpop.permute.xlu0 %1397
      %1399 = vrot.lane.b32.xlu0 %v629, 24
      %v1400 = vpop.permute.xlu0 %1399
      %1401 = vrot.lane.b32.xlu0 %v630, 24
      %v1402 = vpop.permute.xlu0 %1401
      %1403 = vrot.lane.b32.xlu0 %v631, 24
      %v1404 = vpop.permute.xlu0 %1403
      %1405 = vrot.lane.b32.xlu0 %v632, 24
      %v1406 = vpop.permute.xlu0 %1405
      %1407 = vrot.lane.b32.xlu0 %v633, 24
      %v1408 = vpop.permute.xlu0 %1407
      %1409 = vrot.lane.b32.xlu0 %v634, 24
      %v1410 = vpop.permute.xlu0 %1409
      %1411 = vrot.lane.b32.xlu0 %v635, 24
      %v1412 = vpop.permute.xlu0 %1411
      %1413 = vrot.lane.b32.xlu0 %v636, 24
      %v1414 = vpop.permute.xlu0 %1413
      %1415 = vrot.lane.b32.xlu0 %v637, 24
      %v1416 = vpop.permute.xlu0 %1415
      %1417 = vrot.lane.b32.xlu0 %v638, 24
      %v1418 = vpop.permute.xlu0 %1417
      %1419 = vrot.lane.b32.xlu0 %v639, 24
      %v1420 = vpop.permute.xlu0 %1419
      %1421 = vrot.lane.b32.xlu0 %v640, 24
      %v1422 = vpop.permute.xlu0 %1421
      %1423 = vrot.lane.b32.xlu0 %v641, 24
      %v1424 = vpop.permute.xlu0 %1423
      %1425 = vrot.lane.b32.xlu0 %v642, 24
      %v1426 = vpop.permute.xlu0 %1425
      %1427 = vrot.lane.b32.xlu0 %v643, 24
      %v1428 = vpop.permute.xlu0 %1427
      %1429 = vrot.lane.b32.xlu0 %v644, 24
      %v1430 = vpop.permute.xlu0 %1429
      %1431 = vrot.lane.b32.xlu0 %v645, 24
      %v1432 = vpop.permute.xlu0 %1431
      %1433 = vrot.lane.b32.xlu0 %v646, 24
      %v1434 = vpop.permute.xlu0 %1433
      %1435 = vrot.lane.b32.xlu0 %v647, 24
      %v1436 = vpop.permute.xlu0 %1435
      %1437 = vrot.lane.b32.xlu0 %v648, 24
      %v1438 = vpop.permute.xlu0 %1437
      %1439 = vrot.lane.b32.xlu0 %v649, 24
      %v1440 = vpop.permute.xlu0 %1439
      %1441 = vrot.lane.b32.xlu0 %v650, 24
      %v1442 = vpop.permute.xlu0 %1441
      %1443 = vrot.lane.b32.xlu0 %v651, 24
      %v1444 = vpop.permute.xlu0 %1443
      %1445 = vrot.lane.b32.xlu0 %v652, 24
      %v1446 = vpop.permute.xlu0 %1445
      %1447 = vrot.lane.b32.xlu0 %v653, 24
      %v1448 = vpop.permute.xlu0 %1447
      %1449 = vrot.lane.b32.xlu0 %v654, 24
      %v1450 = vpop.permute.xlu0 %1449
      %1451 = vrot.lane.b32.xlu0 %v655, 24
      %v1452 = vpop.permute.xlu0 %1451
      %1453 = vrot.lane.b32.xlu0 %v656, 24
      %v1454 = vpop.permute.xlu0 %1453
      %1455 = vrot.lane.b32.xlu0 %v657, 24
      %v1456 = vpop.permute.xlu0 %1455
      %1457 = vrot.lane.b32.xlu0 %v658, 24
      %v1458 = vpop.permute.xlu0 %1457
      %1523 = vrot.lane.b32.xlu0 %v659, 28
      %v1524 = vpop.permute.xlu0 %1523
      %1525 = vrot.lane.b32.xlu0 %v660, 28
      %v1526 = vpop.permute.xlu0 %1525
      %1527 = vrot.lane.b32.xlu0 %v661, 28
      %v1528 = vpop.permute.xlu0 %1527
      %1529 = vrot.lane.b32.xlu0 %v662, 28
      %v1530 = vpop.permute.xlu0 %1529
      %1531 = vrot.lane.b32.xlu0 %v663, 28
      %v1532 = vpop.permute.xlu0 %1531
      %1533 = vrot.lane.b32.xlu0 %v664, 28
      %v1534 = vpop.permute.xlu0 %1533
      %1535 = vrot.lane.b32.xlu0 %v665, 28
      %v1536 = vpop.permute.xlu0 %1535
      %1537 = vrot.lane.b32.xlu0 %v666, 28
      %v1538 = vpop.permute.xlu0 %1537
      %1539 = vrot.lane.b32.xlu0 %v667, 28
      %v1540 = vpop.permute.xlu0 %1539
      %1541 = vrot.lane.b32.xlu0 %v668, 28
      %v1542 = vpop.permute.xlu0 %1541
      %1543 = vrot.lane.b32.xlu0 %v669, 28
      %v1544 = vpop.permute.xlu0 %1543
      %1545 = vrot.lane.b32.xlu0 %v670, 28
      %v1546 = vpop.permute.xlu0 %1545
      %1547 = vrot.lane.b32.xlu0 %v671, 28
      %v1548 = vpop.permute.xlu0 %1547
      %1549 = vrot.lane.b32.xlu0 %v672, 28
      %v1550 = vpop.permute.xlu0 %1549
      %1551 = vrot.lane.b32.xlu0 %v673, 28
      %v1552 = vpop.permute.xlu0 %1551
      %1553 = vrot.lane.b32.xlu0 %v674, 28
      %v1554 = vpop.permute.xlu0 %1553
      %1555 = vrot.lane.b32.xlu0 %v675, 28
      %v1556 = vpop.permute.xlu0 %1555
      %1557 = vrot.lane.b32.xlu0 %v676, 28
      %v1558 = vpop.permute.xlu0 %1557
      %1559 = vrot.lane.b32.xlu0 %v677, 28
      %v1560 = vpop.permute.xlu0 %1559
      %1561 = vrot.lane.b32.xlu0 %v678, 28
      %v1562 = vpop.permute.xlu0 %1561
      %1563 = vrot.lane.b32.xlu0 %v679, 28
      %v1564 = vpop.permute.xlu0 %1563
      %1565 = vrot.lane.b32.xlu0 %v680, 28
      %v1566 = vpop.permute.xlu0 %1565
      %1567 = vrot.lane.b32.xlu0 %v681, 28
      %v1568 = vpop.permute.xlu0 %1567
      %1569 = vrot.lane.b32.xlu0 %v682, 28
      %v1570 = vpop.permute.xlu0 %1569
      %1571 = vrot.lane.b32.xlu0 %v683, 28
      %v1572 = vpop.permute.xlu0 %1571
      %1573 = vrot.lane.b32.xlu0 %v684, 28
      %v1574 = vpop.permute.xlu0 %1573
      %1575 = vrot.lane.b32.xlu0 %v685, 28
      %v1576 = vpop.permute.xlu0 %1575
      %1577 = vrot.lane.b32.xlu0 %v686, 28
      %v1578 = vpop.permute.xlu0 %1577
      %1579 = vrot.lane.b32.xlu0 %v687, 28
      %v1580 = vpop.permute.xlu0 %1579
      %1581 = vrot.lane.b32.xlu0 %v688, 28
      %v1582 = vpop.permute.xlu0 %1581
      %1583 = vrot.lane.b32.xlu0 %v689, 28
      %v1584 = vpop.permute.xlu0 %1583
      %1585 = vrot.lane.b32.xlu0 %v690, 28
      %v1586 = vpop.permute.xlu0 %1585
      %1651 = vrot.lane.b32.xlu0 %v691, 32
      %v1652 = vpop.permute.xlu0 %1651
      %1653 = vrot.lane.b32.xlu0 %v692, 32
      %v1654 = vpop.permute.xlu0 %1653
      %1655 = vrot.lane.b32.xlu0 %v693, 32
      %v1656 = vpop.permute.xlu0 %1655
      %1657 = vrot.lane.b32.xlu0 %v694, 32
      %v1658 = vpop.permute.xlu0 %1657
      %1659 = vrot.lane.b32.xlu0 %v695, 32
      %v1660 = vpop.permute.xlu0 %1659
      %1661 = vrot.lane.b32.xlu0 %v696, 32
      %v1662 = vpop.permute.xlu0 %1661
      %1663 = vrot.lane.b32.xlu0 %v697, 32
      %v1664 = vpop.permute.xlu0 %1663
      %1665 = vrot.lane.b32.xlu0 %v698, 32
      %v1666 = vpop.permute.xlu0 %1665
      %1667 = vrot.lane.b32.xlu0 %v699, 32
      %v1668 = vpop.permute.xlu0 %1667
      %1669 = vrot.lane.b32.xlu0 %v700, 32
      %v1670 = vpop.permute.xlu0 %1669
      %1671 = vrot.lane.b32.xlu0 %v701, 32
      %v1672 = vpop.permute.xlu0 %1671
      %1673 = vrot.lane.b32.xlu0 %v702, 32
      %v1674 = vpop.permute.xlu0 %1673
      %1675 = vrot.lane.b32.xlu0 %v703, 32
      %v1676 = vpop.permute.xlu0 %1675
      %1677 = vrot.lane.b32.xlu0 %v704, 32
      %v1678 = vpop.permute.xlu0 %1677
      %1679 = vrot.lane.b32.xlu0 %v705, 32
      %v1680 = vpop.permute.xlu0 %1679
      %1681 = vrot.lane.b32.xlu0 %v706, 32
      %v1682 = vpop.permute.xlu0 %1681
      %1683 = vrot.lane.b32.xlu0 %v707, 32
      %v1684 = vpop.permute.xlu0 %1683
      %1685 = vrot.lane.b32.xlu0 %v708, 32
      %v1686 = vpop.permute.xlu0 %1685
      %1687 = vrot.lane.b32.xlu0 %v709, 32
      %v1688 = vpop.permute.xlu0 %1687
      %1689 = vrot.lane.b32.xlu0 %v710, 32
      %v1690 = vpop.permute.xlu0 %1689
      %1691 = vrot.lane.b32.xlu0 %v711, 32
      %v1692 = vpop.permute.xlu0 %1691
      %1693 = vrot.lane.b32.xlu0 %v712, 32
      %v1694 = vpop.permute.xlu0 %1693
      %1695 = vrot.lane.b32.xlu0 %v713, 32
      %v1696 = vpop.permute.xlu0 %1695
      %1697 = vrot.lane.b32.xlu0 %v714, 32
      %v1698 = vpop.permute.xlu0 %1697
      %1699 = vrot.lane.b32.xlu0 %v715, 32
      %v1700 = vpop.permute.xlu0 %1699
      %1701 = vrot.lane.b32.xlu0 %v716, 32
      %v1702 = vpop.permute.xlu0 %1701
      %1703 = vrot.lane.b32.xlu0 %v717, 32
      %v1704 = vpop.permute.xlu0 %1703
      %1705 = vrot.lane.b32.xlu0 %v718, 32
      %v1706 = vpop.permute.xlu0 %1705
      %1707 = vrot.lane.b32.xlu0 %v719, 32
      %v1708 = vpop.permute.xlu0 %1707
      %1709 = vrot.lane.b32.xlu0 %v720, 32
      %v1710 = vpop.permute.xlu0 %1709
      %1711 = vrot.lane.b32.xlu0 %v721, 32
      %v1712 = vpop.permute.xlu0 %1711
      %1713 = vrot.lane.b32.xlu0 %v722, 32
      %v1714 = vpop.permute.xlu0 %1713
      %v1747 = vsel %vm280, %v434, %v756
      %v1748 = vsel %vm280, %v435, %v758
      %v1749 = vsel %vm280, %v436, %v760
      %v1750 = vsel %vm280, %v437, %v762
      %v1751 = vsel %vm280, %v438, %v764
      %v1752 = vsel %vm280, %v439, %v766
      %v1753 = vsel %vm280, %v440, %v768
      %v1754 = vsel %vm280, %v441, %v770
      %v1755 = vsel %vm280, %v442, %v772
      %v1756 = vsel %vm280, %v443, %v774
      %v1757 = vsel %vm280, %v444, %v776
      %v1758 = vsel %vm280, %v445, %v778
      %v1759 = vsel %vm280, %v446, %v780
      %v1760 = vsel %vm280, %v447, %v782
      %v1761 = vsel %vm280, %v448, %v784
      %v1762 = vsel %vm280, %v449, %v786
      %v1763 = vsel %vm280, %v450, %v788
      %v1764 = vsel %vm280, %v451, %v790
      %v1765 = vsel %vm280, %v452, %v792
      %v1766 = vsel %vm280, %v453, %v794
      %v1767 = vsel %vm280, %v454, %v796
      %v1768 = vsel %vm280, %v455, %v798
      %v1769 = vsel %vm280, %v456, %v800
      %v1770 = vsel %vm280, %v457, %v802
      %v1771 = vsel %vm280, %v458, %v804
      %v1772 = vsel %vm280, %v459, %v806
      %v1773 = vsel %vm280, %v460, %v808
      %v1774 = vsel %vm280, %v461, %v810
      %v1775 = vsel %vm280, %v462, %v812
      %v1776 = vsel %vm280, %v463, %v814
      %v1777 = vsel %vm280, %v464, %v816
      %v1778 = vsel %vm280, %v465, %v818
      %vm1779 = vcmask 64512
      %v1780 = vsel %vm1779, %v1747, %v884
      %v1781 = vsel %vm1779, %v1748, %v886
      %v1782 = vsel %vm1779, %v1749, %v888
      %v1783 = vsel %vm1779, %v1750, %v890
      %v1784 = vsel %vm1779, %v1751, %v892
      %v1785 = vsel %vm1779, %v1752, %v894
      %v1786 = vsel %vm1779, %v1753, %v896
      %v1787 = vsel %vm1779, %v1754, %v898
      %v1788 = vsel %vm1779, %v1755, %v900
      %v1789 = vsel %vm1779, %v1756, %v902
      %v1790 = vsel %vm1779, %v1757, %v904
      %v1791 = vsel %vm1779, %v1758, %v906
      %v1792 = vsel %vm1779, %v1759, %v908
      %v1793 = vsel %vm1779, %v1760, %v910
      %v1794 = vsel %vm1779, %v1761, %v912
      %v1795 = vsel %vm1779, %v1762, %v914
      %v1796 = vsel %vm1779, %v1763, %v916
      %v1797 = vsel %vm1779, %v1764, %v918
      %v1798 = vsel %vm1779, %v1765, %v920
      %v1799 = vsel %vm1779, %v1766, %v922
      %v1800 = vsel %vm1779, %v1767, %v924
      %v1801 = vsel %vm1779, %v1768, %v926
      %v1802 = vsel %vm1779, %v1769, %v928
      %v1803 = vsel %vm1779, %v1770, %v930
      %v1804 = vsel %vm1779, %v1771, %v932
      %v1805 = vsel %vm1779, %v1772, %v934
      %v1806 = vsel %vm1779, %v1773, %v936
      %v1807 = vsel %vm1779, %v1774, %v938
      %v1808 = vsel %vm1779, %v1775, %v940
      %v1809 = vsel %vm1779, %v1776, %v942
      %v1810 = vsel %vm1779, %v1777, %v944
      %v1811 = vsel %vm1779, %v1778, %v946
      %vm1812 = vcmask 97280
      %v1813 = vsel %vm1812, %v1780, %v1012
      %v1814 = vsel %vm1812, %v1781, %v1014
      %v1815 = vsel %vm1812, %v1782, %v1016
      %v1816 = vsel %vm1812, %v1783, %v1018
      %v1817 = vsel %vm1812, %v1784, %v1020
      %v1818 = vsel %vm1812, %v1785, %v1022
      %v1819 = vsel %vm1812, %v1786, %v1024
      %v1820 = vsel %vm1812, %v1787, %v1026
      %v1821 = vsel %vm1812, %v1788, %v1028
      %v1822 = vsel %vm1812, %v1789, %v1030
      %v1823 = vsel %vm1812, %v1790, %v1032
      %v1824 = vsel %vm1812, %v1791, %v1034
      %v1825 = vsel %vm1812, %v1792, %v1036
      %v1826 = vsel %vm1812, %v1793, %v1038
      %v1827 = vsel %vm1812, %v1794, %v1040
      %v1828 = vsel %vm1812, %v1795, %v1042
      %v1829 = vsel %vm1812, %v1796, %v1044
      %v1830 = vsel %vm1812, %v1797, %v1046
      %v1831 = vsel %vm1812, %v1798, %v1048
      %v1832 = vsel %vm1812, %v1799, %v1050
      %v1833 = vsel %vm1812, %v1800, %v1052
      %v1834 = vsel %vm1812, %v1801, %v1054
      %v1835 = vsel %vm1812, %v1802, %v1056
      %v1836 = vsel %vm1812, %v1803, %v1058
      %v1837 = vsel %vm1812, %v1804, %v1060
      %v1838 = vsel %vm1812, %v1805, %v1062
      %v1839 = vsel %vm1812, %v1806, %v1064
      %v1840 = vsel %vm1812, %v1807, %v1066
      %v1841 = vsel %vm1812, %v1808, %v1068
      %v1842 = vsel %vm1812, %v1809, %v1070
      %v1843 = vsel %vm1812, %v1810, %v1072
      %v1844 = vsel %vm1812, %v1811, %v1074
      %vm1845 = vcmask 130048
      %v1846 = vsel %vm1845, %v1813, %v1140
      %v1847 = vsel %vm1845, %v1814, %v1142
      %v1848 = vsel %vm1845, %v1815, %v1144
      %v1849 = vsel %vm1845, %v1816, %v1146
      %v1850 = vsel %vm1845, %v1817, %v1148
      %v1851 = vsel %vm1845, %v1818, %v1150
      %v1852 = vsel %vm1845, %v1819, %v1152
      %v1853 = vsel %vm1845, %v1820, %v1154
      %v1854 = vsel %vm1845, %v1821, %v1156
      %v1855 = vsel %vm1845, %v1822, %v1158
      %v1856 = vsel %vm1845, %v1823, %v1160
      %v1857 = vsel %vm1845, %v1824, %v1162
      %v1858 = vsel %vm1845, %v1825, %v1164
      %v1859 = vsel %vm1845, %v1826, %v1166
      %v1860 = vsel %vm1845, %v1827, %v1168
      %v1861 = vsel %vm1845, %v1828, %v1170
      %v1862 = vsel %vm1845, %v1829, %v1172
      %v1863 = vsel %vm1845, %v1830, %v1174
      %v1864 = vsel %vm1845, %v1831, %v1176
      %v1865 = vsel %vm1845, %v1832, %v1178
      %v1866 = vsel %vm1845, %v1833, %v1180
      %v1867 = vsel %vm1845, %v1834, %v1182
      %v1868 = vsel %vm1845, %v1835, %v1184
      %v1869 = vsel %vm1845, %v1836, %v1186
      %v1870 = vsel %vm1845, %v1837, %v1188
      %v1871 = vsel %vm1845, %v1838, %v1190
      %v1872 = vsel %vm1845, %v1839, %v1192
      %v1873 = vsel %vm1845, %v1840, %v1194
      %v1874 = vsel %vm1845, %v1841, %v1196
      %v1875 = vsel %vm1845, %v1842, %v1198
      %v1876 = vsel %vm1845, %v1843, %v1200
      %v1877 = vsel %vm1845, %v1844, %v1202
      %vm1878 = vcmask 162816
      %v1879 = vsel %vm1878, %v1846, %v1268
      %v1880 = vsel %vm1878, %v1847, %v1270
      %v1881 = vsel %vm1878, %v1848, %v1272
      %v1882 = vsel %vm1878, %v1849, %v1274
      %v1883 = vsel %vm1878, %v1850, %v1276
      %v1884 = vsel %vm1878, %v1851, %v1278
      %v1885 = vsel %vm1878, %v1852, %v1280
      %v1886 = vsel %vm1878, %v1853, %v1282
      %v1887 = vsel %vm1878, %v1854, %v1284
      %v1888 = vsel %vm1878, %v1855, %v1286
      %v1889 = vsel %vm1878, %v1856, %v1288
      %v1890 = vsel %vm1878, %v1857, %v1290
      %v1891 = vsel %vm1878, %v1858, %v1292
      %v1892 = vsel %vm1878, %v1859, %v1294
      %v1893 = vsel %vm1878, %v1860, %v1296
      %v1894 = vsel %vm1878, %v1861, %v1298
      %v1895 = vsel %vm1878, %v1862, %v1300
      %v1896 = vsel %vm1878, %v1863, %v1302
      %v1897 = vsel %vm1878, %v1864, %v1304
      %v1898 = vsel %vm1878, %v1865, %v1306
      %v1899 = vsel %vm1878, %v1866, %v1308
      %v1900 = vsel %vm1878, %v1867, %v1310
      %v1901 = vsel %vm1878, %v1868, %v1312
      %v1902 = vsel %vm1878, %v1869, %v1314
      %v1903 = vsel %vm1878, %v1870, %v1316
      %v1904 = vsel %vm1878, %v1871, %v1318
      %v1905 = vsel %vm1878, %v1872, %v1320
      %v1906 = vsel %vm1878, %v1873, %v1322
      %v1907 = vsel %vm1878, %v1874, %v1324
      %v1908 = vsel %vm1878, %v1875, %v1326
      %v1909 = vsel %vm1878, %v1876, %v1328
      %v1910 = vsel %vm1878, %v1877, %v1330
      %vm1911 = vcmask 195584
      %v1912 = vsel %vm1911, %v1879, %v1396
      %v1913 = vsel %vm1911, %v1880, %v1398
      %v1914 = vsel %vm1911, %v1881, %v1400
      %v1915 = vsel %vm1911, %v1882, %v1402
      %v1916 = vsel %vm1911, %v1883, %v1404
      %v1917 = vsel %vm1911, %v1884, %v1406
      %v1918 = vsel %vm1911, %v1885, %v1408
      %v1919 = vsel %vm1911, %v1886, %v1410
      %v1920 = vsel %vm1911, %v1887, %v1412
      %v1921 = vsel %vm1911, %v1888, %v1414
      %v1922 = vsel %vm1911, %v1889, %v1416
      %v1923 = vsel %vm1911, %v1890, %v1418
      %v1924 = vsel %vm1911, %v1891, %v1420
      %v1925 = vsel %vm1911, %v1892, %v1422
      %v1926 = vsel %vm1911, %v1893, %v1424
      %v1927 = vsel %vm1911, %v1894, %v1426
      %v1928 = vsel %vm1911, %v1895, %v1428
      %v1929 = vsel %vm1911, %v1896, %v1430
      %v1930 = vsel %vm1911, %v1897, %v1432
      %v1931 = vsel %vm1911, %v1898, %v1434
      %v1932 = vsel %vm1911, %v1899, %v1436
      %v1933 = vsel %vm1911, %v1900, %v1438
      %v1934 = vsel %vm1911, %v1901, %v1440
      %v1935 = vsel %vm1911, %v1902, %v1442
      %v1936 = vsel %vm1911, %v1903, %v1444
      %v1937 = vsel %vm1911, %v1904, %v1446
      %v1938 = vsel %vm1911, %v1905, %v1448
      %v1939 = vsel %vm1911, %v1906, %v1450
      %v1940 = vsel %vm1911, %v1907, %v1452
      %v1941 = vsel %vm1911, %v1908, %v1454
      %v1942 = vsel %vm1911, %v1909, %v1456
      %v1943 = vsel %vm1911, %v1910, %v1458
      %vm1944 = vcmask 228352
      %v1945 = vsel %vm1944, %v1912, %v1524
      %v1946 = vsel %vm1944, %v1913, %v1526
      %v1947 = vsel %vm1944, %v1914, %v1528
      %v1948 = vsel %vm1944, %v1915, %v1530
      %v1949 = vsel %vm1944, %v1916, %v1532
      %v1950 = vsel %vm1944, %v1917, %v1534
      %v1951 = vsel %vm1944, %v1918, %v1536
      %v1952 = vsel %vm1944, %v1919, %v1538
      %v1953 = vsel %vm1944, %v1920, %v1540
      %v1954 = vsel %vm1944, %v1921, %v1542
      %v1955 = vsel %vm1944, %v1922, %v1544
      %v1956 = vsel %vm1944, %v1923, %v1546
      %v1957 = vsel %vm1944, %v1924, %v1548
      %v1958 = vsel %vm1944, %v1925, %v1550
      %v1959 = vsel %vm1944, %v1926, %v1552
      %v1960 = vsel %vm1944, %v1927, %v1554
      %v1961 = vsel %vm1944, %v1928, %v1556
      %v1962 = vsel %vm1944, %v1929, %v1558
      %v1963 = vsel %vm1944, %v1930, %v1560
      %v1964 = vsel %vm1944, %v1931, %v1562
      %v1965 = vsel %vm1944, %v1932, %v1564
      %v1966 = vsel %vm1944, %v1933, %v1566
      %v1967 = vsel %vm1944, %v1934, %v1568
      %v1968 = vsel %vm1944, %v1935, %v1570
      %v1969 = vsel %vm1944, %v1936, %v1572
      %v1970 = vsel %vm1944, %v1937, %v1574
      %v1971 = vsel %vm1944, %v1938, %v1576
      %v1972 = vsel %vm1944, %v1939, %v1578
      %v1973 = vsel %vm1944, %v1940, %v1580
      %v1974 = vsel %vm1944, %v1941, %v1582
      %v1975 = vsel %vm1944, %v1942, %v1584
      %v1976 = vsel %vm1944, %v1943, %v1586
      %vm1977 = vcmask 261120
      %v1978 = vsel %vm1977, %v1945, %v1652
      %v1979 = vsel %vm1977, %v1946, %v1654
      %v1980 = vsel %vm1977, %v1947, %v1656
      %v1981 = vsel %vm1977, %v1948, %v1658
      %v1982 = vsel %vm1977, %v1949, %v1660
      %v1983 = vsel %vm1977, %v1950, %v1662
      %v1984 = vsel %vm1977, %v1951, %v1664
      %v1985 = vsel %vm1977, %v1952, %v1666
      %v1986 = vsel %vm1977, %v1953, %v1668
      %v1987 = vsel %vm1977, %v1954, %v1670
      %v1988 = vsel %vm1977, %v1955, %v1672
      %v1989 = vsel %vm1977, %v1956, %v1674
      %v1990 = vsel %vm1977, %v1957, %v1676
      %v1991 = vsel %vm1977, %v1958, %v1678
      %v1992 = vsel %vm1977, %v1959, %v1680
      %v1993 = vsel %vm1977, %v1960, %v1682
      %v1994 = vsel %vm1977, %v1961, %v1684
      %v1995 = vsel %vm1977, %v1962, %v1686
      %v1996 = vsel %vm1977, %v1963, %v1688
      %v1997 = vsel %vm1977, %v1964, %v1690
      %v1998 = vsel %vm1977, %v1965, %v1692
      %v1999 = vsel %vm1977, %v1966, %v1694
      %v2000 = vsel %vm1977, %v1967, %v1696
      %v2001 = vsel %vm1977, %v1968, %v1698
      %v2002 = vsel %vm1977, %v1969, %v1700
      %v2003 = vsel %vm1977, %v1970, %v1702
      %v2004 = vsel %vm1977, %v1971, %v1704
      %v2005 = vsel %vm1977, %v1972, %v1706
      %v2006 = vsel %vm1977, %v1973, %v1708
      %v2007 = vsel %vm1977, %v1974, %v1710
      %v2008 = vsel %vm1977, %v1975, %v1712
      %v2009 = vsel %vm1977, %v1976, %v1714
      %v2010 = vpack.c.bf16 %v1979, %v1978
      %v2011 = vpack.c.bf16 %v1981, %v1980
      %v2012 = vpack.c.bf16 %v1983, %v1982
      %v2013 = vpack.c.bf16 %v1985, %v1984
      %v2014 = vpack.c.bf16 %v1987, %v1986
      %v2015 = vpack.c.bf16 %v1989, %v1988
      %v2016 = vpack.c.bf16 %v1991, %v1990
      %v2017 = vpack.c.bf16 %v1993, %v1992
      %v2018 = vpack.c.bf16 %v1995, %v1994
      %v2019 = vpack.c.bf16 %v1997, %v1996
      %v2020 = vpack.c.bf16 %v1999, %v1998
      %v2021 = vpack.c.bf16 %v2001, %v2000
      %v2022 = vpack.c.bf16 %v2003, %v2002
      %v2023 = vpack.c.bf16 %v2005, %v2004
      %v2024 = vpack.c.bf16 %v2007, %v2006
      %v2025 = vpack.c.bf16 %v2009, %v2008
      %v2026 = vld [vmem:[%s1] sm:$0xf]
      %v2027 = vld [vmem:[%s1 + $0x4] sm:$0xf]
      %v2028 = vld [vmem:[%s1 + $0x8] sm:$0xf]
      %v2029 = vld [vmem:[%s1 + $0xc] sm:$0xf]
      %v2030 = vld [vmem:[%s1 + $0x10] sm:$0x3]
      %v2031 = vld [vmem:[%s2] sm:$0x1]
      %v2033 = vlaneseq
      %v2034 = vshrl.u32 %v2033, 7
      %v2035 = vsub.s32 0, %v2034
      %v2036 = vrot.slane %v2031, %v2035
      %v2043 = vunpack.c.l.b16 %v2026
      %v2044 = vunpack.c.l.b16 %v2027
      %v2045 = vunpack.c.l.b16 %v2028
      %v2046 = vunpack.c.l.b16 %v2029
      %v2047 = vunpack.c.l.b16 %v2030
      %v2048 = vpack.c.b16 %v2044, %v2043
      %v2049 = vpack.c.b16 %v2046, %v2045
      %v2050 = vpack.c.b16 %v2047, %v2047
      %vm2053 = vcmask 293888
      %v2055 = vsel %vm2053, %v2010, 0
      %v2058 = vsel %vm2053, %v2011, 0
      %v2061 = vsel %vm2053, %v2012, 0
      %v2064 = vsel %vm2053, %v2013, 0
      %v2067 = vsel %vm2053, %v2014, 0
      %v2070 = vsel %vm2053, %v2015, 0
      %v2073 = vsel %vm2053, %v2016, 0
      %v2076 = vsel %vm2053, %v2017, 0
      %v2079 = vsel %vm2053, %v2018, 0
      %v2082 = vsel %vm2053, %v2019, 0
      %v2085 = vsel %vm2053, %v2020, 0
      %v2088 = vsel %vm2053, %v2021, 0
      %v2091 = vsel %vm2053, %v2022, 0
      %v2094 = vsel %vm2053, %v2023, 0
      %v2097 = vsel %vm2053, %v2024, 0
      %v2100 = vsel %vm2053, %v2025, 0
      %vm2102 = vcmask 1041408
      %v2104 = vsel %vm2102, %v2050, 0
      %2106 = vmatprep.subr.bf16.mxu0 0
      %2107 = vmatpush1.bf16.msra.mxu0 %v2048
      %2108 = vmatprep.subr.bf16.mxu0 0
      %2109 = vmatpush1.bf16.msra.mxu0 %v2049
      %2110 = vmatprep.subr.bf16.mxu0 0
      %2111 = vmatpush1.bf16.msra.mxu0 %v2104
      %2112 = vmatprep.subr.bf16.mxu0 0
      %2113 = vmatpush1.bf16.msra.mxu0 0
      %2114 = vmatprep.subr.bf16.mxu0 0
      %2115 = vmatpush1.bf16.msra.mxu0 0
      %2116 = vmatprep.subr.bf16.mxu0 0
      %2117 = vmatpush1.bf16.msra.mxu0 0
      %2118 = vmatprep.subr.bf16.mxu0 0
      %2119 = vmatpush1.bf16.msra.mxu0 0
      %2120 = vmatprep.subr.bf16.mxu0 0
      %2121 = vmatpush1.bf16.msra.mxu0 0
      %2122 = vmatprep.subr.bf16.mxu0 0
      %2123 = vmatpush1.bf16.msra.mxu0 0
      %2124 = vmatprep.subr.bf16.mxu0 0
      %2125 = vmatpush1.bf16.msra.mxu0 0
      %2126 = vmatprep.subr.bf16.mxu0 0
      %2127 = vmatpush1.bf16.msra.mxu0 0
      %2128 = vmatprep.subr.bf16.mxu0 0
      %2129 = vmatpush1.bf16.msra.mxu0 0
      %2130 = vmatprep.subr.bf16.mxu0 0
      %2131 = vmatpush1.bf16.msra.mxu0 0
      %2132 = vmatprep.subr.bf16.mxu0 0
      %2133 = vmatpush1.bf16.msra.mxu0 0
      %2134 = vmatprep.subr.bf16.mxu0 0
      %2135 = vmatpush1.bf16.msra.mxu0 0
      %2136 = vmatprep.subr.bf16.mxu0 0
      %2137 = vmatpush1.bf16.msra.mxu0 0
      %2138 = vmatprep.mubr.bf16.mxu0 0
      %2139 = vmatmul.mubr.bf16.gmra.mrb[0].mxu0 %v2055
      %v2140 = vpop.f32.mrb[0].mxu0
      %v2141 = vadd.f32 %v2036, %v2140
      %v2142 = vpop.f32.mrb[0].mxu0
      %v2143 = vpop.f32.mrb[0].mxu0
      %v2144 = vadd.f32 %v2036, %v2143
      %v2145 = vpop.f32.mrb[0].mxu0
      %2146 = vmatprep.mubr.bf16.mxu0 0
      %2147 = vmatmul.mubr.bf16.gmra.mrb[0].mxu0 %v2058
      %v2148 = vpop.f32.mrb[0].mxu0
      %v2149 = vadd.f32 %v2036, %v2148
      %v2150 = vpop.f32.mrb[0].mxu0
      %v2151 = vpop.f32.mrb[0].mxu0
      %v2152 = vadd.f32 %v2036, %v2151
      %v2153 = vpop.f32.mrb[0].mxu0
      %2154 = vmatprep.mubr.bf16.mxu0 0
      %2155 = vmatmul.mubr.bf16.gmra.mrb[0].mxu0 %v2061
      %v2156 = vpop.f32.mrb[0].mxu0
      %v2157 = vadd.f32 %v2036, %v2156
      %v2158 = vpop.f32.mrb[0].mxu0
      %v2159 = vpop.f32.mrb[0].mxu0
      %v2160 = vadd.f32 %v2036, %v2159
      %v2161 = vpop.f32.mrb[0].mxu0
      %2162 = vmatprep.mubr.bf16.mxu0 0
      %2163 = vmatmul.mubr.bf16.gmra.mrb[0].mxu0 %v2064
      %v2164 = vpop.f32.mrb[0].mxu0
      %v2165 = vadd.f32 %v2036, %v2164
      %v2166 = vpop.f32.mrb[0].mxu0
      %v2167 = vpop.f32.mrb[0].mxu0
      %v2168 = vadd.f32 %v2036, %v2167
      %v2169 = vpop.f32.mrb[0].mxu0
      %2170 = vmatprep.mubr.bf16.mxu0 0
      %2171 = vmatmul.mubr.bf16.gmra.mrb[0].mxu0 %v2067
      %v2172 = vpop.f32.mrb[0].mxu0
      %v2173 = vadd.f32 %v2036, %v2172
      %v2174 = vpop.f32.mrb[0].mxu0
      %v2175 = vpop.f32.mrb[0].mxu0
      %v2176 = vadd.f32 %v2036, %v2175
      %v2177 = vpop.f32.mrb[0].mxu0
      %2178 = vmatprep.mubr.bf16.mxu0 0
      %2179 = vmatmul.mubr.bf16.gmra.mrb[0].mxu0 %v2070
      %v2180 = vpop.f32.mrb[0].mxu0
      %v2181 = vadd.f32 %v2036, %v2180
      %v2182 = vpop.f32.mrb[0].mxu0
      %v2183 = vpop.f32.mrb[0].mxu0
      %v2184 = vadd.f32 %v2036, %v2183
      %v2185 = vpop.f32.mrb[0].mxu0
      %2186 = vmatprep.mubr.bf16.mxu0 0
      %2187 = vmatmul.mubr.bf16.gmra.mrb[0].mxu0 %v2073
      %v2188 = vpop.f32.mrb[0].mxu0
      %v2189 = vadd.f32 %v2036, %v2188
      %v2190 = vpop.f32.mrb[0].mxu0
      %v2191 = vpop.f32.mrb[0].mxu0
      %v2192 = vadd.f32 %v2036, %v2191
      %v2193 = vpop.f32.mrb[0].mxu0
      %2194 = vmatprep.mubr.bf16.mxu0 0
      %2195 = vmatmul.mubr.bf16.gmra.mrb[0].mxu0 %v2076
      %v2196 = vpop.f32.mrb[0].mxu0
      %v2197 = vadd.f32 %v2036, %v2196
      %v2198 = vpop.f32.mrb[0].mxu0
      %v2199 = vpop.f32.mrb[0].mxu0
      %v2200 = vadd.f32 %v2036, %v2199
      %v2201 = vpop.f32.mrb[0].mxu0
      %2202 = vmatprep.mubr.bf16.mxu0 0
      %2203 = vmatmul.mubr.bf16.gmra.mrb[0].mxu0 %v2079
      %v2204 = vpop.f32.mrb[0].mxu0
      %v2205 = vadd.f32 %v2036, %v2204
      %v2206 = vpop.f32.mrb[0].mxu0
      %v2207 = vpop.f32.mrb[0].mxu0
      %v2208 = vadd.f32 %v2036, %v2207
      %v2209 = vpop.f32.mrb[0].mxu0
      %2210 = vmatprep.mubr.bf16.mxu0 0
      %2211 = vmatmul.mubr.bf16.gmra.mrb[0].mxu0 %v2082
      %v2212 = vpop.f32.mrb[0].mxu0
      %v2213 = vadd.f32 %v2036, %v2212
      %v2214 = vpop.f32.mrb[0].mxu0
      %v2215 = vpop.f32.mrb[0].mxu0
      %v2216 = vadd.f32 %v2036, %v2215
      %v2217 = vpop.f32.mrb[0].mxu0
      %2218 = vmatprep.mubr.bf16.mxu0 0
      %2219 = vmatmul.mubr.bf16.gmra.mrb[0].mxu0 %v2085
      %v2220 = vpop.f32.mrb[0].mxu0
      %v2221 = vadd.f32 %v2036, %v2220
      %v2222 = vpop.f32.mrb[0].mxu0
      %v2223 = vpop.f32.mrb[0].mxu0
      %v2224 = vadd.f32 %v2036, %v2223
      %v2225 = vpop.f32.mrb[0].mxu0
      %2226 = vmatprep.mubr.bf16.mxu0 0
      %2227 = vmatmul.mubr.bf16.gmra.mrb[0].mxu0 %v2088
      %v2228 = vpop.f32.mrb[0].mxu0
      %v2229 = vadd.f32 %v2036, %v2228
      %v2230 = vpop.f32.mrb[0].mxu0
      %v2231 = vpop.f32.mrb[0].mxu0
      %v2232 = vadd.f32 %v2036, %v2231
      %v2233 = vpop.f32.mrb[0].mxu0
      %2234 = vmatprep.mubr.bf16.mxu0 0
      %2235 = vmatmul.mubr.bf16.gmra.mrb[0].mxu0 %v2091
      %v2236 = vpop.f32.mrb[0].mxu0
      %v2237 = vadd.f32 %v2036, %v2236
      %v2238 = vpop.f32.mrb[0].mxu0
      %v2239 = vpop.f32.mrb[0].mxu0
      %v2240 = vadd.f32 %v2036, %v2239
      %v2241 = vpop.f32.mrb[0].mxu0
      %2242 = vmatprep.mubr.bf16.mxu0 0
      %2243 = vmatmul.mubr.bf16.gmra.mrb[0].mxu0 %v2094
      %v2244 = vpop.f32.mrb[0].mxu0
      %v2245 = vadd.f32 %v2036, %v2244
      %v2246 = vpop.f32.mrb[0].mxu0
      %v2247 = vpop.f32.mrb[0].mxu0
      %v2248 = vadd.f32 %v2036, %v2247
      %v2249 = vpop.f32.mrb[0].mxu0
      %2250 = vmatprep.mubr.bf16.mxu0 0
      %2251 = vmatmul.mubr.bf16.gmra.mrb[0].mxu0 %v2097
      %v2252 = vpop.f32.mrb[0].mxu0
      %v2253 = vadd.f32 %v2036, %v2252
      %v2254 = vpop.f32.mrb[0].mxu0
      %v2255 = vpop.f32.mrb[0].mxu0
      %v2256 = vadd.f32 %v2036, %v2255
      %v2257 = vpop.f32.mrb[0].mxu0
      %2258 = vmatprep.mubr.bf16.mxu0 0
      %2259 = vmatmul.mubr.bf16.gmra.mrb[0].mxu0 %v2100
      %v2260 = vpop.f32.mrb[0].mxu0
      %v2261 = vadd.f32 %v2036, %v2260
      %v2262 = vpop.f32.mrb[0].mxu0
      %v2263 = vpop.f32.mrb[0].mxu0
      %v2264 = vadd.f32 %v2036, %v2263
      %v2265 = vpop.f32.mrb[0].mxu0
      %2266 = vdwg.mxu0
      %v2267 = vmul.f32 %v2141, 0.2
      %v2268 = vmul.f32 %v2144, 0.2
      %v2269 = vmul.f32 %v2149, 0.2
      %v2270 = vmul.f32 %v2152, 0.2
      %v2271 = vmul.f32 %v2157, 0.2
      %v2272 = vmul.f32 %v2160, 0.2
      %v2273 = vmul.f32 %v2165, 0.2
      %v2274 = vmul.f32 %v2168, 0.2
      %v2275 = vmul.f32 %v2173, 0.2
      %v2276 = vmul.f32 %v2176, 0.2
      %v2277 = vmul.f32 %v2181, 0.2
      %v2278 = vmul.f32 %v2184, 0.2
      %v2279 = vmul.f32 %v2189, 0.2
      %v2280 = vmul.f32 %v2192, 0.2
      %v2281 = vmul.f32 %v2197, 0.2
      %v2282 = vmul.f32 %v2200, 0.2
      %v2283 = vmul.f32 %v2205, 0.2
      %v2284 = vmul.f32 %v2208, 0.2
      %v2285 = vmul.f32 %v2213, 0.2
      %v2286 = vmul.f32 %v2216, 0.2
      %v2287 = vmul.f32 %v2221, 0.2
      %v2288 = vmul.f32 %v2224, 0.2
      %v2289 = vmul.f32 %v2229, 0.2
      %v2290 = vmul.f32 %v2232, 0.2
      %v2291 = vmul.f32 %v2237, 0.2
      %v2292 = vmul.f32 %v2240, 0.2
      %v2293 = vmul.f32 %v2245, 0.2
      %v2294 = vmul.f32 %v2248, 0.2
      %v2295 = vmul.f32 %v2253, 0.2
      %v2296 = vmul.f32 %v2256, 0.2
      %v2297 = vmul.f32 %v2261, 0.2
      %v2298 = vmul.f32 %v2264, 0.2
      %v2299 = vmax.f32 %v2141, %v2267
      %v2300 = vmax.f32 %v2144, %v2268
      %v2301 = vmax.f32 %v2149, %v2269
      %v2302 = vmax.f32 %v2152, %v2270
      %v2303 = vmax.f32 %v2157, %v2271
      %v2304 = vmax.f32 %v2160, %v2272
      %v2305 = vmax.f32 %v2165, %v2273
      %v2306 = vmax.f32 %v2168, %v2274
      %v2307 = vmax.f32 %v2173, %v2275
      %v2308 = vmax.f32 %v2176, %v2276
      %v2309 = vmax.f32 %v2181, %v2277
      %v2310 = vmax.f32 %v2184, %v2278
      %v2311 = vmax.f32 %v2189, %v2279
      %v2312 = vmax.f32 %v2192, %v2280
      %v2313 = vmax.f32 %v2197, %v2281
      %v2314 = vmax.f32 %v2200, %v2282
      %v2315 = vmax.f32 %v2205, %v2283
      %v2316 = vmax.f32 %v2208, %v2284
      %v2317 = vmax.f32 %v2213, %v2285
      %v2318 = vmax.f32 %v2216, %v2286
      %v2319 = vmax.f32 %v2221, %v2287
      %v2320 = vmax.f32 %v2224, %v2288
      %v2321 = vmax.f32 %v2229, %v2289
      %v2322 = vmax.f32 %v2232, %v2290
      %v2323 = vmax.f32 %v2237, %v2291
      %v2324 = vmax.f32 %v2240, %v2292
      %v2325 = vmax.f32 %v2245, %v2293
      %v2326 = vmax.f32 %v2248, %v2294
      %v2327 = vmax.f32 %v2253, %v2295
      %v2328 = vmax.f32 %v2256, %v2296
      %v2329 = vmax.f32 %v2261, %v2297
      %v2330 = vmax.f32 %v2264, %v2298
      %s2331 = scalar_lea.vmem [#allocation3], 24
      %2332 = vst.msk [vmem:[%s2331 + $0x1] sm:$0xff] %vm280, %v2299
      %2333 = vst.msk [vmem:[%s2331 + $0x9] sm:$0xff] %vm280, %v2300
      %2334 = vst.msk [vmem:[%s2331 + $0x19] sm:$0xff] %vm280, %v2301
      %2335 = vst.msk [vmem:[%s2331 + $0x21] sm:$0xff] %vm280, %v2302
      %2336 = vst.msk [vmem:[%s2331 + $0x31] sm:$0xff] %vm280, %v2303
      %2337 = vst.msk [vmem:[%s2331 + $0x39] sm:$0xff] %vm280, %v2304
      %2338 = vst.msk [vmem:[%s2331 + $0x49] sm:$0xff] %vm280, %v2305
      %2339 = vst.msk [vmem:[%s2331 + $0x51] sm:$0xff] %vm280, %v2306
      %2340 = vst.msk [vmem:[%s2331 + $0x61] sm:$0xff] %vm280, %v2307
      %2341 = vst.msk [vmem:[%s2331 + $0x69] sm:$0xff] %vm280, %v2308
      %2342 = vst.msk [vmem:[%s2331 + $0x79] sm:$0xff] %vm280, %v2309
      %2343 = vst.msk [vmem:[%s2331 + $0x81] sm:$0xff] %vm280, %v2310
      %2344 = vst.msk [vmem:[%s2331 + $0x91] sm:$0xff] %vm280, %v2311
      %2345 = vst.msk [vmem:[%s2331 + $0x99] sm:$0xff] %vm280, %v2312
      %2346 = vst.msk [vmem:[%s2331 + $0xa9] sm:$0xff] %vm280, %v2313
      %2347 = vst.msk [vmem:[%s2331 + $0xb1] sm:$0xff] %vm280, %v2314
      %2348 = vst.msk [vmem:[%s2331 + $0xc1] sm:$0xff] %vm280, %v2315
      %2349 = vst.msk [vmem:[%s2331 + $0xc9] sm:$0xff] %vm280, %v2316
      %2350 = vst.msk [vmem:[%s2331 + $0xd9] sm:$0xff] %vm280, %v2317
      %2351 = vst.msk [vmem:[%s2331 + $0xe1] sm:$0xff] %vm280, %v2318
      %2352 = vst.msk [vmem:[%s2331 + $0xf1] sm:$0xff] %vm280, %v2319
      %2353 = vst.msk [vmem:[%s2331 + $0xf9] sm:$0xff] %vm280, %v2320
      %2354 = vst.msk [vmem:[%s2331 + $0x109] sm:$0xff] %vm280, %v2321
      %2355 = vst.msk [vmem:[%s2331 + $0x111] sm:$0xff] %vm280, %v2322
      %2356 = vst.msk [vmem:[%s2331 + $0x121] sm:$0xff] %vm280, %v2323
      %2357 = vst.msk [vmem:[%s2331 + $0x129] sm:$0xff] %vm280, %v2324
      %2358 = vst.msk [vmem:[%s2331 + $0x139] sm:$0xff] %vm280, %v2325
      %2359 = vst.msk [vmem:[%s2331 + $0x141] sm:$0xff] %vm280, %v2326
      %2360 = vst.msk [vmem:[%s2331 + $0x151] sm:$0xff] %vm280, %v2327
      %2361 = vst.msk [vmem:[%s2331 + $0x159] sm:$0xff] %vm280, %v2328
      %2362 = vst.msk [vmem:[%s2331 + $0x169] sm:$0xff] %vm280, %v2329
      %2363 = vst.msk [vmem:[%s2331 + $0x171] sm:$0xff] %vm280, %v2330
      %v2364 = vld [vmem:[#allocation2] sm:$0xff]
      %v2365 = vld [vmem:[#allocation2 + $0x8] sm:$0xff]
      %v2366 = vld [vmem:[#allocation2 + $0x18] sm:$0xff]
      %v2367 = vld [vmem:[#allocation2 + $0x20] sm:$0xff]
      %v2368 = vld [vmem:[#allocation2 + $0x30] sm:$0xff]
      %v2369 = vld [vmem:[#allocation2 + $0x38] sm:$0xff]
      %v2370 = vld [vmem:[#allocation2 + $0x48] sm:$0xff]
      %v2371 = vld [vmem:[#allocation2 + $0x50] sm:$0xff]
      %v2372 = vld [vmem:[#allocation2 + $0x60] sm:$0xff]
      %v2373 = vld [vmem:[#allocation2 + $0x68] sm:$0xff]
      %v2374 = vld [vmem:[#allocation2 + $0x78] sm:$0xff]
      %v2375 = vld [vmem:[#allocation2 + $0x80] sm:$0xff]
      %v2376 = vld [vmem:[#allocation2 + $0x90] sm:$0xff]
      %v2377 = vld [vmem:[#allocation2 + $0x98] sm:$0xff]
      %v2378 = vld [vmem:[#allocation2 + $0xa8] sm:$0xff]
      %v2379 = vld [vmem:[#allocation2 + $0xb0] sm:$0xff]
      %v2380 = vld [vmem:[#allocation2 + $0xc0] sm:$0xff]
      %v2381 = vld [vmem:[#allocation2 + $0xc8] sm:$0xff]
      %v2382 = vld [vmem:[#allocation2 + $0xd8] sm:$0xff]
      %v2383 = vld [vmem:[#allocation2 + $0xe0] sm:$0xff]
      %v2384 = vld [vmem:[#allocation2 + $0xf0] sm:$0xff]
      %v2385 = vld [vmem:[#allocation2 + $0xf8] sm:$0xff]
      %v2386 = vld [vmem:[#allocation2 + $0x108] sm:$0xff]
      %v2387 = vld [vmem:[#allocation2 + $0x110] sm:$0xff]
      %v2388 = vld [vmem:[#allocation2 + $0x120] sm:$0xff]
      %v2389 = vld [vmem:[#allocation2 + $0x128] sm:$0xff]
      %v2390 = vld [vmem:[#allocation2 + $0x138] sm:$0xff]
      %v2391 = vld [vmem:[#allocation2 + $0x140] sm:$0xff]
      %v2392 = vld [vmem:[#allocation2 + $0x150] sm:$0xff]
      %v2393 = vld [vmem:[#allocation2 + $0x158] sm:$0xff]
      %v2394 = vld [vmem:[#allocation2 + $0x168] sm:$0xff]
      %v2395 = vld [vmem:[#allocation2 + $0x170] sm:$0xff]
      %v2396 = vld [vmem:[#allocation3] sm:$0xff]
      %v2397 = vld [vmem:[#allocation3 + $0x8] sm:$0xff]
      %v2398 = vld [vmem:[#allocation3 + $0x18] sm:$0xff]
      %v2399 = vld [vmem:[#allocation3 + $0x20] sm:$0xff]
      %v2400 = vld [vmem:[#allocation3 + $0x30] sm:$0xff]
      %v2401 = vld [vmem:[#allocation3 + $0x38] sm:$0xff]
      %v2402 = vld [vmem:[#allocation3 + $0x48] sm:$0xff]
      %v2403 = vld [vmem:[#allocation3 + $0x50] sm:$0xff]
      %v2404 = vld [vmem:[#allocation3 + $0x60] sm:$0xff]
      %v2405 = vld [vmem:[#allocation3 + $0x68] sm:$0xff]
      %v2406 = vld [vmem:[#allocation3 + $0x78] sm:$0xff]
      %v2407 = vld [vmem:[#allocation3 + $0x80] sm:$0xff]
      %v2408 = vld [vmem:[#allocation3 + $0x90] sm:$0xff]
      %v2409 = vld [vmem:[#allocation3 + $0x98] sm:$0xff]
      %v2410 = vld [vmem:[#allocation3 + $0xa8] sm:$0xff]
      %v2411 = vld [vmem:[#allocation3 + $0xb0] sm:$0xff]
      %v2412 = vld [vmem:[#allocation3 + $0xc0] sm:$0xff]
      %v2413 = vld [vmem:[#allocation3 + $0xc8] sm:$0xff]
      %v2414 = vld [vmem:[#allocation3 + $0xd8] sm:$0xff]
      %v2415 = vld [vmem:[#allocation3 + $0xe0] sm:$0xff]
      %v2416 = vld [vmem:[#allocation3 + $0xf0] sm:$0xff]
      %v2417 = vld [vmem:[#allocation3 + $0xf8] sm:$0xff]
      %v2418 = vld [vmem:[#allocation3 + $0x108] sm:$0xff]
      %v2419 = vld [vmem:[#allocation3 + $0x110] sm:$0xff]
      %v2420 = vld [vmem:[#allocation3 + $0x120] sm:$0xff]
      %v2421 = vld [vmem:[#allocation3 + $0x128] sm:$0xff]
      %v2422 = vld [vmem:[#allocation3 + $0x138] sm:$0xff]
      %v2423 = vld [vmem:[#allocation3 + $0x140] sm:$0xff]
      %v2424 = vld [vmem:[#allocation3 + $0x150] sm:$0xff]
      %v2425 = vld [vmem:[#allocation3 + $0x158] sm:$0xff]
      %v2426 = vld [vmem:[#allocation3 + $0x168] sm:$0xff]
      %v2427 = vld [vmem:[#allocation3 + $0x170] sm:$0xff]
      %v2428 = vld [vmem:[#allocation2 + $0x1] sm:$0xff]
      %v2429 = vld [vmem:[#allocation2 + $0x9] sm:$0xff]
      %v2430 = vld [vmem:[#allocation2 + $0x19] sm:$0xff]
      %v2431 = vld [vmem:[#allocation2 + $0x21] sm:$0xff]
      %v2432 = vld [vmem:[#allocation2 + $0x31] sm:$0xff]
      %v2433 = vld [vmem:[#allocation2 + $0x39] sm:$0xff]
      %v2434 = vld [vmem:[#allocation2 + $0x49] sm:$0xff]
      %v2435 = vld [vmem:[#allocation2 + $0x51] sm:$0xff]
      %v2436 = vld [vmem:[#allocation2 + $0x61] sm:$0xff]
      %v2437 = vld [vmem:[#allocation2 + $0x69] sm:$0xff]
      %v2438 = vld [vmem:[#allocation2 + $0x79] sm:$0xff]
      %v2439 = vld [vmem:[#allocation2 + $0x81] sm:$0xff]
      %v2440 = vld [vmem:[#allocation2 + $0x91] sm:$0xff]
      %v2441 = vld [vmem:[#allocation2 + $0x99] sm:$0xff]
      %v2442 = vld [vmem:[#allocation2 + $0xa9] sm:$0xff]
      %v2443 = vld [vmem:[#allocation2 + $0xb1] sm:$0xff]
      %v2444 = vld [vmem:[#allocation2 + $0xc1] sm:$0xff]
      %v2445 = vld [vmem:[#allocation2 + $0xc9] sm:$0xff]
      %v2446 = vld [vmem:[#allocation2 + $0xd9] sm:$0xff]
      %v2447 = vld [vmem:[#allocation2 + $0xe1] sm:$0xff]
      %v2448 = vld [vmem:[#allocation2 + $0xf1] sm:$0xff]
      %v2449 = vld [vmem:[#allocation2 + $0xf9] sm:$0xff]
      %v2450 = vld [vmem:[#allocation2 + $0x109] sm:$0xff]
      %v2451 = vld [vmem:[#allocation2 + $0x111] sm:$0xff]
      %v2452 = vld [vmem:[#allocation2 + $0x121] sm:$0xff]
      %v2453 = vld [vmem:[#allocation2 + $0x129] sm:$0xff]
      %v2454 = vld [vmem:[#allocation2 + $0x139] sm:$0xff]
      %v2455 = vld [vmem:[#allocation2 + $0x141] sm:$0xff]
      %v2456 = vld [vmem:[#allocation2 + $0x151] sm:$0xff]
      %v2457 = vld [vmem:[#allocation2 + $0x159] sm:$0xff]
      %v2458 = vld [vmem:[#allocation2 + $0x169] sm:$0xff]
      %v2459 = vld [vmem:[#allocation2 + $0x171] sm:$0xff]
      %v2460 = vld [vmem:[#allocation3 + $0x1] sm:$0xff]
      %v2461 = vld [vmem:[#allocation3 + $0x9] sm:$0xff]
      %v2462 = vld [vmem:[#allocation3 + $0x19] sm:$0xff]
      %v2463 = vld [vmem:[#allocation3 + $0x21] sm:$0xff]
      %v2464 = vld [vmem:[#allocation3 + $0x31] sm:$0xff]
      %v2465 = vld [vmem:[#allocation3 + $0x39] sm:$0xff]
      %v2466 = vld [vmem:[#allocation3 + $0x49] sm:$0xff]
      %v2467 = vld [vmem:[#allocation3 + $0x51] sm:$0xff]
      %v2468 = vld [vmem:[#allocation3 + $0x61] sm:$0xff]
      %v2469 = vld [vmem:[#allocation3 + $0x69] sm:$0xff]
      %v2470 = vld [vmem:[#allocation3 + $0x79] sm:$0xff]
      %v2471 = vld [vmem:[#allocation3 + $0x81] sm:$0xff]
      %v2472 = vld [vmem:[#allocation3 + $0x91] sm:$0xff]
      %v2473 = vld [vmem:[#allocation3 + $0x99] sm:$0xff]
      %v2474 = vld [vmem:[#allocation3 + $0xa9] sm:$0xff]
      %v2475 = vld [vmem:[#allocation3 + $0xb1] sm:$0xff]
      %v2476 = vld [vmem:[#allocation3 + $0xc1] sm:$0xff]
      %v2477 = vld [vmem:[#allocation3 + $0xc9] sm:$0xff]
      %v2478 = vld [vmem:[#allocation3 + $0xd9] sm:$0xff]
      %v2479 = vld [vmem:[#allocation3 + $0xe1] sm:$0xff]
      %v2480 = vld [vmem:[#allocation3 + $0xf1] sm:$0xff]
      %v2481 = vld [vmem:[#allocation3 + $0xf9] sm:$0xff]
      %v2482 = vld [vmem:[#allocation3 + $0x109] sm:$0xff]
      %v2483 = vld [vmem:[#allocation3 + $0x111] sm:$0xff]
      %v2484 = vld [vmem:[#allocation3 + $0x121] sm:$0xff]
      %v2485 = vld [vmem:[#allocation3 + $0x129] sm:$0xff]
      %v2486 = vld [vmem:[#allocation3 + $0x139] sm:$0xff]
      %v2487 = vld [vmem:[#allocation3 + $0x141] sm:$0xff]
      %v2488 = vld [vmem:[#allocation3 + $0x151] sm:$0xff]
      %v2489 = vld [vmem:[#allocation3 + $0x159] sm:$0xff]
      %v2490 = vld [vmem:[#allocation3 + $0x169] sm:$0xff]
      %v2491 = vld [vmem:[#allocation3 + $0x171] sm:$0xff]
      %v2492 = vld [vmem:[#allocation2 + $0x2] sm:$0xff]
      %v2493 = vld [vmem:[#allocation2 + $0xa] sm:$0xff]
      %v2494 = vld [vmem:[#allocation2 + $0x1a] sm:$0xff]
      %v2495 = vld [vmem:[#allocation2 + $0x22] sm:$0xff]
      %v2496 = vld [vmem:[#allocation2 + $0x32] sm:$0xff]
      %v2497 = vld [vmem:[#allocation2 + $0x3a] sm:$0xff]
      %v2498 = vld [vmem:[#allocation2 + $0x4a] sm:$0xff]
      %v2499 = vld [vmem:[#allocation2 + $0x52] sm:$0xff]
      %v2500 = vld [vmem:[#allocation2 + $0x62] sm:$0xff]
      %v2501 = vld [vmem:[#allocation2 + $0x6a] sm:$0xff]
      %v2502 = vld [vmem:[#allocation2 + $0x7a] sm:$0xff]
      %v2503 = vld [vmem:[#allocation2 + $0x82] sm:$0xff]
      %v2504 = vld [vmem:[#allocation2 + $0x92] sm:$0xff]
      %v2505 = vld [vmem:[#allocation2 + $0x9a] sm:$0xff]
      %v2506 = vld [vmem:[#allocation2 + $0xaa] sm:$0xff]
      %v2507 = vld [vmem:[#allocation2 + $0xb2] sm:$0xff]
      %v2508 = vld [vmem:[#allocation2 + $0xc2] sm:$0xff]
      %v2509 = vld [vmem:[#allocation2 + $0xca] sm:$0xff]
      %v2510 = vld [vmem:[#allocation2 + $0xda] sm:$0xff]
      %v2511 = vld [vmem:[#allocation2 + $0xe2] sm:$0xff]
      %v2512 = vld [vmem:[#allocation2 + $0xf2] sm:$0xff]
      %v2513 = vld [vmem:[#allocation2 + $0xfa] sm:$0xff]
      %v2514 = vld [vmem:[#allocation2 + $0x10a] sm:$0xff]
      %v2515 = vld [vmem:[#allocation2 + $0x112] sm:$0xff]
      %v2516 = vld [vmem:[#allocation2 + $0x122] sm:$0xff]
      %v2517 = vld [vmem:[#allocation2 + $0x12a] sm:$0xff]
      %v2518 = vld [vmem:[#allocation2 + $0x13a] sm:$0xff]
      %v2519 = vld [vmem:[#allocation2 + $0x142] sm:$0xff]
      %v2520 = vld [vmem:[#allocation2 + $0x152] sm:$0xff]
      %v2521 = vld [vmem:[#allocation2 + $0x15a] sm:$0xff]
      %v2522 = vld [vmem:[#allocation2 + $0x16a] sm:$0xff]
      %v2523 = vld [vmem:[#allocation2 + $0x172] sm:$0xff]
      %v2524 = vld [vmem:[#allocation3 + $0x2] sm:$0xff]
      %v2525 = vld [vmem:[#allocation3 + $0xa] sm:$0xff]
      %v2526 = vld [vmem:[#allocation3 + $0x1a] sm:$0xff]
      %v2527 = vld [vmem:[#allocation3 + $0x22] sm:$0xff]
      %v2528 = vld [vmem:[#allocation3 + $0x32] sm:$0xff]
      %v2529 = vld [vmem:[#allocation3 + $0x3a] sm:$0xff]
      %v2530 = vld [vmem:[#allocation3 + $0x4a] sm:$0xff]
      %v2531 = vld [vmem:[#allocation3 + $0x52] sm:$0xff]
      %v2532 = vld [vmem:[#allocation3 + $0x62] sm:$0xff]
      %v2533 = vld [vmem:[#allocation3 + $0x6a] sm:$0xff]
      %v2534 = vld [vmem:[#allocation3 + $0x7a] sm:$0xff]
      %v2535 = vld [vmem:[#allocation3 + $0x82] sm:$0xff]
      %v2536 = vld [vmem:[#allocation3 + $0x92] sm:$0xff]
      %v2537 = vld [vmem:[#allocation3 + $0x9a] sm:$0xff]
      %v2538 = vld [vmem:[#allocation3 + $0xaa] sm:$0xff]
      %v2539 = vld [vmem:[#allocation3 + $0xb2] sm:$0xff]
      %v2540 = vld [vmem:[#allocation3 + $0xc2] sm:$0xff]
      %v2541 = vld [vmem:[#allocation3 + $0xca] sm:$0xff]
      %v2542 = vld [vmem:[#allocation3 + $0xda] sm:$0xff]
      %v2543 = vld [vmem:[#allocation3 + $0xe2] sm:$0xff]
      %v2544 = vld [vmem:[#allocation3 + $0xf2] sm:$0xff]
      %v2545 = vld [vmem:[#allocation3 + $0xfa] sm:$0xff]
      %v2546 = vld [vmem:[#allocation3 + $0x10a] sm:$0xff]
      %v2547 = vld [vmem:[#allocation3 + $0x112] sm:$0xff]
      %v2548 = vld [vmem:[#allocation3 + $0x122] sm:$0xff]
      %v2549 = vld [vmem:[#allocation3 + $0x12a] sm:$0xff]
      %v2550 = vld [vmem:[#allocation3 + $0x13a] sm:$0xff]
      %v2551 = vld [vmem:[#allocation3 + $0x142] sm:$0xff]
      %v2552 = vld [vmem:[#allocation3 + $0x152] sm:$0xff]
      %v2553 = vld [vmem:[#allocation3 + $0x15a] sm:$0xff]
      %v2554 = vld [vmem:[#allocation3 + $0x16a] sm:$0xff]
      %v2555 = vld [vmem:[#allocation3 + $0x172] sm:$0xff]
      %v2556 = vld [vmem:[%s401] sm:$0xff]
      %v2557 = vld [vmem:[%s401 + $0x8] sm:$0xff]
      %v2558 = vld [vmem:[%s401 + $0x18] sm:$0xff]
      %v2559 = vld [vmem:[%s401 + $0x20] sm:$0xff]
      %v2560 = vld [vmem:[%s401 + $0x30] sm:$0xff]
      %v2561 = vld [vmem:[%s401 + $0x38] sm:$0xff]
      %v2562 = vld [vmem:[%s401 + $0x48] sm:$0xff]
      %v2563 = vld [vmem:[%s401 + $0x50] sm:$0xff]
      %v2564 = vld [vmem:[%s401 + $0x60] sm:$0xff]
      %v2565 = vld [vmem:[%s401 + $0x68] sm:$0xff]
      %v2566 = vld [vmem:[%s401 + $0x78] sm:$0xff]
      %v2567 = vld [vmem:[%s401 + $0x80] sm:$0xff]
      %v2568 = vld [vmem:[%s401 + $0x90] sm:$0xff]
      %v2569 = vld [vmem:[%s401 + $0x98] sm:$0xff]
      %v2570 = vld [vmem:[%s401 + $0xa8] sm:$0xff]
      %v2571 = vld [vmem:[%s401 + $0xb0] sm:$0xff]
      %v2572 = vld [vmem:[%s401 + $0xc0] sm:$0xff]
      %v2573 = vld [vmem:[%s401 + $0xc8] sm:$0xff]
      %v2574 = vld [vmem:[%s401 + $0xd8] sm:$0xff]
      %v2575 = vld [vmem:[%s401 + $0xe0] sm:$0xff]
      %v2576 = vld [vmem:[%s401 + $0xf0] sm:$0xff]
      %v2577 = vld [vmem:[%s401 + $0xf8] sm:$0xff]
      %v2578 = vld [vmem:[%s401 + $0x108] sm:$0xff]
      %v2579 = vld [vmem:[%s401 + $0x110] sm:$0xff]
      %v2580 = vld [vmem:[%s401 + $0x120] sm:$0xff]
      %v2581 = vld [vmem:[%s401 + $0x128] sm:$0xff]
      %v2582 = vld [vmem:[%s401 + $0x138] sm:$0xff]
      %v2583 = vld [vmem:[%s401 + $0x140] sm:$0xff]
      %v2584 = vld [vmem:[%s401 + $0x150] sm:$0xff]
      %v2585 = vld [vmem:[%s401 + $0x158] sm:$0xff]
      %v2586 = vld [vmem:[%s401 + $0x168] sm:$0xff]
      %v2587 = vld [vmem:[%s401 + $0x170] sm:$0xff]
      %v2588 = vld [vmem:[%s2331] sm:$0xff]
      %v2589 = vld [vmem:[%s2331 + $0x8] sm:$0xff]
      %v2590 = vld [vmem:[%s2331 + $0x18] sm:$0xff]
      %v2591 = vld [vmem:[%s2331 + $0x20] sm:$0xff]
      %v2592 = vld [vmem:[%s2331 + $0x30] sm:$0xff]
      %v2593 = vld [vmem:[%s2331 + $0x38] sm:$0xff]
      %v2594 = vld [vmem:[%s2331 + $0x48] sm:$0xff]
      %v2595 = vld [vmem:[%s2331 + $0x50] sm:$0xff]
      %v2596 = vld [vmem:[%s2331 + $0x60] sm:$0xff]
      %v2597 = vld [vmem:[%s2331 + $0x68] sm:$0xff]
      %v2598 = vld [vmem:[%s2331 + $0x78] sm:$0xff]
      %v2599 = vld [vmem:[%s2331 + $0x80] sm:$0xff]
      %v2600 = vld [vmem:[%s2331 + $0x90] sm:$0xff]
      %v2601 = vld [vmem:[%s2331 + $0x98] sm:$0xff]
      %v2602 = vld [vmem:[%s2331 + $0xa8] sm:$0xff]
      %v2603 = vld [vmem:[%s2331 + $0xb0] sm:$0xff]
      %v2604 = vld [vmem:[%s2331 + $0xc0] sm:$0xff]
      %v2605 = vld [vmem:[%s2331 + $0xc8] sm:$0xff]
      %v2606 = vld [vmem:[%s2331 + $0xd8] sm:$0xff]
      %v2607 = vld [vmem:[%s2331 + $0xe0] sm:$0xff]
      %v2608 = vld [vmem:[%s2331 + $0xf0] sm:$0xff]
      %v2609 = vld [vmem:[%s2331 + $0xf8] sm:$0xff]
      %v2610 = vld [vmem:[%s2331 + $0x108] sm:$0xff]
      %v2611 = vld [vmem:[%s2331 + $0x110] sm:$0xff]
      %v2612 = vld [vmem:[%s2331 + $0x120] sm:$0xff]
      %v2613 = vld [vmem:[%s2331 + $0x128] sm:$0xff]
      %v2614 = vld [vmem:[%s2331 + $0x138] sm:$0xff]
      %v2615 = vld [vmem:[%s2331 + $0x140] sm:$0xff]
      %v2616 = vld [vmem:[%s2331 + $0x150] sm:$0xff]
      %v2617 = vld [vmem:[%s2331 + $0x158] sm:$0xff]
      %v2618 = vld [vmem:[%s2331 + $0x168] sm:$0xff]
      %v2619 = vld [vmem:[%s2331 + $0x170] sm:$0xff]
      %v2620 = vld [vmem:[%s401 + $0x1] sm:$0xff]
      %v2621 = vld [vmem:[%s401 + $0x9] sm:$0xff]
      %v2622 = vld [vmem:[%s401 + $0x19] sm:$0xff]
      %v2623 = vld [vmem:[%s401 + $0x21] sm:$0xff]
      %v2624 = vld [vmem:[%s401 + $0x31] sm:$0xff]
      %v2625 = vld [vmem:[%s401 + $0x39] sm:$0xff]
      %v2626 = vld [vmem:[%s401 + $0x49] sm:$0xff]
      %v2627 = vld [vmem:[%s401 + $0x51] sm:$0xff]
      %v2628 = vld [vmem:[%s401 + $0x61] sm:$0xff]
      %v2629 = vld [vmem:[%s401 + $0x69] sm:$0xff]
      %v2630 = vld [vmem:[%s401 + $0x79] sm:$0xff]
      %v2631 = vld [vmem:[%s401 + $0x81] sm:$0xff]
      %v2632 = vld [vmem:[%s401 + $0x91] sm:$0xff]
      %v2633 = vld [vmem:[%s401 + $0x99] sm:$0xff]
      %v2634 = vld [vmem:[%s401 + $0xa9] sm:$0xff]
      %v2635 = vld [vmem:[%s401 + $0xb1] sm:$0xff]
      %v2636 = vld [vmem:[%s401 + $0xc1] sm:$0xff]
      %v2637 = vld [vmem:[%s401 + $0xc9] sm:$0xff]
      %v2638 = vld [vmem:[%s401 + $0xd9] sm:$0xff]
      %v2639 = vld [vmem:[%s401 + $0xe1] sm:$0xff]
      %v2640 = vld [vmem:[%s401 + $0xf1] sm:$0xff]
      %v2641 = vld [vmem:[%s401 + $0xf9] sm:$0xff]
      %v2642 = vld [vmem:[%s401 + $0x109] sm:$0xff]
      %v2643 = vld [vmem:[%s401 + $0x111] sm:$0xff]
      %v2644 = vld [vmem:[%s401 + $0x121] sm:$0xff]
      %v2645 = vld [vmem:[%s401 + $0x129] sm:$0xff]
      %v2646 = vld [vmem:[%s401 + $0x139] sm:$0xff]
      %v2647 = vld [vmem:[%s401 + $0x141] sm:$0xff]
      %v2648 = vld [vmem:[%s401 + $0x151] sm:$0xff]
      %v2649 = vld [vmem:[%s401 + $0x159] sm:$0xff]
      %v2650 = vld [vmem:[%s401 + $0x169] sm:$0xff]
      %v2651 = vld [vmem:[%s401 + $0x171] sm:$0xff]
      %v2652 = vld [vmem:[%s2331 + $0x1] sm:$0xff]
      %v2653 = vld [vmem:[%s2331 + $0x9] sm:$0xff]
      %v2654 = vld [vmem:[%s2331 + $0x19] sm:$0xff]
      %v2655 = vld [vmem:[%s2331 + $0x21] sm:$0xff]
      %v2656 = vld [vmem:[%s2331 + $0x31] sm:$0xff]
      %v2657 = vld [vmem:[%s2331 + $0x39] sm:$0xff]
      %v2658 = vld [vmem:[%s2331 + $0x49] sm:$0xff]
      %v2659 = vld [vmem:[%s2331 + $0x51] sm:$0xff]
      %v2660 = vld [vmem:[%s2331 + $0x61] sm:$0xff]
      %v2661 = vld [vmem:[%s2331 + $0x69] sm:$0xff]
      %v2662 = vld [vmem:[%s2331 + $0x79] sm:$0xff]
      %v2663 = vld [vmem:[%s2331 + $0x81] sm:$0xff]
      %v2664 = vld [vmem:[%s2331 + $0x91] sm:$0xff]
      %v2665 = vld [vmem:[%s2331 + $0x99] sm:$0xff]
      %v2666 = vld [vmem:[%s2331 + $0xa9] sm:$0xff]
      %v2667 = vld [vmem:[%s2331 + $0xb1] sm:$0xff]
      %v2668 = vld [vmem:[%s2331 + $0xc1] sm:$0xff]
      %v2669 = vld [vmem:[%s2331 + $0xc9] sm:$0xff]
      %v2670 = vld [vmem:[%s2331 + $0xd9] sm:$0xff]
      %v2671 = vld [vmem:[%s2331 + $0xe1] sm:$0xff]
      %v2672 = vld [vmem:[%s2331 + $0xf1] sm:$0xff]
      %v2673 = vld [vmem:[%s2331 + $0xf9] sm:$0xff]
      %v2674 = vld [vmem:[%s2331 + $0x109] sm:$0xff]
      %v2675 = vld [vmem:[%s2331 + $0x111] sm:$0xff]
      %v2676 = vld [vmem:[%s2331 + $0x121] sm:$0xff]
      %v2677 = vld [vmem:[%s2331 + $0x129] sm:$0xff]
      %v2678 = vld [vmem:[%s2331 + $0x139] sm:$0xff]
      %v2679 = vld [vmem:[%s2331 + $0x141] sm:$0xff]
      %v2680 = vld [vmem:[%s2331 + $0x151] sm:$0xff]
      %v2681 = vld [vmem:[%s2331 + $0x159] sm:$0xff]
      %v2682 = vld [vmem:[%s2331 + $0x169] sm:$0xff]
      %v2683 = vld [vmem:[%s2331 + $0x171] sm:$0xff]
      %v2684 = vld [vmem:[%s401 + $0x2] sm:$0xff]
      %v2685 = vld [vmem:[%s401 + $0xa] sm:$0xff]
      %v2686 = vld [vmem:[%s401 + $0x1a] sm:$0xff]
      %v2687 = vld [vmem:[%s401 + $0x22] sm:$0xff]
      %v2688 = vld [vmem:[%s401 + $0x32] sm:$0xff]
      %v2689 = vld [vmem:[%s401 + $0x3a] sm:$0xff]
      %v2690 = vld [vmem:[%s401 + $0x4a] sm:$0xff]
      %v2691 = vld [vmem:[%s401 + $0x52] sm:$0xff]
      %v2692 = vld [vmem:[%s401 + $0x62] sm:$0xff]
      %v2693 = vld [vmem:[%s401 + $0x6a] sm:$0xff]
      %v2694 = vld [vmem:[%s401 + $0x7a] sm:$0xff]
      %v2695 = vld [vmem:[%s401 + $0x82] sm:$0xff]
      %v2696 = vld [vmem:[%s401 + $0x92] sm:$0xff]
      %v2697 = vld [vmem:[%s401 + $0x9a] sm:$0xff]
      %v2698 = vld [vmem:[%s401 + $0xaa] sm:$0xff]
      %v2699 = vld [vmem:[%s401 + $0xb2] sm:$0xff]
      %v2700 = vld [vmem:[%s401 + $0xc2] sm:$0xff]
      %v2701 = vld [vmem:[%s401 + $0xca] sm:$0xff]
      %v2702 = vld [vmem:[%s401 + $0xda] sm:$0xff]
      %v2703 = vld [vmem:[%s401 + $0xe2] sm:$0xff]
      %v2704 = vld [vmem:[%s401 + $0xf2] sm:$0xff]
      %v2705 = vld [vmem:[%s401 + $0xfa] sm:$0xff]
      %v2706 = vld [vmem:[%s401 + $0x10a] sm:$0xff]
      %v2707 = vld [vmem:[%s401 + $0x112] sm:$0xff]
      %v2708 = vld [vmem:[%s401 + $0x122] sm:$0xff]
      %v2709 = vld [vmem:[%s401 + $0x12a] sm:$0xff]
      %v2710 = vld [vmem:[%s401 + $0x13a] sm:$0xff]
      %v2711 = vld [vmem:[%s401 + $0x142] sm:$0xff]
      %v2712 = vld [vmem:[%s401 + $0x152] sm:$0xff]
      %v2713 = vld [vmem:[%s401 + $0x15a] sm:$0xff]
      %v2714 = vld [vmem:[%s401 + $0x16a] sm:$0xff]
      %v2715 = vld [vmem:[%s401 + $0x172] sm:$0xff]
      %v2716 = vld [vmem:[%s2331 + $0x2] sm:$0xff]
      %v2717 = vld [vmem:[%s2331 + $0xa] sm:$0xff]
      %v2718 = vld [vmem:[%s2331 + $0x1a] sm:$0xff]
      %v2719 = vld [vmem:[%s2331 + $0x22] sm:$0xff]
      %v2720 = vld [vmem:[%s2331 + $0x32] sm:$0xff]
      %v2721 = vld [vmem:[%s2331 + $0x3a] sm:$0xff]
      %v2722 = vld [vmem:[%s2331 + $0x4a] sm:$0xff]
      %v2723 = vld [vmem:[%s2331 + $0x52] sm:$0xff]
      %v2724 = vld [vmem:[%s2331 + $0x62] sm:$0xff]
      %v2725 = vld [vmem:[%s2331 + $0x6a] sm:$0xff]
      %v2726 = vld [vmem:[%s2331 + $0x7a] sm:$0xff]
      %v2727 = vld [vmem:[%s2331 + $0x82] sm:$0xff]
      %v2728 = vld [vmem:[%s2331 + $0x92] sm:$0xff]
      %v2729 = vld [vmem:[%s2331 + $0x9a] sm:$0xff]
      %v2730 = vld [vmem:[%s2331 + $0xaa] sm:$0xff]
      %v2731 = vld [vmem:[%s2331 + $0xb2] sm:$0xff]
      %v2732 = vld [vmem:[%s2331 + $0xc2] sm:$0xff]
      %v2733 = vld [vmem:[%s2331 + $0xca] sm:$0xff]
      %v2734 = vld [vmem:[%s2331 + $0xda] sm:$0xff]
      %v2735 = vld [vmem:[%s2331 + $0xe2] sm:$0xff]
      %v2736 = vld [vmem:[%s2331 + $0xf2] sm:$0xff]
      %v2737 = vld [vmem:[%s2331 + $0xfa] sm:$0xff]
      %v2738 = vld [vmem:[%s2331 + $0x10a] sm:$0xff]
      %v2739 = vld [vmem:[%s2331 + $0x112] sm:$0xff]
      %v2740 = vld [vmem:[%s2331 + $0x122] sm:$0xff]
      %v2741 = vld [vmem:[%s2331 + $0x12a] sm:$0xff]
      %v2742 = vld [vmem:[%s2331 + $0x13a] sm:$0xff]
      %v2743 = vld [vmem:[%s2331 + $0x142] sm:$0xff]
      %v2744 = vld [vmem:[%s2331 + $0x152] sm:$0xff]
      %v2745 = vld [vmem:[%s2331 + $0x15a] sm:$0xff]
      %v2746 = vld [vmem:[%s2331 + $0x16a] sm:$0xff]
      %v2747 = vld [vmem:[%s2331 + $0x172] sm:$0xff]
      %v2748 = vld [vmem:[%s626] sm:$0xff]
      %v2749 = vld [vmem:[%s626 + $0x8] sm:$0xff]
      %v2750 = vld [vmem:[%s626 + $0x18] sm:$0xff]
      %v2751 = vld [vmem:[%s626 + $0x20] sm:$0xff]
      %v2752 = vld [vmem:[%s626 + $0x30] sm:$0xff]
      %v2753 = vld [vmem:[%s626 + $0x38] sm:$0xff]
      %v2754 = vld [vmem:[%s626 + $0x48] sm:$0xff]
      %v2755 = vld [vmem:[%s626 + $0x50] sm:$0xff]
      %v2756 = vld [vmem:[%s626 + $0x60] sm:$0xff]
      %v2757 = vld [vmem:[%s626 + $0x68] sm:$0xff]
      %v2758 = vld [vmem:[%s626 + $0x78] sm:$0xff]
      %v2759 = vld [vmem:[%s626 + $0x80] sm:$0xff]
      %v2760 = vld [vmem:[%s626 + $0x90] sm:$0xff]
      %v2761 = vld [vmem:[%s626 + $0x98] sm:$0xff]
      %v2762 = vld [vmem:[%s626 + $0xa8] sm:$0xff]
      %v2763 = vld [vmem:[%s626 + $0xb0] sm:$0xff]
      %v2764 = vld [vmem:[%s626 + $0xc0] sm:$0xff]
      %v2765 = vld [vmem:[%s626 + $0xc8] sm:$0xff]
      %v2766 = vld [vmem:[%s626 + $0xd8] sm:$0xff]
      %v2767 = vld [vmem:[%s626 + $0xe0] sm:$0xff]
      %v2768 = vld [vmem:[%s626 + $0xf0] sm:$0xff]
      %v2769 = vld [vmem:[%s626 + $0xf8] sm:$0xff]
      %v2770 = vld [vmem:[%s626 + $0x108] sm:$0xff]
      %v2771 = vld [vmem:[%s626 + $0x110] sm:$0xff]
      %v2772 = vld [vmem:[%s626 + $0x120] sm:$0xff]
      %v2773 = vld [vmem:[%s626 + $0x128] sm:$0xff]
      %v2774 = vld [vmem:[%s626 + $0x138] sm:$0xff]
      %v2775 = vld [vmem:[%s626 + $0x140] sm:$0xff]
      %v2776 = vld [vmem:[%s626 + $0x150] sm:$0xff]
      %v2777 = vld [vmem:[%s626 + $0x158] sm:$0xff]
      %v2778 = vld [vmem:[%s626 + $0x168] sm:$0xff]
      %v2779 = vld [vmem:[%s626 + $0x170] sm:$0xff]
      %s2780 = scalar_lea.vmem [#allocation3], 48
      %v2781 = vld [vmem:[%s2780] sm:$0xff]
      %v2782 = vld [vmem:[%s2780 + $0x8] sm:$0xff]
      %v2783 = vld [vmem:[%s2780 + $0x18] sm:$0xff]
      %v2784 = vld [vmem:[%s2780 + $0x20] sm:$0xff]
      %v2785 = vld [vmem:[%s2780 + $0x30] sm:$0xff]
      %v2786 = vld [vmem:[%s2780 + $0x38] sm:$0xff]
      %v2787 = vld [vmem:[%s2780 + $0x48] sm:$0xff]
      %v2788 = vld [vmem:[%s2780 + $0x50] sm:$0xff]
      %v2789 = vld [vmem:[%s2780 + $0x60] sm:$0xff]
      %v2790 = vld [vmem:[%s2780 + $0x68] sm:$0xff]
      %v2791 = vld [vmem:[%s2780 + $0x78] sm:$0xff]
      %v2792 = vld [vmem:[%s2780 + $0x80] sm:$0xff]
      %v2793 = vld [vmem:[%s2780 + $0x90] sm:$0xff]
      %v2794 = vld [vmem:[%s2780 + $0x98] sm:$0xff]
      %v2795 = vld [vmem:[%s2780 + $0xa8] sm:$0xff]
      %v2796 = vld [vmem:[%s2780 + $0xb0] sm:$0xff]
      %v2797 = vld [vmem:[%s2780 + $0xc0] sm:$0xff]
      %v2798 = vld [vmem:[%s2780 + $0xc8] sm:$0xff]
      %v2799 = vld [vmem:[%s2780 + $0xd8] sm:$0xff]
      %v2800 = vld [vmem:[%s2780 + $0xe0] sm:$0xff]
      %v2801 = vld [vmem:[%s2780 + $0xf0] sm:$0xff]
      %v2802 = vld [vmem:[%s2780 + $0xf8] sm:$0xff]
      %v2803 = vld [vmem:[%s2780 + $0x108] sm:$0xff]
      %v2804 = vld [vmem:[%s2780 + $0x110] sm:$0xff]
      %v2805 = vld [vmem:[%s2780 + $0x120] sm:$0xff]
      %v2806 = vld [vmem:[%s2780 + $0x128] sm:$0xff]
      %v2807 = vld [vmem:[%s2780 + $0x138] sm:$0xff]
      %v2808 = vld [vmem:[%s2780 + $0x140] sm:$0xff]
      %v2809 = vld [vmem:[%s2780 + $0x150] sm:$0xff]
      %v2810 = vld [vmem:[%s2780 + $0x158] sm:$0xff]
      %v2811 = vld [vmem:[%s2780 + $0x168] sm:$0xff]
      %v2812 = vld [vmem:[%s2780 + $0x170] sm:$0xff]
      %v2813 = vld [vmem:[%s626 + $0x1] sm:$0xff]
      %v2814 = vld [vmem:[%s626 + $0x9] sm:$0xff]
      %v2815 = vld [vmem:[%s626 + $0x19] sm:$0xff]
      %v2816 = vld [vmem:[%s626 + $0x21] sm:$0xff]
      %v2817 = vld [vmem:[%s626 + $0x31] sm:$0xff]
      %v2818 = vld [vmem:[%s626 + $0x39] sm:$0xff]
      %v2819 = vld [vmem:[%s626 + $0x49] sm:$0xff]
      %v2820 = vld [vmem:[%s626 + $0x51] sm:$0xff]
      %v2821 = vld [vmem:[%s626 + $0x61] sm:$0xff]
      %v2822 = vld [vmem:[%s626 + $0x69] sm:$0xff]
      %v2823 = vld [vmem:[%s626 + $0x79] sm:$0xff]
      %v2824 = vld [vmem:[%s626 + $0x81] sm:$0xff]
      %v2825 = vld [vmem:[%s626 + $0x91] sm:$0xff]
      %v2826 = vld [vmem:[%s626 + $0x99] sm:$0xff]
      %v2827 = vld [vmem:[%s626 + $0xa9] sm:$0xff]
      %v2828 = vld [vmem:[%s626 + $0xb1] sm:$0xff]
      %v2829 = vld [vmem:[%s626 + $0xc1] sm:$0xff]
      %v2830 = vld [vmem:[%s626 + $0xc9] sm:$0xff]
      %v2831 = vld [vmem:[%s626 + $0xd9] sm:$0xff]
      %v2832 = vld [vmem:[%s626 + $0xe1] sm:$0xff]
      %v2833 = vld [vmem:[%s626 + $0xf1] sm:$0xff]
      %v2834 = vld [vmem:[%s626 + $0xf9] sm:$0xff]
      %v2835 = vld [vmem:[%s626 + $0x109] sm:$0xff]
      %v2836 = vld [vmem:[%s626 + $0x111] sm:$0xff]
      %v2837 = vld [vmem:[%s626 + $0x121] sm:$0xff]
      %v2838 = vld [vmem:[%s626 + $0x129] sm:$0xff]
      %v2839 = vld [vmem:[%s626 + $0x139] sm:$0xff]
      %v2840 = vld [vmem:[%s626 + $0x141] sm:$0xff]
      %v2841 = vld [vmem:[%s626 + $0x151] sm:$0xff]
      %v2842 = vld [vmem:[%s626 + $0x159] sm:$0xff]
      %v2843 = vld [vmem:[%s626 + $0x169] sm:$0xff]
      %v2844 = vld [vmem:[%s626 + $0x171] sm:$0xff]
      %v2845 = vld [vmem:[%s2780 + $0x1] sm:$0xff]
      %v2846 = vld [vmem:[%s2780 + $0x9] sm:$0xff]
      %v2847 = vld [vmem:[%s2780 + $0x19] sm:$0xff]
      %v2848 = vld [vmem:[%s2780 + $0x21] sm:$0xff]
      %v2849 = vld [vmem:[%s2780 + $0x31] sm:$0xff]
      %v2850 = vld [vmem:[%s2780 + $0x39] sm:$0xff]
      %v2851 = vld [vmem:[%s2780 + $0x49] sm:$0xff]
      %v2852 = vld [vmem:[%s2780 + $0x51] sm:$0xff]
      %v2853 = vld [vmem:[%s2780 + $0x61] sm:$0xff]
      %v2854 = vld [vmem:[%s2780 + $0x69] sm:$0xff]
      %v2855 = vld [vmem:[%s2780 + $0x79] sm:$0xff]
      %v2856 = vld [vmem:[%s2780 + $0x81] sm:$0xff]
      %v2857 = vld [vmem:[%s2780 + $0x91] sm:$0xff]
      %v2858 = vld [vmem:[%s2780 + $0x99] sm:$0xff]
      %v2859 = vld [vmem:[%s2780 + $0xa9] sm:$0xff]
      %v2860 = vld [vmem:[%s2780 + $0xb1] sm:$0xff]
      %v2861 = vld [vmem:[%s2780 + $0xc1] sm:$0xff]
      %v2862 = vld [vmem:[%s2780 + $0xc9] sm:$0xff]
      %v2863 = vld [vmem:[%s2780 + $0xd9] sm:$0xff]
      %v2864 = vld [vmem:[%s2780 + $0xe1] sm:$0xff]
      %v2865 = vld [vmem:[%s2780 + $0xf1] sm:$0xff]
      %v2866 = vld [vmem:[%s2780 + $0xf9] sm:$0xff]
      %v2867 = vld [vmem:[%s2780 + $0x109] sm:$0xff]
      %v2868 = vld [vmem:[%s2780 + $0x111] sm:$0xff]
      %v2869 = vld [vmem:[%s2780 + $0x121] sm:$0xff]
      %v2870 = vld [vmem:[%s2780 + $0x129] sm:$0xff]
      %v2871 = vld [vmem:[%s2780 + $0x139] sm:$0xff]
      %v2872 = vld [vmem:[%s2780 + $0x141] sm:$0xff]
      %v2873 = vld [vmem:[%s2780 + $0x151] sm:$0xff]
      %v2874 = vld [vmem:[%s2780 + $0x159] sm:$0xff]
      %v2875 = vld [vmem:[%s2780 + $0x169] sm:$0xff]
      %v2876 = vld [vmem:[%s2780 + $0x171] sm:$0xff]
      %v2877 = vld [vmem:[%s626 + $0x2] sm:$0xff]
      %v2878 = vld [vmem:[%s626 + $0xa] sm:$0xff]
      %v2879 = vld [vmem:[%s626 + $0x1a] sm:$0xff]
      %v2880 = vld [vmem:[%s626 + $0x22] sm:$0xff]
      %v2881 = vld [vmem:[%s626 + $0x32] sm:$0xff]
      %v2882 = vld [vmem:[%s626 + $0x3a] sm:$0xff]
      %v2883 = vld [vmem:[%s626 + $0x4a] sm:$0xff]
      %v2884 = vld [vmem:[%s626 + $0x52] sm:$0xff]
      %v2885 = vld [vmem:[%s626 + $0x62] sm:$0xff]
      %v2886 = vld [vmem:[%s626 + $0x6a] sm:$0xff]
      %v2887 = vld [vmem:[%s626 + $0x7a] sm:$0xff]
      %v2888 = vld [vmem:[%s626 + $0x82] sm:$0xff]
      %v2889 = vld [vmem:[%s626 + $0x92] sm:$0xff]
      %v2890 = vld [vmem:[%s626 + $0x9a] sm:$0xff]
      %v2891 = vld [vmem:[%s626 + $0xaa] sm:$0xff]
      %v2892 = vld [vmem:[%s626 + $0xb2] sm:$0xff]
      %v2893 = vld [vmem:[%s626 + $0xc2] sm:$0xff]
      %v2894 = vld [vmem:[%s626 + $0xca] sm:$0xff]
      %v2895 = vld [vmem:[%s626 + $0xda] sm:$0xff]
      %v2896 = vld [vmem:[%s626 + $0xe2] sm:$0xff]
      %v2897 = vld [vmem:[%s626 + $0xf2] sm:$0xff]
      %v2898 = vld [vmem:[%s626 + $0xfa] sm:$0xff]
      %v2899 = vld [vmem:[%s626 + $0x10a] sm:$0xff]
      %v2900 = vld [vmem:[%s626 + $0x112] sm:$0xff]
      %v2901 = vld [vmem:[%s626 + $0x122] sm:$0xff]
      %v2902 = vld [vmem:[%s626 + $0x12a] sm:$0xff]
      %v2903 = vld [vmem:[%s626 + $0x13a] sm:$0xff]
      %v2904 = vld [vmem:[%s626 + $0x142] sm:$0xff]
      %v2905 = vld [vmem:[%s626 + $0x152] sm:$0xff]
      %v2906 = vld [vmem:[%s626 + $0x15a] sm:$0xff]
      %v2907 = vld [vmem:[%s626 + $0x16a] sm:$0xff]
      %v2908 = vld [vmem:[%s626 + $0x172] sm:$0xff]
      %v2909 = vld [vmem:[%s2780 + $0x2] sm:$0xff]
      %v2910 = vld [vmem:[%s2780 + $0xa] sm:$0xff]
      %v2911 = vld [vmem:[%s2780 + $0x1a] sm:$0xff]
      %v2912 = vld [vmem:[%s2780 + $0x22] sm:$0xff]
      %v2913 = vld [vmem:[%s2780 + $0x32] sm:$0xff]
      %v2914 = vld [vmem:[%s2780 + $0x3a] sm:$0xff]
      %v2915 = vld [vmem:[%s2780 + $0x4a] sm:$0xff]
      %v2916 = vld [vmem:[%s2780 + $0x52] sm:$0xff]
      %v2917 = vld [vmem:[%s2780 + $0x62] sm:$0xff]
      %v2918 = vld [vmem:[%s2780 + $0x6a] sm:$0xff]
      %v2919 = vld [vmem:[%s2780 + $0x7a] sm:$0xff]
      %v2920 = vld [vmem:[%s2780 + $0x82] sm:$0xff]
      %v2921 = vld [vmem:[%s2780 + $0x92] sm:$0xff]
      %v2922 = vld [vmem:[%s2780 + $0x9a] sm:$0xff]
      %v2923 = vld [vmem:[%s2780 + $0xaa] sm:$0xff]
      %v2924 = vld [vmem:[%s2780 + $0xb2] sm:$0xff]
      %v2925 = vld [vmem:[%s2780 + $0xc2] sm:$0xff]
      %v2926 = vld [vmem:[%s2780 + $0xca] sm:$0xff]
      %v2927 = vld [vmem:[%s2780 + $0xda] sm:$0xff]
      %v2928 = vld [vmem:[%s2780 + $0xe2] sm:$0xff]
      %v2929 = vld [vmem:[%s2780 + $0xf2] sm:$0xff]
      %v2930 = vld [vmem:[%s2780 + $0xfa] sm:$0xff]
      %v2931 = vld [vmem:[%s2780 + $0x10a] sm:$0xff]
      %v2932 = vld [vmem:[%s2780 + $0x112] sm:$0xff]
      %v2933 = vld [vmem:[%s2780 + $0x122] sm:$0xff]
      %v2934 = vld [vmem:[%s2780 + $0x12a] sm:$0xff]
      %v2935 = vld [vmem:[%s2780 + $0x13a] sm:$0xff]
      %v2936 = vld [vmem:[%s2780 + $0x142] sm:$0xff]
      %v2937 = vld [vmem:[%s2780 + $0x152] sm:$0xff]
      %v2938 = vld [vmem:[%s2780 + $0x15a] sm:$0xff]
      %v2939 = vld [vmem:[%s2780 + $0x16a] sm:$0xff]
      %v2940 = vld [vmem:[%s2780 + $0x172] sm:$0xff]
      %2973 = vrot.lane.b32.xlu0 %v2396, 4
      %v2974 = vpop.permute.xlu0 %2973
      %2975 = vrot.lane.b32.xlu0 %v2397, 4
      %v2976 = vpop.permute.xlu0 %2975
      %2977 = vrot.lane.b32.xlu0 %v2398, 4
      %v2978 = vpop.permute.xlu0 %2977
      %2979 = vrot.lane.b32.xlu0 %v2399, 4
      %v2980 = vpop.permute.xlu0 %2979
      %2981 = vrot.lane.b32.xlu0 %v2400, 4
      %v2982 = vpop.permute.xlu0 %2981
      %2983 = vrot.lane.b32.xlu0 %v2401, 4
      %v2984 = vpop.permute.xlu0 %2983
      %2985 = vrot.lane.b32.xlu0 %v2402, 4
      %v2986 = vpop.permute.xlu0 %2985
      %2987 = vrot.lane.b32.xlu0 %v2403, 4
      %v2988 = vpop.permute.xlu0 %2987
      %2989 = vrot.lane.b32.xlu0 %v2404, 4
      %v2990 = vpop.permute.xlu0 %2989
      %2991 = vrot.lane.b32.xlu0 %v2405, 4
      %v2992 = vpop.permute.xlu0 %2991
      %2993 = vrot.lane.b32.xlu0 %v2406, 4
      %v2994 = vpop.permute.xlu0 %2993
      %2995 = vrot.lane.b32.xlu0 %v2407, 4
      %v2996 = vpop.permute.xlu0 %2995
      %2997 = vrot.lane.b32.xlu0 %v2408, 4
      %v2998 = vpop.permute.xlu0 %2997
      %2999 = vrot.lane.b32.xlu0 %v2409, 4
      %v3000 = vpop.permute.xlu0 %2999
      %3001 = vrot.lane.b32.xlu0 %v2410, 4
      %v3002 = vpop.permute.xlu0 %3001
      %3003 = vrot.lane.b32.xlu0 %v2411, 4
      %v3004 = vpop.permute.xlu0 %3003
      %3005 = vrot.lane.b32.xlu0 %v2412, 4
      %v3006 = vpop.permute.xlu0 %3005
      %3007 = vrot.lane.b32.xlu0 %v2413, 4
      %v3008 = vpop.permute.xlu0 %3007
      %3009 = vrot.lane.b32.xlu0 %v2414, 4
      %v3010 = vpop.permute.xlu0 %3009
      %3011 = vrot.lane.b32.xlu0 %v2415, 4
      %v3012 = vpop.permute.xlu0 %3011
      %3013 = vrot.lane.b32.xlu0 %v2416, 4
      %v3014 = vpop.permute.xlu0 %3013
      %3015 = vrot.lane.b32.xlu0 %v2417, 4
      %v3016 = vpop.permute.xlu0 %3015
      %3017 = vrot.lane.b32.xlu0 %v2418, 4
      %v3018 = vpop.permute.xlu0 %3017
      %3019 = vrot.lane.b32.xlu0 %v2419, 4
      %v3020 = vpop.permute.xlu0 %3019
      %3021 = vrot.lane.b32.xlu0 %v2420, 4
      %v3022 = vpop.permute.xlu0 %3021
      %3023 = vrot.lane.b32.xlu0 %v2421, 4
      %v3024 = vpop.permute.xlu0 %3023
      %3025 = vrot.lane.b32.xlu0 %v2422, 4
      %v3026 = vpop.permute.xlu0 %3025
      %3027 = vrot.lane.b32.xlu0 %v2423, 4
      %v3028 = vpop.permute.xlu0 %3027
      %3029 = vrot.lane.b32.xlu0 %v2424, 4
      %v3030 = vpop.permute.xlu0 %3029
      %3031 = vrot.lane.b32.xlu0 %v2425, 4
      %v3032 = vpop.permute.xlu0 %3031
      %3033 = vrot.lane.b32.xlu0 %v2426, 4
      %v3034 = vpop.permute.xlu0 %3033
      %3035 = vrot.lane.b32.xlu0 %v2427, 4
      %v3036 = vpop.permute.xlu0 %3035
      %3101 = vrot.lane.b32.xlu0 %v2428, 8
      %v3102 = vpop.permute.xlu0 %3101
      %3103 = vrot.lane.b32.xlu0 %v2429, 8
      %v3104 = vpop.permute.xlu0 %3103
      %3105 = vrot.lane.b32.xlu0 %v2430, 8
      %v3106 = vpop.permute.xlu0 %3105
      %3107 = vrot.lane.b32.xlu0 %v2431, 8
      %v3108 = vpop.permute.xlu0 %3107
      %3109 = vrot.lane.b32.xlu0 %v2432, 8
      %v3110 = vpop.permute.xlu0 %3109
      %3111 = vrot.lane.b32.xlu0 %v2433, 8
      %v3112 = vpop.permute.xlu0 %3111
      %3113 = vrot.lane.b32.xlu0 %v2434, 8
      %v3114 = vpop.permute.xlu0 %3113
      %3115 = vrot.lane.b32.xlu0 %v2435, 8
      %v3116 = vpop.permute.xlu0 %3115
      %3117 = vrot.lane.b32.xlu0 %v2436, 8
      %v3118 = vpop.permute.xlu0 %3117
      %3119 = vrot.lane.b32.xlu0 %v2437, 8
      %v3120 = vpop.permute.xlu0 %3119
      %3121 = vrot.lane.b32.xlu0 %v2438, 8
      %v3122 = vpop.permute.xlu0 %3121
      %3123 = vrot.lane.b32.xlu0 %v2439, 8
      %v3124 = vpop.permute.xlu0 %3123
      %3125 = vrot.lane.b32.xlu0 %v2440, 8
      %v3126 = vpop.permute.xlu0 %3125
      %3127 = vrot.lane.b32.xlu0 %v2441, 8
      %v3128 = vpop.permute.xlu0 %3127
      %3129 = vrot.lane.b32.xlu0 %v2442, 8
      %v3130 = vpop.permute.xlu0 %3129
      %3131 = vrot.lane.b32.xlu0 %v2443, 8
      %v3132 = vpop.permute.xlu0 %3131
      %3133 = vrot.lane.b32.xlu0 %v2444, 8
      %v3134 = vpop.permute.xlu0 %3133
      %3135 = vrot.lane.b32.xlu0 %v2445, 8
      %v3136 = vpop.permute.xlu0 %3135
      %3137 = vrot.lane.b32.xlu0 %v2446, 8
      %v3138 = vpop.permute.xlu0 %3137
      %3139 = vrot.lane.b32.xlu0 %v2447, 8
      %v3140 = vpop.permute.xlu0 %3139
      %3141 = vrot.lane.b32.xlu0 %v2448, 8
      %v3142 = vpop.permute.xlu0 %3141
      %3143 = vrot.lane.b32.xlu0 %v2449, 8
      %v3144 = vpop.permute.xlu0 %3143
      %3145 = vrot.lane.b32.xlu0 %v2450, 8
      %v3146 = vpop.permute.xlu0 %3145
      %3147 = vrot.lane.b32.xlu0 %v2451, 8
      %v3148 = vpop.permute.xlu0 %3147
      %3149 = vrot.lane.b32.xlu0 %v2452, 8
      %v3150 = vpop.permute.xlu0 %3149
      %3151 = vrot.lane.b32.xlu0 %v2453, 8
      %v3152 = vpop.permute.xlu0 %3151
      %3153 = vrot.lane.b32.xlu0 %v2454, 8
      %v3154 = vpop.permute.xlu0 %3153
      %3155 = vrot.lane.b32.xlu0 %v2455, 8
      %v3156 = vpop.permute.xlu0 %3155
      %3157 = vrot.lane.b32.xlu0 %v2456, 8
      %v3158 = vpop.permute.xlu0 %3157
      %3159 = vrot.lane.b32.xlu0 %v2457, 8
      %v3160 = vpop.permute.xlu0 %3159
      %3161 = vrot.lane.b32.xlu0 %v2458, 8
      %v3162 = vpop.permute.xlu0 %3161
      %3163 = vrot.lane.b32.xlu0 %v2459, 8
      %v3164 = vpop.permute.xlu0 %3163
      %3229 = vrot.lane.b32.xlu0 %v2460, 12
      %v3230 = vpop.permute.xlu0 %3229
      %3231 = vrot.lane.b32.xlu0 %v2461, 12
      %v3232 = vpop.permute.xlu0 %3231
      %3233 = vrot.lane.b32.xlu0 %v2462, 12
      %v3234 = vpop.permute.xlu0 %3233
      %3235 = vrot.lane.b32.xlu0 %v2463, 12
      %v3236 = vpop.permute.xlu0 %3235
      %3237 = vrot.lane.b32.xlu0 %v2464, 12
      %v3238 = vpop.permute.xlu0 %3237
      %3239 = vrot.lane.b32.xlu0 %v2465, 12
      %v3240 = vpop.permute.xlu0 %3239
      %3241 = vrot.lane.b32.xlu0 %v2466, 12
      %v3242 = vpop.permute.xlu0 %3241
      %3243 = vrot.lane.b32.xlu0 %v2467, 12
      %v3244 = vpop.permute.xlu0 %3243
      %3245 = vrot.lane.b32.xlu0 %v2468, 12
      %v3246 = vpop.permute.xlu0 %3245
      %3247 = vrot.lane.b32.xlu0 %v2469, 12
      %v3248 = vpop.permute.xlu0 %3247
      %3249 = vrot.lane.b32.xlu0 %v2470, 12
      %v3250 = vpop.permute.xlu0 %3249
      %3251 = vrot.lane.b32.xlu0 %v2471, 12
      %v3252 = vpop.permute.xlu0 %3251
      %3253 = vrot.lane.b32.xlu0 %v2472, 12
      %v3254 = vpop.permute.xlu0 %3253
      %3255 = vrot.lane.b32.xlu0 %v2473, 12
      %v3256 = vpop.permute.xlu0 %3255
      %3257 = vrot.lane.b32.xlu0 %v2474, 12
      %v3258 = vpop.permute.xlu0 %3257
      %3259 = vrot.lane.b32.xlu0 %v2475, 12
      %v3260 = vpop.permute.xlu0 %3259
      %3261 = vrot.lane.b32.xlu0 %v2476, 12
      %v3262 = vpop.permute.xlu0 %3261
      %3263 = vrot.lane.b32.xlu0 %v2477, 12
      %v3264 = vpop.permute.xlu0 %3263
      %3265 = vrot.lane.b32.xlu0 %v2478, 12
      %v3266 = vpop.permute.xlu0 %3265
      %3267 = vrot.lane.b32.xlu0 %v2479, 12
      %v3268 = vpop.permute.xlu0 %3267
      %3269 = vrot.lane.b32.xlu0 %v2480, 12
      %v3270 = vpop.permute.xlu0 %3269
      %3271 = vrot.lane.b32.xlu0 %v2481, 12
      %v3272 = vpop.permute.xlu0 %3271
      %3273 = vrot.lane.b32.xlu0 %v2482, 12
      %v3274 = vpop.permute.xlu0 %3273
      %3275 = vrot.lane.b32.xlu0 %v2483, 12
      %v3276 = vpop.permute.xlu0 %3275
      %3277 = vrot.lane.b32.xlu0 %v2484, 12
      %v3278 = vpop.permute.xlu0 %3277
      %3279 = vrot.lane.b32.xlu0 %v2485, 12
      %v3280 = vpop.permute.xlu0 %3279
      %3281 = vrot.lane.b32.xlu0 %v2486, 12
      %v3282 = vpop.permute.xlu0 %3281
      %3283 = vrot.lane.b32.xlu0 %v2487, 12
      %v3284 = vpop.permute.xlu0 %3283
      %3285 = vrot.lane.b32.xlu0 %v2488, 12
      %v3286 = vpop.permute.xlu0 %3285
      %3287 = vrot.lane.b32.xlu0 %v2489, 12
      %v3288 = vpop.permute.xlu0 %3287
      %3289 = vrot.lane.b32.xlu0 %v2490, 12
      %v3290 = vpop.permute.xlu0 %3289
      %3291 = vrot.lane.b32.xlu0 %v2491, 12
      %v3292 = vpop.permute.xlu0 %3291
      %3357 = vrot.lane.b32.xlu0 %v2492, 16
      %v3358 = vpop.permute.xlu0 %3357
      %3359 = vrot.lane.b32.xlu0 %v2493, 16
      %v3360 = vpop.permute.xlu0 %3359
      %3361 = vrot.lane.b32.xlu0 %v2494, 16
      %v3362 = vpop.permute.xlu0 %3361
      %3363 = vrot.lane.b32.xlu0 %v2495, 16
      %v3364 = vpop.permute.xlu0 %3363
      %3365 = vrot.lane.b32.xlu0 %v2496, 16
      %v3366 = vpop.permute.xlu0 %3365
      %3367 = vrot.lane.b32.xlu0 %v2497, 16
      %v3368 = vpop.permute.xlu0 %3367
      %3369 = vrot.lane.b32.xlu0 %v2498, 16
      %v3370 = vpop.permute.xlu0 %3369
      %3371 = vrot.lane.b32.xlu0 %v2499, 16
      %v3372 = vpop.permute.xlu0 %3371
      %3373 = vrot.lane.b32.xlu0 %v2500, 16
      %v3374 = vpop.permute.xlu0 %3373
      %3375 = vrot.lane.b32.xlu0 %v2501, 16
      %v3376 = vpop.permute.xlu0 %3375
      %3377 = vrot.lane.b32.xlu0 %v2502, 16
      %v3378 = vpop.permute.xlu0 %3377
      %3379 = vrot.lane.b32.xlu0 %v2503, 16
      %v3380 = vpop.permute.xlu0 %3379
      %3381 = vrot.lane.b32.xlu0 %v2504, 16
      %v3382 = vpop.permute.xlu0 %3381
      %3383 = vrot.lane.b32.xlu0 %v2505, 16
      %v3384 = vpop.permute.xlu0 %3383
      %3385 = vrot.lane.b32.xlu0 %v2506, 16
      %v3386 = vpop.permute.xlu0 %3385
      %3387 = vrot.lane.b32.xlu0 %v2507, 16
      %v3388 = vpop.permute.xlu0 %3387
      %3389 = vrot.lane.b32.xlu0 %v2508, 16
      %v3390 = vpop.permute.xlu0 %3389
      %3391 = vrot.lane.b32.xlu0 %v2509, 16
      %v3392 = vpop.permute.xlu0 %3391
      %3393 = vrot.lane.b32.xlu0 %v2510, 16
      %v3394 = vpop.permute.xlu0 %3393
      %3395 = vrot.lane.b32.xlu0 %v2511, 16
      %v3396 = vpop.permute.xlu0 %3395
      %3397 = vrot.lane.b32.xlu0 %v2512, 16
      %v3398 = vpop.permute.xlu0 %3397
      %3399 = vrot.lane.b32.xlu0 %v2513, 16
      %v3400 = vpop.permute.xlu0 %3399
      %3401 = vrot.lane.b32.xlu0 %v2514, 16
      %v3402 = vpop.permute.xlu0 %3401
      %3403 = vrot.lane.b32.xlu0 %v2515, 16
      %v3404 = vpop.permute.xlu0 %3403
      %3405 = vrot.lane.b32.xlu0 %v2516, 16
      %v3406 = vpop.permute.xlu0 %3405
      %3407 = vrot.lane.b32.xlu0 %v2517, 16
      %v3408 = vpop.permute.xlu0 %3407
      %3409 = vrot.lane.b32.xlu0 %v2518, 16
      %v3410 = vpop.permute.xlu0 %3409
      %3411 = vrot.lane.b32.xlu0 %v2519, 16
      %v3412 = vpop.permute.xlu0 %3411
      %3413 = vrot.lane.b32.xlu0 %v2520, 16
      %v3414 = vpop.permute.xlu0 %3413
      %3415 = vrot.lane.b32.xlu0 %v2521, 16
      %v3416 = vpop.permute.xlu0 %3415
      %3417 = vrot.lane.b32.xlu0 %v2522, 16
      %v3418 = vpop.permute.xlu0 %3417
      %3419 = vrot.lane.b32.xlu0 %v2523, 16
      %v3420 = vpop.permute.xlu0 %3419
      %3485 = vrot.lane.b32.xlu0 %v2524, 20
      %v3486 = vpop.permute.xlu0 %3485
      %3487 = vrot.lane.b32.xlu0 %v2525, 20
      %v3488 = vpop.permute.xlu0 %3487
      %3489 = vrot.lane.b32.xlu0 %v2526, 20
      %v3490 = vpop.permute.xlu0 %3489
      %3491 = vrot.lane.b32.xlu0 %v2527, 20
      %v3492 = vpop.permute.xlu0 %3491
      %3493 = vrot.lane.b32.xlu0 %v2528, 20
      %v3494 = vpop.permute.xlu0 %3493
      %3495 = vrot.lane.b32.xlu0 %v2529, 20
      %v3496 = vpop.permute.xlu0 %3495
      %3497 = vrot.lane.b32.xlu0 %v2530, 20
      %v3498 = vpop.permute.xlu0 %3497
      %3499 = vrot.lane.b32.xlu0 %v2531, 20
      %v3500 = vpop.permute.xlu0 %3499
      %3501 = vrot.lane.b32.xlu0 %v2532, 20
      %v3502 = vpop.permute.xlu0 %3501
      %3503 = vrot.lane.b32.xlu0 %v2533, 20
      %v3504 = vpop.permute.xlu0 %3503
      %3505 = vrot.lane.b32.xlu0 %v2534, 20
      %v3506 = vpop.permute.xlu0 %3505
      %3507 = vrot.lane.b32.xlu0 %v2535, 20
      %v3508 = vpop.permute.xlu0 %3507
      %3509 = vrot.lane.b32.xlu0 %v2536, 20
      %v3510 = vpop.permute.xlu0 %3509
      %3511 = vrot.lane.b32.xlu0 %v2537, 20
      %v3512 = vpop.permute.xlu0 %3511
      %3513 = vrot.lane.b32.xlu0 %v2538, 20
      %v3514 = vpop.permute.xlu0 %3513
      %3515 = vrot.lane.b32.xlu0 %v2539, 20
      %v3516 = vpop.permute.xlu0 %3515
      %3517 = vrot.lane.b32.xlu0 %v2540, 20
      %v3518 = vpop.permute.xlu0 %3517
      %3519 = vrot.lane.b32.xlu0 %v2541, 20
      %v3520 = vpop.permute.xlu0 %3519
      %3521 = vrot.lane.b32.xlu0 %v2542, 20
      %v3522 = vpop.permute.xlu0 %3521
      %3523 = vrot.lane.b32.xlu0 %v2543, 20
      %v3524 = vpop.permute.xlu0 %3523
      %3525 = vrot.lane.b32.xlu0 %v2544, 20
      %v3526 = vpop.permute.xlu0 %3525
      %3527 = vrot.lane.b32.xlu0 %v2545, 20
      %v3528 = vpop.permute.xlu0 %3527
      %3529 = vrot.lane.b32.xlu0 %v2546, 20
      %v3530 = vpop.permute.xlu0 %3529
      %3531 = vrot.lane.b32.xlu0 %v2547, 20
      %v3532 = vpop.permute.xlu0 %3531
      %3533 = vrot.lane.b32.xlu0 %v2548, 20
      %v3534 = vpop.permute.xlu0 %3533
      %3535 = vrot.lane.b32.xlu0 %v2549, 20
      %v3536 = vpop.permute.xlu0 %3535
      %3537 = vrot.lane.b32.xlu0 %v2550, 20
      %v3538 = vpop.permute.xlu0 %3537
      %3539 = vrot.lane.b32.xlu0 %v2551, 20
      %v3540 = vpop.permute.xlu0 %3539
      %3541 = vrot.lane.b32.xlu0 %v2552, 20
      %v3542 = vpop.permute.xlu0 %3541
      %3543 = vrot.lane.b32.xlu0 %v2553, 20
      %v3544 = vpop.permute.xlu0 %3543
      %3545 = vrot.lane.b32.xlu0 %v2554, 20
      %v3546 = vpop.permute.xlu0 %3545
      %3547 = vrot.lane.b32.xlu0 %v2555, 20
      %v3548 = vpop.permute.xlu0 %3547
      %3613 = vrot.lane.b32.xlu0 %v2556, 24
      %v3614 = vpop.permute.xlu0 %3613
      %3615 = vrot.lane.b32.xlu0 %v2557, 24
      %v3616 = vpop.permute.xlu0 %3615
      %3617 = vrot.lane.b32.xlu0 %v2558, 24
      %v3618 = vpop.permute.xlu0 %3617
      %3619 = vrot.lane.b32.xlu0 %v2559, 24
      %v3620 = vpop.permute.xlu0 %3619
      %3621 = vrot.lane.b32.xlu0 %v2560, 24
      %v3622 = vpop.permute.xlu0 %3621
      %3623 = vrot.lane.b32.xlu0 %v2561, 24
      %v3624 = vpop.permute.xlu0 %3623
      %3625 = vrot.lane.b32.xlu0 %v2562, 24
      %v3626 = vpop.permute.xlu0 %3625
      %3627 = vrot.lane.b32.xlu0 %v2563, 24
      %v3628 = vpop.permute.xlu0 %3627
      %3629 = vrot.lane.b32.xlu0 %v2564, 24
      %v3630 = vpop.permute.xlu0 %3629
      %3631 = vrot.lane.b32.xlu0 %v2565, 24
      %v3632 = vpop.permute.xlu0 %3631
      %3633 = vrot.lane.b32.xlu0 %v2566, 24
      %v3634 = vpop.permute.xlu0 %3633
      %3635 = vrot.lane.b32.xlu0 %v2567, 24
      %v3636 = vpop.permute.xlu0 %3635
      %3637 = vrot.lane.b32.xlu0 %v2568, 24
      %v3638 = vpop.permute.xlu0 %3637
      %3639 = vrot.lane.b32.xlu0 %v2569, 24
      %v3640 = vpop.permute.xlu0 %3639
      %3641 = vrot.lane.b32.xlu0 %v2570, 24
      %v3642 = vpop.permute.xlu0 %3641
      %3643 = vrot.lane.b32.xlu0 %v2571, 24
      %v3644 = vpop.permute.xlu0 %3643
      %3645 = vrot.lane.b32.xlu0 %v2572, 24
      %v3646 = vpop.permute.xlu0 %3645
      %3647 = vrot.lane.b32.xlu0 %v2573, 24
      %v3648 = vpop.permute.xlu0 %3647
      %3649 = vrot.lane.b32.xlu0 %v2574, 24
      %v3650 = vpop.permute.xlu0 %3649
      %3651 = vrot.lane.b32.xlu0 %v2575, 24
      %v3652 = vpop.permute.xlu0 %3651
      %3653 = vrot.lane.b32.xlu0 %v2576, 24
      %v3654 = vpop.permute.xlu0 %3653
      %3655 = vrot.lane.b32.xlu0 %v2577, 24
      %v3656 = vpop.permute.xlu0 %3655
      %3657 = vrot.lane.b32.xlu0 %v2578, 24
      %v3658 = vpop.permute.xlu0 %3657
      %3659 = vrot.lane.b32.xlu0 %v2579, 24
      %v3660 = vpop.permute.xlu0 %3659
      %3661 = vrot.lane.b32.xlu0 %v2580, 24
      %v3662 = vpop.permute.xlu0 %3661
      %3663 = vrot.lane.b32.xlu0 %v2581, 24
      %v3664 = vpop.permute.xlu0 %3663
      %3665 = vrot.lane.b32.xlu0 %v2582, 24
      %v3666 = vpop.permute.xlu0 %3665
      %3667 = vrot.lane.b32.xlu0 %v2583, 24
      %v3668 = vpop.permute.xlu0 %3667
      %3669 = vrot.lane.b32.xlu0 %v2584, 24
      %v3670 = vpop.permute.xlu0 %3669
      %3671 = vrot.lane.b32.xlu0 %v2585, 24
      %v3672 = vpop.permute.xlu0 %3671
      %3673 = vrot.lane.b32.xlu0 %v2586, 24
      %v3674 = vpop.permute.xlu0 %3673
      %3675 = vrot.lane.b32.xlu0 %v2587, 24
      %v3676 = vpop.permute.xlu0 %3675
      %3741 = vrot.lane.b32.xlu0 %v2588, 28
      %v3742 = vpop.permute.xlu0 %3741
      %3743 = vrot.lane.b32.xlu0 %v2589, 28
      %v3744 = vpop.permute.xlu0 %3743
      %3745 = vrot.lane.b32.xlu0 %v2590, 28
      %v3746 = vpop.permute.xlu0 %3745
      %3747 = vrot.lane.b32.xlu0 %v2591, 28
      %v3748 = vpop.permute.xlu0 %3747
      %3749 = vrot.lane.b32.xlu0 %v2592, 28
      %v3750 = vpop.permute.xlu0 %3749
      %3751 = vrot.lane.b32.xlu0 %v2593, 28
      %v3752 = vpop.permute.xlu0 %3751
      %3753 = vrot.lane.b32.xlu0 %v2594, 28
      %v3754 = vpop.permute.xlu0 %3753
      %3755 = vrot.lane.b32.xlu0 %v2595, 28
      %v3756 = vpop.permute.xlu0 %3755
      %3757 = vrot.lane.b32.xlu0 %v2596, 28
      %v3758 = vpop.permute.xlu0 %3757
      %3759 = vrot.lane.b32.xlu0 %v2597, 28
      %v3760 = vpop.permute.xlu0 %3759
      %3761 = vrot.lane.b32.xlu0 %v2598, 28
      %v3762 = vpop.permute.xlu0 %3761
      %3763 = vrot.lane.b32.xlu0 %v2599, 28
      %v3764 = vpop.permute.xlu0 %3763
      %3765 = vrot.lane.b32.xlu0 %v2600, 28
      %v3766 = vpop.permute.xlu0 %3765
      %3767 = vrot.lane.b32.xlu0 %v2601, 28
      %v3768 = vpop.permute.xlu0 %3767
      %3769 = vrot.lane.b32.xlu0 %v2602, 28
      %v3770 = vpop.permute.xlu0 %3769
      %3771 = vrot.lane.b32.xlu0 %v2603, 28
      %v3772 = vpop.permute.xlu0 %3771
      %3773 = vrot.lane.b32.xlu0 %v2604, 28
      %v3774 = vpop.permute.xlu0 %3773
      %3775 = vrot.lane.b32.xlu0 %v2605, 28
      %v3776 = vpop.permute.xlu0 %3775
      %3777 = vrot.lane.b32.xlu0 %v2606, 28
      %v3778 = vpop.permute.xlu0 %3777
      %3779 = vrot.lane.b32.xlu0 %v2607, 28
      %v3780 = vpop.permute.xlu0 %3779
      %3781 = vrot.lane.b32.xlu0 %v2608, 28
      %v3782 = vpop.permute.xlu0 %3781
      %3783 = vrot.lane.b32.xlu0 %v2609, 28
      %v3784 = vpop.permute.xlu0 %3783
      %3785 = vrot.lane.b32.xlu0 %v2610, 28
      %v3786 = vpop.permute.xlu0 %3785
      %3787 = vrot.lane.b32.xlu0 %v2611, 28
      %v3788 = vpop.permute.xlu0 %3787
      %3789 = vrot.lane.b32.xlu0 %v2612, 28
      %v3790 = vpop.permute.xlu0 %3789
      %3791 = vrot.lane.b32.xlu0 %v2613, 28
      %v3792 = vpop.permute.xlu0 %3791
      %3793 = vrot.lane.b32.xlu0 %v2614, 28
      %v3794 = vpop.permute.xlu0 %3793
      %3795 = vrot.lane.b32.xlu0 %v2615, 28
      %v3796 = vpop.permute.xlu0 %3795
      %3797 = vrot.lane.b32.xlu0 %v2616, 28
      %v3798 = vpop.permute.xlu0 %3797
      %3799 = vrot.lane.b32.xlu0 %v2617, 28
      %v3800 = vpop.permute.xlu0 %3799
      %3801 = vrot.lane.b32.xlu0 %v2618, 28
      %v3802 = vpop.permute.xlu0 %3801
      %3803 = vrot.lane.b32.xlu0 %v2619, 28
      %v3804 = vpop.permute.xlu0 %3803
      %3869 = vrot.lane.b32.xlu0 %v2620, 32
      %v3870 = vpop.permute.xlu0 %3869
      %3871 = vrot.lane.b32.xlu0 %v2621, 32
      %v3872 = vpop.permute.xlu0 %3871
      %3873 = vrot.lane.b32.xlu0 %v2622, 32
      %v3874 = vpop.permute.xlu0 %3873
      %3875 = vrot.lane.b32.xlu0 %v2623, 32
      %v3876 = vpop.permute.xlu0 %3875
      %3877 = vrot.lane.b32.xlu0 %v2624, 32
      %v3878 = vpop.permute.xlu0 %3877
      %3879 = vrot.lane.b32.xlu0 %v2625, 32
      %v3880 = vpop.permute.xlu0 %3879
      %3881 = vrot.lane.b32.xlu0 %v2626, 32
      %v3882 = vpop.permute.xlu0 %3881
      %3883 = vrot.lane.b32.xlu0 %v2627, 32
      %v3884 = vpop.permute.xlu0 %3883
      %3885 = vrot.lane.b32.xlu0 %v2628, 32
      %v3886 = vpop.permute.xlu0 %3885
      %3887 = vrot.lane.b32.xlu0 %v2629, 32
      %v3888 = vpop.permute.xlu0 %3887
      %3889 = vrot.lane.b32.xlu0 %v2630, 32
      %v3890 = vpop.permute.xlu0 %3889
      %3891 = vrot.lane.b32.xlu0 %v2631, 32
      %v3892 = vpop.permute.xlu0 %3891
      %3893 = vrot.lane.b32.xlu0 %v2632, 32
      %v3894 = vpop.permute.xlu0 %3893
      %3895 = vrot.lane.b32.xlu0 %v2633, 32
      %v3896 = vpop.permute.xlu0 %3895
      %3897 = vrot.lane.b32.xlu0 %v2634, 32
      %v3898 = vpop.permute.xlu0 %3897
      %3899 = vrot.lane.b32.xlu0 %v2635, 32
      %v3900 = vpop.permute.xlu0 %3899
      %3901 = vrot.lane.b32.xlu0 %v2636, 32
      %v3902 = vpop.permute.xlu0 %3901
      %3903 = vrot.lane.b32.xlu0 %v2637, 32
      %v3904 = vpop.permute.xlu0 %3903
      %3905 = vrot.lane.b32.xlu0 %v2638, 32
      %v3906 = vpop.permute.xlu0 %3905
      %3907 = vrot.lane.b32.xlu0 %v2639, 32
      %v3908 = vpop.permute.xlu0 %3907
      %3909 = vrot.lane.b32.xlu0 %v2640, 32
      %v3910 = vpop.permute.xlu0 %3909
      %3911 = vrot.lane.b32.xlu0 %v2641, 32
      %v3912 = vpop.permute.xlu0 %3911
      %3913 = vrot.lane.b32.xlu0 %v2642, 32
      %v3914 = vpop.permute.xlu0 %3913
      %3915 = vrot.lane.b32.xlu0 %v2643, 32
      %v3916 = vpop.permute.xlu0 %3915
      %3917 = vrot.lane.b32.xlu0 %v2644, 32
      %v3918 = vpop.permute.xlu0 %3917
      %3919 = vrot.lane.b32.xlu0 %v2645, 32
      %v3920 = vpop.permute.xlu0 %3919
      %3921 = vrot.lane.b32.xlu0 %v2646, 32
      %v3922 = vpop.permute.xlu0 %3921
      %3923 = vrot.lane.b32.xlu0 %v2647, 32
      %v3924 = vpop.permute.xlu0 %3923
      %3925 = vrot.lane.b32.xlu0 %v2648, 32
      %v3926 = vpop.permute.xlu0 %3925
      %3927 = vrot.lane.b32.xlu0 %v2649, 32
      %v3928 = vpop.permute.xlu0 %3927
      %3929 = vrot.lane.b32.xlu0 %v2650, 32
      %v3930 = vpop.permute.xlu0 %3929
      %3931 = vrot.lane.b32.xlu0 %v2651, 32
      %v3932 = vpop.permute.xlu0 %3931
      %3997 = vrot.lane.b32.xlu0 %v2652, 36
      %v3998 = vpop.permute.xlu0 %3997
      %3999 = vrot.lane.b32.xlu0 %v2653, 36
      %v4000 = vpop.permute.xlu0 %3999
      %4001 = vrot.lane.b32.xlu0 %v2654, 36
      %v4002 = vpop.permute.xlu0 %4001
      %4003 = vrot.lane.b32.xlu0 %v2655, 36
      %v4004 = vpop.permute.xlu0 %4003
      %4005 = vrot.lane.b32.xlu0 %v2656, 36
      %v4006 = vpop.permute.xlu0 %4005
      %4007 = vrot.lane.b32.xlu0 %v2657, 36
      %v4008 = vpop.permute.xlu0 %4007
      %4009 = vrot.lane.b32.xlu0 %v2658, 36
      %v4010 = vpop.permute.xlu0 %4009
      %4011 = vrot.lane.b32.xlu0 %v2659, 36
      %v4012 = vpop.permute.xlu0 %4011
      %4013 = vrot.lane.b32.xlu0 %v2660, 36
      %v4014 = vpop.permute.xlu0 %4013
      %4015 = vrot.lane.b32.xlu0 %v2661, 36
      %v4016 = vpop.permute.xlu0 %4015
      %4017 = vrot.lane.b32.xlu0 %v2662, 36
      %v4018 = vpop.permute.xlu0 %4017
      %4019 = vrot.lane.b32.xlu0 %v2663, 36
      %v4020 = vpop.permute.xlu0 %4019
      %4021 = vrot.lane.b32.xlu0 %v2664, 36
      %v4022 = vpop.permute.xlu0 %4021
      %4023 = vrot.lane.b32.xlu0 %v2665, 36
      %v4024 = vpop.permute.xlu0 %4023
      %4025 = vrot.lane.b32.xlu0 %v2666, 36
      %v4026 = vpop.permute.xlu0 %4025
      %4027 = vrot.lane.b32.xlu0 %v2667, 36
      %v4028 = vpop.permute.xlu0 %4027
      %4029 = vrot.lane.b32.xlu0 %v2668, 36
      %v4030 = vpop.permute.xlu0 %4029
      %4031 = vrot.lane.b32.xlu0 %v2669, 36
      %v4032 = vpop.permute.xlu0 %4031
      %4033 = vrot.lane.b32.xlu0 %v2670, 36
      %v4034 = vpop.permute.xlu0 %4033
      %4035 = vrot.lane.b32.xlu0 %v2671, 36
      %v4036 = vpop.permute.xlu0 %4035
      %4037 = vrot.lane.b32.xlu0 %v2672, 36
      %v4038 = vpop.permute.xlu0 %4037
      %4039 = vrot.lane.b32.xlu0 %v2673, 36
      %v4040 = vpop.permute.xlu0 %4039
      %4041 = vrot.lane.b32.xlu0 %v2674, 36
      %v4042 = vpop.permute.xlu0 %4041
      %4043 = vrot.lane.b32.xlu0 %v2675, 36
      %v4044 = vpop.permute.xlu0 %4043
      %4045 = vrot.lane.b32.xlu0 %v2676, 36
      %v4046 = vpop.permute.xlu0 %4045
      %4047 = vrot.lane.b32.xlu0 %v2677, 36
      %v4048 = vpop.permute.xlu0 %4047
      %4049 = vrot.lane.b32.xlu0 %v2678, 36
      %v4050 = vpop.permute.xlu0 %4049
      %4051 = vrot.lane.b32.xlu0 %v2679, 36
      %v4052 = vpop.permute.xlu0 %4051
      %4053 = vrot.lane.b32.xlu0 %v2680, 36
      %v4054 = vpop.permute.xlu0 %4053
      %4055 = vrot.lane.b32.xlu0 %v2681, 36
      %v4056 = vpop.permute.xlu0 %4055
      %4057 = vrot.lane.b32.xlu0 %v2682, 36
      %v4058 = vpop.permute.xlu0 %4057
      %4059 = vrot.lane.b32.xlu0 %v2683, 36
      %v4060 = vpop.permute.xlu0 %4059
      %4125 = vrot.lane.b32.xlu0 %v2684, 40
      %v4126 = vpop.permute.xlu0 %4125
      %4127 = vrot.lane.b32.xlu0 %v2685, 40
      %v4128 = vpop.permute.xlu0 %4127
      %4129 = vrot.lane.b32.xlu0 %v2686, 40
      %v4130 = vpop.permute.xlu0 %4129
      %4131 = vrot.lane.b32.xlu0 %v2687, 40
      %v4132 = vpop.permute.xlu0 %4131
      %4133 = vrot.lane.b32.xlu0 %v2688, 40
      %v4134 = vpop.permute.xlu0 %4133
      %4135 = vrot.lane.b32.xlu0 %v2689, 40
      %v4136 = vpop.permute.xlu0 %4135
      %4137 = vrot.lane.b32.xlu0 %v2690, 40
      %v4138 = vpop.permute.xlu0 %4137
      %4139 = vrot.lane.b32.xlu0 %v2691, 40
      %v4140 = vpop.permute.xlu0 %4139
      %4141 = vrot.lane.b32.xlu0 %v2692, 40
      %v4142 = vpop.permute.xlu0 %4141
      %4143 = vrot.lane.b32.xlu0 %v2693, 40
      %v4144 = vpop.permute.xlu0 %4143
      %4145 = vrot.lane.b32.xlu0 %v2694, 40
      %v4146 = vpop.permute.xlu0 %4145
      %4147 = vrot.lane.b32.xlu0 %v2695, 40
      %v4148 = vpop.permute.xlu0 %4147
      %4149 = vrot.lane.b32.xlu0 %v2696, 40
      %v4150 = vpop.permute.xlu0 %4149
      %4151 = vrot.lane.b32.xlu0 %v2697, 40
      %v4152 = vpop.permute.xlu0 %4151
      %4153 = vrot.lane.b32.xlu0 %v2698, 40
      %v4154 = vpop.permute.xlu0 %4153
      %4155 = vrot.lane.b32.xlu0 %v2699, 40
      %v4156 = vpop.permute.xlu0 %4155
      %4157 = vrot.lane.b32.xlu0 %v2700, 40
      %v4158 = vpop.permute.xlu0 %4157
      %4159 = vrot.lane.b32.xlu0 %v2701, 40
      %v4160 = vpop.permute.xlu0 %4159
      %4161 = vrot.lane.b32.xlu0 %v2702, 40
      %v4162 = vpop.permute.xlu0 %4161
      %4163 = vrot.lane.b32.xlu0 %v2703, 40
      %v4164 = vpop.permute.xlu0 %4163
      %4165 = vrot.lane.b32.xlu0 %v2704, 40
      %v4166 = vpop.permute.xlu0 %4165
      %4167 = vrot.lane.b32.xlu0 %v2705, 40
      %v4168 = vpop.permute.xlu0 %4167
      %4169 = vrot.lane.b32.xlu0 %v2706, 40
      %v4170 = vpop.permute.xlu0 %4169
      %4171 = vrot.lane.b32.xlu0 %v2707, 40
      %v4172 = vpop.permute.xlu0 %4171
      %4173 = vrot.lane.b32.xlu0 %v2708, 40
      %v4174 = vpop.permute.xlu0 %4173
      %4175 = vrot.lane.b32.xlu0 %v2709, 40
      %v4176 = vpop.permute.xlu0 %4175
      %4177 = vrot.lane.b32.xlu0 %v2710, 40
      %v4178 = vpop.permute.xlu0 %4177
      %4179 = vrot.lane.b32.xlu0 %v2711, 40
      %v4180 = vpop.permute.xlu0 %4179
      %4181 = vrot.lane.b32.xlu0 %v2712, 40
      %v4182 = vpop.permute.xlu0 %4181
      %4183 = vrot.lane.b32.xlu0 %v2713, 40
      %v4184 = vpop.permute.xlu0 %4183
      %4185 = vrot.lane.b32.xlu0 %v2714, 40
      %v4186 = vpop.permute.xlu0 %4185
      %4187 = vrot.lane.b32.xlu0 %v2715, 40
      %v4188 = vpop.permute.xlu0 %4187
      %4253 = vrot.lane.b32.xlu0 %v2716, 44
      %v4254 = vpop.permute.xlu0 %4253
      %4255 = vrot.lane.b32.xlu0 %v2717, 44
      %v4256 = vpop.permute.xlu0 %4255
      %4257 = vrot.lane.b32.xlu0 %v2718, 44
      %v4258 = vpop.permute.xlu0 %4257
      %4259 = vrot.lane.b32.xlu0 %v2719, 44
      %v4260 = vpop.permute.xlu0 %4259
      %4261 = vrot.lane.b32.xlu0 %v2720, 44
      %v4262 = vpop.permute.xlu0 %4261
      %4263 = vrot.lane.b32.xlu0 %v2721, 44
      %v4264 = vpop.permute.xlu0 %4263
      %4265 = vrot.lane.b32.xlu0 %v2722, 44
      %v4266 = vpop.permute.xlu0 %4265
      %4267 = vrot.lane.b32.xlu0 %v2723, 44
      %v4268 = vpop.permute.xlu0 %4267
      %4269 = vrot.lane.b32.xlu0 %v2724, 44
      %v4270 = vpop.permute.xlu0 %4269
      %4271 = vrot.lane.b32.xlu0 %v2725, 44
      %v4272 = vpop.permute.xlu0 %4271
      %4273 = vrot.lane.b32.xlu0 %v2726, 44
      %v4274 = vpop.permute.xlu0 %4273
      %4275 = vrot.lane.b32.xlu0 %v2727, 44
      %v4276 = vpop.permute.xlu0 %4275
      %4277 = vrot.lane.b32.xlu0 %v2728, 44
      %v4278 = vpop.permute.xlu0 %4277
      %4279 = vrot.lane.b32.xlu0 %v2729, 44
      %v4280 = vpop.permute.xlu0 %4279
      %4281 = vrot.lane.b32.xlu0 %v2730, 44
      %v4282 = vpop.permute.xlu0 %4281
      %4283 = vrot.lane.b32.xlu0 %v2731, 44
      %v4284 = vpop.permute.xlu0 %4283
      %4285 = vrot.lane.b32.xlu0 %v2732, 44
      %v4286 = vpop.permute.xlu0 %4285
      %4287 = vrot.lane.b32.xlu0 %v2733, 44
      %v4288 = vpop.permute.xlu0 %4287
      %4289 = vrot.lane.b32.xlu0 %v2734, 44
      %v4290 = vpop.permute.xlu0 %4289
      %4291 = vrot.lane.b32.xlu0 %v2735, 44
      %v4292 = vpop.permute.xlu0 %4291
      %4293 = vrot.lane.b32.xlu0 %v2736, 44
      %v4294 = vpop.permute.xlu0 %4293
      %4295 = vrot.lane.b32.xlu0 %v2737, 44
      %v4296 = vpop.permute.xlu0 %4295
      %4297 = vrot.lane.b32.xlu0 %v2738, 44
      %v4298 = vpop.permute.xlu0 %4297
      %4299 = vrot.lane.b32.xlu0 %v2739, 44
      %v4300 = vpop.permute.xlu0 %4299
      %4301 = vrot.lane.b32.xlu0 %v2740, 44
      %v4302 = vpop.permute.xlu0 %4301
      %4303 = vrot.lane.b32.xlu0 %v2741, 44
      %v4304 = vpop.permute.xlu0 %4303
      %4305 = vrot.lane.b32.xlu0 %v2742, 44
      %v4306 = vpop.permute.xlu0 %4305
      %4307 = vrot.lane.b32.xlu0 %v2743, 44
      %v4308 = vpop.permute.xlu0 %4307
      %4309 = vrot.lane.b32.xlu0 %v2744, 44
      %v4310 = vpop.permute.xlu0 %4309
      %4311 = vrot.lane.b32.xlu0 %v2745, 44
      %v4312 = vpop.permute.xlu0 %4311
      %4313 = vrot.lane.b32.xlu0 %v2746, 44
      %v4314 = vpop.permute.xlu0 %4313
      %4315 = vrot.lane.b32.xlu0 %v2747, 44
      %v4316 = vpop.permute.xlu0 %4315
      %4381 = vrot.lane.b32.xlu0 %v2748, 48
      %v4382 = vpop.permute.xlu0 %4381
      %4383 = vrot.lane.b32.xlu0 %v2749, 48
      %v4384 = vpop.permute.xlu0 %4383
      %4385 = vrot.lane.b32.xlu0 %v2750, 48
      %v4386 = vpop.permute.xlu0 %4385
      %4387 = vrot.lane.b32.xlu0 %v2751, 48
      %v4388 = vpop.permute.xlu0 %4387
      %4389 = vrot.lane.b32.xlu0 %v2752, 48
      %v4390 = vpop.permute.xlu0 %4389
      %4391 = vrot.lane.b32.xlu0 %v2753, 48
      %v4392 = vpop.permute.xlu0 %4391
      %4393 = vrot.lane.b32.xlu0 %v2754, 48
      %v4394 = vpop.permute.xlu0 %4393
      %4395 = vrot.lane.b32.xlu0 %v2755, 48
      %v4396 = vpop.permute.xlu0 %4395
      %4397 = vrot.lane.b32.xlu0 %v2756, 48
      %v4398 = vpop.permute.xlu0 %4397
      %4399 = vrot.lane.b32.xlu0 %v2757, 48
      %v4400 = vpop.permute.xlu0 %4399
      %4401 = vrot.lane.b32.xlu0 %v2758, 48
      %v4402 = vpop.permute.xlu0 %4401
      %4403 = vrot.lane.b32.xlu0 %v2759, 48
      %v4404 = vpop.permute.xlu0 %4403
      %4405 = vrot.lane.b32.xlu0 %v2760, 48
      %v4406 = vpop.permute.xlu0 %4405
      %4407 = vrot.lane.b32.xlu0 %v2761, 48
      %v4408 = vpop.permute.xlu0 %4407
      %4409 = vrot.lane.b32.xlu0 %v2762, 48
      %v4410 = vpop.permute.xlu0 %4409
      %4411 = vrot.lane.b32.xlu0 %v2763, 48
      %v4412 = vpop.permute.xlu0 %4411
      %4413 = vrot.lane.b32.xlu0 %v2764, 48
      %v4414 = vpop.permute.xlu0 %4413
      %4415 = vrot.lane.b32.xlu0 %v2765, 48
      %v4416 = vpop.permute.xlu0 %4415
      %4417 = vrot.lane.b32.xlu0 %v2766, 48
      %v4418 = vpop.permute.xlu0 %4417
      %4419 = vrot.lane.b32.xlu0 %v2767, 48
      %v4420 = vpop.permute.xlu0 %4419
      %4421 = vrot.lane.b32.xlu0 %v2768, 48
      %v4422 = vpop.permute.xlu0 %4421
      %4423 = vrot.lane.b32.xlu0 %v2769, 48
      %v4424 = vpop.permute.xlu0 %4423
      %4425 = vrot.lane.b32.xlu0 %v2770, 48
      %v4426 = vpop.permute.xlu0 %4425
      %4427 = vrot.lane.b32.xlu0 %v2771, 48
      %v4428 = vpop.permute.xlu0 %4427
      %4429 = vrot.lane.b32.xlu0 %v2772, 48
      %v4430 = vpop.permute.xlu0 %4429
      %4431 = vrot.lane.b32.xlu0 %v2773, 48
      %v4432 = vpop.permute.xlu0 %4431
      %4433 = vrot.lane.b32.xlu0 %v2774, 48
      %v4434 = vpop.permute.xlu0 %4433
      %4435 = vrot.lane.b32.xlu0 %v2775, 48
      %v4436 = vpop.permute.xlu0 %4435
      %4437 = vrot.lane.b32.xlu0 %v2776, 48
      %v4438 = vpop.permute.xlu0 %4437
      %4439 = vrot.lane.b32.xlu0 %v2777, 48
      %v4440 = vpop.permute.xlu0 %4439
      %4441 = vrot.lane.b32.xlu0 %v2778, 48
      %v4442 = vpop.permute.xlu0 %4441
      %4443 = vrot.lane.b32.xlu0 %v2779, 48
      %v4444 = vpop.permute.xlu0 %4443
      %4509 = vrot.lane.b32.xlu0 %v2781, 52
      %v4510 = vpop.permute.xlu0 %4509
      %4511 = vrot.lane.b32.xlu0 %v2782, 52
      %v4512 = vpop.permute.xlu0 %4511
      %4513 = vrot.lane.b32.xlu0 %v2783, 52
      %v4514 = vpop.permute.xlu0 %4513
      %4515 = vrot.lane.b32.xlu0 %v2784, 52
      %v4516 = vpop.permute.xlu0 %4515
      %4517 = vrot.lane.b32.xlu0 %v2785, 52
      %v4518 = vpop.permute.xlu0 %4517
      %4519 = vrot.lane.b32.xlu0 %v2786, 52
      %v4520 = vpop.permute.xlu0 %4519
      %4521 = vrot.lane.b32.xlu0 %v2787, 52
      %v4522 = vpop.permute.xlu0 %4521
      %4523 = vrot.lane.b32.xlu0 %v2788, 52
      %v4524 = vpop.permute.xlu0 %4523
      %4525 = vrot.lane.b32.xlu0 %v2789, 52
      %v4526 = vpop.permute.xlu0 %4525
      %4527 = vrot.lane.b32.xlu0 %v2790, 52
      %v4528 = vpop.permute.xlu0 %4527
      %4529 = vrot.lane.b32.xlu0 %v2791, 52
      %v4530 = vpop.permute.xlu0 %4529
      %4531 = vrot.lane.b32.xlu0 %v2792, 52
      %v4532 = vpop.permute.xlu0 %4531
      %4533 = vrot.lane.b32.xlu0 %v2793, 52
      %v4534 = vpop.permute.xlu0 %4533
      %4535 = vrot.lane.b32.xlu0 %v2794, 52
      %v4536 = vpop.permute.xlu0 %4535
      %4537 = vrot.lane.b32.xlu0 %v2795, 52
      %v4538 = vpop.permute.xlu0 %4537
      %4539 = vrot.lane.b32.xlu0 %v2796, 52
      %v4540 = vpop.permute.xlu0 %4539
      %4541 = vrot.lane.b32.xlu0 %v2797, 52
      %v4542 = vpop.permute.xlu0 %4541
      %4543 = vrot.lane.b32.xlu0 %v2798, 52
      %v4544 = vpop.permute.xlu0 %4543
      %4545 = vrot.lane.b32.xlu0 %v2799, 52
      %v4546 = vpop.permute.xlu0 %4545
      %4547 = vrot.lane.b32.xlu0 %v2800, 52
      %v4548 = vpop.permute.xlu0 %4547
      %4549 = vrot.lane.b32.xlu0 %v2801, 52
      %v4550 = vpop.permute.xlu0 %4549
      %4551 = vrot.lane.b32.xlu0 %v2802, 52
      %v4552 = vpop.permute.xlu0 %4551
      %4553 = vrot.lane.b32.xlu0 %v2803, 52
      %v4554 = vpop.permute.xlu0 %4553
      %4555 = vrot.lane.b32.xlu0 %v2804, 52
      %v4556 = vpop.permute.xlu0 %4555
      %4557 = vrot.lane.b32.xlu0 %v2805, 52
      %v4558 = vpop.permute.xlu0 %4557
      %4559 = vrot.lane.b32.xlu0 %v2806, 52
      %v4560 = vpop.permute.xlu0 %4559
      %4561 = vrot.lane.b32.xlu0 %v2807, 52
      %v4562 = vpop.permute.xlu0 %4561
      %4563 = vrot.lane.b32.xlu0 %v2808, 52
      %v4564 = vpop.permute.xlu0 %4563
      %4565 = vrot.lane.b32.xlu0 %v2809, 52
      %v4566 = vpop.permute.xlu0 %4565
      %4567 = vrot.lane.b32.xlu0 %v2810, 52
      %v4568 = vpop.permute.xlu0 %4567
      %4569 = vrot.lane.b32.xlu0 %v2811, 52
      %v4570 = vpop.permute.xlu0 %4569
      %4571 = vrot.lane.b32.xlu0 %v2812, 52
      %v4572 = vpop.permute.xlu0 %4571
      %4637 = vrot.lane.b32.xlu0 %v2813, 56
      %v4638 = vpop.permute.xlu0 %4637
      %4639 = vrot.lane.b32.xlu0 %v2814, 56
      %v4640 = vpop.permute.xlu0 %4639
      %4641 = vrot.lane.b32.xlu0 %v2815, 56
      %v4642 = vpop.permute.xlu0 %4641
      %4643 = vrot.lane.b32.xlu0 %v2816, 56
      %v4644 = vpop.permute.xlu0 %4643
      %4645 = vrot.lane.b32.xlu0 %v2817, 56
      %v4646 = vpop.permute.xlu0 %4645
      %4647 = vrot.lane.b32.xlu0 %v2818, 56
      %v4648 = vpop.permute.xlu0 %4647
      %4649 = vrot.lane.b32.xlu0 %v2819, 56
      %v4650 = vpop.permute.xlu0 %4649
      %4651 = vrot.lane.b32.xlu0 %v2820, 56
      %v4652 = vpop.permute.xlu0 %4651
      %4653 = vrot.lane.b32.xlu0 %v2821, 56
      %v4654 = vpop.permute.xlu0 %4653
      %4655 = vrot.lane.b32.xlu0 %v2822, 56
      %v4656 = vpop.permute.xlu0 %4655
      %4657 = vrot.lane.b32.xlu0 %v2823, 56
      %v4658 = vpop.permute.xlu0 %4657
      %4659 = vrot.lane.b32.xlu0 %v2824, 56
      %v4660 = vpop.permute.xlu0 %4659
      %4661 = vrot.lane.b32.xlu0 %v2825, 56
      %v4662 = vpop.permute.xlu0 %4661
      %4663 = vrot.lane.b32.xlu0 %v2826, 56
      %v4664 = vpop.permute.xlu0 %4663
      %4665 = vrot.lane.b32.xlu0 %v2827, 56
      %v4666 = vpop.permute.xlu0 %4665
      %4667 = vrot.lane.b32.xlu0 %v2828, 56
      %v4668 = vpop.permute.xlu0 %4667
      %4669 = vrot.lane.b32.xlu0 %v2829, 56
      %v4670 = vpop.permute.xlu0 %4669
      %4671 = vrot.lane.b32.xlu0 %v2830, 56
      %v4672 = vpop.permute.xlu0 %4671
      %4673 = vrot.lane.b32.xlu0 %v2831, 56
      %v4674 = vpop.permute.xlu0 %4673
      %4675 = vrot.lane.b32.xlu0 %v2832, 56
      %v4676 = vpop.permute.xlu0 %4675
      %4677 = vrot.lane.b32.xlu0 %v2833, 56
      %v4678 = vpop.permute.xlu0 %4677
      %4679 = vrot.lane.b32.xlu0 %v2834, 56
      %v4680 = vpop.permute.xlu0 %4679
      %4681 = vrot.lane.b32.xlu0 %v2835, 56
      %v4682 = vpop.permute.xlu0 %4681
      %4683 = vrot.lane.b32.xlu0 %v2836, 56
      %v4684 = vpop.permute.xlu0 %4683
      %4685 = vrot.lane.b32.xlu0 %v2837, 56
      %v4686 = vpop.permute.xlu0 %4685
      %4687 = vrot.lane.b32.xlu0 %v2838, 56
      %v4688 = vpop.permute.xlu0 %4687
      %4689 = vrot.lane.b32.xlu0 %v2839, 56
      %v4690 = vpop.permute.xlu0 %4689
      %4691 = vrot.lane.b32.xlu0 %v2840, 56
      %v4692 = vpop.permute.xlu0 %4691
      %4693 = vrot.lane.b32.xlu0 %v2841, 56
      %v4694 = vpop.permute.xlu0 %4693
      %4695 = vrot.lane.b32.xlu0 %v2842, 56
      %v4696 = vpop.permute.xlu0 %4695
      %4697 = vrot.lane.b32.xlu0 %v2843, 56
      %v4698 = vpop.permute.xlu0 %4697
      %4699 = vrot.lane.b32.xlu0 %v2844, 56
      %v4700 = vpop.permute.xlu0 %4699
      %4765 = vrot.lane.b32.xlu0 %v2845, 60
      %v4766 = vpop.permute.xlu0 %4765
      %4767 = vrot.lane.b32.xlu0 %v2846, 60
      %v4768 = vpop.permute.xlu0 %4767
      %4769 = vrot.lane.b32.xlu0 %v2847, 60
      %v4770 = vpop.permute.xlu0 %4769
      %4771 = vrot.lane.b32.xlu0 %v2848, 60
      %v4772 = vpop.permute.xlu0 %4771
      %4773 = vrot.lane.b32.xlu0 %v2849, 60
      %v4774 = vpop.permute.xlu0 %4773
      %4775 = vrot.lane.b32.xlu0 %v2850, 60
      %v4776 = vpop.permute.xlu0 %4775
      %4777 = vrot.lane.b32.xlu0 %v2851, 60
      %v4778 = vpop.permute.xlu0 %4777
      %4779 = vrot.lane.b32.xlu0 %v2852, 60
      %v4780 = vpop.permute.xlu0 %4779
      %4781 = vrot.lane.b32.xlu0 %v2853, 60
      %v4782 = vpop.permute.xlu0 %4781
      %4783 = vrot.lane.b32.xlu0 %v2854, 60
      %v4784 = vpop.permute.xlu0 %4783
      %4785 = vrot.lane.b32.xlu0 %v2855, 60
      %v4786 = vpop.permute.xlu0 %4785
      %4787 = vrot.lane.b32.xlu0 %v2856, 60
      %v4788 = vpop.permute.xlu0 %4787
      %4789 = vrot.lane.b32.xlu0 %v2857, 60
      %v4790 = vpop.permute.xlu0 %4789
      %4791 = vrot.lane.b32.xlu0 %v2858, 60
      %v4792 = vpop.permute.xlu0 %4791
      %4793 = vrot.lane.b32.xlu0 %v2859, 60
      %v4794 = vpop.permute.xlu0 %4793
      %4795 = vrot.lane.b32.xlu0 %v2860, 60
      %v4796 = vpop.permute.xlu0 %4795
      %4797 = vrot.lane.b32.xlu0 %v2861, 60
      %v4798 = vpop.permute.xlu0 %4797
      %4799 = vrot.lane.b32.xlu0 %v2862, 60
      %v4800 = vpop.permute.xlu0 %4799
      %4801 = vrot.lane.b32.xlu0 %v2863, 60
      %v4802 = vpop.permute.xlu0 %4801
      %4803 = vrot.lane.b32.xlu0 %v2864, 60
      %v4804 = vpop.permute.xlu0 %4803
      %4805 = vrot.lane.b32.xlu0 %v2865, 60
      %v4806 = vpop.permute.xlu0 %4805
      %4807 = vrot.lane.b32.xlu0 %v2866, 60
      %v4808 = vpop.permute.xlu0 %4807
      %4809 = vrot.lane.b32.xlu0 %v2867, 60
      %v4810 = vpop.permute.xlu0 %4809
      %4811 = vrot.lane.b32.xlu0 %v2868, 60
      %v4812 = vpop.permute.xlu0 %4811
      %4813 = vrot.lane.b32.xlu0 %v2869, 60
      %v4814 = vpop.permute.xlu0 %4813
      %4815 = vrot.lane.b32.xlu0 %v2870, 60
      %v4816 = vpop.permute.xlu0 %4815
      %4817 = vrot.lane.b32.xlu0 %v2871, 60
      %v4818 = vpop.permute.xlu0 %4817
      %4819 = vrot.lane.b32.xlu0 %v2872, 60
      %v4820 = vpop.permute.xlu0 %4819
      %4821 = vrot.lane.b32.xlu0 %v2873, 60
      %v4822 = vpop.permute.xlu0 %4821
      %4823 = vrot.lane.b32.xlu0 %v2874, 60
      %v4824 = vpop.permute.xlu0 %4823
      %4825 = vrot.lane.b32.xlu0 %v2875, 60
      %v4826 = vpop.permute.xlu0 %4825
      %4827 = vrot.lane.b32.xlu0 %v2876, 60
      %v4828 = vpop.permute.xlu0 %4827
      %v4861 = vsel %vm280, %v2364, %v2974
      %v4862 = vsel %vm280, %v2365, %v2976
      %v4863 = vsel %vm280, %v2366, %v2978
      %v4864 = vsel %vm280, %v2367, %v2980
      %v4865 = vsel %vm280, %v2368, %v2982
      %v4866 = vsel %vm280, %v2369, %v2984
      %v4867 = vsel %vm280, %v2370, %v2986
      %v4868 = vsel %vm280, %v2371, %v2988
      %v4869 = vsel %vm280, %v2372, %v2990
      %v4870 = vsel %vm280, %v2373, %v2992
      %v4871 = vsel %vm280, %v2374, %v2994
      %v4872 = vsel %vm280, %v2375, %v2996
      %v4873 = vsel %vm280, %v2376, %v2998
      %v4874 = vsel %vm280, %v2377, %v3000
      %v4875 = vsel %vm280, %v2378, %v3002
      %v4876 = vsel %vm280, %v2379, %v3004
      %v4877 = vsel %vm280, %v2380, %v3006
      %v4878 = vsel %vm280, %v2381, %v3008
      %v4879 = vsel %vm280, %v2382, %v3010
      %v4880 = vsel %vm280, %v2383, %v3012
      %v4881 = vsel %vm280, %v2384, %v3014
      %v4882 = vsel %vm280, %v2385, %v3016
      %v4883 = vsel %vm280, %v2386, %v3018
      %v4884 = vsel %vm280, %v2387, %v3020
      %v4885 = vsel %vm280, %v2388, %v3022
      %v4886 = vsel %vm280, %v2389, %v3024
      %v4887 = vsel %vm280, %v2390, %v3026
      %v4888 = vsel %vm280, %v2391, %v3028
      %v4889 = vsel %vm280, %v2392, %v3030
      %v4890 = vsel %vm280, %v2393, %v3032
      %v4891 = vsel %vm280, %v2394, %v3034
      %v4892 = vsel %vm280, %v2395, %v3036
      %v4893 = vsel %vm1779, %v4861, %v3102
      %v4894 = vsel %vm1779, %v4862, %v3104
      %v4895 = vsel %vm1779, %v4863, %v3106
      %v4896 = vsel %vm1779, %v4864, %v3108
      %v4897 = vsel %vm1779, %v4865, %v3110
      %v4898 = vsel %vm1779, %v4866, %v3112
      %v4899 = vsel %vm1779, %v4867, %v3114
      %v4900 = vsel %vm1779, %v4868, %v3116
      %v4901 = vsel %vm1779, %v4869, %v3118
      %v4902 = vsel %vm1779, %v4870, %v3120
      %v4903 = vsel %vm1779, %v4871, %v3122
      %v4904 = vsel %vm1779, %v4872, %v3124
      %v4905 = vsel %vm1779, %v4873, %v3126
      %v4906 = vsel %vm1779, %v4874, %v3128
      %v4907 = vsel %vm1779, %v4875, %v3130
      %v4908 = vsel %vm1779, %v4876, %v3132
      %v4909 = vsel %vm1779, %v4877, %v3134
      %v4910 = vsel %vm1779, %v4878, %v3136
      %v4911 = vsel %vm1779, %v4879, %v3138
      %v4912 = vsel %vm1779, %v4880, %v3140
      %v4913 = vsel %vm1779, %v4881, %v3142
      %v4914 = vsel %vm1779, %v4882, %v3144
      %v4915 = vsel %vm1779, %v4883, %v3146
      %v4916 = vsel %vm1779, %v4884, %v3148
      %v4917 = vsel %vm1779, %v4885, %v3150
      %v4918 = vsel %vm1779, %v4886, %v3152
      %v4919 = vsel %vm1779, %v4887, %v3154
      %v4920 = vsel %vm1779, %v4888, %v3156
      %v4921 = vsel %vm1779, %v4889, %v3158
      %v4922 = vsel %vm1779, %v4890, %v3160
      %v4923 = vsel %vm1779, %v4891, %v3162
      %v4924 = vsel %vm1779, %v4892, %v3164
      %v4925 = vsel %vm1812, %v4893, %v3230
      %v4926 = vsel %vm1812, %v4894, %v3232
      %v4927 = vsel %vm1812, %v4895, %v3234
      %v4928 = vsel %vm1812, %v4896, %v3236
      %v4929 = vsel %vm1812, %v4897, %v3238
      %v4930 = vsel %vm1812, %v4898, %v3240
      %v4931 = vsel %vm1812, %v4899, %v3242
      %v4932 = vsel %vm1812, %v4900, %v3244
      %v4933 = vsel %vm1812, %v4901, %v3246
      %v4934 = vsel %vm1812, %v4902, %v3248
      %v4935 = vsel %vm1812, %v4903, %v3250
      %v4936 = vsel %vm1812, %v4904, %v3252
      %v4937 = vsel %vm1812, %v4905, %v3254
      %v4938 = vsel %vm1812, %v4906, %v3256
      %v4939 = vsel %vm1812, %v4907, %v3258
      %v4940 = vsel %vm1812, %v4908, %v3260
      %v4941 = vsel %vm1812, %v4909, %v3262
      %v4942 = vsel %vm1812, %v4910, %v3264
      %v4943 = vsel %vm1812, %v4911, %v3266
      %v4944 = vsel %vm1812, %v4912, %v3268
      %v4945 = vsel %vm1812, %v4913, %v3270
      %v4946 = vsel %vm1812, %v4914, %v3272
      %v4947 = vsel %vm1812, %v4915, %v3274
      %v4948 = vsel %vm1812, %v4916, %v3276
      %v4949 = vsel %vm1812, %v4917, %v3278
      %v4950 = vsel %vm1812, %v4918, %v3280
      %v4951 = vsel %vm1812, %v4919, %v3282
      %v4952 = vsel %vm1812, %v4920, %v3284
      %v4953 = vsel %vm1812, %v4921, %v3286
      %v4954 = vsel %vm1812, %v4922, %v3288
      %v4955 = vsel %vm1812, %v4923, %v3290
      %v4956 = vsel %vm1812, %v4924, %v3292
      %v4957 = vsel %vm1845, %v4925, %v3358
      %v4958 = vsel %vm1845, %v4926, %v3360
      %v4959 = vsel %vm1845, %v4927, %v3362
      %v4960 = vsel %vm1845, %v4928, %v3364
      %v4961 = vsel %vm1845, %v4929, %v3366
      %v4962 = vsel %vm1845, %v4930, %v3368
      %v4963 = vsel %vm1845, %v4931, %v3370
      %v4964 = vsel %vm1845, %v4932, %v3372
      %v4965 = vsel %vm1845, %v4933, %v3374
      %v4966 = vsel %vm1845, %v4934, %v3376
      %v4967 = vsel %vm1845, %v4935, %v3378
      %v4968 = vsel %vm1845, %v4936, %v3380
      %v4969 = vsel %vm1845, %v4937, %v3382
      %v4970 = vsel %vm1845, %v4938, %v3384
      %v4971 = vsel %vm1845, %v4939, %v3386
      %v4972 = vsel %vm1845, %v4940, %v3388
      %v4973 = vsel %vm1845, %v4941, %v3390
      %v4974 = vsel %vm1845, %v4942, %v3392
      %v4975 = vsel %vm1845, %v4943, %v3394
      %v4976 = vsel %vm1845, %v4944, %v3396
      %v4977 = vsel %vm1845, %v4945, %v3398
      %v4978 = vsel %vm1845, %v4946, %v3400
      %v4979 = vsel %vm1845, %v4947, %v3402
      %v4980 = vsel %vm1845, %v4948, %v3404
      %v4981 = vsel %vm1845, %v4949, %v3406
      %v4982 = vsel %vm1845, %v4950, %v3408
      %v4983 = vsel %vm1845, %v4951, %v3410
      %v4984 = vsel %vm1845, %v4952, %v3412
      %v4985 = vsel %vm1845, %v4953, %v3414
      %v4986 = vsel %vm1845, %v4954, %v3416
      %v4987 = vsel %vm1845, %v4955, %v3418
      %v4988 = vsel %vm1845, %v4956, %v3420
      %v4989 = vsel %vm1878, %v4957, %v3486
      %v4990 = vsel %vm1878, %v4958, %v3488
      %v4991 = vsel %vm1878, %v4959, %v3490
      %v4992 = vsel %vm1878, %v4960, %v3492
      %v4993 = vsel %vm1878, %v4961, %v3494
      %v4994 = vsel %vm1878, %v4962, %v3496
      %v4995 = vsel %vm1878, %v4963, %v3498
      %v4996 = vsel %vm1878, %v4964, %v3500
      %v4997 = vsel %vm1878, %v4965, %v3502
      %v4998 = vsel %vm1878, %v4966, %v3504
      %v4999 = vsel %vm1878, %v4967, %v3506
      %v5000 = vsel %vm1878, %v4968, %v3508
      %v5001 = vsel %vm1878, %v4969, %v3510
      %v5002 = vsel %vm1878, %v4970, %v3512
      %v5003 = vsel %vm1878, %v4971, %v3514
      %v5004 = vsel %vm1878, %v4972, %v3516
      %v5005 = vsel %vm1878, %v4973, %v3518
      %v5006 = vsel %vm1878, %v4974, %v3520
      %v5007 = vsel %vm1878, %v4975, %v3522
      %v5008 = vsel %vm1878, %v4976, %v3524
      %v5009 = vsel %vm1878, %v4977, %v3526
      %v5010 = vsel %vm1878, %v4978, %v3528
      %v5011 = vsel %vm1878, %v4979, %v3530
      %v5012 = vsel %vm1878, %v4980, %v3532
      %v5013 = vsel %vm1878, %v4981, %v3534
      %v5014 = vsel %vm1878, %v4982, %v3536
      %v5015 = vsel %vm1878, %v4983, %v3538
      %v5016 = vsel %vm1878, %v4984, %v3540
      %v5017 = vsel %vm1878, %v4985, %v3542
      %v5018 = vsel %vm1878, %v4986, %v3544
      %v5019 = vsel %vm1878, %v4987, %v3546
      %v5020 = vsel %vm1878, %v4988, %v3548
      %v5021 = vsel %vm1911, %v4989, %v3614
      %v5022 = vsel %vm1911, %v4990, %v3616
      %v5023 = vsel %vm1911, %v4991, %v3618
      %v5024 = vsel %vm1911, %v4992, %v3620
      %v5025 = vsel %vm1911, %v4993, %v3622
      %v5026 = vsel %vm1911, %v4994, %v3624
      %v5027 = vsel %vm1911, %v4995, %v3626
      %v5028 = vsel %vm1911, %v4996, %v3628
      %v5029 = vsel %vm1911, %v4997, %v3630
      %v5030 = vsel %vm1911, %v4998, %v3632
      %v5031 = vsel %vm1911, %v4999, %v3634
      %v5032 = vsel %vm1911, %v5000, %v3636
      %v5033 = vsel %vm1911, %v5001, %v3638
      %v5034 = vsel %vm1911, %v5002, %v3640
      %v5035 = vsel %vm1911, %v5003, %v3642
      %v5036 = vsel %vm1911, %v5004, %v3644
      %v5037 = vsel %vm1911, %v5005, %v3646
      %v5038 = vsel %vm1911, %v5006, %v3648
      %v5039 = vsel %vm1911, %v5007, %v3650
      %v5040 = vsel %vm1911, %v5008, %v3652
      %v5041 = vsel %vm1911, %v5009, %v3654
      %v5042 = vsel %vm1911, %v5010, %v3656
      %v5043 = vsel %vm1911, %v5011, %v3658
      %v5044 = vsel %vm1911, %v5012, %v3660
      %v5045 = vsel %vm1911, %v5013, %v3662
      %v5046 = vsel %vm1911, %v5014, %v3664
      %v5047 = vsel %vm1911, %v5015, %v3666
      %v5048 = vsel %vm1911, %v5016, %v3668
      %v5049 = vsel %vm1911, %v5017, %v3670
      %v5050 = vsel %vm1911, %v5018, %v3672
      %v5051 = vsel %vm1911, %v5019, %v3674
      %v5052 = vsel %vm1911, %v5020, %v3676
      %v5053 = vsel %vm1944, %v5021, %v3742
      %v5054 = vsel %vm1944, %v5022, %v3744
      %v5055 = vsel %vm1944, %v5023, %v3746
      %v5056 = vsel %vm1944, %v5024, %v3748
      %v5057 = vsel %vm1944, %v5025, %v3750
      %v5058 = vsel %vm1944, %v5026, %v3752
      %v5059 = vsel %vm1944, %v5027, %v3754
      %v5060 = vsel %vm1944, %v5028, %v3756
      %v5061 = vsel %vm1944, %v5029, %v3758
      %v5062 = vsel %vm1944, %v5030, %v3760
      %v5063 = vsel %vm1944, %v5031, %v3762
      %v5064 = vsel %vm1944, %v5032, %v3764
      %v5065 = vsel %vm1944, %v5033, %v3766
      %v5066 = vsel %vm1944, %v5034, %v3768
      %v5067 = vsel %vm1944, %v5035, %v3770
      %v5068 = vsel %vm1944, %v5036, %v3772
      %v5069 = vsel %vm1944, %v5037, %v3774
      %v5070 = vsel %vm1944, %v5038, %v3776
      %v5071 = vsel %vm1944, %v5039, %v3778
      %v5072 = vsel %vm1944, %v5040, %v3780
      %v5073 = vsel %vm1944, %v5041, %v3782
      %v5074 = vsel %vm1944, %v5042, %v3784
      %v5075 = vsel %vm1944, %v5043, %v3786
      %v5076 = vsel %vm1944, %v5044, %v3788
      %v5077 = vsel %vm1944, %v5045, %v3790
      %v5078 = vsel %vm1944, %v5046, %v3792
      %v5079 = vsel %vm1944, %v5047, %v3794
      %v5080 = vsel %vm1944, %v5048, %v3796
      %v5081 = vsel %vm1944, %v5049, %v3798
      %v5082 = vsel %vm1944, %v5050, %v3800
      %v5083 = vsel %vm1944, %v5051, %v3802
      %v5084 = vsel %vm1944, %v5052, %v3804
      %v5085 = vsel %vm1977, %v5053, %v3870
      %v5086 = vsel %vm1977, %v5054, %v3872
      %v5087 = vsel %vm1977, %v5055, %v3874
      %v5088 = vsel %vm1977, %v5056, %v3876
      %v5089 = vsel %vm1977, %v5057, %v3878
      %v5090 = vsel %vm1977, %v5058, %v3880
      %v5091 = vsel %vm1977, %v5059, %v3882
      %v5092 = vsel %vm1977, %v5060, %v3884
      %v5093 = vsel %vm1977, %v5061, %v3886
      %v5094 = vsel %vm1977, %v5062, %v3888
      %v5095 = vsel %vm1977, %v5063, %v3890
      %v5096 = vsel %vm1977, %v5064, %v3892
      %v5097 = vsel %vm1977, %v5065, %v3894
      %v5098 = vsel %vm1977, %v5066, %v3896
      %v5099 = vsel %vm1977, %v5067, %v3898
      %v5100 = vsel %vm1977, %v5068, %v3900
      %v5101 = vsel %vm1977, %v5069, %v3902
      %v5102 = vsel %vm1977, %v5070, %v3904
      %v5103 = vsel %vm1977, %v5071, %v3906
      %v5104 = vsel %vm1977, %v5072, %v3908
      %v5105 = vsel %vm1977, %v5073, %v3910
      %v5106 = vsel %vm1977, %v5074, %v3912
      %v5107 = vsel %vm1977, %v5075, %v3914
      %v5108 = vsel %vm1977, %v5076, %v3916
      %v5109 = vsel %vm1977, %v5077, %v3918
      %v5110 = vsel %vm1977, %v5078, %v3920
      %v5111 = vsel %vm1977, %v5079, %v3922
      %v5112 = vsel %vm1977, %v5080, %v3924
      %v5113 = vsel %vm1977, %v5081, %v3926
      %v5114 = vsel %vm1977, %v5082, %v3928
      %v5115 = vsel %vm1977, %v5083, %v3930
      %v5116 = vsel %vm1977, %v5084, %v3932
      %v5117 = vsel %vm2053, %v5085, %v3998
      %v5118 = vsel %vm2053, %v5086, %v4000
      %v5119 = vsel %vm2053, %v5087, %v4002
      %v5120 = vsel %vm2053, %v5088, %v4004
      %v5121 = vsel %vm2053, %v5089, %v4006
      %v5122 = vsel %vm2053, %v5090, %v4008
      %v5123 = vsel %vm2053, %v5091, %v4010
      %v5124 = vsel %vm2053, %v5092, %v4012
      %v5125 = vsel %vm2053, %v5093, %v4014
      %v5126 = vsel %vm2053, %v5094, %v4016
      %v5127 = vsel %vm2053, %v5095, %v4018
      %v5128 = vsel %vm2053, %v5096, %v4020
      %v5129 = vsel %vm2053, %v5097, %v4022
      %v5130 = vsel %vm2053, %v5098, %v4024
      %v5131 = vsel %vm2053, %v5099, %v4026
      %v5132 = vsel %vm2053, %v5100, %v4028
      %v5133 = vsel %vm2053, %v5101, %v4030
      %v5134 = vsel %vm2053, %v5102, %v4032
      %v5135 = vsel %vm2053, %v5103, %v4034
      %v5136 = vsel %vm2053, %v5104, %v4036
      %v5137 = vsel %vm2053, %v5105, %v4038
      %v5138 = vsel %vm2053, %v5106, %v4040
      %v5139 = vsel %vm2053, %v5107, %v4042
      %v5140 = vsel %vm2053, %v5108, %v4044
      %v5141 = vsel %vm2053, %v5109, %v4046
      %v5142 = vsel %vm2053, %v5110, %v4048
      %v5143 = vsel %vm2053, %v5111, %v4050
      %v5144 = vsel %vm2053, %v5112, %v4052
      %v5145 = vsel %vm2053, %v5113, %v4054
      %v5146 = vsel %vm2053, %v5114, %v4056
      %v5147 = vsel %vm2053, %v5115, %v4058
      %v5148 = vsel %vm2053, %v5116, %v4060
      %vm5149 = vcmask 326656
      %v5150 = vsel %vm5149, %v5117, %v4126
      %v5151 = vsel %vm5149, %v5118, %v4128
      %v5152 = vsel %vm5149, %v5119, %v4130
      %v5153 = vsel %vm5149, %v5120, %v4132
      %v5154 = vsel %vm5149, %v5121, %v4134
      %v5155 = vsel %vm5149, %v5122, %v4136
      %v5156 = vsel %vm5149, %v5123, %v4138
      %v5157 = vsel %vm5149, %v5124, %v4140
      %v5158 = vsel %vm5149, %v5125, %v4142
      %v5159 = vsel %vm5149, %v5126, %v4144
      %v5160 = vsel %vm5149, %v5127, %v4146
      %v5161 = vsel %vm5149, %v5128, %v4148
      %v5162 = vsel %vm5149, %v5129, %v4150
      %v5163 = vsel %vm5149, %v5130, %v4152
      %v5164 = vsel %vm5149, %v5131, %v4154
      %v5165 = vsel %vm5149, %v5132, %v4156
      %v5166 = vsel %vm5149, %v5133, %v4158
      %v5167 = vsel %vm5149, %v5134, %v4160
      %v5168 = vsel %vm5149, %v5135, %v4162
      %v5169 = vsel %vm5149, %v5136, %v4164
      %v5170 = vsel %vm5149, %v5137, %v4166
      %v5171 = vsel %vm5149, %v5138, %v4168
      %v5172 = vsel %vm5149, %v5139, %v4170
      %v5173 = vsel %vm5149, %v5140, %v4172
      %v5174 = vsel %vm5149, %v5141, %v4174
      %v5175 = vsel %vm5149, %v5142, %v4176
      %v5176 = vsel %vm5149, %v5143, %v4178
      %v5177 = vsel %vm5149, %v5144, %v4180
      %v5178 = vsel %vm5149, %v5145, %v4182
      %v5179 = vsel %vm5149, %v5146, %v4184
      %v5180 = vsel %vm5149, %v5147, %v4186
      %v5181 = vsel %vm5149, %v5148, %v4188
      %vm5182 = vcmask 359424
      %v5183 = vsel %vm5182, %v5150, %v4254
      %v5184 = vsel %vm5182, %v5151, %v4256
      %v5185 = vsel %vm5182, %v5152, %v4258
      %v5186 = vsel %vm5182, %v5153, %v4260
      %v5187 = vsel %vm5182, %v5154, %v4262
      %v5188 = vsel %vm5182, %v5155, %v4264
      %v5189 = vsel %vm5182, %v5156, %v4266
      %v5190 = vsel %vm5182, %v5157, %v4268
      %v5191 = vsel %vm5182, %v5158, %v4270
      %v5192 = vsel %vm5182, %v5159, %v4272
      %v5193 = vsel %vm5182, %v5160, %v4274
      %v5194 = vsel %vm5182, %v5161, %v4276
      %v5195 = vsel %vm5182, %v5162, %v4278
      %v5196 = vsel %vm5182, %v5163, %v4280
      %v5197 = vsel %vm5182, %v5164, %v4282
      %v5198 = vsel %vm5182, %v5165, %v4284
      %v5199 = vsel %vm5182, %v5166, %v4286
      %v5200 = vsel %vm5182, %v5167, %v4288
      %v5201 = vsel %vm5182, %v5168, %v4290
      %v5202 = vsel %vm5182, %v5169, %v4292
      %v5203 = vsel %vm5182, %v5170, %v4294
      %v5204 = vsel %vm5182, %v5171, %v4296
      %v5205 = vsel %vm5182, %v5172, %v4298
      %v5206 = vsel %vm5182, %v5173, %v4300
      %v5207 = vsel %vm5182, %v5174, %v4302
      %v5208 = vsel %vm5182, %v5175, %v4304
      %v5209 = vsel %vm5182, %v5176, %v4306
      %v5210 = vsel %vm5182, %v5177, %v4308
      %v5211 = vsel %vm5182, %v5178, %v4310
      %v5212 = vsel %vm5182, %v5179, %v4312
      %v5213 = vsel %vm5182, %v5180, %v4314
      %v5214 = vsel %vm5182, %v5181, %v4316
      %vm5215 = vcmask 392192
      %v5216 = vsel %vm5215, %v5183, %v4382
      %v5217 = vsel %vm5215, %v5184, %v4384
      %v5218 = vsel %vm5215, %v5185, %v4386
      %v5219 = vsel %vm5215, %v5186, %v4388
      %v5220 = vsel %vm5215, %v5187, %v4390
      %v5221 = vsel %vm5215, %v5188, %v4392
      %v5222 = vsel %vm5215, %v5189, %v4394
      %v5223 = vsel %vm5215, %v5190, %v4396
      %v5224 = vsel %vm5215, %v5191, %v4398
      %v5225 = vsel %vm5215, %v5192, %v4400
      %v5226 = vsel %vm5215, %v5193, %v4402
      %v5227 = vsel %vm5215, %v5194, %v4404
      %v5228 = vsel %vm5215, %v5195, %v4406
      %v5229 = vsel %vm5215, %v5196, %v4408
      %v5230 = vsel %vm5215, %v5197, %v4410
      %v5231 = vsel %vm5215, %v5198, %v4412
      %v5232 = vsel %vm5215, %v5199, %v4414
      %v5233 = vsel %vm5215, %v5200, %v4416
      %v5234 = vsel %vm5215, %v5201, %v4418
      %v5235 = vsel %vm5215, %v5202, %v4420
      %v5236 = vsel %vm5215, %v5203, %v4422
      %v5237 = vsel %vm5215, %v5204, %v4424
      %v5238 = vsel %vm5215, %v5205, %v4426
      %v5239 = vsel %vm5215, %v5206, %v4428
      %v5240 = vsel %vm5215, %v5207, %v4430
      %v5241 = vsel %vm5215, %v5208, %v4432
      %v5242 = vsel %vm5215, %v5209, %v4434
      %v5243 = vsel %vm5215, %v5210, %v4436
      %v5244 = vsel %vm5215, %v5211, %v4438
      %v5245 = vsel %vm5215, %v5212, %v4440
      %v5246 = vsel %vm5215, %v5213, %v4442
      %v5247 = vsel %vm5215, %v5214, %v4444
      %vm5248 = vcmask 424960
      %v5249 = vsel %vm5248, %v5216, %v4510
      %v5250 = vsel %vm5248, %v5217, %v4512
      %v5251 = vsel %vm5248, %v5218, %v4514
      %v5252 = vsel %vm5248, %v5219, %v4516
      %v5253 = vsel %vm5248, %v5220, %v4518
      %v5254 = vsel %vm5248, %v5221, %v4520
      %v5255 = vsel %vm5248, %v5222, %v4522
      %v5256 = vsel %vm5248, %v5223, %v4524
      %v5257 = vsel %vm5248, %v5224, %v4526
      %v5258 = vsel %vm5248, %v5225, %v4528
      %v5259 = vsel %vm5248, %v5226, %v4530
      %v5260 = vsel %vm5248, %v5227, %v4532
      %v5261 = vsel %vm5248, %v5228, %v4534
      %v5262 = vsel %vm5248, %v5229, %v4536
      %v5263 = vsel %vm5248, %v5230, %v4538
      %v5264 = vsel %vm5248, %v5231, %v4540
      %v5265 = vsel %vm5248, %v5232, %v4542
      %v5266 = vsel %vm5248, %v5233, %v4544
      %v5267 = vsel %vm5248, %v5234, %v4546
      %v5268 = vsel %vm5248, %v5235, %v4548
      %v5269 = vsel %vm5248, %v5236, %v4550
      %v5270 = vsel %vm5248, %v5237, %v4552
      %v5271 = vsel %vm5248, %v5238, %v4554
      %v5272 = vsel %vm5248, %v5239, %v4556
      %v5273 = vsel %vm5248, %v5240, %v4558
      %v5274 = vsel %vm5248, %v5241, %v4560
      %v5275 = vsel %vm5248, %v5242, %v4562
      %v5276 = vsel %vm5248, %v5243, %v4564
      %v5277 = vsel %vm5248, %v5244, %v4566
      %v5278 = vsel %vm5248, %v5245, %v4568
      %v5279 = vsel %vm5248, %v5246, %v4570
      %v5280 = vsel %vm5248, %v5247, %v4572
      %vm5281 = vcmask 457728
      %v5282 = vsel %vm5281, %v5249, %v4638
      %v5283 = vsel %vm5281, %v5250, %v4640
      %v5284 = vsel %vm5281, %v5251, %v4642
      %v5285 = vsel %vm5281, %v5252, %v4644
      %v5286 = vsel %vm5281, %v5253, %v4646
      %v5287 = vsel %vm5281, %v5254, %v4648
      %v5288 = vsel %vm5281, %v5255, %v4650
      %v5289 = vsel %vm5281, %v5256, %v4652
      %v5290 = vsel %vm5281, %v5257, %v4654
      %v5291 = vsel %vm5281, %v5258, %v4656
      %v5292 = vsel %vm5281, %v5259, %v4658
      %v5293 = vsel %vm5281, %v5260, %v4660
      %v5294 = vsel %vm5281, %v5261, %v4662
      %v5295 = vsel %vm5281, %v5262, %v4664
      %v5296 = vsel %vm5281, %v5263, %v4666
      %v5297 = vsel %vm5281, %v5264, %v4668
      %v5298 = vsel %vm5281, %v5265, %v4670
      %v5299 = vsel %vm5281, %v5266, %v4672
      %v5300 = vsel %vm5281, %v5267, %v4674
      %v5301 = vsel %vm5281, %v5268, %v4676
      %v5302 = vsel %vm5281, %v5269, %v4678
      %v5303 = vsel %vm5281, %v5270, %v4680
      %v5304 = vsel %vm5281, %v5271, %v4682
      %v5305 = vsel %vm5281, %v5272, %v4684
      %v5306 = vsel %vm5281, %v5273, %v4686
      %v5307 = vsel %vm5281, %v5274, %v4688
      %v5308 = vsel %vm5281, %v5275, %v4690
      %v5309 = vsel %vm5281, %v5276, %v4692
      %v5310 = vsel %vm5281, %v5277, %v4694
      %v5311 = vsel %vm5281, %v5278, %v4696
      %v5312 = vsel %vm5281, %v5279, %v4698
      %v5313 = vsel %vm5281, %v5280, %v4700
      %vm5314 = vcmask 490496
      %v5315 = vsel %vm5314, %v5282, %v4766
      %v5316 = vsel %vm5314, %v5283, %v4768
      %v5317 = vsel %vm5314, %v5284, %v4770
      %v5318 = vsel %vm5314, %v5285, %v4772
      %v5319 = vsel %vm5314, %v5286, %v4774
      %v5320 = vsel %vm5314, %v5287, %v4776
      %v5321 = vsel %vm5314, %v5288, %v4778
      %v5322 = vsel %vm5314, %v5289, %v4780
      %v5323 = vsel %vm5314, %v5290, %v4782
      %v5324 = vsel %vm5314, %v5291, %v4784
      %v5325 = vsel %vm5314, %v5292, %v4786
      %v5326 = vsel %vm5314, %v5293, %v4788
      %v5327 = vsel %vm5314, %v5294, %v4790
      %v5328 = vsel %vm5314, %v5295, %v4792
      %v5329 = vsel %vm5314, %v5296, %v4794
      %v5330 = vsel %vm5314, %v5297, %v4796
      %v5331 = vsel %vm5314, %v5298, %v4798
      %v5332 = vsel %vm5314, %v5299, %v4800
      %v5333 = vsel %vm5314, %v5300, %v4802
      %v5334 = vsel %vm5314, %v5301, %v4804
      %v5335 = vsel %vm5314, %v5302, %v4806
      %v5336 = vsel %vm5314, %v5303, %v4808
      %v5337 = vsel %vm5314, %v5304, %v4810
      %v5338 = vsel %vm5314, %v5305, %v4812
      %v5339 = vsel %vm5314, %v5306, %v4814
      %v5340 = vsel %vm5314, %v5307, %v4816
      %v5341 = vsel %vm5314, %v5308, %v4818
      %v5342 = vsel %vm5314, %v5309, %v4820
      %v5343 = vsel %vm5314, %v5310, %v4822
      %v5344 = vsel %vm5314, %v5311, %v4824
      %v5345 = vsel %vm5314, %v5312, %v4826
      %v5346 = vsel %vm5314, %v5313, %v4828
      %5379 = vrot.lane.b32.xlu0 %v2909, 4
      %v5380 = vpop.permute.xlu0 %5379
      %5381 = vrot.lane.b32.xlu0 %v2910, 4
      %v5382 = vpop.permute.xlu0 %5381
      %5383 = vrot.lane.b32.xlu0 %v2911, 4
      %v5384 = vpop.permute.xlu0 %5383
      %5385 = vrot.lane.b32.xlu0 %v2912, 4
      %v5386 = vpop.permute.xlu0 %5385
      %5387 = vrot.lane.b32.xlu0 %v2913, 4
      %v5388 = vpop.permute.xlu0 %5387
      %5389 = vrot.lane.b32.xlu0 %v2914, 4
      %v5390 = vpop.permute.xlu0 %5389
      %5391 = vrot.lane.b32.xlu0 %v2915, 4
      %v5392 = vpop.permute.xlu0 %5391
      %5393 = vrot.lane.b32.xlu0 %v2916, 4
      %v5394 = vpop.permute.xlu0 %5393
      %5395 = vrot.lane.b32.xlu0 %v2917, 4
      %v5396 = vpop.permute.xlu0 %5395
      %5397 = vrot.lane.b32.xlu0 %v2918, 4
      %v5398 = vpop.permute.xlu0 %5397
      %5399 = vrot.lane.b32.xlu0 %v2919, 4
      %v5400 = vpop.permute.xlu0 %5399
      %5401 = vrot.lane.b32.xlu0 %v2920, 4
      %v5402 = vpop.permute.xlu0 %5401
      %5403 = vrot.lane.b32.xlu0 %v2921, 4
      %v5404 = vpop.permute.xlu0 %5403
      %5405 = vrot.lane.b32.xlu0 %v2922, 4
      %v5406 = vpop.permute.xlu0 %5405
      %5407 = vrot.lane.b32.xlu0 %v2923, 4
      %v5408 = vpop.permute.xlu0 %5407
      %5409 = vrot.lane.b32.xlu0 %v2924, 4
      %v5410 = vpop.permute.xlu0 %5409
      %5411 = vrot.lane.b32.xlu0 %v2925, 4
      %v5412 = vpop.permute.xlu0 %5411
      %5413 = vrot.lane.b32.xlu0 %v2926, 4
      %v5414 = vpop.permute.xlu0 %5413
      %5415 = vrot.lane.b32.xlu0 %v2927, 4
      %v5416 = vpop.permute.xlu0 %5415
      %5417 = vrot.lane.b32.xlu0 %v2928, 4
      %v5418 = vpop.permute.xlu0 %5417
      %5419 = vrot.lane.b32.xlu0 %v2929, 4
      %v5420 = vpop.permute.xlu0 %5419
      %5421 = vrot.lane.b32.xlu0 %v2930, 4
      %v5422 = vpop.permute.xlu0 %5421
      %5423 = vrot.lane.b32.xlu0 %v2931, 4
      %v5424 = vpop.permute.xlu0 %5423
      %5425 = vrot.lane.b32.xlu0 %v2932, 4
      %v5426 = vpop.permute.xlu0 %5425
      %5427 = vrot.lane.b32.xlu0 %v2933, 4
      %v5428 = vpop.permute.xlu0 %5427
      %5429 = vrot.lane.b32.xlu0 %v2934, 4
      %v5430 = vpop.permute.xlu0 %5429
      %5431 = vrot.lane.b32.xlu0 %v2935, 4
      %v5432 = vpop.permute.xlu0 %5431
      %5433 = vrot.lane.b32.xlu0 %v2936, 4
      %v5434 = vpop.permute.xlu0 %5433
      %5435 = vrot.lane.b32.xlu0 %v2937, 4
      %v5436 = vpop.permute.xlu0 %5435
      %5437 = vrot.lane.b32.xlu0 %v2938, 4
      %v5438 = vpop.permute.xlu0 %5437
      %5439 = vrot.lane.b32.xlu0 %v2939, 4
      %v5440 = vpop.permute.xlu0 %5439
      %5441 = vrot.lane.b32.xlu0 %v2940, 4
      %v5442 = vpop.permute.xlu0 %5441
      %v5475 = vsel %vm280, %v2877, %v5380
      %v5476 = vsel %vm280, %v2878, %v5382
      %v5477 = vsel %vm280, %v2879, %v5384
      %v5478 = vsel %vm280, %v2880, %v5386
      %v5479 = vsel %vm280, %v2881, %v5388
      %v5480 = vsel %vm280, %v2882, %v5390
      %v5481 = vsel %vm280, %v2883, %v5392
      %v5482 = vsel %vm280, %v2884, %v5394
      %v5483 = vsel %vm280, %v2885, %v5396
      %v5484 = vsel %vm280, %v2886, %v5398
      %v5485 = vsel %vm280, %v2887, %v5400
      %v5486 = vsel %vm280, %v2888, %v5402
      %v5487 = vsel %vm280, %v2889, %v5404
      %v5488 = vsel %vm280, %v2890, %v5406
      %v5489 = vsel %vm280, %v2891, %v5408
      %v5490 = vsel %vm280, %v2892, %v5410
      %v5491 = vsel %vm280, %v2893, %v5412
      %v5492 = vsel %vm280, %v2894, %v5414
      %v5493 = vsel %vm280, %v2895, %v5416
      %v5494 = vsel %vm280, %v2896, %v5418
      %v5495 = vsel %vm280, %v2897, %v5420
      %v5496 = vsel %vm280, %v2898, %v5422
      %v5497 = vsel %vm280, %v2899, %v5424
      %v5498 = vsel %vm280, %v2900, %v5426
      %v5499 = vsel %vm280, %v2901, %v5428
      %v5500 = vsel %vm280, %v2902, %v5430
      %v5501 = vsel %vm280, %v2903, %v5432
      %v5502 = vsel %vm280, %v2904, %v5434
      %v5503 = vsel %vm280, %v2905, %v5436
      %v5504 = vsel %vm280, %v2906, %v5438
      %v5505 = vsel %vm280, %v2907, %v5440
      %v5506 = vsel %vm280, %v2908, %v5442
      %5539 = vrot.lane.b32.xlu0 %v5475, 64
      %v5540 = vpop.permute.xlu0 %5539
      %5541 = vrot.lane.b32.xlu0 %v5476, 64
      %v5542 = vpop.permute.xlu0 %5541
      %5543 = vrot.lane.b32.xlu0 %v5477, 64
      %v5544 = vpop.permute.xlu0 %5543
      %5545 = vrot.lane.b32.xlu0 %v5478, 64
      %v5546 = vpop.permute.xlu0 %5545
      %5547 = vrot.lane.b32.xlu0 %v5479, 64
      %v5548 = vpop.permute.xlu0 %5547
      %5549 = vrot.lane.b32.xlu0 %v5480, 64
      %v5550 = vpop.permute.xlu0 %5549
      %5551 = vrot.lane.b32.xlu0 %v5481, 64
      %v5552 = vpop.permute.xlu0 %5551
      %5553 = vrot.lane.b32.xlu0 %v5482, 64
      %v5554 = vpop.permute.xlu0 %5553
      %5555 = vrot.lane.b32.xlu0 %v5483, 64
      %v5556 = vpop.permute.xlu0 %5555
      %5557 = vrot.lane.b32.xlu0 %v5484, 64
      %v5558 = vpop.permute.xlu0 %5557
      %5559 = vrot.lane.b32.xlu0 %v5485, 64
      %v5560 = vpop.permute.xlu0 %5559
      %5561 = vrot.lane.b32.xlu0 %v5486, 64
      %v5562 = vpop.permute.xlu0 %5561
      %5563 = vrot.lane.b32.xlu0 %v5487, 64
      %v5564 = vpop.permute.xlu0 %5563
      %5565 = vrot.lane.b32.xlu0 %v5488, 64
      %v5566 = vpop.permute.xlu0 %5565
      %5567 = vrot.lane.b32.xlu0 %v5489, 64
      %v5568 = vpop.permute.xlu0 %5567
      %5569 = vrot.lane.b32.xlu0 %v5490, 64
      %v5570 = vpop.permute.xlu0 %5569
      %5571 = vrot.lane.b32.xlu0 %v5491, 64
      %v5572 = vpop.permute.xlu0 %5571
      %5573 = vrot.lane.b32.xlu0 %v5492, 64
      %v5574 = vpop.permute.xlu0 %5573
      %5575 = vrot.lane.b32.xlu0 %v5493, 64
      %v5576 = vpop.permute.xlu0 %5575
      %5577 = vrot.lane.b32.xlu0 %v5494, 64
      %v5578 = vpop.permute.xlu0 %5577
      %5579 = vrot.lane.b32.xlu0 %v5495, 64
      %v5580 = vpop.permute.xlu0 %5579
      %5581 = vrot.lane.b32.xlu0 %v5496, 64
      %v5582 = vpop.permute.xlu0 %5581
      %5583 = vrot.lane.b32.xlu0 %v5497, 64
      %v5584 = vpop.permute.xlu0 %5583
      %5585 = vrot.lane.b32.xlu0 %v5498, 64
      %v5586 = vpop.permute.xlu0 %5585
      %5587 = vrot.lane.b32.xlu0 %v5499, 64
      %v5588 = vpop.permute.xlu0 %5587
      %5589 = vrot.lane.b32.xlu0 %v5500, 64
      %v5590 = vpop.permute.xlu0 %5589
      %5591 = vrot.lane.b32.xlu0 %v5501, 64
      %v5592 = vpop.permute.xlu0 %5591
      %5593 = vrot.lane.b32.xlu0 %v5502, 64
      %v5594 = vpop.permute.xlu0 %5593
      %5595 = vrot.lane.b32.xlu0 %v5503, 64
      %v5596 = vpop.permute.xlu0 %5595
      %5597 = vrot.lane.b32.xlu0 %v5504, 64
      %v5598 = vpop.permute.xlu0 %5597
      %5599 = vrot.lane.b32.xlu0 %v5505, 64
      %v5600 = vpop.permute.xlu0 %5599
      %5601 = vrot.lane.b32.xlu0 %v5506, 64
      %v5602 = vpop.permute.xlu0 %5601
      %vm5635 = vcmask 523264
      %v5636 = vsel %vm5635, %v5315, %v5540
      %v5637 = vsel %vm5635, %v5316, %v5542
      %v5638 = vsel %vm5635, %v5317, %v5544
      %v5639 = vsel %vm5635, %v5318, %v5546
      %v5640 = vsel %vm5635, %v5319, %v5548
      %v5641 = vsel %vm5635, %v5320, %v5550
      %v5642 = vsel %vm5635, %v5321, %v5552
      %v5643 = vsel %vm5635, %v5322, %v5554
      %v5644 = vsel %vm5635, %v5323, %v5556
      %v5645 = vsel %vm5635, %v5324, %v5558
      %v5646 = vsel %vm5635, %v5325, %v5560
      %v5647 = vsel %vm5635, %v5326, %v5562
      %v5648 = vsel %vm5635, %v5327, %v5564
      %v5649 = vsel %vm5635, %v5328, %v5566
      %v5650 = vsel %vm5635, %v5329, %v5568
      %v5651 = vsel %vm5635, %v5330, %v5570
      %v5652 = vsel %vm5635, %v5331, %v5572
      %v5653 = vsel %vm5635, %v5332, %v5574
      %v5654 = vsel %vm5635, %v5333, %v5576
      %v5655 = vsel %vm5635, %v5334, %v5578
      %v5656 = vsel %vm5635, %v5335, %v5580
      %v5657 = vsel %vm5635, %v5336, %v5582
      %v5658 = vsel %vm5635, %v5337, %v5584
      %v5659 = vsel %vm5635, %v5338, %v5586
      %v5660 = vsel %vm5635, %v5339, %v5588
      %v5661 = vsel %vm5635, %v5340, %v5590
      %v5662 = vsel %vm5635, %v5341, %v5592
      %v5663 = vsel %vm5635, %v5342, %v5594
      %v5664 = vsel %vm5635, %v5343, %v5596
      %v5665 = vsel %vm5635, %v5344, %v5598
      %v5666 = vsel %vm5635, %v5345, %v5600
      %v5667 = vsel %vm5635, %v5346, %v5602
      %v5668 = vpack.c.bf16 %v5637, %v5636
      %v5669 = vpack.c.bf16 %v5639, %v5638
      %v5670 = vpack.c.bf16 %v5641, %v5640
      %v5671 = vpack.c.bf16 %v5643, %v5642
      %v5672 = vpack.c.bf16 %v5645, %v5644
      %v5673 = vpack.c.bf16 %v5647, %v5646
      %v5674 = vpack.c.bf16 %v5649, %v5648
      %v5675 = vpack.c.bf16 %v5651, %v5650
      %v5676 = vpack.c.bf16 %v5653, %v5652
      %v5677 = vpack.c.bf16 %v5655, %v5654
      %v5678 = vpack.c.bf16 %v5657, %v5656
      %v5679 = vpack.c.bf16 %v5659, %v5658
      %v5680 = vpack.c.bf16 %v5661, %v5660
      %v5681 = vpack.c.bf16 %v5663, %v5662
      %v5682 = vpack.c.bf16 %v5665, %v5664
      %v5683 = vpack.c.bf16 %v5667, %v5666
      %v5684 = vld [vmem:[%s3] sm:$0xf]
      %v5685 = vld [vmem:[%s3 + $0x4] sm:$0xf]
      %v5686 = vld [vmem:[%s3 + $0x8] sm:$0xf]
      %v5687 = vld [vmem:[%s3 + $0xc] sm:$0xf]
      %v5688 = vld [vmem:[%s3 + $0x10] sm:$0xf]
      %v5689 = vld [vmem:[%s3 + $0x14] sm:$0xf]
      %v5690 = vld [vmem:[%s3 + $0x18] sm:$0xf]
      %v5691 = vld [vmem:[%s3 + $0x1c] sm:$0xf]
      %v5692 = vld [vmem:[%s3 + $0x20] sm:$0xf]
      %v5693 = vld [vmem:[%s4] sm:$0x1]
      %v5695 = vlaneseq
      %v5696 = vshrl.u32 %v5695, 7
      %v5697 = vsub.s32 0, %v5696
      %v5698 = vrot.slane %v5693, %v5697
      %v5709 = vunpack.c.l.b16 %v5684
      %v5710 = vunpack.c.l.b16 %v5685
      %v5711 = vunpack.c.l.b16 %v5686
      %v5712 = vunpack.c.l.b16 %v5687
      %v5713 = vunpack.c.l.b16 %v5688
      %v5714 = vunpack.c.l.b16 %v5689
      %v5715 = vunpack.c.l.b16 %v5690
      %v5716 = vunpack.c.l.b16 %v5691
      %v5717 = vunpack.c.l.b16 %v5692
      %v5718 = vpack.c.b16 %v5710, %v5709
      %v5719 = vpack.c.b16 %v5712, %v5711
      %v5720 = vpack.c.b16 %v5714, %v5713
      %v5721 = vpack.c.b16 %v5716, %v5715
      %v5722 = vpack.c.b16 %v5717, %v5717
      %vm5727 = vcmask 588800
      %v5729 = vsel %vm5727, %v5668, 0
      %v5732 = vsel %vm5727, %v5669, 0
      %v5735 = vsel %vm5727, %v5670, 0
      %v5738 = vsel %vm5727, %v5671, 0
      %v5741 = vsel %vm5727, %v5672, 0
      %v5744 = vsel %vm5727, %v5673, 0
      %v5747 = vsel %vm5727, %v5674, 0
      %v5750 = vsel %vm5727, %v5675, 0
      %v5753 = vsel %vm5727, %v5676, 0
      %v5756 = vsel %vm5727, %v5677, 0
      %v5759 = vsel %vm5727, %v5678, 0
      %v5762 = vsel %vm5727, %v5679, 0
      %v5765 = vsel %vm5727, %v5680, 0
      %v5768 = vsel %vm5727, %v5681, 0
      %v5771 = vsel %vm5727, %v5682, 0
      %v5774 = vsel %vm5727, %v5683, 0
      %vm5776 = vcmask 1043456
      %v5778 = vsel %vm5776, %v5722, 0
      %5780 = vmatprep.subr.bf16.mxu0 0
      %5781 = vmatpush1.bf16.msra.mxu0 %v5718
      %5782 = vmatprep.subr.bf16.mxu0 0
      %5783 = vmatpush1.bf16.msra.mxu0 %v5719
      %5784 = vmatprep.subr.bf16.mxu0 0
      %5785 = vmatpush1.bf16.msra.mxu0 %v5720
      %5786 = vmatprep.subr.bf16.mxu0 0
      %5787 = vmatpush1.bf16.msra.mxu0 %v5721
      %5788 = vmatprep.subr.bf16.mxu0 0
      %5789 = vmatpush1.bf16.msra.mxu0 %v5778
      %5790 = vmatprep.subr.bf16.mxu0 0
      %5791 = vmatpush1.bf16.msra.mxu0 0
      %5792 = vmatprep.subr.bf16.mxu0 0
      %5793 = vmatpush1.bf16.msra.mxu0 0
      %5794 = vmatprep.subr.bf16.mxu0 0
      %5795 = vmatpush1.bf16.msra.mxu0 0
      %5796 = vmatprep.subr.bf16.mxu0 0
      %5797 = vmatpush1.bf16.msra.mxu0 0
      %5798 = vmatprep.subr.bf16.mxu0 0
      %5799 = vmatpush1.bf16.msra.mxu0 0
      %5800 = vmatprep.subr.bf16.mxu0 0
      %5801 = vmatpush1.bf16.msra.mxu0 0
      %5802 = vmatprep.subr.bf16.mxu0 0
      %5803 = vmatpush1.bf16.msra.mxu0 0
      %5804 = vmatprep.subr.bf16.mxu0 0
      %5805 = vmatpush1.bf16.msra.mxu0 0
      %5806 = vmatprep.subr.bf16.mxu0 0
      %5807 = vmatpush1.bf16.msra.mxu0 0
      %5808 = vmatprep.subr.bf16.mxu0 0
      %5809 = vmatpush1.bf16.msra.mxu0 0
      %5810 = vmatprep.subr.bf16.mxu0 0
      %5811 = vmatpush1.bf16.msra.mxu0 0
      %5812 = vmatprep.mubr.bf16.mxu0 0
      %5813 = vmatmul.mubr.bf16.gmra.mrb[0].mxu0 %v5729
      %v5814 = vpop.f32.mrb[0].mxu0
      %v5815 = vadd.f32 %v5698, %v5814
      %v5816 = vpop.f32.mrb[0].mxu0
      %v5817 = vpop.f32.mrb[0].mxu0
      %v5818 = vadd.f32 %v5698, %v5817
      %v5819 = vpop.f32.mrb[0].mxu0
      %5820 = vmatprep.mubr.bf16.mxu0 0
      %5821 = vmatmul.mubr.bf16.gmra.mrb[0].mxu0 %v5732
      %v5822 = vpop.f32.mrb[0].mxu0
      %v5823 = vadd.f32 %v5698, %v5822
      %v5824 = vpop.f32.mrb[0].mxu0
      %v5825 = vpop.f32.mrb[0].mxu0
      %v5826 = vadd.f32 %v5698, %v5825
      %v5827 = vpop.f32.mrb[0].mxu0
      %5828 = vmatprep.mubr.bf16.mxu0 0
      %5829 = vmatmul.mubr.bf16.gmra.mrb[0].mxu0 %v5735
      %v5830 = vpop.f32.mrb[0].mxu0
      %v5831 = vadd.f32 %v5698, %v5830
      %v5832 = vpop.f32.mrb[0].mxu0
      %v5833 = vpop.f32.mrb[0].mxu0
      %v5834 = vadd.f32 %v5698, %v5833
      %v5835 = vpop.f32.mrb[0].mxu0
      %5836 = vmatprep.mubr.bf16.mxu0 0
      %5837 = vmatmul.mubr.bf16.gmra.mrb[0].mxu0 %v5738
      %v5838 = vpop.f32.mrb[0].mxu0
      %v5839 = vadd.f32 %v5698, %v5838
      %v5840 = vpop.f32.mrb[0].mxu0
      %v5841 = vpop.f32.mrb[0].mxu0
      %v5842 = vadd.f32 %v5698, %v5841
      %v5843 = vpop.f32.mrb[0].mxu0
      %5844 = vmatprep.mubr.bf16.mxu0 0
      %5845 = vmatmul.mubr.bf16.gmra.mrb[0].mxu0 %v5741
      %v5846 = vpop.f32.mrb[0].mxu0
      %v5847 = vadd.f32 %v5698, %v5846
      %v5848 = vpop.f32.mrb[0].mxu0
      %v5849 = vpop.f32.mrb[0].mxu0
      %v5850 = vadd.f32 %v5698, %v5849
      %v5851 = vpop.f32.mrb[0].mxu0
      %5852 = vmatprep.mubr.bf16.mxu0 0
      %5853 = vmatmul.mubr.bf16.gmra.mrb[0].mxu0 %v5744
      %v5854 = vpop.f32.mrb[0].mxu0
      %v5855 = vadd.f32 %v5698, %v5854
      %v5856 = vpop.f32.mrb[0].mxu0
      %v5857 = vpop.f32.mrb[0].mxu0
      %v5858 = vadd.f32 %v5698, %v5857
      %v5859 = vpop.f32.mrb[0].mxu0
      %5860 = vmatprep.mubr.bf16.mxu0 0
      %5861 = vmatmul.mubr.bf16.gmra.mrb[0].mxu0 %v5747
      %v5862 = vpop.f32.mrb[0].mxu0
      %v5863 = vadd.f32 %v5698, %v5862
      %v5864 = vpop.f32.mrb[0].mxu0
      %v5865 = vpop.f32.mrb[0].mxu0
      %v5866 = vadd.f32 %v5698, %v5865
      %v5867 = vpop.f32.mrb[0].mxu0
      %5868 = vmatprep.mubr.bf16.mxu0 0
      %5869 = vmatmul.mubr.bf16.gmra.mrb[0].mxu0 %v5750
      %v5870 = vpop.f32.mrb[0].mxu0
      %v5871 = vadd.f32 %v5698, %v5870
      %v5872 = vpop.f32.mrb[0].mxu0
      %v5873 = vpop.f32.mrb[0].mxu0
      %v5874 = vadd.f32 %v5698, %v5873
      %v5875 = vpop.f32.mrb[0].mxu0
      %5876 = vmatprep.mubr.bf16.mxu0 0
      %5877 = vmatmul.mubr.bf16.gmra.mrb[0].mxu0 %v5753
      %v5878 = vpop.f32.mrb[0].mxu0
      %v5879 = vadd.f32 %v5698, %v5878
      %v5880 = vpop.f32.mrb[0].mxu0
      %v5881 = vpop.f32.mrb[0].mxu0
      %v5882 = vadd.f32 %v5698, %v5881
      %v5883 = vpop.f32.mrb[0].mxu0
      %5884 = vmatprep.mubr.bf16.mxu0 0
      %5885 = vmatmul.mubr.bf16.gmra.mrb[0].mxu0 %v5756
      %v5886 = vpop.f32.mrb[0].mxu0
      %v5887 = vadd.f32 %v5698, %v5886
      %v5888 = vpop.f32.mrb[0].mxu0
      %v5889 = vpop.f32.mrb[0].mxu0
      %v5890 = vadd.f32 %v5698, %v5889
      %v5891 = vpop.f32.mrb[0].mxu0
      %5892 = vmatprep.mubr.bf16.mxu0 0
      %5893 = vmatmul.mubr.bf16.gmra.mrb[0].mxu0 %v5759
      %v5894 = vpop.f32.mrb[0].mxu0
      %v5895 = vadd.f32 %v5698, %v5894
      %v5896 = vpop.f32.mrb[0].mxu0
      %v5897 = vpop.f32.mrb[0].mxu0
      %v5898 = vadd.f32 %v5698, %v5897
      %v5899 = vpop.f32.mrb[0].mxu0
      %5900 = vmatprep.mubr.bf16.mxu0 0
      %5901 = vmatmul.mubr.bf16.gmra.mrb[0].mxu0 %v5762
      %v5902 = vpop.f32.mrb[0].mxu0
      %v5903 = vadd.f32 %v5698, %v5902
      %v5904 = vpop.f32.mrb[0].mxu0
      %v5905 = vpop.f32.mrb[0].mxu0
      %v5906 = vadd.f32 %v5698, %v5905
      %v5907 = vpop.f32.mrb[0].mxu0
      %5908 = vmatprep.mubr.bf16.mxu0 0
      %5909 = vmatmul.mubr.bf16.gmra.mrb[0].mxu0 %v5765
      %v5910 = vpop.f32.mrb[0].mxu0
      %v5911 = vadd.f32 %v5698, %v5910
      %v5912 = vpop.f32.mrb[0].mxu0
      %v5913 = vpop.f32.mrb[0].mxu0
      %v5914 = vadd.f32 %v5698, %v5913
      %v5915 = vpop.f32.mrb[0].mxu0
      %5916 = vmatprep.mubr.bf16.mxu0 0
      %5917 = vmatmul.mubr.bf16.gmra.mrb[0].mxu0 %v5768
      %v5918 = vpop.f32.mrb[0].mxu0
      %v5919 = vadd.f32 %v5698, %v5918
      %v5920 = vpop.f32.mrb[0].mxu0
      %v5921 = vpop.f32.mrb[0].mxu0
      %v5922 = vadd.f32 %v5698, %v5921
      %v5923 = vpop.f32.mrb[0].mxu0
      %5924 = vmatprep.mubr.bf16.mxu0 0
      %5925 = vmatmul.mubr.bf16.gmra.mrb[0].mxu0 %v5771
      %v5926 = vpop.f32.mrb[0].mxu0
      %v5927 = vadd.f32 %v5698, %v5926
      %v5928 = vpop.f32.mrb[0].mxu0
      %v5929 = vpop.f32.mrb[0].mxu0
      %v5930 = vadd.f32 %v5698, %v5929
      %v5931 = vpop.f32.mrb[0].mxu0
      %5932 = vmatprep.mubr.bf16.mxu0 0
      %5933 = vmatmul.mubr.bf16.gmra.mrb[0].mxu0 %v5774
      %v5934 = vpop.f32.mrb[0].mxu0
      %v5935 = vadd.f32 %v5698, %v5934
      %v5936 = vpop.f32.mrb[0].mxu0
      %v5937 = vpop.f32.mrb[0].mxu0
      %v5938 = vadd.f32 %v5698, %v5937
      %v5939 = vpop.f32.mrb[0].mxu0
      %5940 = vdwg.mxu0
      %v5941 = vmul.f32 %v5815, 0.2
      %v5942 = vmul.f32 %v5818, 0.2
      %v5943 = vmul.f32 %v5823, 0.2
      %v5944 = vmul.f32 %v5826, 0.2
      %v5945 = vmul.f32 %v5831, 0.2
      %v5946 = vmul.f32 %v5834, 0.2
      %v5947 = vmul.f32 %v5839, 0.2
      %v5948 = vmul.f32 %v5842, 0.2
      %v5949 = vmul.f32 %v5847, 0.2
      %v5950 = vmul.f32 %v5850, 0.2
      %v5951 = vmul.f32 %v5855, 0.2
      %v5952 = vmul.f32 %v5858, 0.2
      %v5953 = vmul.f32 %v5863, 0.2
      %v5954 = vmul.f32 %v5866, 0.2
      %v5955 = vmul.f32 %v5871, 0.2
      %v5956 = vmul.f32 %v5874, 0.2
      %v5957 = vmul.f32 %v5879, 0.2
      %v5958 = vmul.f32 %v5882, 0.2
      %v5959 = vmul.f32 %v5887, 0.2
      %v5960 = vmul.f32 %v5890, 0.2
      %v5961 = vmul.f32 %v5895, 0.2
      %v5962 = vmul.f32 %v5898, 0.2
      %v5963 = vmul.f32 %v5903, 0.2
      %v5964 = vmul.f32 %v5906, 0.2
      %v5965 = vmul.f32 %v5911, 0.2
      %v5966 = vmul.f32 %v5914, 0.2
      %v5967 = vmul.f32 %v5919, 0.2
      %v5968 = vmul.f32 %v5922, 0.2
      %v5969 = vmul.f32 %v5927, 0.2
      %v5970 = vmul.f32 %v5930, 0.2
      %v5971 = vmul.f32 %v5935, 0.2
      %v5972 = vmul.f32 %v5938, 0.2
      %v5973 = vmax.f32 %v5815, %v5941
      %v5974 = vmax.f32 %v5818, %v5942
      %v5975 = vmax.f32 %v5823, %v5943
      %v5976 = vmax.f32 %v5826, %v5944
      %v5977 = vmax.f32 %v5831, %v5945
      %v5978 = vmax.f32 %v5834, %v5946
      %v5979 = vmax.f32 %v5839, %v5947
      %v5980 = vmax.f32 %v5842, %v5948
      %v5981 = vmax.f32 %v5847, %v5949
      %v5982 = vmax.f32 %v5850, %v5950
      %v5983 = vmax.f32 %v5855, %v5951
      %v5984 = vmax.f32 %v5858, %v5952
      %v5985 = vmax.f32 %v5863, %v5953
      %v5986 = vmax.f32 %v5866, %v5954
      %v5987 = vmax.f32 %v5871, %v5955
      %v5988 = vmax.f32 %v5874, %v5956
      %v5989 = vmax.f32 %v5879, %v5957
      %v5990 = vmax.f32 %v5882, %v5958
      %v5991 = vmax.f32 %v5887, %v5959
      %v5992 = vmax.f32 %v5890, %v5960
      %v5993 = vmax.f32 %v5895, %v5961
      %v5994 = vmax.f32 %v5898, %v5962
      %v5995 = vmax.f32 %v5903, %v5963
      %v5996 = vmax.f32 %v5906, %v5964
      %v5997 = vmax.f32 %v5911, %v5965
      %v5998 = vmax.f32 %v5914, %v5966
      %v5999 = vmax.f32 %v5919, %v5967
      %v6000 = vmax.f32 %v5922, %v5968
      %v6001 = vmax.f32 %v5927, %v5969
      %v6002 = vmax.f32 %v5930, %v5970
      %v6003 = vmax.f32 %v5935, %v5971
      %v6004 = vmax.f32 %v5938, %v5972
      %6037 = vrot.lane.b32.xlu0 %v2299, 4
      %v6038 = vpop.permute.xlu0 %6037
      %6039 = vrot.lane.b32.xlu0 %v2300, 4
      %v6040 = vpop.permute.xlu0 %6039
      %6041 = vrot.lane.b32.xlu0 %v2301, 4
      %v6042 = vpop.permute.xlu0 %6041
      %6043 = vrot.lane.b32.xlu0 %v2302, 4
      %v6044 = vpop.permute.xlu0 %6043
      %6045 = vrot.lane.b32.xlu0 %v2303, 4
      %v6046 = vpop.permute.xlu0 %6045
      %6047 = vrot.lane.b32.xlu0 %v2304, 4
      %v6048 = vpop.permute.xlu0 %6047
      %6049 = vrot.lane.b32.xlu0 %v2305, 4
      %v6050 = vpop.permute.xlu0 %6049
      %6051 = vrot.lane.b32.xlu0 %v2306, 4
      %v6052 = vpop.permute.xlu0 %6051
      %6053 = vrot.lane.b32.xlu0 %v2307, 4
      %v6054 = vpop.permute.xlu0 %6053
      %6055 = vrot.lane.b32.xlu0 %v2308, 4
      %v6056 = vpop.permute.xlu0 %6055
      %6057 = vrot.lane.b32.xlu0 %v2309, 4
      %v6058 = vpop.permute.xlu0 %6057
      %6059 = vrot.lane.b32.xlu0 %v2310, 4
      %v6060 = vpop.permute.xlu0 %6059
      %6061 = vrot.lane.b32.xlu0 %v2311, 4
      %v6062 = vpop.permute.xlu0 %6061
      %6063 = vrot.lane.b32.xlu0 %v2312, 4
      %v6064 = vpop.permute.xlu0 %6063
      %6065 = vrot.lane.b32.xlu0 %v2313, 4
      %v6066 = vpop.permute.xlu0 %6065
      %6067 = vrot.lane.b32.xlu0 %v2314, 4
      %v6068 = vpop.permute.xlu0 %6067
      %6069 = vrot.lane.b32.xlu0 %v2315, 4
      %v6070 = vpop.permute.xlu0 %6069
      %6071 = vrot.lane.b32.xlu0 %v2316, 4
      %v6072 = vpop.permute.xlu0 %6071
      %6073 = vrot.lane.b32.xlu0 %v2317, 4
      %v6074 = vpop.permute.xlu0 %6073
      %6075 = vrot.lane.b32.xlu0 %v2318, 4
      %v6076 = vpop.permute.xlu0 %6075
      %6077 = vrot.lane.b32.xlu0 %v2319, 4
      %v6078 = vpop.permute.xlu0 %6077
      %6079 = vrot.lane.b32.xlu0 %v2320, 4
      %v6080 = vpop.permute.xlu0 %6079
      %6081 = vrot.lane.b32.xlu0 %v2321, 4
      %v6082 = vpop.permute.xlu0 %6081
      %6083 = vrot.lane.b32.xlu0 %v2322, 4
      %v6084 = vpop.permute.xlu0 %6083
      %6085 = vrot.lane.b32.xlu0 %v2323, 4
      %v6086 = vpop.permute.xlu0 %6085
      %6087 = vrot.lane.b32.xlu0 %v2324, 4
      %v6088 = vpop.permute.xlu0 %6087
      %6089 = vrot.lane.b32.xlu0 %v2325, 4
      %v6090 = vpop.permute.xlu0 %6089
      %6091 = vrot.lane.b32.xlu0 %v2326, 4
      %v6092 = vpop.permute.xlu0 %6091
      %6093 = vrot.lane.b32.xlu0 %v2327, 4
      %v6094 = vpop.permute.xlu0 %6093
      %6095 = vrot.lane.b32.xlu0 %v2328, 4
      %v6096 = vpop.permute.xlu0 %6095
      %6097 = vrot.lane.b32.xlu0 %v2329, 4
      %v6098 = vpop.permute.xlu0 %6097
      %6099 = vrot.lane.b32.xlu0 %v2330, 4
      %v6100 = vpop.permute.xlu0 %6099
      %6165 = vrot.lane.b32.xlu0 %v5973, 8
      %v6166 = vpop.permute.xlu0 %6165
      %6167 = vrot.lane.b32.xlu0 %v5974, 8
      %v6168 = vpop.permute.xlu0 %6167
      %6169 = vrot.lane.b32.xlu0 %v5975, 8
      %v6170 = vpop.permute.xlu0 %6169
      %6171 = vrot.lane.b32.xlu0 %v5976, 8
      %v6172 = vpop.permute.xlu0 %6171
      %6173 = vrot.lane.b32.xlu0 %v5977, 8
      %v6174 = vpop.permute.xlu0 %6173
      %6175 = vrot.lane.b32.xlu0 %v5978, 8
      %v6176 = vpop.permute.xlu0 %6175
      %6177 = vrot.lane.b32.xlu0 %v5979, 8
      %v6178 = vpop.permute.xlu0 %6177
      %6179 = vrot.lane.b32.xlu0 %v5980, 8
      %v6180 = vpop.permute.xlu0 %6179
      %6181 = vrot.lane.b32.xlu0 %v5981, 8
      %v6182 = vpop.permute.xlu0 %6181
      %6183 = vrot.lane.b32.xlu0 %v5982, 8
      %v6184 = vpop.permute.xlu0 %6183
      %6185 = vrot.lane.b32.xlu0 %v5983, 8
      %v6186 = vpop.permute.xlu0 %6185
      %6187 = vrot.lane.b32.xlu0 %v5984, 8
      %v6188 = vpop.permute.xlu0 %6187
      %6189 = vrot.lane.b32.xlu0 %v5985, 8
      %v6190 = vpop.permute.xlu0 %6189
      %6191 = vrot.lane.b32.xlu0 %v5986, 8
      %v6192 = vpop.permute.xlu0 %6191
      %6193 = vrot.lane.b32.xlu0 %v5987, 8
      %v6194 = vpop.permute.xlu0 %6193
      %6195 = vrot.lane.b32.xlu0 %v5988, 8
      %v6196 = vpop.permute.xlu0 %6195
      %6197 = vrot.lane.b32.xlu0 %v5989, 8
      %v6198 = vpop.permute.xlu0 %6197
      %6199 = vrot.lane.b32.xlu0 %v5990, 8
      %v6200 = vpop.permute.xlu0 %6199
      %6201 = vrot.lane.b32.xlu0 %v5991, 8
      %v6202 = vpop.permute.xlu0 %6201
      %6203 = vrot.lane.b32.xlu0 %v5992, 8
      %v6204 = vpop.permute.xlu0 %6203
      %6205 = vrot.lane.b32.xlu0 %v5993, 8
      %v6206 = vpop.permute.xlu0 %6205
      %6207 = vrot.lane.b32.xlu0 %v5994, 8
      %v6208 = vpop.permute.xlu0 %6207
      %6209 = vrot.lane.b32.xlu0 %v5995, 8
      %v6210 = vpop.permute.xlu0 %6209
      %6211 = vrot.lane.b32.xlu0 %v5996, 8
      %v6212 = vpop.permute.xlu0 %6211
      %6213 = vrot.lane.b32.xlu0 %v5997, 8
      %v6214 = vpop.permute.xlu0 %6213
      %6215 = vrot.lane.b32.xlu0 %v5998, 8
      %v6216 = vpop.permute.xlu0 %6215
      %6217 = vrot.lane.b32.xlu0 %v5999, 8
      %v6218 = vpop.permute.xlu0 %6217
      %6219 = vrot.lane.b32.xlu0 %v6000, 8
      %v6220 = vpop.permute.xlu0 %6219
      %6221 = vrot.lane.b32.xlu0 %v6001, 8
      %v6222 = vpop.permute.xlu0 %6221
      %6223 = vrot.lane.b32.xlu0 %v6002, 8
      %v6224 = vpop.permute.xlu0 %6223
      %6225 = vrot.lane.b32.xlu0 %v6003, 8
      %v6226 = vpop.permute.xlu0 %6225
      %6227 = vrot.lane.b32.xlu0 %v6004, 8
      %v6228 = vpop.permute.xlu0 %6227
      %v6261 = vsel %vm280, %v369, %v6038
      %v6262 = vsel %vm280, %v370, %v6040
      %v6263 = vsel %vm280, %v371, %v6042
      %v6264 = vsel %vm280, %v372, %v6044
      %v6265 = vsel %vm280, %v373, %v6046
      %v6266 = vsel %vm280, %v374, %v6048
      %v6267 = vsel %vm280, %v375, %v6050
      %v6268 = vsel %vm280, %v376, %v6052
      %v6269 = vsel %vm280, %v377, %v6054
      %v6270 = vsel %vm280, %v378, %v6056
      %v6271 = vsel %vm280, %v379, %v6058
      %v6272 = vsel %vm280, %v380, %v6060
      %v6273 = vsel %vm280, %v381, %v6062
      %v6274 = vsel %vm280, %v382, %v6064
      %v6275 = vsel %vm280, %v383, %v6066
      %v6276 = vsel %vm280, %v384, %v6068
      %v6277 = vsel %vm280, %v385, %v6070
      %v6278 = vsel %vm280, %v386, %v6072
      %v6279 = vsel %vm280, %v387, %v6074
      %v6280 = vsel %vm280, %v388, %v6076
      %v6281 = vsel %vm280, %v389, %v6078
      %v6282 = vsel %vm280, %v390, %v6080
      %v6283 = vsel %vm280, %v391, %v6082
      %v6284 = vsel %vm280, %v392, %v6084
      %v6285 = vsel %vm280, %v393, %v6086
      %v6286 = vsel %vm280, %v394, %v6088
      %v6287 = vsel %vm280, %v395, %v6090
      %v6288 = vsel %vm280, %v396, %v6092
      %v6289 = vsel %vm280, %v397, %v6094
      %v6290 = vsel %vm280, %v398, %v6096
      %v6291 = vsel %vm280, %v399, %v6098
      %v6292 = vsel %vm280, %v400, %v6100
      %v6293 = vsel %vm1779, %v6261, %v6166
      %v6294 = vsel %vm1779, %v6262, %v6168
      %v6295 = vsel %vm1779, %v6263, %v6170
      %v6296 = vsel %vm1779, %v6264, %v6172
      %v6297 = vsel %vm1779, %v6265, %v6174
      %v6298 = vsel %vm1779, %v6266, %v6176
      %v6299 = vsel %vm1779, %v6267, %v6178
      %v6300 = vsel %vm1779, %v6268, %v6180
      %v6301 = vsel %vm1779, %v6269, %v6182
      %v6302 = vsel %vm1779, %v6270, %v6184
      %v6303 = vsel %vm1779, %v6271, %v6186
      %v6304 = vsel %vm1779, %v6272, %v6188
      %v6305 = vsel %vm1779, %v6273, %v6190
      %v6306 = vsel %vm1779, %v6274, %v6192
      %v6307 = vsel %vm1779, %v6275, %v6194
      %v6308 = vsel %vm1779, %v6276, %v6196
      %v6309 = vsel %vm1779, %v6277, %v6198
      %v6310 = vsel %vm1779, %v6278, %v6200
      %v6311 = vsel %vm1779, %v6279, %v6202
      %v6312 = vsel %vm1779, %v6280, %v6204
      %v6313 = vsel %vm1779, %v6281, %v6206
      %v6314 = vsel %vm1779, %v6282, %v6208
      %v6315 = vsel %vm1779, %v6283, %v6210
      %v6316 = vsel %vm1779, %v6284, %v6212
      %v6317 = vsel %vm1779, %v6285, %v6214
      %v6318 = vsel %vm1779, %v6286, %v6216
      %v6319 = vsel %vm1779, %v6287, %v6218
      %v6320 = vsel %vm1779, %v6288, %v6220
      %v6321 = vsel %vm1779, %v6289, %v6222
      %v6322 = vsel %vm1779, %v6290, %v6224
      %v6323 = vsel %vm1779, %v6291, %v6226
      %v6324 = vsel %vm1779, %v6292, %v6228
      %v6325 = vsel %vm280, %v6293, -inf
      %6326 = vmax.xlane.f32.xlu0 %v6325
      %v6327 = vpop.xlane.xlu0 %6326
      %v6328 = vsel %vm280, %v6294, -inf
      %6329 = vmax.xlane.f32.xlu0 %v6328
      %v6330 = vpop.xlane.xlu0 %6329
      %v6331 = vsel %vm280, %v6295, -inf
      %6332 = vmax.xlane.f32.xlu0 %v6331
      %v6333 = vpop.xlane.xlu0 %6332
      %v6334 = vsel %vm280, %v6296, -inf
      %6335 = vmax.xlane.f32.xlu0 %v6334
      %v6336 = vpop.xlane.xlu0 %6335
      %v6337 = vsel %vm280, %v6297, -inf
      %6338 = vmax.xlane.f32.xlu0 %v6337
      %v6339 = vpop.xlane.xlu0 %6338
      %v6340 = vsel %vm280, %v6298, -inf
      %6341 = vmax.xlane.f32.xlu0 %v6340
      %v6342 = vpop.xlane.xlu0 %6341
      %v6343 = vsel %vm280, %v6299, -inf
      %6344 = vmax.xlane.f32.xlu0 %v6343
      %v6345 = vpop.xlane.xlu0 %6344
      %v6346 = vsel %vm280, %v6300, -inf
      %6347 = vmax.xlane.f32.xlu0 %v6346
      %v6348 = vpop.xlane.xlu0 %6347
      %v6349 = vsel %vm280, %v6301, -inf
      %6350 = vmax.xlane.f32.xlu0 %v6349
      %v6351 = vpop.xlane.xlu0 %6350
      %v6352 = vsel %vm280, %v6302, -inf
      %6353 = vmax.xlane.f32.xlu0 %v6352
      %v6354 = vpop.xlane.xlu0 %6353
      %v6355 = vsel %vm280, %v6303, -inf
      %6356 = vmax.xlane.f32.xlu0 %v6355
      %v6357 = vpop.xlane.xlu0 %6356
      %v6358 = vsel %vm280, %v6304, -inf
      %6359 = vmax.xlane.f32.xlu0 %v6358
      %v6360 = vpop.xlane.xlu0 %6359
      %v6361 = vsel %vm280, %v6305, -inf
      %6362 = vmax.xlane.f32.xlu0 %v6361
      %v6363 = vpop.xlane.xlu0 %6362
      %v6364 = vsel %vm280, %v6306, -inf
      %6365 = vmax.xlane.f32.xlu0 %v6364
      %v6366 = vpop.xlane.xlu0 %6365
      %v6367 = vsel %vm280, %v6307, -inf
      %6368 = vmax.xlane.f32.xlu0 %v6367
      %v6369 = vpop.xlane.xlu0 %6368
      %v6370 = vsel %vm280, %v6308, -inf
      %6371 = vmax.xlane.f32.xlu0 %v6370
      %v6372 = vpop.xlane.xlu0 %6371
      %v6373 = vsel %vm280, %v6309, -inf
      %6374 = vmax.xlane.f32.xlu0 %v6373
      %v6375 = vpop.xlane.xlu0 %6374
      %v6376 = vsel %vm280, %v6310, -inf
      %6377 = vmax.xlane.f32.xlu0 %v6376
      %v6378 = vpop.xlane.xlu0 %6377
      %v6379 = vsel %vm280, %v6311, -inf
      %6380 = vmax.xlane.f32.xlu0 %v6379
      %v6381 = vpop.xlane.xlu0 %6380
      %v6382 = vsel %vm280, %v6312, -inf
      %6383 = vmax.xlane.f32.xlu0 %v6382
      %v6384 = vpop.xlane.xlu0 %6383
      %v6385 = vsel %vm280, %v6313, -inf
      %6386 = vmax.xlane.f32.xlu0 %v6385
      %v6387 = vpop.xlane.xlu0 %6386
      %v6388 = vsel %vm280, %v6314, -inf
      %6389 = vmax.xlane.f32.xlu0 %v6388
      %v6390 = vpop.xlane.xlu0 %6389
      %v6391 = vsel %vm280, %v6315, -inf
      %6392 = vmax.xlane.f32.xlu0 %v6391
      %v6393 = vpop.xlane.xlu0 %6392
      %v6394 = vsel %vm280, %v6316, -inf
      %6395 = vmax.xlane.f32.xlu0 %v6394
      %v6396 = vpop.xlane.xlu0 %6395
      %v6397 = vsel %vm280, %v6317, -inf
      %6398 = vmax.xlane.f32.xlu0 %v6397
      %v6399 = vpop.xlane.xlu0 %6398
      %v6400 = vsel %vm280, %v6318, -inf
      %6401 = vmax.xlane.f32.xlu0 %v6400
      %v6402 = vpop.xlane.xlu0 %6401
      %v6403 = vsel %vm280, %v6319, -inf
      %6404 = vmax.xlane.f32.xlu0 %v6403
      %v6405 = vpop.xlane.xlu0 %6404
      %v6406 = vsel %vm280, %v6320, -inf
      %6407 = vmax.xlane.f32.xlu0 %v6406
      %v6408 = vpop.xlane.xlu0 %6407
      %v6409 = vsel %vm280, %v6321, -inf
      %6410 = vmax.xlane.f32.xlu0 %v6409
      %v6411 = vpop.xlane.xlu0 %6410
      %v6412 = vsel %vm280, %v6322, -inf
      %6413 = vmax.xlane.f32.xlu0 %v6412
      %v6414 = vpop.xlane.xlu0 %6413
      %v6415 = vsel %vm280, %v6323, -inf
      %6416 = vmax.xlane.f32.xlu0 %v6415
      %v6417 = vpop.xlane.xlu0 %6416
      %v6418 = vsel %vm280, %v6324, -inf
      %6419 = vmax.xlane.f32.xlu0 %v6418
      %v6420 = vpop.xlane.xlu0 %6419
      %vm6421 = vcmask 64544
      %v6422 = vsel %vm6421, %v6293, -inf
      %6423 = vmax.xlane.f32.xlu0 %v6422
      %v6424 = vpop.xlane.xlu0 %6423
      %v6425 = vsel %vm6421, %v6294, -inf
      %6426 = vmax.xlane.f32.xlu0 %v6425
      %v6427 = vpop.xlane.xlu0 %6426
      %v6428 = vsel %vm6421, %v6295, -inf
      %6429 = vmax.xlane.f32.xlu0 %v6428
      %v6430 = vpop.xlane.xlu0 %6429
      %v6431 = vsel %vm6421, %v6296, -inf
      %6432 = vmax.xlane.f32.xlu0 %v6431
      %v6433 = vpop.xlane.xlu0 %6432
      %v6434 = vsel %vm6421, %v6297, -inf
      %6435 = vmax.xlane.f32.xlu0 %v6434
      %v6436 = vpop.xlane.xlu0 %6435
      %v6437 = vsel %vm6421, %v6298, -inf
      %6438 = vmax.xlane.f32.xlu0 %v6437
      %v6439 = vpop.xlane.xlu0 %6438
      %v6440 = vsel %vm6421, %v6299, -inf
      %6441 = vmax.xlane.f32.xlu0 %v6440
      %v6442 = vpop.xlane.xlu0 %6441
      %v6443 = vsel %vm6421, %v6300, -inf
      %6444 = vmax.xlane.f32.xlu0 %v6443
      %v6445 = vpop.xlane.xlu0 %6444
      %v6446 = vsel %vm6421, %v6301, -inf
      %6447 = vmax.xlane.f32.xlu0 %v6446
      %v6448 = vpop.xlane.xlu0 %6447
      %v6449 = vsel %vm6421, %v6302, -inf
      %6450 = vmax.xlane.f32.xlu0 %v6449
      %v6451 = vpop.xlane.xlu0 %6450
      %v6452 = vsel %vm6421, %v6303, -inf
      %6453 = vmax.xlane.f32.xlu0 %v6452
      %v6454 = vpop.xlane.xlu0 %6453
      %v6455 = vsel %vm6421, %v6304, -inf
      %6456 = vmax.xlane.f32.xlu0 %v6455
      %v6457 = vpop.xlane.xlu0 %6456
      %v6458 = vsel %vm6421, %v6305, -inf
      %6459 = vmax.xlane.f32.xlu0 %v6458
      %v6460 = vpop.xlane.xlu0 %6459
      %v6461 = vsel %vm6421, %v6306, -inf
      %6462 = vmax.xlane.f32.xlu0 %v6461
      %v6463 = vpop.xlane.xlu0 %6462
      %v6464 = vsel %vm6421, %v6307, -inf
      %6465 = vmax.xlane.f32.xlu0 %v6464
      %v6466 = vpop.xlane.xlu0 %6465
      %v6467 = vsel %vm6421, %v6308, -inf
      %6468 = vmax.xlane.f32.xlu0 %v6467
      %v6469 = vpop.xlane.xlu0 %6468
      %v6470 = vsel %vm6421, %v6309, -inf
      %6471 = vmax.xlane.f32.xlu0 %v6470
      %v6472 = vpop.xlane.xlu0 %6471
      %v6473 = vsel %vm6421, %v6310, -inf
      %6474 = vmax.xlane.f32.xlu0 %v6473
      %v6475 = vpop.xlane.xlu0 %6474
      %v6476 = vsel %vm6421, %v6311, -inf
      %6477 = vmax.xlane.f32.xlu0 %v6476
      %v6478 = vpop.xlane.xlu0 %6477
      %v6479 = vsel %vm6421, %v6312, -inf
      %6480 = vmax.xlane.f32.xlu0 %v6479
      %v6481 = vpop.xlane.xlu0 %6480
      %v6482 = vsel %vm6421, %v6313, -inf
      %6483 = vmax.xlane.f32.xlu0 %v6482
      %v6484 = vpop.xlane.xlu0 %6483
      %v6485 = vsel %vm6421, %v6314, -inf
      %6486 = vmax.xlane.f32.xlu0 %v6485
      %v6487 = vpop.xlane.xlu0 %6486
      %v6488 = vsel %vm6421, %v6315, -inf
      %6489 = vmax.xlane.f32.xlu0 %v6488
      %v6490 = vpop.xlane.xlu0 %6489
      %v6491 = vsel %vm6421, %v6316, -inf
      %6492 = vmax.xlane.f32.xlu0 %v6491
      %v6493 = vpop.xlane.xlu0 %6492
      %v6494 = vsel %vm6421, %v6317, -inf
      %6495 = vmax.xlane.f32.xlu0 %v6494
      %v6496 = vpop.xlane.xlu0 %6495
      %v6497 = vsel %vm6421, %v6318, -inf
      %6498 = vmax.xlane.f32.xlu0 %v6497
      %v6499 = vpop.xlane.xlu0 %6498
      %v6500 = vsel %vm6421, %v6319, -inf
      %6501 = vmax.xlane.f32.xlu0 %v6500
      %v6502 = vpop.xlane.xlu0 %6501
      %v6503 = vsel %vm6421, %v6320, -inf
      %6504 = vmax.xlane.f32.xlu0 %v6503
      %v6505 = vpop.xlane.xlu0 %6504
      %v6506 = vsel %vm6421, %v6321, -inf
      %6507 = vmax.xlane.f32.xlu0 %v6506
      %v6508 = vpop.xlane.xlu0 %6507
      %v6509 = vsel %vm6421, %v6322, -inf
      %6510 = vmax.xlane.f32.xlu0 %v6509
      %v6511 = vpop.xlane.xlu0 %6510
      %v6512 = vsel %vm6421, %v6323, -inf
      %6513 = vmax.xlane.f32.xlu0 %v6512
      %v6514 = vpop.xlane.xlu0 %6513
      %v6515 = vsel %vm6421, %v6324, -inf
      %6516 = vmax.xlane.f32.xlu0 %v6515
      %v6517 = vpop.xlane.xlu0 %6516
      %vm6518 = vcmask 97344
      %v6519 = vsel %vm6518, %v6293, -inf
      %6520 = vmax.xlane.f32.xlu0 %v6519
      %v6521 = vpop.xlane.xlu0 %6520
      %v6522 = vsel %vm6518, %v6294, -inf
      %6523 = vmax.xlane.f32.xlu0 %v6522
      %v6524 = vpop.xlane.xlu0 %6523
      %v6525 = vsel %vm6518, %v6295, -inf
      %6526 = vmax.xlane.f32.xlu0 %v6525
      %v6527 = vpop.xlane.xlu0 %6526
      %v6528 = vsel %vm6518, %v6296, -inf
      %6529 = vmax.xlane.f32.xlu0 %v6528
      %v6530 = vpop.xlane.xlu0 %6529
      %v6531 = vsel %vm6518, %v6297, -inf
      %6532 = vmax.xlane.f32.xlu0 %v6531
      %v6533 = vpop.xlane.xlu0 %6532
      %v6534 = vsel %vm6518, %v6298, -inf
      %6535 = vmax.xlane.f32.xlu0 %v6534
      %v6536 = vpop.xlane.xlu0 %6535
      %v6537 = vsel %vm6518, %v6299, -inf
      %6538 = vmax.xlane.f32.xlu0 %v6537
      %v6539 = vpop.xlane.xlu0 %6538
      %v6540 = vsel %vm6518, %v6300, -inf
      %6541 = vmax.xlane.f32.xlu0 %v6540
      %v6542 = vpop.xlane.xlu0 %6541
      %v6543 = vsel %vm6518, %v6301, -inf
      %6544 = vmax.xlane.f32.xlu0 %v6543
      %v6545 = vpop.xlane.xlu0 %6544
      %v6546 = vsel %vm6518, %v6302, -inf
      %6547 = vmax.xlane.f32.xlu0 %v6546
      %v6548 = vpop.xlane.xlu0 %6547
      %v6549 = vsel %vm6518, %v6303, -inf
      %6550 = vmax.xlane.f32.xlu0 %v6549
      %v6551 = vpop.xlane.xlu0 %6550
      %v6552 = vsel %vm6518, %v6304, -inf
      %6553 = vmax.xlane.f32.xlu0 %v6552
      %v6554 = vpop.xlane.xlu0 %6553
      %v6555 = vsel %vm6518, %v6305, -inf
      %6556 = vmax.xlane.f32.xlu0 %v6555
      %v6557 = vpop.xlane.xlu0 %6556
      %v6558 = vsel %vm6518, %v6306, -inf
      %6559 = vmax.xlane.f32.xlu0 %v6558
      %v6560 = vpop.xlane.xlu0 %6559
      %v6561 = vsel %vm6518, %v6307, -inf
      %6562 = vmax.xlane.f32.xlu0 %v6561
      %v6563 = vpop.xlane.xlu0 %6562
      %v6564 = vsel %vm6518, %v6308, -inf
      %6565 = vmax.xlane.f32.xlu0 %v6564
      %v6566 = vpop.xlane.xlu0 %6565
      %v6567 = vsel %vm6518, %v6309, -inf
      %6568 = vmax.xlane.f32.xlu0 %v6567
      %v6569 = vpop.xlane.xlu0 %6568
      %v6570 = vsel %vm6518, %v6310, -inf
      %6571 = vmax.xlane.f32.xlu0 %v6570
      %v6572 = vpop.xlane.xlu0 %6571
      %v6573 = vsel %vm6518, %v6311, -inf
      %6574 = vmax.xlane.f32.xlu0 %v6573
      %v6575 = vpop.xlane.xlu0 %6574
      %v6576 = vsel %vm6518, %v6312, -inf
      %6577 = vmax.xlane.f32.xlu0 %v6576
      %v6578 = vpop.xlane.xlu0 %6577
      %v6579 = vsel %vm6518, %v6313, -inf
      %6580 = vmax.xlane.f32.xlu0 %v6579
      %v6581 = vpop.xlane.xlu0 %6580
      %v6582 = vsel %vm6518, %v6314, -inf
      %6583 = vmax.xlane.f32.xlu0 %v6582
      %v6584 = vpop.xlane.xlu0 %6583
      %v6585 = vsel %vm6518, %v6315, -inf
      %6586 = vmax.xlane.f32.xlu0 %v6585
      %v6587 = vpop.xlane.xlu0 %6586
      %v6588 = vsel %vm6518, %v6316, -inf
      %6589 = vmax.xlane.f32.xlu0 %v6588
      %v6590 = vpop.xlane.xlu0 %6589
      %v6591 = vsel %vm6518, %v6317, -inf
      %6592 = vmax.xlane.f32.xlu0 %v6591
      %v6593 = vpop.xlane.xlu0 %6592
      %v6594 = vsel %vm6518, %v6318, -inf
      %6595 = vmax.xlane.f32.xlu0 %v6594
      %v6596 = vpop.xlane.xlu0 %6595
      %v6597 = vsel %vm6518, %v6319, -inf
      %6598 = vmax.xlane.f32.xlu0 %v6597
      %v6599 = vpop.xlane.xlu0 %6598
      %v6600 = vsel %vm6518, %v6320, -inf
      %6601 = vmax.xlane.f32.xlu0 %v6600
      %v6602 = vpop.xlane.xlu0 %6601
      %v6603 = vsel %vm6518, %v6321, -inf
      %6604 = vmax.xlane.f32.xlu0 %v6603
      %v6605 = vpop.xlane.xlu0 %6604
      %v6606 = vsel %vm6518, %v6322, -inf
      %6607 = vmax.xlane.f32.xlu0 %v6606
      %v6608 = vpop.xlane.xlu0 %6607
      %v6609 = vsel %vm6518, %v6323, -inf
      %6610 = vmax.xlane.f32.xlu0 %v6609
      %v6611 = vpop.xlane.xlu0 %6610
      %v6612 = vsel %vm6518, %v6324, -inf
      %6613 = vmax.xlane.f32.xlu0 %v6612
      %v6614 = vpop.xlane.xlu0 %6613
      %vm6615 = vcmask 130144
      %v6616 = vsel %vm6615, %v6293, -inf
      %6617 = vmax.xlane.f32.xlu0 %v6616
      %v6618 = vpop.xlane.xlu0 %6617
      %v6619 = vsel %vm6615, %v6294, -inf
      %6620 = vmax.xlane.f32.xlu0 %v6619
      %v6621 = vpop.xlane.xlu0 %6620
      %v6622 = vsel %vm6615, %v6295, -inf
      %6623 = vmax.xlane.f32.xlu0 %v6622
      %v6624 = vpop.xlane.xlu0 %6623
      %v6625 = vsel %vm6615, %v6296, -inf
      %6626 = vmax.xlane.f32.xlu0 %v6625
      %v6627 = vpop.xlane.xlu0 %6626
      %v6628 = vsel %vm6615, %v6297, -inf
      %6629 = vmax.xlane.f32.xlu0 %v6628
      %v6630 = vpop.xlane.xlu0 %6629
      %v6631 = vsel %vm6615, %v6298, -inf
      %6632 = vmax.xlane.f32.xlu0 %v6631
      %v6633 = vpop.xlane.xlu0 %6632
      %v6634 = vsel %vm6615, %v6299, -inf
      %6635 = vmax.xlane.f32.xlu0 %v6634
      %v6636 = vpop.xlane.xlu0 %6635
      %v6637 = vsel %vm6615, %v6300, -inf
      %6638 = vmax.xlane.f32.xlu0 %v6637
      %v6639 = vpop.xlane.xlu0 %6638
      %v6640 = vsel %vm6615, %v6301, -inf
      %6641 = vmax.xlane.f32.xlu0 %v6640
      %v6642 = vpop.xlane.xlu0 %6641
      %v6643 = vsel %vm6615, %v6302, -inf
      %6644 = vmax.xlane.f32.xlu0 %v6643
      %v6645 = vpop.xlane.xlu0 %6644
      %v6646 = vsel %vm6615, %v6303, -inf
      %6647 = vmax.xlane.f32.xlu0 %v6646
      %v6648 = vpop.xlane.xlu0 %6647
      %v6649 = vsel %vm6615, %v6304, -inf
      %6650 = vmax.xlane.f32.xlu0 %v6649
      %v6651 = vpop.xlane.xlu0 %6650
      %v6652 = vsel %vm6615, %v6305, -inf
      %6653 = vmax.xlane.f32.xlu0 %v6652
      %v6654 = vpop.xlane.xlu0 %6653
      %v6655 = vsel %vm6615, %v6306, -inf
      %6656 = vmax.xlane.f32.xlu0 %v6655
      %v6657 = vpop.xlane.xlu0 %6656
      %v6658 = vsel %vm6615, %v6307, -inf
      %6659 = vmax.xlane.f32.xlu0 %v6658
      %v6660 = vpop.xlane.xlu0 %6659
      %v6661 = vsel %vm6615, %v6308, -inf
      %6662 = vmax.xlane.f32.xlu0 %v6661
      %v6663 = vpop.xlane.xlu0 %6662
      %v6664 = vsel %vm6615, %v6309, -inf
      %6665 = vmax.xlane.f32.xlu0 %v6664
      %v6666 = vpop.xlane.xlu0 %6665
      %v6667 = vsel %vm6615, %v6310, -inf
      %6668 = vmax.xlane.f32.xlu0 %v6667
      %v6669 = vpop.xlane.xlu0 %6668
      %v6670 = vsel %vm6615, %v6311, -inf
      %6671 = vmax.xlane.f32.xlu0 %v6670
      %v6672 = vpop.xlane.xlu0 %6671
      %v6673 = vsel %vm6615, %v6312, -inf
      %6674 = vmax.xlane.f32.xlu0 %v6673
      %v6675 = vpop.xlane.xlu0 %6674
      %v6676 = vsel %vm6615, %v6313, -inf
      %6677 = vmax.xlane.f32.xlu0 %v6676
      %v6678 = vpop.xlane.xlu0 %6677
      %v6679 = vsel %vm6615, %v6314, -inf
      %6680 = vmax.xlane.f32.xlu0 %v6679
      %v6681 = vpop.xlane.xlu0 %6680
      %v6682 = vsel %vm6615, %v6315, -inf
      %6683 = vmax.xlane.f32.xlu0 %v6682
      %v6684 = vpop.xlane.xlu0 %6683
      %v6685 = vsel %vm6615, %v6316, -inf
      %6686 = vmax.xlane.f32.xlu0 %v6685
      %v6687 = vpop.xlane.xlu0 %6686
      %v6688 = vsel %vm6615, %v6317, -inf
      %6689 = vmax.xlane.f32.xlu0 %v6688
      %v6690 = vpop.xlane.xlu0 %6689
      %v6691 = vsel %vm6615, %v6318, -inf
      %6692 = vmax.xlane.f32.xlu0 %v6691
      %v6693 = vpop.xlane.xlu0 %6692
      %v6694 = vsel %vm6615, %v6319, -inf
      %6695 = vmax.xlane.f32.xlu0 %v6694
      %v6696 = vpop.xlane.xlu0 %6695
      %v6697 = vsel %vm6615, %v6320, -inf
      %6698 = vmax.xlane.f32.xlu0 %v6697
      %v6699 = vpop.xlane.xlu0 %6698
      %v6700 = vsel %vm6615, %v6321, -inf
      %6701 = vmax.xlane.f32.xlu0 %v6700
      %v6702 = vpop.xlane.xlu0 %6701
      %v6703 = vsel %vm6615, %v6322, -inf
      %6704 = vmax.xlane.f32.xlu0 %v6703
      %v6705 = vpop.xlane.xlu0 %6704
      %v6706 = vsel %vm6615, %v6323, -inf
      %6707 = vmax.xlane.f32.xlu0 %v6706
      %v6708 = vpop.xlane.xlu0 %6707
      %v6709 = vsel %vm6615, %v6324, -inf
      %6710 = vmax.xlane.f32.xlu0 %v6709
      %v6711 = vpop.xlane.xlu0 %6710
      %vm6712 = vcmask 7168
      %v6713 = vsel %vm6712, %v6327, %v6424
      %v6714 = vsel %vm6712, %v6330, %v6427
      %v6715 = vsel %vm6712, %v6333, %v6430
      %v6716 = vsel %vm6712, %v6336, %v6433
      %v6717 = vsel %vm6712, %v6339, %v6436
      %v6718 = vsel %vm6712, %v6342, %v6439
      %v6719 = vsel %vm6712, %v6345, %v6442
      %v6720 = vsel %vm6712, %v6348, %v6445
      %v6721 = vsel %vm6712, %v6351, %v6448
      %v6722 = vsel %vm6712, %v6354, %v6451
      %v6723 = vsel %vm6712, %v6357, %v6454
      %v6724 = vsel %vm6712, %v6360, %v6457
      %v6725 = vsel %vm6712, %v6363, %v6460
      %v6726 = vsel %vm6712, %v6366, %v6463
      %v6727 = vsel %vm6712, %v6369, %v6466
      %v6728 = vsel %vm6712, %v6372, %v6469
      %v6729 = vsel %vm6712, %v6375, %v6472
      %v6730 = vsel %vm6712, %v6378, %v6475
      %v6731 = vsel %vm6712, %v6381, %v6478
      %v6732 = vsel %vm6712, %v6384, %v6481
      %v6733 = vsel %vm6712, %v6387, %v6484
      %v6734 = vsel %vm6712, %v6390, %v6487
      %v6735 = vsel %vm6712, %v6393, %v6490
      %v6736 = vsel %vm6712, %v6396, %v6493
      %v6737 = vsel %vm6712, %v6399, %v6496
      %v6738 = vsel %vm6712, %v6402, %v6499
      %v6739 = vsel %vm6712, %v6405, %v6502
      %v6740 = vsel %vm6712, %v6408, %v6505
      %v6741 = vsel %vm6712, %v6411, %v6508
      %v6742 = vsel %vm6712, %v6414, %v6511
      %v6743 = vsel %vm6712, %v6417, %v6514
      %v6744 = vsel %vm6712, %v6420, %v6517
      %vm6745 = vcmask 15360
      %v6746 = vsel %vm6745, %v6713, %v6521
      %v6747 = vsel %vm6745, %v6714, %v6524
      %v6748 = vsel %vm6745, %v6715, %v6527
      %v6749 = vsel %vm6745, %v6716, %v6530
      %v6750 = vsel %vm6745, %v6717, %v6533
      %v6751 = vsel %vm6745, %v6718, %v6536
      %v6752 = vsel %vm6745, %v6719, %v6539
      %v6753 = vsel %vm6745, %v6720, %v6542
      %v6754 = vsel %vm6745, %v6721, %v6545
      %v6755 = vsel %vm6745, %v6722, %v6548
      %v6756 = vsel %vm6745, %v6723, %v6551
      %v6757 = vsel %vm6745, %v6724, %v6554
      %v6758 = vsel %vm6745, %v6725, %v6557
      %v6759 = vsel %vm6745, %v6726, %v6560
      %v6760 = vsel %vm6745, %v6727, %v6563
      %v6761 = vsel %vm6745, %v6728, %v6566
      %v6762 = vsel %vm6745, %v6729, %v6569
      %v6763 = vsel %vm6745, %v6730, %v6572
      %v6764 = vsel %vm6745, %v6731, %v6575
      %v6765 = vsel %vm6745, %v6732, %v6578
      %v6766 = vsel %vm6745, %v6733, %v6581
      %v6767 = vsel %vm6745, %v6734, %v6584
      %v6768 = vsel %vm6745, %v6735, %v6587
      %v6769 = vsel %vm6745, %v6736, %v6590
      %v6770 = vsel %vm6745, %v6737, %v6593
      %v6771 = vsel %vm6745, %v6738, %v6596
      %v6772 = vsel %vm6745, %v6739, %v6599
      %v6773 = vsel %vm6745, %v6740, %v6602
      %v6774 = vsel %vm6745, %v6741, %v6605
      %v6775 = vsel %vm6745, %v6742, %v6608
      %v6776 = vsel %vm6745, %v6743, %v6611
      %v6777 = vsel %vm6745, %v6744, %v6614
      %vm6778 = vcmask 23552
      %v6779 = vsel %vm6778, %v6746, %v6618
      %v6780 = vsel %vm6778, %v6747, %v6621
      %v6781 = vsel %vm6778, %v6748, %v6624
      %v6782 = vsel %vm6778, %v6749, %v6627
      %v6783 = vsel %vm6778, %v6750, %v6630
      %v6784 = vsel %vm6778, %v6751, %v6633
      %v6785 = vsel %vm6778, %v6752, %v6636
      %v6786 = vsel %vm6778, %v6753, %v6639
      %v6787 = vsel %vm6778, %v6754, %v6642
      %v6788 = vsel %vm6778, %v6755, %v6645
      %v6789 = vsel %vm6778, %v6756, %v6648
      %v6790 = vsel %vm6778, %v6757, %v6651
      %v6791 = vsel %vm6778, %v6758, %v6654
      %v6792 = vsel %vm6778, %v6759, %v6657
      %v6793 = vsel %vm6778, %v6760, %v6660
      %v6794 = vsel %vm6778, %v6761, %v6663
      %v6795 = vsel %vm6778, %v6762, %v6666
      %v6796 = vsel %vm6778, %v6763, %v6669
      %v6797 = vsel %vm6778, %v6764, %v6672
      %v6798 = vsel %vm6778, %v6765, %v6675
      %v6799 = vsel %vm6778, %v6766, %v6678
      %v6800 = vsel %vm6778, %v6767, %v6681
      %v6801 = vsel %vm6778, %v6768, %v6684
      %v6802 = vsel %vm6778, %v6769, %v6687
      %v6803 = vsel %vm6778, %v6770, %v6690
      %v6804 = vsel %vm6778, %v6771, %v6693
      %v6805 = vsel %vm6778, %v6772, %v6696
      %v6806 = vsel %vm6778, %v6773, %v6699
      %v6807 = vsel %vm6778, %v6774, %v6702
      %v6808 = vsel %vm6778, %v6775, %v6705
      %v6809 = vsel %vm6778, %v6776, %v6708
      %v6810 = vsel %vm6778, %v6777, %v6711
      %6811 = vst.msk [vmem:[%s401 + $0x1] sm:$0xff] %vm280, %v6779
      %6812 = vst.msk [vmem:[%s401 + $0x9] sm:$0xff] %vm280, %v6780
      %6813 = vst.msk [vmem:[%s401 + $0x19] sm:$0xff] %vm280, %v6781
      %6814 = vst.msk [vmem:[%s401 + $0x21] sm:$0xff] %vm280, %v6782
      %6815 = vst.msk [vmem:[%s401 + $0x31] sm:$0xff] %vm280, %v6783
      %6816 = vst.msk [vmem:[%s401 + $0x39] sm:$0xff] %vm280, %v6784
      %6817 = vst.msk [vmem:[%s401 + $0x49] sm:$0xff] %vm280, %v6785
      %6818 = vst.msk [vmem:[%s401 + $0x51] sm:$0xff] %vm280, %v6786
      %6819 = vst.msk [vmem:[%s401 + $0x61] sm:$0xff] %vm280, %v6787
      %6820 = vst.msk [vmem:[%s401 + $0x69] sm:$0xff] %vm280, %v6788
      %6821 = vst.msk [vmem:[%s401 + $0x79] sm:$0xff] %vm280, %v6789
      %6822 = vst.msk [vmem:[%s401 + $0x81] sm:$0xff] %vm280, %v6790
      %6823 = vst.msk [vmem:[%s401 + $0x91] sm:$0xff] %vm280, %v6791
      %6824 = vst.msk [vmem:[%s401 + $0x99] sm:$0xff] %vm280, %v6792
      %6825 = vst.msk [vmem:[%s401 + $0xa9] sm:$0xff] %vm280, %v6793
      %6826 = vst.msk [vmem:[%s401 + $0xb1] sm:$0xff] %vm280, %v6794
      %6827 = vst.msk [vmem:[%s401 + $0xc1] sm:$0xff] %vm280, %v6795
      %6828 = vst.msk [vmem:[%s401 + $0xc9] sm:$0xff] %vm280, %v6796
      %6829 = vst.msk [vmem:[%s401 + $0xd9] sm:$0xff] %vm280, %v6797
      %6830 = vst.msk [vmem:[%s401 + $0xe1] sm:$0xff] %vm280, %v6798
      %6831 = vst.msk [vmem:[%s401 + $0xf1] sm:$0xff] %vm280, %v6799
      %6832 = vst.msk [vmem:[%s401 + $0xf9] sm:$0xff] %vm280, %v6800
      %6833 = vst.msk [vmem:[%s401 + $0x109] sm:$0xff] %vm280, %v6801
      %6834 = vst.msk [vmem:[%s401 + $0x111] sm:$0xff] %vm280, %v6802
      %6835 = vst.msk [vmem:[%s401 + $0x121] sm:$0xff] %vm280, %v6803
      %6836 = vst.msk [vmem:[%s401 + $0x129] sm:$0xff] %vm280, %v6804
      %6837 = vst.msk [vmem:[%s401 + $0x139] sm:$0xff] %vm280, %v6805
      %6838 = vst.msk [vmem:[%s401 + $0x141] sm:$0xff] %vm280, %v6806
      %6839 = vst.msk [vmem:[%s401 + $0x151] sm:$0xff] %vm280, %v6807
      %6840 = vst.msk [vmem:[%s401 + $0x159] sm:$0xff] %vm280, %v6808
      %6841 = vst.msk [vmem:[%s401 + $0x169] sm:$0xff] %vm280, %v6809
      %6842 = vst.msk [vmem:[%s401 + $0x171] sm:$0xff] %vm280, %v6810
      %v6843 = vld [vmem:[#allocation2] sm:$0xff]
      %v6844 = vld [vmem:[#allocation2 + $0x8] sm:$0xff]
      %v6845 = vld [vmem:[#allocation2 + $0x18] sm:$0xff]
      %v6846 = vld [vmem:[#allocation2 + $0x20] sm:$0xff]
      %v6847 = vld [vmem:[#allocation2 + $0x30] sm:$0xff]
      %v6848 = vld [vmem:[#allocation2 + $0x38] sm:$0xff]
      %v6849 = vld [vmem:[#allocation2 + $0x48] sm:$0xff]
      %v6850 = vld [vmem:[#allocation2 + $0x50] sm:$0xff]
      %v6851 = vld [vmem:[#allocation2 + $0x60] sm:$0xff]
      %v6852 = vld [vmem:[#allocation2 + $0x68] sm:$0xff]
      %v6853 = vld [vmem:[#allocation2 + $0x78] sm:$0xff]
      %v6854 = vld [vmem:[#allocation2 + $0x80] sm:$0xff]
      %v6855 = vld [vmem:[#allocation2 + $0x90] sm:$0xff]
      %v6856 = vld [vmem:[#allocation2 + $0x98] sm:$0xff]
      %v6857 = vld [vmem:[#allocation2 + $0xa8] sm:$0xff]
      %v6858 = vld [vmem:[#allocation2 + $0xb0] sm:$0xff]
      %v6859 = vld [vmem:[#allocation2 + $0xc0] sm:$0xff]
      %v6860 = vld [vmem:[#allocation2 + $0xc8] sm:$0xff]
      %v6861 = vld [vmem:[#allocation2 + $0xd8] sm:$0xff]
      %v6862 = vld [vmem:[#allocation2 + $0xe0] sm:$0xff]
      %v6863 = vld [vmem:[#allocation2 + $0xf0] sm:$0xff]
      %v6864 = vld [vmem:[#allocation2 + $0xf8] sm:$0xff]
      %v6865 = vld [vmem:[#allocation2 + $0x108] sm:$0xff]
      %v6866 = vld [vmem:[#allocation2 + $0x110] sm:$0xff]
      %v6867 = vld [vmem:[#allocation2 + $0x120] sm:$0xff]
      %v6868 = vld [vmem:[#allocation2 + $0x128] sm:$0xff]
      %v6869 = vld [vmem:[#allocation2 + $0x138] sm:$0xff]
      %v6870 = vld [vmem:[#allocation2 + $0x140] sm:$0xff]
      %v6871 = vld [vmem:[#allocation2 + $0x150] sm:$0xff]
      %v6872 = vld [vmem:[#allocation2 + $0x158] sm:$0xff]
      %v6873 = vld [vmem:[#allocation2 + $0x168] sm:$0xff]
      %v6874 = vld [vmem:[#allocation2 + $0x170] sm:$0xff]
      %v6875 = vld [vmem:[#allocation2 + $0x1] sm:$0xff]
      %v6876 = vld [vmem:[#allocation2 + $0x9] sm:$0xff]
      %v6877 = vld [vmem:[#allocation2 + $0x19] sm:$0xff]
      %v6878 = vld [vmem:[#allocation2 + $0x21] sm:$0xff]
      %v6879 = vld [vmem:[#allocation2 + $0x31] sm:$0xff]
      %v6880 = vld [vmem:[#allocation2 + $0x39] sm:$0xff]
      %v6881 = vld [vmem:[#allocation2 + $0x49] sm:$0xff]
      %v6882 = vld [vmem:[#allocation2 + $0x51] sm:$0xff]
      %v6883 = vld [vmem:[#allocation2 + $0x61] sm:$0xff]
      %v6884 = vld [vmem:[#allocation2 + $0x69] sm:$0xff]
      %v6885 = vld [vmem:[#allocation2 + $0x79] sm:$0xff]
      %v6886 = vld [vmem:[#allocation2 + $0x81] sm:$0xff]
      %v6887 = vld [vmem:[#allocation2 + $0x91] sm:$0xff]
      %v6888 = vld [vmem:[#allocation2 + $0x99] sm:$0xff]
      %v6889 = vld [vmem:[#allocation2 + $0xa9] sm:$0xff]
      %v6890 = vld [vmem:[#allocation2 + $0xb1] sm:$0xff]
      %v6891 = vld [vmem:[#allocation2 + $0xc1] sm:$0xff]
      %v6892 = vld [vmem:[#allocation2 + $0xc9] sm:$0xff]
      %v6893 = vld [vmem:[#allocation2 + $0xd9] sm:$0xff]
      %v6894 = vld [vmem:[#allocation2 + $0xe1] sm:$0xff]
      %v6895 = vld [vmem:[#allocation2 + $0xf1] sm:$0xff]
      %v6896 = vld [vmem:[#allocation2 + $0xf9] sm:$0xff]
      %v6897 = vld [vmem:[#allocation2 + $0x109] sm:$0xff]
      %v6898 = vld [vmem:[#allocation2 + $0x111] sm:$0xff]
      %v6899 = vld [vmem:[#allocation2 + $0x121] sm:$0xff]
      %v6900 = vld [vmem:[#allocation2 + $0x129] sm:$0xff]
      %v6901 = vld [vmem:[#allocation2 + $0x139] sm:$0xff]
      %v6902 = vld [vmem:[#allocation2 + $0x141] sm:$0xff]
      %v6903 = vld [vmem:[#allocation2 + $0x151] sm:$0xff]
      %v6904 = vld [vmem:[#allocation2 + $0x159] sm:$0xff]
      %v6905 = vld [vmem:[#allocation2 + $0x169] sm:$0xff]
      %v6906 = vld [vmem:[#allocation2 + $0x171] sm:$0xff]
      %v6907 = vld [vmem:[#allocation2 + $0x2] sm:$0xff]
      %v6908 = vld [vmem:[#allocation2 + $0xa] sm:$0xff]
      %v6909 = vld [vmem:[#allocation2 + $0x1a] sm:$0xff]
      %v6910 = vld [vmem:[#allocation2 + $0x22] sm:$0xff]
      %v6911 = vld [vmem:[#allocation2 + $0x32] sm:$0xff]
      %v6912 = vld [vmem:[#allocation2 + $0x3a] sm:$0xff]
      %v6913 = vld [vmem:[#allocation2 + $0x4a] sm:$0xff]
      %v6914 = vld [vmem:[#allocation2 + $0x52] sm:$0xff]
      %v6915 = vld [vmem:[#allocation2 + $0x62] sm:$0xff]
      %v6916 = vld [vmem:[#allocation2 + $0x6a] sm:$0xff]
      %v6917 = vld [vmem:[#allocation2 + $0x7a] sm:$0xff]
      %v6918 = vld [vmem:[#allocation2 + $0x82] sm:$0xff]
      %v6919 = vld [vmem:[#allocation2 + $0x92] sm:$0xff]
      %v6920 = vld [vmem:[#allocation2 + $0x9a] sm:$0xff]
      %v6921 = vld [vmem:[#allocation2 + $0xaa] sm:$0xff]
      %v6922 = vld [vmem:[#allocation2 + $0xb2] sm:$0xff]
      %v6923 = vld [vmem:[#allocation2 + $0xc2] sm:$0xff]
      %v6924 = vld [vmem:[#allocation2 + $0xca] sm:$0xff]
      %v6925 = vld [vmem:[#allocation2 + $0xda] sm:$0xff]
      %v6926 = vld [vmem:[#allocation2 + $0xe2] sm:$0xff]
      %v6927 = vld [vmem:[#allocation2 + $0xf2] sm:$0xff]
      %v6928 = vld [vmem:[#allocation2 + $0xfa] sm:$0xff]
      %v6929 = vld [vmem:[#allocation2 + $0x10a] sm:$0xff]
      %v6930 = vld [vmem:[#allocation2 + $0x112] sm:$0xff]
      %v6931 = vld [vmem:[#allocation2 + $0x122] sm:$0xff]
      %v6932 = vld [vmem:[#allocation2 + $0x12a] sm:$0xff]
      %v6933 = vld [vmem:[#allocation2 + $0x13a] sm:$0xff]
      %v6934 = vld [vmem:[#allocation2 + $0x142] sm:$0xff]
      %v6935 = vld [vmem:[#allocation2 + $0x152] sm:$0xff]
      %v6936 = vld [vmem:[#allocation2 + $0x15a] sm:$0xff]
      %v6937 = vld [vmem:[#allocation2 + $0x16a] sm:$0xff]
      %v6938 = vld [vmem:[#allocation2 + $0x172] sm:$0xff]
      %v6939 = vld [vmem:[%s401] sm:$0xff]
      %v6940 = vld [vmem:[%s401 + $0x8] sm:$0xff]
      %v6941 = vld [vmem:[%s401 + $0x18] sm:$0xff]
      %v6942 = vld [vmem:[%s401 + $0x20] sm:$0xff]
      %v6943 = vld [vmem:[%s401 + $0x30] sm:$0xff]
      %v6944 = vld [vmem:[%s401 + $0x38] sm:$0xff]
      %v6945 = vld [vmem:[%s401 + $0x48] sm:$0xff]
      %v6946 = vld [vmem:[%s401 + $0x50] sm:$0xff]
      %v6947 = vld [vmem:[%s401 + $0x60] sm:$0xff]
      %v6948 = vld [vmem:[%s401 + $0x68] sm:$0xff]
      %v6949 = vld [vmem:[%s401 + $0x78] sm:$0xff]
      %v6950 = vld [vmem:[%s401 + $0x80] sm:$0xff]
      %v6951 = vld [vmem:[%s401 + $0x90] sm:$0xff]
      %v6952 = vld [vmem:[%s401 + $0x98] sm:$0xff]
      %v6953 = vld [vmem:[%s401 + $0xa8] sm:$0xff]
      %v6954 = vld [vmem:[%s401 + $0xb0] sm:$0xff]
      %v6955 = vld [vmem:[%s401 + $0xc0] sm:$0xff]
      %v6956 = vld [vmem:[%s401 + $0xc8] sm:$0xff]
      %v6957 = vld [vmem:[%s401 + $0xd8] sm:$0xff]
      %v6958 = vld [vmem:[%s401 + $0xe0] sm:$0xff]
      %v6959 = vld [vmem:[%s401 + $0xf0] sm:$0xff]
      %v6960 = vld [vmem:[%s401 + $0xf8] sm:$0xff]
      %v6961 = vld [vmem:[%s401 + $0x108] sm:$0xff]
      %v6962 = vld [vmem:[%s401 + $0x110] sm:$0xff]
      %v6963 = vld [vmem:[%s401 + $0x120] sm:$0xff]
      %v6964 = vld [vmem:[%s401 + $0x128] sm:$0xff]
      %v6965 = vld [vmem:[%s401 + $0x138] sm:$0xff]
      %v6966 = vld [vmem:[%s401 + $0x140] sm:$0xff]
      %v6967 = vld [vmem:[%s401 + $0x150] sm:$0xff]
      %v6968 = vld [vmem:[%s401 + $0x158] sm:$0xff]
      %v6969 = vld [vmem:[%s401 + $0x168] sm:$0xff]
      %v6970 = vld [vmem:[%s401 + $0x170] sm:$0xff]
      %v6971 = vld [vmem:[%s401 + $0x1] sm:$0xff]
      %v6972 = vld [vmem:[%s401 + $0x9] sm:$0xff]
      %v6973 = vld [vmem:[%s401 + $0x19] sm:$0xff]
      %v6974 = vld [vmem:[%s401 + $0x21] sm:$0xff]
      %v6975 = vld [vmem:[%s401 + $0x31] sm:$0xff]
      %v6976 = vld [vmem:[%s401 + $0x39] sm:$0xff]
      %v6977 = vld [vmem:[%s401 + $0x49] sm:$0xff]
      %v6978 = vld [vmem:[%s401 + $0x51] sm:$0xff]
      %v6979 = vld [vmem:[%s401 + $0x61] sm:$0xff]
      %v6980 = vld [vmem:[%s401 + $0x69] sm:$0xff]
      %v6981 = vld [vmem:[%s401 + $0x79] sm:$0xff]
      %v6982 = vld [vmem:[%s401 + $0x81] sm:$0xff]
      %v6983 = vld [vmem:[%s401 + $0x91] sm:$0xff]
      %v6984 = vld [vmem:[%s401 + $0x99] sm:$0xff]
      %v6985 = vld [vmem:[%s401 + $0xa9] sm:$0xff]
      %v6986 = vld [vmem:[%s401 + $0xb1] sm:$0xff]
      %v6987 = vld [vmem:[%s401 + $0xc1] sm:$0xff]
      %v6988 = vld [vmem:[%s401 + $0xc9] sm:$0xff]
      %v6989 = vld [vmem:[%s401 + $0xd9] sm:$0xff]
      %v6990 = vld [vmem:[%s401 + $0xe1] sm:$0xff]
      %v6991 = vld [vmem:[%s401 + $0xf1] sm:$0xff]
      %v6992 = vld [vmem:[%s401 + $0xf9] sm:$0xff]
      %v6993 = vld [vmem:[%s401 + $0x109] sm:$0xff]
      %v6994 = vld [vmem:[%s401 + $0x111] sm:$0xff]
      %v6995 = vld [vmem:[%s401 + $0x121] sm:$0xff]
      %v6996 = vld [vmem:[%s401 + $0x129] sm:$0xff]
      %v6997 = vld [vmem:[%s401 + $0x139] sm:$0xff]
      %v6998 = vld [vmem:[%s401 + $0x141] sm:$0xff]
      %v6999 = vld [vmem:[%s401 + $0x151] sm:$0xff]
      %v7000 = vld [vmem:[%s401 + $0x159] sm:$0xff]
      %v7001 = vld [vmem:[%s401 + $0x169] sm:$0xff]
      %v7002 = vld [vmem:[%s401 + $0x171] sm:$0xff]
      %v7003 = vld [vmem:[%s401 + $0x2] sm:$0xff]
      %v7004 = vld [vmem:[%s401 + $0xa] sm:$0xff]
      %v7005 = vld [vmem:[%s401 + $0x1a] sm:$0xff]
      %v7006 = vld [vmem:[%s401 + $0x22] sm:$0xff]
      %v7007 = vld [vmem:[%s401 + $0x32] sm:$0xff]
      %v7008 = vld [vmem:[%s401 + $0x3a] sm:$0xff]
      %v7009 = vld [vmem:[%s401 + $0x4a] sm:$0xff]
      %v7010 = vld [vmem:[%s401 + $0x52] sm:$0xff]
      %v7011 = vld [vmem:[%s401 + $0x62] sm:$0xff]
      %v7012 = vld [vmem:[%s401 + $0x6a] sm:$0xff]
      %v7013 = vld [vmem:[%s401 + $0x7a] sm:$0xff]
      %v7014 = vld [vmem:[%s401 + $0x82] sm:$0xff]
      %v7015 = vld [vmem:[%s401 + $0x92] sm:$0xff]
      %v7016 = vld [vmem:[%s401 + $0x9a] sm:$0xff]
      %v7017 = vld [vmem:[%s401 + $0xaa] sm:$0xff]
      %v7018 = vld [vmem:[%s401 + $0xb2] sm:$0xff]
      %v7019 = vld [vmem:[%s401 + $0xc2] sm:$0xff]
      %v7020 = vld [vmem:[%s401 + $0xca] sm:$0xff]
      %v7021 = vld [vmem:[%s401 + $0xda] sm:$0xff]
      %v7022 = vld [vmem:[%s401 + $0xe2] sm:$0xff]
      %v7023 = vld [vmem:[%s401 + $0xf2] sm:$0xff]
      %v7024 = vld [vmem:[%s401 + $0xfa] sm:$0xff]
      %v7025 = vld [vmem:[%s401 + $0x10a] sm:$0xff]
      %v7026 = vld [vmem:[%s401 + $0x112] sm:$0xff]
      %v7027 = vld [vmem:[%s401 + $0x122] sm:$0xff]
      %v7028 = vld [vmem:[%s401 + $0x12a] sm:$0xff]
      %v7029 = vld [vmem:[%s401 + $0x13a] sm:$0xff]
      %v7030 = vld [vmem:[%s401 + $0x142] sm:$0xff]
      %v7031 = vld [vmem:[%s401 + $0x152] sm:$0xff]
      %v7032 = vld [vmem:[%s401 + $0x15a] sm:$0xff]
      %v7033 = vld [vmem:[%s401 + $0x16a] sm:$0xff]
      %v7034 = vld [vmem:[%s401 + $0x172] sm:$0xff]
      %v7035 = vld [vmem:[%s626] sm:$0xff]
      %v7036 = vld [vmem:[%s626 + $0x8] sm:$0xff]
      %v7037 = vld [vmem:[%s626 + $0x18] sm:$0xff]
      %v7038 = vld [vmem:[%s626 + $0x20] sm:$0xff]
      %v7039 = vld [vmem:[%s626 + $0x30] sm:$0xff]
      %v7040 = vld [vmem:[%s626 + $0x38] sm:$0xff]
      %v7041 = vld [vmem:[%s626 + $0x48] sm:$0xff]
      %v7042 = vld [vmem:[%s626 + $0x50] sm:$0xff]
      %v7043 = vld [vmem:[%s626 + $0x60] sm:$0xff]
      %v7044 = vld [vmem:[%s626 + $0x68] sm:$0xff]
      %v7045 = vld [vmem:[%s626 + $0x78] sm:$0xff]
      %v7046 = vld [vmem:[%s626 + $0x80] sm:$0xff]
      %v7047 = vld [vmem:[%s626 + $0x90] sm:$0xff]
      %v7048 = vld [vmem:[%s626 + $0x98] sm:$0xff]
      %v7049 = vld [vmem:[%s626 + $0xa8] sm:$0xff]
      %v7050 = vld [vmem:[%s626 + $0xb0] sm:$0xff]
      %v7051 = vld [vmem:[%s626 + $0xc0] sm:$0xff]
      %v7052 = vld [vmem:[%s626 + $0xc8] sm:$0xff]
      %v7053 = vld [vmem:[%s626 + $0xd8] sm:$0xff]
      %v7054 = vld [vmem:[%s626 + $0xe0] sm:$0xff]
      %v7055 = vld [vmem:[%s626 + $0xf0] sm:$0xff]
      %v7056 = vld [vmem:[%s626 + $0xf8] sm:$0xff]
      %v7057 = vld [vmem:[%s626 + $0x108] sm:$0xff]
      %v7058 = vld [vmem:[%s626 + $0x110] sm:$0xff]
      %v7059 = vld [vmem:[%s626 + $0x120] sm:$0xff]
      %v7060 = vld [vmem:[%s626 + $0x128] sm:$0xff]
      %v7061 = vld [vmem:[%s626 + $0x138] sm:$0xff]
      %v7062 = vld [vmem:[%s626 + $0x140] sm:$0xff]
      %v7063 = vld [vmem:[%s626 + $0x150] sm:$0xff]
      %v7064 = vld [vmem:[%s626 + $0x158] sm:$0xff]
      %v7065 = vld [vmem:[%s626 + $0x168] sm:$0xff]
      %v7066 = vld [vmem:[%s626 + $0x170] sm:$0xff]
      %v7067 = vld [vmem:[%s626 + $0x1] sm:$0xff]
      %v7068 = vld [vmem:[%s626 + $0x9] sm:$0xff]
      %v7069 = vld [vmem:[%s626 + $0x19] sm:$0xff]
      %v7070 = vld [vmem:[%s626 + $0x21] sm:$0xff]
      %v7071 = vld [vmem:[%s626 + $0x31] sm:$0xff]
      %v7072 = vld [vmem:[%s626 + $0x39] sm:$0xff]
      %v7073 = vld [vmem:[%s626 + $0x49] sm:$0xff]
      %v7074 = vld [vmem:[%s626 + $0x51] sm:$0xff]
      %v7075 = vld [vmem:[%s626 + $0x61] sm:$0xff]
      %v7076 = vld [vmem:[%s626 + $0x69] sm:$0xff]
      %v7077 = vld [vmem:[%s626 + $0x79] sm:$0xff]
      %v7078 = vld [vmem:[%s626 + $0x81] sm:$0xff]
      %v7079 = vld [vmem:[%s626 + $0x91] sm:$0xff]
      %v7080 = vld [vmem:[%s626 + $0x99] sm:$0xff]
      %v7081 = vld [vmem:[%s626 + $0xa9] sm:$0xff]
      %v7082 = vld [vmem:[%s626 + $0xb1] sm:$0xff]
      %v7083 = vld [vmem:[%s626 + $0xc1] sm:$0xff]
      %v7084 = vld [vmem:[%s626 + $0xc9] sm:$0xff]
      %v7085 = vld [vmem:[%s626 + $0xd9] sm:$0xff]
      %v7086 = vld [vmem:[%s626 + $0xe1] sm:$0xff]
      %v7087 = vld [vmem:[%s626 + $0xf1] sm:$0xff]
      %v7088 = vld [vmem:[%s626 + $0xf9] sm:$0xff]
      %v7089 = vld [vmem:[%s626 + $0x109] sm:$0xff]
      %v7090 = vld [vmem:[%s626 + $0x111] sm:$0xff]
      %v7091 = vld [vmem:[%s626 + $0x121] sm:$0xff]
      %v7092 = vld [vmem:[%s626 + $0x129] sm:$0xff]
      %v7093 = vld [vmem:[%s626 + $0x139] sm:$0xff]
      %v7094 = vld [vmem:[%s626 + $0x141] sm:$0xff]
      %v7095 = vld [vmem:[%s626 + $0x151] sm:$0xff]
      %v7096 = vld [vmem:[%s626 + $0x159] sm:$0xff]
      %v7097 = vld [vmem:[%s626 + $0x169] sm:$0xff]
      %v7098 = vld [vmem:[%s626 + $0x171] sm:$0xff]
      %v7099 = vld [vmem:[%s626 + $0x2] sm:$0xff]
      %v7100 = vld [vmem:[%s626 + $0xa] sm:$0xff]
      %v7101 = vld [vmem:[%s626 + $0x1a] sm:$0xff]
      %v7102 = vld [vmem:[%s626 + $0x22] sm:$0xff]
      %v7103 = vld [vmem:[%s626 + $0x32] sm:$0xff]
      %v7104 = vld [vmem:[%s626 + $0x3a] sm:$0xff]
      %v7105 = vld [vmem:[%s626 + $0x4a] sm:$0xff]
      %v7106 = vld [vmem:[%s626 + $0x52] sm:$0xff]
      %v7107 = vld [vmem:[%s626 + $0x62] sm:$0xff]
      %v7108 = vld [vmem:[%s626 + $0x6a] sm:$0xff]
      %v7109 = vld [vmem:[%s626 + $0x7a] sm:$0xff]
      %v7110 = vld [vmem:[%s626 + $0x82] sm:$0xff]
      %v7111 = vld [vmem:[%s626 + $0x92] sm:$0xff]
      %v7112 = vld [vmem:[%s626 + $0x9a] sm:$0xff]
      %v7113 = vld [vmem:[%s626 + $0xaa] sm:$0xff]
      %v7114 = vld [vmem:[%s626 + $0xb2] sm:$0xff]
      %v7115 = vld [vmem:[%s626 + $0xc2] sm:$0xff]
      %v7116 = vld [vmem:[%s626 + $0xca] sm:$0xff]
      %v7117 = vld [vmem:[%s626 + $0xda] sm:$0xff]
      %v7118 = vld [vmem:[%s626 + $0xe2] sm:$0xff]
      %v7119 = vld [vmem:[%s626 + $0xf2] sm:$0xff]
      %v7120 = vld [vmem:[%s626 + $0xfa] sm:$0xff]
      %v7121 = vld [vmem:[%s626 + $0x10a] sm:$0xff]
      %v7122 = vld [vmem:[%s626 + $0x112] sm:$0xff]
      %v7123 = vld [vmem:[%s626 + $0x122] sm:$0xff]
      %v7124 = vld [vmem:[%s626 + $0x12a] sm:$0xff]
      %v7125 = vld [vmem:[%s626 + $0x13a] sm:$0xff]
      %v7126 = vld [vmem:[%s626 + $0x142] sm:$0xff]
      %v7127 = vld [vmem:[%s626 + $0x152] sm:$0xff]
      %v7128 = vld [vmem:[%s626 + $0x15a] sm:$0xff]
      %v7129 = vld [vmem:[%s626 + $0x16a] sm:$0xff]
      %v7130 = vld [vmem:[%s626 + $0x172] sm:$0xff]
      %7163 = vrot.lane.b32.xlu0 %v6875, 4
      %v7164 = vpop.permute.xlu0 %7163
      %7165 = vrot.lane.b32.xlu0 %v6876, 4
      %v7166 = vpop.permute.xlu0 %7165
      %7167 = vrot.lane.b32.xlu0 %v6877, 4
      %v7168 = vpop.permute.xlu0 %7167
      %7169 = vrot.lane.b32.xlu0 %v6878, 4
      %v7170 = vpop.permute.xlu0 %7169
      %7171 = vrot.lane.b32.xlu0 %v6879, 4
      %v7172 = vpop.permute.xlu0 %7171
      %7173 = vrot.lane.b32.xlu0 %v6880, 4
      %v7174 = vpop.permute.xlu0 %7173
      %7175 = vrot.lane.b32.xlu0 %v6881, 4
      %v7176 = vpop.permute.xlu0 %7175
      %7177 = vrot.lane.b32.xlu0 %v6882, 4
      %v7178 = vpop.permute.xlu0 %7177
      %7179 = vrot.lane.b32.xlu0 %v6883, 4
      %v7180 = vpop.permute.xlu0 %7179
      %7181 = vrot.lane.b32.xlu0 %v6884, 4
      %v7182 = vpop.permute.xlu0 %7181
      %7183 = vrot.lane.b32.xlu0 %v6885, 4
      %v7184 = vpop.permute.xlu0 %7183
      %7185 = vrot.lane.b32.xlu0 %v6886, 4
      %v7186 = vpop.permute.xlu0 %7185
      %7187 = vrot.lane.b32.xlu0 %v6887, 4
      %v7188 = vpop.permute.xlu0 %7187
      %7189 = vrot.lane.b32.xlu0 %v6888, 4
      %v7190 = vpop.permute.xlu0 %7189
      %7191 = vrot.lane.b32.xlu0 %v6889, 4
      %v7192 = vpop.permute.xlu0 %7191
      %7193 = vrot.lane.b32.xlu0 %v6890, 4
      %v7194 = vpop.permute.xlu0 %7193
      %7195 = vrot.lane.b32.xlu0 %v6891, 4
      %v7196 = vpop.permute.xlu0 %7195
      %7197 = vrot.lane.b32.xlu0 %v6892, 4
      %v7198 = vpop.permute.xlu0 %7197
      %7199 = vrot.lane.b32.xlu0 %v6893, 4
      %v7200 = vpop.permute.xlu0 %7199
      %7201 = vrot.lane.b32.xlu0 %v6894, 4
      %v7202 = vpop.permute.xlu0 %7201
      %7203 = vrot.lane.b32.xlu0 %v6895, 4
      %v7204 = vpop.permute.xlu0 %7203
      %7205 = vrot.lane.b32.xlu0 %v6896, 4
      %v7206 = vpop.permute.xlu0 %7205
      %7207 = vrot.lane.b32.xlu0 %v6897, 4
      %v7208 = vpop.permute.xlu0 %7207
      %7209 = vrot.lane.b32.xlu0 %v6898, 4
      %v7210 = vpop.permute.xlu0 %7209
      %7211 = vrot.lane.b32.xlu0 %v6899, 4
      %v7212 = vpop.permute.xlu0 %7211
      %7213 = vrot.lane.b32.xlu0 %v6900, 4
      %v7214 = vpop.permute.xlu0 %7213
      %7215 = vrot.lane.b32.xlu0 %v6901, 4
      %v7216 = vpop.permute.xlu0 %7215
      %7217 = vrot.lane.b32.xlu0 %v6902, 4
      %v7218 = vpop.permute.xlu0 %7217
      %7219 = vrot.lane.b32.xlu0 %v6903, 4
      %v7220 = vpop.permute.xlu0 %7219
      %7221 = vrot.lane.b32.xlu0 %v6904, 4
      %v7222 = vpop.permute.xlu0 %7221
      %7223 = vrot.lane.b32.xlu0 %v6905, 4
      %v7224 = vpop.permute.xlu0 %7223
      %7225 = vrot.lane.b32.xlu0 %v6906, 4
      %v7226 = vpop.permute.xlu0 %7225
      %7291 = vrot.lane.b32.xlu0 %v6907, 8
      %v7292 = vpop.permute.xlu0 %7291
      %7293 = vrot.lane.b32.xlu0 %v6908, 8
      %v7294 = vpop.permute.xlu0 %7293
      %7295 = vrot.lane.b32.xlu0 %v6909, 8
      %v7296 = vpop.permute.xlu0 %7295
      %7297 = vrot.lane.b32.xlu0 %v6910, 8
      %v7298 = vpop.permute.xlu0 %7297
      %7299 = vrot.lane.b32.xlu0 %v6911, 8
      %v7300 = vpop.permute.xlu0 %7299
      %7301 = vrot.lane.b32.xlu0 %v6912, 8
      %v7302 = vpop.permute.xlu0 %7301
      %7303 = vrot.lane.b32.xlu0 %v6913, 8
      %v7304 = vpop.permute.xlu0 %7303
      %7305 = vrot.lane.b32.xlu0 %v6914, 8
      %v7306 = vpop.permute.xlu0 %7305
      %7307 = vrot.lane.b32.xlu0 %v6915, 8
      %v7308 = vpop.permute.xlu0 %7307
      %7309 = vrot.lane.b32.xlu0 %v6916, 8
      %v7310 = vpop.permute.xlu0 %7309
      %7311 = vrot.lane.b32.xlu0 %v6917, 8
      %v7312 = vpop.permute.xlu0 %7311
      %7313 = vrot.lane.b32.xlu0 %v6918, 8
      %v7314 = vpop.permute.xlu0 %7313
      %7315 = vrot.lane.b32.xlu0 %v6919, 8
      %v7316 = vpop.permute.xlu0 %7315
      %7317 = vrot.lane.b32.xlu0 %v6920, 8
      %v7318 = vpop.permute.xlu0 %7317
      %7319 = vrot.lane.b32.xlu0 %v6921, 8
      %v7320 = vpop.permute.xlu0 %7319
      %7321 = vrot.lane.b32.xlu0 %v6922, 8
      %v7322 = vpop.permute.xlu0 %7321
      %7323 = vrot.lane.b32.xlu0 %v6923, 8
      %v7324 = vpop.permute.xlu0 %7323
      %7325 = vrot.lane.b32.xlu0 %v6924, 8
      %v7326 = vpop.permute.xlu0 %7325
      %7327 = vrot.lane.b32.xlu0 %v6925, 8
      %v7328 = vpop.permute.xlu0 %7327
      %7329 = vrot.lane.b32.xlu0 %v6926, 8
      %v7330 = vpop.permute.xlu0 %7329
      %7331 = vrot.lane.b32.xlu0 %v6927, 8
      %v7332 = vpop.permute.xlu0 %7331
      %7333 = vrot.lane.b32.xlu0 %v6928, 8
      %v7334 = vpop.permute.xlu0 %7333
      %7335 = vrot.lane.b32.xlu0 %v6929, 8
      %v7336 = vpop.permute.xlu0 %7335
      %7337 = vrot.lane.b32.xlu0 %v6930, 8
      %v7338 = vpop.permute.xlu0 %7337
      %7339 = vrot.lane.b32.xlu0 %v6931, 8
      %v7340 = vpop.permute.xlu0 %7339
      %7341 = vrot.lane.b32.xlu0 %v6932, 8
      %v7342 = vpop.permute.xlu0 %7341
      %7343 = vrot.lane.b32.xlu0 %v6933, 8
      %v7344 = vpop.permute.xlu0 %7343
      %7345 = vrot.lane.b32.xlu0 %v6934, 8
      %v7346 = vpop.permute.xlu0 %7345
      %7347 = vrot.lane.b32.xlu0 %v6935, 8
      %v7348 = vpop.permute.xlu0 %7347
      %7349 = vrot.lane.b32.xlu0 %v6936, 8
      %v7350 = vpop.permute.xlu0 %7349
      %7351 = vrot.lane.b32.xlu0 %v6937, 8
      %v7352 = vpop.permute.xlu0 %7351
      %7353 = vrot.lane.b32.xlu0 %v6938, 8
      %v7354 = vpop.permute.xlu0 %7353
      %7419 = vrot.lane.b32.xlu0 %v6939, 12
      %v7420 = vpop.permute.xlu0 %7419
      %7421 = vrot.lane.b32.xlu0 %v6940, 12
      %v7422 = vpop.permute.xlu0 %7421
      %7423 = vrot.lane.b32.xlu0 %v6941, 12
      %v7424 = vpop.permute.xlu0 %7423
      %7425 = vrot.lane.b32.xlu0 %v6942, 12
      %v7426 = vpop.permute.xlu0 %7425
      %7427 = vrot.lane.b32.xlu0 %v6943, 12
      %v7428 = vpop.permute.xlu0 %7427
      %7429 = vrot.lane.b32.xlu0 %v6944, 12
      %v7430 = vpop.permute.xlu0 %7429
      %7431 = vrot.lane.b32.xlu0 %v6945, 12
      %v7432 = vpop.permute.xlu0 %7431
      %7433 = vrot.lane.b32.xlu0 %v6946, 12
      %v7434 = vpop.permute.xlu0 %7433
      %7435 = vrot.lane.b32.xlu0 %v6947, 12
      %v7436 = vpop.permute.xlu0 %7435
      %7437 = vrot.lane.b32.xlu0 %v6948, 12
      %v7438 = vpop.permute.xlu0 %7437
      %7439 = vrot.lane.b32.xlu0 %v6949, 12
      %v7440 = vpop.permute.xlu0 %7439
      %7441 = vrot.lane.b32.xlu0 %v6950, 12
      %v7442 = vpop.permute.xlu0 %7441
      %7443 = vrot.lane.b32.xlu0 %v6951, 12
      %v7444 = vpop.permute.xlu0 %7443
      %7445 = vrot.lane.b32.xlu0 %v6952, 12
      %v7446 = vpop.permute.xlu0 %7445
      %7447 = vrot.lane.b32.xlu0 %v6953, 12
      %v7448 = vpop.permute.xlu0 %7447
      %7449 = vrot.lane.b32.xlu0 %v6954, 12
      %v7450 = vpop.permute.xlu0 %7449
      %7451 = vrot.lane.b32.xlu0 %v6955, 12
      %v7452 = vpop.permute.xlu0 %7451
      %7453 = vrot.lane.b32.xlu0 %v6956, 12
      %v7454 = vpop.permute.xlu0 %7453
      %7455 = vrot.lane.b32.xlu0 %v6957, 12
      %v7456 = vpop.permute.xlu0 %7455
      %7457 = vrot.lane.b32.xlu0 %v6958, 12
      %v7458 = vpop.permute.xlu0 %7457
      %7459 = vrot.lane.b32.xlu0 %v6959, 12
      %v7460 = vpop.permute.xlu0 %7459
      %7461 = vrot.lane.b32.xlu0 %v6960, 12
      %v7462 = vpop.permute.xlu0 %7461
      %7463 = vrot.lane.b32.xlu0 %v6961, 12
      %v7464 = vpop.permute.xlu0 %7463
      %7465 = vrot.lane.b32.xlu0 %v6962, 12
      %v7466 = vpop.permute.xlu0 %7465
      %7467 = vrot.lane.b32.xlu0 %v6963, 12
      %v7468 = vpop.permute.xlu0 %7467
      %7469 = vrot.lane.b32.xlu0 %v6964, 12
      %v7470 = vpop.permute.xlu0 %7469
      %7471 = vrot.lane.b32.xlu0 %v6965, 12
      %v7472 = vpop.permute.xlu0 %7471
      %7473 = vrot.lane.b32.xlu0 %v6966, 12
      %v7474 = vpop.permute.xlu0 %7473
      %7475 = vrot.lane.b32.xlu0 %v6967, 12
      %v7476 = vpop.permute.xlu0 %7475
      %7477 = vrot.lane.b32.xlu0 %v6968, 12
      %v7478 = vpop.permute.xlu0 %7477
      %7479 = vrot.lane.b32.xlu0 %v6969, 12
      %v7480 = vpop.permute.xlu0 %7479
      %7481 = vrot.lane.b32.xlu0 %v6970, 12
      %v7482 = vpop.permute.xlu0 %7481
      %7547 = vrot.lane.b32.xlu0 %v6971, 16
      %v7548 = vpop.permute.xlu0 %7547
      %7549 = vrot.lane.b32.xlu0 %v6972, 16
      %v7550 = vpop.permute.xlu0 %7549
      %7551 = vrot.lane.b32.xlu0 %v6973, 16
      %v7552 = vpop.permute.xlu0 %7551
      %7553 = vrot.lane.b32.xlu0 %v6974, 16
      %v7554 = vpop.permute.xlu0 %7553
      %7555 = vrot.lane.b32.xlu0 %v6975, 16
      %v7556 = vpop.permute.xlu0 %7555
      %7557 = vrot.lane.b32.xlu0 %v6976, 16
      %v7558 = vpop.permute.xlu0 %7557
      %7559 = vrot.lane.b32.xlu0 %v6977, 16
      %v7560 = vpop.permute.xlu0 %7559
      %7561 = vrot.lane.b32.xlu0 %v6978, 16
      %v7562 = vpop.permute.xlu0 %7561
      %7563 = vrot.lane.b32.xlu0 %v6979, 16
      %v7564 = vpop.permute.xlu0 %7563
      %7565 = vrot.lane.b32.xlu0 %v6980, 16
      %v7566 = vpop.permute.xlu0 %7565
      %7567 = vrot.lane.b32.xlu0 %v6981, 16
      %v7568 = vpop.permute.xlu0 %7567
      %7569 = vrot.lane.b32.xlu0 %v6982, 16
      %v7570 = vpop.permute.xlu0 %7569
      %7571 = vrot.lane.b32.xlu0 %v6983, 16
      %v7572 = vpop.permute.xlu0 %7571
      %7573 = vrot.lane.b32.xlu0 %v6984, 16
      %v7574 = vpop.permute.xlu0 %7573
      %7575 = vrot.lane.b32.xlu0 %v6985, 16
      %v7576 = vpop.permute.xlu0 %7575
      %7577 = vrot.lane.b32.xlu0 %v6986, 16
      %v7578 = vpop.permute.xlu0 %7577
      %7579 = vrot.lane.b32.xlu0 %v6987, 16
      %v7580 = vpop.permute.xlu0 %7579
      %7581 = vrot.lane.b32.xlu0 %v6988, 16
      %v7582 = vpop.permute.xlu0 %7581
      %7583 = vrot.lane.b32.xlu0 %v6989, 16
      %v7584 = vpop.permute.xlu0 %7583
      %7585 = vrot.lane.b32.xlu0 %v6990, 16
      %v7586 = vpop.permute.xlu0 %7585
      %7587 = vrot.lane.b32.xlu0 %v6991, 16
      %v7588 = vpop.permute.xlu0 %7587
      %7589 = vrot.lane.b32.xlu0 %v6992, 16
      %v7590 = vpop.permute.xlu0 %7589
      %7591 = vrot.lane.b32.xlu0 %v6993, 16
      %v7592 = vpop.permute.xlu0 %7591
      %7593 = vrot.lane.b32.xlu0 %v6994, 16
      %v7594 = vpop.permute.xlu0 %7593
      %7595 = vrot.lane.b32.xlu0 %v6995, 16
      %v7596 = vpop.permute.xlu0 %7595
      %7597 = vrot.lane.b32.xlu0 %v6996, 16
      %v7598 = vpop.permute.xlu0 %7597
      %7599 = vrot.lane.b32.xlu0 %v6997, 16
      %v7600 = vpop.permute.xlu0 %7599
      %7601 = vrot.lane.b32.xlu0 %v6998, 16
      %v7602 = vpop.permute.xlu0 %7601
      %7603 = vrot.lane.b32.xlu0 %v6999, 16
      %v7604 = vpop.permute.xlu0 %7603
      %7605 = vrot.lane.b32.xlu0 %v7000, 16
      %v7606 = vpop.permute.xlu0 %7605
      %7607 = vrot.lane.b32.xlu0 %v7001, 16
      %v7608 = vpop.permute.xlu0 %7607
      %7609 = vrot.lane.b32.xlu0 %v7002, 16
      %v7610 = vpop.permute.xlu0 %7609
      %7675 = vrot.lane.b32.xlu0 %v7003, 20
      %v7676 = vpop.permute.xlu0 %7675
      %7677 = vrot.lane.b32.xlu0 %v7004, 20
      %v7678 = vpop.permute.xlu0 %7677
      %7679 = vrot.lane.b32.xlu0 %v7005, 20
      %v7680 = vpop.permute.xlu0 %7679
      %7681 = vrot.lane.b32.xlu0 %v7006, 20
      %v7682 = vpop.permute.xlu0 %7681
      %7683 = vrot.lane.b32.xlu0 %v7007, 20
      %v7684 = vpop.permute.xlu0 %7683
      %7685 = vrot.lane.b32.xlu0 %v7008, 20
      %v7686 = vpop.permute.xlu0 %7685
      %7687 = vrot.lane.b32.xlu0 %v7009, 20
      %v7688 = vpop.permute.xlu0 %7687
      %7689 = vrot.lane.b32.xlu0 %v7010, 20
      %v7690 = vpop.permute.xlu0 %7689
      %7691 = vrot.lane.b32.xlu0 %v7011, 20
      %v7692 = vpop.permute.xlu0 %7691
      %7693 = vrot.lane.b32.xlu0 %v7012, 20
      %v7694 = vpop.permute.xlu0 %7693
      %7695 = vrot.lane.b32.xlu0 %v7013, 20
      %v7696 = vpop.permute.xlu0 %7695
      %7697 = vrot.lane.b32.xlu0 %v7014, 20
      %v7698 = vpop.permute.xlu0 %7697
      %7699 = vrot.lane.b32.xlu0 %v7015, 20
      %v7700 = vpop.permute.xlu0 %7699
      %7701 = vrot.lane.b32.xlu0 %v7016, 20
      %v7702 = vpop.permute.xlu0 %7701
      %7703 = vrot.lane.b32.xlu0 %v7017, 20
      %v7704 = vpop.permute.xlu0 %7703
      %7705 = vrot.lane.b32.xlu0 %v7018, 20
      %v7706 = vpop.permute.xlu0 %7705
      %7707 = vrot.lane.b32.xlu0 %v7019, 20
      %v7708 = vpop.permute.xlu0 %7707
      %7709 = vrot.lane.b32.xlu0 %v7020, 20
      %v7710 = vpop.permute.xlu0 %7709
      %7711 = vrot.lane.b32.xlu0 %v7021, 20
      %v7712 = vpop.permute.xlu0 %7711
      %7713 = vrot.lane.b32.xlu0 %v7022, 20
      %v7714 = vpop.permute.xlu0 %7713
      %7715 = vrot.lane.b32.xlu0 %v7023, 20
      %v7716 = vpop.permute.xlu0 %7715
      %7717 = vrot.lane.b32.xlu0 %v7024, 20
      %v7718 = vpop.permute.xlu0 %7717
      %7719 = vrot.lane.b32.xlu0 %v7025, 20
      %v7720 = vpop.permute.xlu0 %7719
      %7721 = vrot.lane.b32.xlu0 %v7026, 20
      %v7722 = vpop.permute.xlu0 %7721
      %7723 = vrot.lane.b32.xlu0 %v7027, 20
      %v7724 = vpop.permute.xlu0 %7723
      %7725 = vrot.lane.b32.xlu0 %v7028, 20
      %v7726 = vpop.permute.xlu0 %7725
      %7727 = vrot.lane.b32.xlu0 %v7029, 20
      %v7728 = vpop.permute.xlu0 %7727
      %7729 = vrot.lane.b32.xlu0 %v7030, 20
      %v7730 = vpop.permute.xlu0 %7729
      %7731 = vrot.lane.b32.xlu0 %v7031, 20
      %v7732 = vpop.permute.xlu0 %7731
      %7733 = vrot.lane.b32.xlu0 %v7032, 20
      %v7734 = vpop.permute.xlu0 %7733
      %7735 = vrot.lane.b32.xlu0 %v7033, 20
      %v7736 = vpop.permute.xlu0 %7735
      %7737 = vrot.lane.b32.xlu0 %v7034, 20
      %v7738 = vpop.permute.xlu0 %7737
      %7803 = vrot.lane.b32.xlu0 %v7035, 24
      %v7804 = vpop.permute.xlu0 %7803
      %7805 = vrot.lane.b32.xlu0 %v7036, 24
      %v7806 = vpop.permute.xlu0 %7805
      %7807 = vrot.lane.b32.xlu0 %v7037, 24
      %v7808 = vpop.permute.xlu0 %7807
      %7809 = vrot.lane.b32.xlu0 %v7038, 24
      %v7810 = vpop.permute.xlu0 %7809
      %7811 = vrot.lane.b32.xlu0 %v7039, 24
      %v7812 = vpop.permute.xlu0 %7811
      %7813 = vrot.lane.b32.xlu0 %v7040, 24
      %v7814 = vpop.permute.xlu0 %7813
      %7815 = vrot.lane.b32.xlu0 %v7041, 24
      %v7816 = vpop.permute.xlu0 %7815
      %7817 = vrot.lane.b32.xlu0 %v7042, 24
      %v7818 = vpop.permute.xlu0 %7817
      %7819 = vrot.lane.b32.xlu0 %v7043, 24
      %v7820 = vpop.permute.xlu0 %7819
      %7821 = vrot.lane.b32.xlu0 %v7044, 24
      %v7822 = vpop.permute.xlu0 %7821
      %7823 = vrot.lane.b32.xlu0 %v7045, 24
      %v7824 = vpop.permute.xlu0 %7823
      %7825 = vrot.lane.b32.xlu0 %v7046, 24
      %v7826 = vpop.permute.xlu0 %7825
      %7827 = vrot.lane.b32.xlu0 %v7047, 24
      %v7828 = vpop.permute.xlu0 %7827
      %7829 = vrot.lane.b32.xlu0 %v7048, 24
      %v7830 = vpop.permute.xlu0 %7829
      %7831 = vrot.lane.b32.xlu0 %v7049, 24
      %v7832 = vpop.permute.xlu0 %7831
      %7833 = vrot.lane.b32.xlu0 %v7050, 24
      %v7834 = vpop.permute.xlu0 %7833
      %7835 = vrot.lane.b32.xlu0 %v7051, 24
      %v7836 = vpop.permute.xlu0 %7835
      %7837 = vrot.lane.b32.xlu0 %v7052, 24
      %v7838 = vpop.permute.xlu0 %7837
      %7839 = vrot.lane.b32.xlu0 %v7053, 24
      %v7840 = vpop.permute.xlu0 %7839
      %7841 = vrot.lane.b32.xlu0 %v7054, 24
      %v7842 = vpop.permute.xlu0 %7841
      %7843 = vrot.lane.b32.xlu0 %v7055, 24
      %v7844 = vpop.permute.xlu0 %7843
      %7845 = vrot.lane.b32.xlu0 %v7056, 24
      %v7846 = vpop.permute.xlu0 %7845
      %7847 = vrot.lane.b32.xlu0 %v7057, 24
      %v7848 = vpop.permute.xlu0 %7847
      %7849 = vrot.lane.b32.xlu0 %v7058, 24
      %v7850 = vpop.permute.xlu0 %7849
      %7851 = vrot.lane.b32.xlu0 %v7059, 24
      %v7852 = vpop.permute.xlu0 %7851
      %7853 = vrot.lane.b32.xlu0 %v7060, 24
      %v7854 = vpop.permute.xlu0 %7853
      %7855 = vrot.lane.b32.xlu0 %v7061, 24
      %v7856 = vpop.permute.xlu0 %7855
      %7857 = vrot.lane.b32.xlu0 %v7062, 24
      %v7858 = vpop.permute.xlu0 %7857
      %7859 = vrot.lane.b32.xlu0 %v7063, 24
      %v7860 = vpop.permute.xlu0 %7859
      %7861 = vrot.lane.b32.xlu0 %v7064, 24
      %v7862 = vpop.permute.xlu0 %7861
      %7863 = vrot.lane.b32.xlu0 %v7065, 24
      %v7864 = vpop.permute.xlu0 %7863
      %7865 = vrot.lane.b32.xlu0 %v7066, 24
      %v7866 = vpop.permute.xlu0 %7865
      %7931 = vrot.lane.b32.xlu0 %v7067, 28
      %v7932 = vpop.permute.xlu0 %7931
      %7933 = vrot.lane.b32.xlu0 %v7068, 28
      %v7934 = vpop.permute.xlu0 %7933
      %7935 = vrot.lane.b32.xlu0 %v7069, 28
      %v7936 = vpop.permute.xlu0 %7935
      %7937 = vrot.lane.b32.xlu0 %v7070, 28
      %v7938 = vpop.permute.xlu0 %7937
      %7939 = vrot.lane.b32.xlu0 %v7071, 28
      %v7940 = vpop.permute.xlu0 %7939
      %7941 = vrot.lane.b32.xlu0 %v7072, 28
      %v7942 = vpop.permute.xlu0 %7941
      %7943 = vrot.lane.b32.xlu0 %v7073, 28
      %v7944 = vpop.permute.xlu0 %7943
      %7945 = vrot.lane.b32.xlu0 %v7074, 28
      %v7946 = vpop.permute.xlu0 %7945
      %7947 = vrot.lane.b32.xlu0 %v7075, 28
      %v7948 = vpop.permute.xlu0 %7947
      %7949 = vrot.lane.b32.xlu0 %v7076, 28
      %v7950 = vpop.permute.xlu0 %7949
      %7951 = vrot.lane.b32.xlu0 %v7077, 28
      %v7952 = vpop.permute.xlu0 %7951
      %7953 = vrot.lane.b32.xlu0 %v7078, 28
      %v7954 = vpop.permute.xlu0 %7953
      %7955 = vrot.lane.b32.xlu0 %v7079, 28
      %v7956 = vpop.permute.xlu0 %7955
      %7957 = vrot.lane.b32.xlu0 %v7080, 28
      %v7958 = vpop.permute.xlu0 %7957
      %7959 = vrot.lane.b32.xlu0 %v7081, 28
      %v7960 = vpop.permute.xlu0 %7959
      %7961 = vrot.lane.b32.xlu0 %v7082, 28
      %v7962 = vpop.permute.xlu0 %7961
      %7963 = vrot.lane.b32.xlu0 %v7083, 28
      %v7964 = vpop.permute.xlu0 %7963
      %7965 = vrot.lane.b32.xlu0 %v7084, 28
      %v7966 = vpop.permute.xlu0 %7965
      %7967 = vrot.lane.b32.xlu0 %v7085, 28
      %v7968 = vpop.permute.xlu0 %7967
      %7969 = vrot.lane.b32.xlu0 %v7086, 28
      %v7970 = vpop.permute.xlu0 %7969
      %7971 = vrot.lane.b32.xlu0 %v7087, 28
      %v7972 = vpop.permute.xlu0 %7971
      %7973 = vrot.lane.b32.xlu0 %v7088, 28
      %v7974 = vpop.permute.xlu0 %7973
      %7975 = vrot.lane.b32.xlu0 %v7089, 28
      %v7976 = vpop.permute.xlu0 %7975
      %7977 = vrot.lane.b32.xlu0 %v7090, 28
      %v7978 = vpop.permute.xlu0 %7977
      %7979 = vrot.lane.b32.xlu0 %v7091, 28
      %v7980 = vpop.permute.xlu0 %7979
      %7981 = vrot.lane.b32.xlu0 %v7092, 28
      %v7982 = vpop.permute.xlu0 %7981
      %7983 = vrot.lane.b32.xlu0 %v7093, 28
      %v7984 = vpop.permute.xlu0 %7983
      %7985 = vrot.lane.b32.xlu0 %v7094, 28
      %v7986 = vpop.permute.xlu0 %7985
      %7987 = vrot.lane.b32.xlu0 %v7095, 28
      %v7988 = vpop.permute.xlu0 %7987
      %7989 = vrot.lane.b32.xlu0 %v7096, 28
      %v7990 = vpop.permute.xlu0 %7989
      %7991 = vrot.lane.b32.xlu0 %v7097, 28
      %v7992 = vpop.permute.xlu0 %7991
      %7993 = vrot.lane.b32.xlu0 %v7098, 28
      %v7994 = vpop.permute.xlu0 %7993
      %8059 = vrot.lane.b32.xlu0 %v7099, 32
      %v8060 = vpop.permute.xlu0 %8059
      %8061 = vrot.lane.b32.xlu0 %v7100, 32
      %v8062 = vpop.permute.xlu0 %8061
      %8063 = vrot.lane.b32.xlu0 %v7101, 32
      %v8064 = vpop.permute.xlu0 %8063
      %8065 = vrot.lane.b32.xlu0 %v7102, 32
      %v8066 = vpop.permute.xlu0 %8065
      %8067 = vrot.lane.b32.xlu0 %v7103, 32
      %v8068 = vpop.permute.xlu0 %8067
      %8069 = vrot.lane.b32.xlu0 %v7104, 32
      %v8070 = vpop.permute.xlu0 %8069
      %8071 = vrot.lane.b32.xlu0 %v7105, 32
      %v8072 = vpop.permute.xlu0 %8071
      %8073 = vrot.lane.b32.xlu0 %v7106, 32
      %v8074 = vpop.permute.xlu0 %8073
      %8075 = vrot.lane.b32.xlu0 %v7107, 32
      %v8076 = vpop.permute.xlu0 %8075
      %8077 = vrot.lane.b32.xlu0 %v7108, 32
      %v8078 = vpop.permute.xlu0 %8077
      %8079 = vrot.lane.b32.xlu0 %v7109, 32
      %v8080 = vpop.permute.xlu0 %8079
      %8081 = vrot.lane.b32.xlu0 %v7110, 32
      %v8082 = vpop.permute.xlu0 %8081
      %8083 = vrot.lane.b32.xlu0 %v7111, 32
      %v8084 = vpop.permute.xlu0 %8083
      %8085 = vrot.lane.b32.xlu0 %v7112, 32
      %v8086 = vpop.permute.xlu0 %8085
      %8087 = vrot.lane.b32.xlu0 %v7113, 32
      %v8088 = vpop.permute.xlu0 %8087
      %8089 = vrot.lane.b32.xlu0 %v7114, 32
      %v8090 = vpop.permute.xlu0 %8089
      %8091 = vrot.lane.b32.xlu0 %v7115, 32
      %v8092 = vpop.permute.xlu0 %8091
      %8093 = vrot.lane.b32.xlu0 %v7116, 32
      %v8094 = vpop.permute.xlu0 %8093
      %8095 = vrot.lane.b32.xlu0 %v7117, 32
      %v8096 = vpop.permute.xlu0 %8095
      %8097 = vrot.lane.b32.xlu0 %v7118, 32
      %v8098 = vpop.permute.xlu0 %8097
      %8099 = vrot.lane.b32.xlu0 %v7119, 32
      %v8100 = vpop.permute.xlu0 %8099
      %8101 = vrot.lane.b32.xlu0 %v7120, 32
      %v8102 = vpop.permute.xlu0 %8101
      %8103 = vrot.lane.b32.xlu0 %v7121, 32
      %v8104 = vpop.permute.xlu0 %8103
      %8105 = vrot.lane.b32.xlu0 %v7122, 32
      %v8106 = vpop.permute.xlu0 %8105
      %8107 = vrot.lane.b32.xlu0 %v7123, 32
      %v8108 = vpop.permute.xlu0 %8107
      %8109 = vrot.lane.b32.xlu0 %v7124, 32
      %v8110 = vpop.permute.xlu0 %8109
      %8111 = vrot.lane.b32.xlu0 %v7125, 32
      %v8112 = vpop.permute.xlu0 %8111
      %8113 = vrot.lane.b32.xlu0 %v7126, 32
      %v8114 = vpop.permute.xlu0 %8113
      %8115 = vrot.lane.b32.xlu0 %v7127, 32
      %v8116 = vpop.permute.xlu0 %8115
      %8117 = vrot.lane.b32.xlu0 %v7128, 32
      %v8118 = vpop.permute.xlu0 %8117
      %8119 = vrot.lane.b32.xlu0 %v7129, 32
      %v8120 = vpop.permute.xlu0 %8119
      %8121 = vrot.lane.b32.xlu0 %v7130, 32
      %v8122 = vpop.permute.xlu0 %8121
      %v8155 = vsel %vm280, %v6843, %v7164
      %v8156 = vsel %vm280, %v6844, %v7166
      %v8157 = vsel %vm280, %v6845, %v7168
      %v8158 = vsel %vm280, %v6846, %v7170
      %v8159 = vsel %vm280, %v6847, %v7172
      %v8160 = vsel %vm280, %v6848, %v7174
      %v8161 = vsel %vm280, %v6849, %v7176
      %v8162 = vsel %vm280, %v6850, %v7178
      %v8163 = vsel %vm280, %v6851, %v7180
      %v8164 = vsel %vm280, %v6852, %v7182
      %v8165 = vsel %vm280, %v6853, %v7184
      %v8166 = vsel %vm280, %v6854, %v7186
      %v8167 = vsel %vm280, %v6855, %v7188
      %v8168 = vsel %vm280, %v6856, %v7190
      %v8169 = vsel %vm280, %v6857, %v7192
      %v8170 = vsel %vm280, %v6858, %v7194
      %v8171 = vsel %vm280, %v6859, %v7196
      %v8172 = vsel %vm280, %v6860, %v7198
      %v8173 = vsel %vm280, %v6861, %v7200
      %v8174 = vsel %vm280, %v6862, %v7202
      %v8175 = vsel %vm280, %v6863, %v7204
      %v8176 = vsel %vm280, %v6864, %v7206
      %v8177 = vsel %vm280, %v6865, %v7208
      %v8178 = vsel %vm280, %v6866, %v7210
      %v8179 = vsel %vm280, %v6867, %v7212
      %v8180 = vsel %vm280, %v6868, %v7214
      %v8181 = vsel %vm280, %v6869, %v7216
      %v8182 = vsel %vm280, %v6870, %v7218
      %v8183 = vsel %vm280, %v6871, %v7220
      %v8184 = vsel %vm280, %v6872, %v7222
      %v8185 = vsel %vm280, %v6873, %v7224
      %v8186 = vsel %vm280, %v6874, %v7226
      %v8187 = vsel %vm1779, %v8155, %v7292
      %v8188 = vsel %vm1779, %v8156, %v7294
      %v8189 = vsel %vm1779, %v8157, %v7296
      %v8190 = vsel %vm1779, %v8158, %v7298
      %v8191 = vsel %vm1779, %v8159, %v7300
      %v8192 = vsel %vm1779, %v8160, %v7302
      %v8193 = vsel %vm1779, %v8161, %v7304
      %v8194 = vsel %vm1779, %v8162, %v7306
      %v8195 = vsel %vm1779, %v8163, %v7308
      %v8196 = vsel %vm1779, %v8164, %v7310
      %v8197 = vsel %vm1779, %v8165, %v7312
      %v8198 = vsel %vm1779, %v8166, %v7314
      %v8199 = vsel %vm1779, %v8167, %v7316
      %v8200 = vsel %vm1779, %v8168, %v7318
      %v8201 = vsel %vm1779, %v8169, %v7320
      %v8202 = vsel %vm1779, %v8170, %v7322
      %v8203 = vsel %vm1779, %v8171, %v7324
      %v8204 = vsel %vm1779, %v8172, %v7326
      %v8205 = vsel %vm1779, %v8173, %v7328
      %v8206 = vsel %vm1779, %v8174, %v7330
      %v8207 = vsel %vm1779, %v8175, %v7332
      %v8208 = vsel %vm1779, %v8176, %v7334
      %v8209 = vsel %vm1779, %v8177, %v7336
      %v8210 = vsel %vm1779, %v8178, %v7338
      %v8211 = vsel %vm1779, %v8179, %v7340
      %v8212 = vsel %vm1779, %v8180, %v7342
      %v8213 = vsel %vm1779, %v8181, %v7344
      %v8214 = vsel %vm1779, %v8182, %v7346
      %v8215 = vsel %vm1779, %v8183, %v7348
      %v8216 = vsel %vm1779, %v8184, %v7350
      %v8217 = vsel %vm1779, %v8185, %v7352
      %v8218 = vsel %vm1779, %v8186, %v7354
      %v8219 = vsel %vm1812, %v8187, %v7420
      %v8220 = vsel %vm1812, %v8188, %v7422
      %v8221 = vsel %vm1812, %v8189, %v7424
      %v8222 = vsel %vm1812, %v8190, %v7426
      %v8223 = vsel %vm1812, %v8191, %v7428
      %v8224 = vsel %vm1812, %v8192, %v7430
      %v8225 = vsel %vm1812, %v8193, %v7432
      %v8226 = vsel %vm1812, %v8194, %v7434
      %v8227 = vsel %vm1812, %v8195, %v7436
      %v8228 = vsel %vm1812, %v8196, %v7438
      %v8229 = vsel %vm1812, %v8197, %v7440
      %v8230 = vsel %vm1812, %v8198, %v7442
      %v8231 = vsel %vm1812, %v8199, %v7444
      %v8232 = vsel %vm1812, %v8200, %v7446
      %v8233 = vsel %vm1812, %v8201, %v7448
      %v8234 = vsel %vm1812, %v8202, %v7450
      %v8235 = vsel %vm1812, %v8203, %v7452
      %v8236 = vsel %vm1812, %v8204, %v7454
      %v8237 = vsel %vm1812, %v8205, %v7456
      %v8238 = vsel %vm1812, %v8206, %v7458
      %v8239 = vsel %vm1812, %v8207, %v7460
      %v8240 = vsel %vm1812, %v8208, %v7462
      %v8241 = vsel %vm1812, %v8209, %v7464
      %v8242 = vsel %vm1812, %v8210, %v7466
      %v8243 = vsel %vm1812, %v8211, %v7468
      %v8244 = vsel %vm1812, %v8212, %v7470
      %v8245 = vsel %vm1812, %v8213, %v7472
      %v8246 = vsel %vm1812, %v8214, %v7474
      %v8247 = vsel %vm1812, %v8215, %v7476
      %v8248 = vsel %vm1812, %v8216, %v7478
      %v8249 = vsel %vm1812, %v8217, %v7480
      %v8250 = vsel %vm1812, %v8218, %v7482
      %v8251 = vsel %vm1845, %v8219, %v7548
      %v8252 = vsel %vm1845, %v8220, %v7550
      %v8253 = vsel %vm1845, %v8221, %v7552
      %v8254 = vsel %vm1845, %v8222, %v7554
      %v8255 = vsel %vm1845, %v8223, %v7556
      %v8256 = vsel %vm1845, %v8224, %v7558
      %v8257 = vsel %vm1845, %v8225, %v7560
      %v8258 = vsel %vm1845, %v8226, %v7562
      %v8259 = vsel %vm1845, %v8227, %v7564
      %v8260 = vsel %vm1845, %v8228, %v7566
      %v8261 = vsel %vm1845, %v8229, %v7568
      %v8262 = vsel %vm1845, %v8230, %v7570
      %v8263 = vsel %vm1845, %v8231, %v7572
      %v8264 = vsel %vm1845, %v8232, %v7574
      %v8265 = vsel %vm1845, %v8233, %v7576
      %v8266 = vsel %vm1845, %v8234, %v7578
      %v8267 = vsel %vm1845, %v8235, %v7580
      %v8268 = vsel %vm1845, %v8236, %v7582
      %v8269 = vsel %vm1845, %v8237, %v7584
      %v8270 = vsel %vm1845, %v8238, %v7586
      %v8271 = vsel %vm1845, %v8239, %v7588
      %v8272 = vsel %vm1845, %v8240, %v7590
      %v8273 = vsel %vm1845, %v8241, %v7592
      %v8274 = vsel %vm1845, %v8242, %v7594
      %v8275 = vsel %vm1845, %v8243, %v7596
      %v8276 = vsel %vm1845, %v8244, %v7598
      %v8277 = vsel %vm1845, %v8245, %v7600
      %v8278 = vsel %vm1845, %v8246, %v7602
      %v8279 = vsel %vm1845, %v8247, %v7604
      %v8280 = vsel %vm1845, %v8248, %v7606
      %v8281 = vsel %vm1845, %v8249, %v7608
      %v8282 = vsel %vm1845, %v8250, %v7610
      %v8283 = vsel %vm1878, %v8251, %v7676
      %v8284 = vsel %vm1878, %v8252, %v7678
      %v8285 = vsel %vm1878, %v8253, %v7680
      %v8286 = vsel %vm1878, %v8254, %v7682
      %v8287 = vsel %vm1878, %v8255, %v7684
      %v8288 = vsel %vm1878, %v8256, %v7686
      %v8289 = vsel %vm1878, %v8257, %v7688
      %v8290 = vsel %vm1878, %v8258, %v7690
      %v8291 = vsel %vm1878, %v8259, %v7692
      %v8292 = vsel %vm1878, %v8260, %v7694
      %v8293 = vsel %vm1878, %v8261, %v7696
      %v8294 = vsel %vm1878, %v8262, %v7698
      %v8295 = vsel %vm1878, %v8263, %v7700
      %v8296 = vsel %vm1878, %v8264, %v7702
      %v8297 = vsel %vm1878, %v8265, %v7704
      %v8298 = vsel %vm1878, %v8266, %v7706
      %v8299 = vsel %vm1878, %v8267, %v7708
      %v8300 = vsel %vm1878, %v8268, %v7710
      %v8301 = vsel %vm1878, %v8269, %v7712
      %v8302 = vsel %vm1878, %v8270, %v7714
      %v8303 = vsel %vm1878, %v8271, %v7716
      %v8304 = vsel %vm1878, %v8272, %v7718
      %v8305 = vsel %vm1878, %v8273, %v7720
      %v8306 = vsel %vm1878, %v8274, %v7722
      %v8307 = vsel %vm1878, %v8275, %v7724
      %v8308 = vsel %vm1878, %v8276, %v7726
      %v8309 = vsel %vm1878, %v8277, %v7728
      %v8310 = vsel %vm1878, %v8278, %v7730
      %v8311 = vsel %vm1878, %v8279, %v7732
      %v8312 = vsel %vm1878, %v8280, %v7734
      %v8313 = vsel %vm1878, %v8281, %v7736
      %v8314 = vsel %vm1878, %v8282, %v7738
      %v8315 = vsel %vm1911, %v8283, %v7804
      %v8316 = vsel %vm1911, %v8284, %v7806
      %v8317 = vsel %vm1911, %v8285, %v7808
      %v8318 = vsel %vm1911, %v8286, %v7810
      %v8319 = vsel %vm1911, %v8287, %v7812
      %v8320 = vsel %vm1911, %v8288, %v7814
      %v8321 = vsel %vm1911, %v8289, %v7816
      %v8322 = vsel %vm1911, %v8290, %v7818
      %v8323 = vsel %vm1911, %v8291, %v7820
      %v8324 = vsel %vm1911, %v8292, %v7822
      %v8325 = vsel %vm1911, %v8293, %v7824
      %v8326 = vsel %vm1911, %v8294, %v7826
      %v8327 = vsel %vm1911, %v8295, %v7828
      %v8328 = vsel %vm1911, %v8296, %v7830
      %v8329 = vsel %vm1911, %v8297, %v7832
      %v8330 = vsel %vm1911, %v8298, %v7834
      %v8331 = vsel %vm1911, %v8299, %v7836
      %v8332 = vsel %vm1911, %v8300, %v7838
      %v8333 = vsel %vm1911, %v8301, %v7840
      %v8334 = vsel %vm1911, %v8302, %v7842
      %v8335 = vsel %vm1911, %v8303, %v7844
      %v8336 = vsel %vm1911, %v8304, %v7846
      %v8337 = vsel %vm1911, %v8305, %v7848
      %v8338 = vsel %vm1911, %v8306, %v7850
      %v8339 = vsel %vm1911, %v8307, %v7852
      %v8340 = vsel %vm1911, %v8308, %v7854
      %v8341 = vsel %vm1911, %v8309, %v7856
      %v8342 = vsel %vm1911, %v8310, %v7858
      %v8343 = vsel %vm1911, %v8311, %v7860
      %v8344 = vsel %vm1911, %v8312, %v7862
      %v8345 = vsel %vm1911, %v8313, %v7864
      %v8346 = vsel %vm1911, %v8314, %v7866
      %v8347 = vsel %vm1944, %v8315, %v7932
      %v8348 = vsel %vm1944, %v8316, %v7934
      %v8349 = vsel %vm1944, %v8317, %v7936
      %v8350 = vsel %vm1944, %v8318, %v7938
      %v8351 = vsel %vm1944, %v8319, %v7940
      %v8352 = vsel %vm1944, %v8320, %v7942
      %v8353 = vsel %vm1944, %v8321, %v7944
      %v8354 = vsel %vm1944, %v8322, %v7946
      %v8355 = vsel %vm1944, %v8323, %v7948
      %v8356 = vsel %vm1944, %v8324, %v7950
      %v8357 = vsel %vm1944, %v8325, %v7952
      %v8358 = vsel %vm1944, %v8326, %v7954
      %v8359 = vsel %vm1944, %v8327, %v7956
      %v8360 = vsel %vm1944, %v8328, %v7958
      %v8361 = vsel %vm1944, %v8329, %v7960
      %v8362 = vsel %vm1944, %v8330, %v7962
      %v8363 = vsel %vm1944, %v8331, %v7964
      %v8364 = vsel %vm1944, %v8332, %v7966
      %v8365 = vsel %vm1944, %v8333, %v7968
      %v8366 = vsel %vm1944, %v8334, %v7970
      %v8367 = vsel %vm1944, %v8335, %v7972
      %v8368 = vsel %vm1944, %v8336, %v7974
      %v8369 = vsel %vm1944, %v8337, %v7976
      %v8370 = vsel %vm1944, %v8338, %v7978
      %v8371 = vsel %vm1944, %v8339, %v7980
      %v8372 = vsel %vm1944, %v8340, %v7982
      %v8373 = vsel %vm1944, %v8341, %v7984
      %v8374 = vsel %vm1944, %v8342, %v7986
      %v8375 = vsel %vm1944, %v8343, %v7988
      %v8376 = vsel %vm1944, %v8344, %v7990
      %v8377 = vsel %vm1944, %v8345, %v7992
      %v8378 = vsel %vm1944, %v8346, %v7994
      %v8379 = vsel %vm1977, %v8347, %v8060
      %v8380 = vsel %vm1977, %v8348, %v8062
      %v8381 = vsel %vm1977, %v8349, %v8064
      %v8382 = vsel %vm1977, %v8350, %v8066
      %v8383 = vsel %vm1977, %v8351, %v8068
      %v8384 = vsel %vm1977, %v8352, %v8070
      %v8385 = vsel %vm1977, %v8353, %v8072
      %v8386 = vsel %vm1977, %v8354, %v8074
      %v8387 = vsel %vm1977, %v8355, %v8076
      %v8388 = vsel %vm1977, %v8356, %v8078
      %v8389 = vsel %vm1977, %v8357, %v8080
      %v8390 = vsel %vm1977, %v8358, %v8082
      %v8391 = vsel %vm1977, %v8359, %v8084
      %v8392 = vsel %vm1977, %v8360, %v8086
      %v8393 = vsel %vm1977, %v8361, %v8088
      %v8394 = vsel %vm1977, %v8362, %v8090
      %v8395 = vsel %vm1977, %v8363, %v8092
      %v8396 = vsel %vm1977, %v8364, %v8094
      %v8397 = vsel %vm1977, %v8365, %v8096
      %v8398 = vsel %vm1977, %v8366, %v8098
      %v8399 = vsel %vm1977, %v8367, %v8100
      %v8400 = vsel %vm1977, %v8368, %v8102
      %v8401 = vsel %vm1977, %v8369, %v8104
      %v8402 = vsel %vm1977, %v8370, %v8106
      %v8403 = vsel %vm1977, %v8371, %v8108
      %v8404 = vsel %vm1977, %v8372, %v8110
      %v8405 = vsel %vm1977, %v8373, %v8112
      %v8406 = vsel %vm1977, %v8374, %v8114
      %v8407 = vsel %vm1977, %v8375, %v8116
      %v8408 = vsel %vm1977, %v8376, %v8118
      %v8409 = vsel %vm1977, %v8377, %v8120
      %v8410 = vsel %vm1977, %v8378, %v8122
      %v8411 = vpack.c.bf16 %v8380, %v8379
      %v8412 = vpack.c.bf16 %v8382, %v8381
      %v8413 = vpack.c.bf16 %v8384, %v8383
      %v8414 = vpack.c.bf16 %v8386, %v8385
      %v8415 = vpack.c.bf16 %v8388, %v8387
      %v8416 = vpack.c.bf16 %v8390, %v8389
      %v8417 = vpack.c.bf16 %v8392, %v8391
      %v8418 = vpack.c.bf16 %v8394, %v8393
      %v8419 = vpack.c.bf16 %v8396, %v8395
      %v8420 = vpack.c.bf16 %v8398, %v8397
      %v8421 = vpack.c.bf16 %v8400, %v8399
      %v8422 = vpack.c.bf16 %v8402, %v8401
      %v8423 = vpack.c.bf16 %v8404, %v8403
      %v8424 = vpack.c.bf16 %v8406, %v8405
      %v8425 = vpack.c.bf16 %v8408, %v8407
      %v8426 = vpack.c.bf16 %v8410, %v8409
      %v8427 = vld [vmem:[%s5] sm:$0xf]
      %v8428 = vld [vmem:[%s5 + $0x4] sm:$0xf]
      %v8429 = vld [vmem:[%s5 + $0x8] sm:$0xf]
      %v8430 = vld [vmem:[%s5 + $0xc] sm:$0xf]
      %v8431 = vld [vmem:[%s5 + $0x10] sm:$0x3]
      %v8432 = vld [vmem:[%s6] sm:$0x1]
      %v8434 = vlaneseq
      %v8435 = vshrl.u32 %v8434, 7
      %v8436 = vsub.s32 0, %v8435
      %v8437 = vrot.slane %v8432, %v8436
      %v8444 = vunpack.c.l.b16 %v8427
      %v8445 = vunpack.c.l.b16 %v8428
      %v8446 = vunpack.c.l.b16 %v8429
      %v8447 = vunpack.c.l.b16 %v8430
      %v8448 = vunpack.c.l.b16 %v8431
      %v8449 = vpack.c.b16 %v8445, %v8444
      %v8450 = vpack.c.b16 %v8447, %v8446
      %v8451 = vpack.c.b16 %v8448, %v8448
      %v8455 = vsel %vm2053, %v8411, 0
      %v8458 = vsel %vm2053, %v8412, 0
      %v8461 = vsel %vm2053, %v8413, 0
      %v8464 = vsel %vm2053, %v8414, 0
      %v8467 = vsel %vm2053, %v8415, 0
      %v8470 = vsel %vm2053, %v8416, 0
      %v8473 = vsel %vm2053, %v8417, 0
      %v8476 = vsel %vm2053, %v8418, 0
      %v8479 = vsel %vm2053, %v8419, 0
      %v8482 = vsel %vm2053, %v8420, 0
      %v8485 = vsel %vm2053, %v8421, 0
      %v8488 = vsel %vm2053, %v8422, 0
      %v8491 = vsel %vm2053, %v8423, 0
      %v8494 = vsel %vm2053, %v8424, 0
      %v8497 = vsel %vm2053, %v8425, 0
      %v8500 = vsel %vm2053, %v8426, 0
      %v8503 = vsel %vm2102, %v8451, 0
      %8505 = vmatprep.subr.bf16.mxu0 0
      %8506 = vmatpush1.bf16.msra.mxu0 %v8449
      %8507 = vmatprep.subr.bf16.mxu0 0
      %8508 = vmatpush1.bf16.msra.mxu0 %v8450
      %8509 = vmatprep.subr.bf16.mxu0 0
      %8510 = vmatpush1.bf16.msra.mxu0 %v8503
      %8511 = vmatprep.subr.bf16.mxu0 0
      %8512 = vmatpush1.bf16.msra.mxu0 0
      %8513 = vmatprep.subr.bf16.mxu0 0
      %8514 = vmatpush1.bf16.msra.mxu0 0
      %8515 = vmatprep.subr.bf16.mxu0 0
      %8516 = vmatpush1.bf16.msra.mxu0 0
      %8517 = vmatprep.subr.bf16.mxu0 0
      %8518 = vmatpush1.bf16.msra.mxu0 0
      %8519 = vmatprep.subr.bf16.mxu0 0
      %8520 = vmatpush1.bf16.msra.mxu0 0
      %8521 = vmatprep.subr.bf16.mxu0 0
      %8522 = vmatpush1.bf16.msra.mxu0 0
      %8523 = vmatprep.subr.bf16.mxu0 0
      %8524 = vmatpush1.bf16.msra.mxu0 0
      %8525 = vmatprep.subr.bf16.mxu0 0
      %8526 = vmatpush1.bf16.msra.mxu0 0
      %8527 = vmatprep.subr.bf16.mxu0 0
      %8528 = vmatpush1.bf16.msra.mxu0 0
      %8529 = vmatprep.subr.bf16.mxu0 0
      %8530 = vmatpush1.bf16.msra.mxu0 0
      %8531 = vmatprep.subr.bf16.mxu0 0
      %8532 = vmatpush1.bf16.msra.mxu0 0
      %8533 = vmatprep.subr.bf16.mxu0 0
      %8534 = vmatpush1.bf16.msra.mxu0 0
      %8535 = vmatprep.subr.bf16.mxu0 0
      %8536 = vmatpush1.bf16.msra.mxu0 0
      %8537 = vmatprep.mubr.bf16.mxu0 0
      %8538 = vmatmul.mubr.bf16.gmra.mrb[0].mxu0 %v8455
      %v8539 = vpop.f32.mrb[0].mxu0
      %v8540 = vadd.f32 %v8437, %v8539
      %v8541 = vpop.f32.mrb[0].mxu0
      %v8542 = vpop.f32.mrb[0].mxu0
      %v8543 = vadd.f32 %v8437, %v8542
      %v8544 = vpop.f32.mrb[0].mxu0
      %8545 = vmatprep.mubr.bf16.mxu0 0
      %8546 = vmatmul.mubr.bf16.gmra.mrb[0].mxu0 %v8458
      %v8547 = vpop.f32.mrb[0].mxu0
      %v8548 = vadd.f32 %v8437, %v8547
      %v8549 = vpop.f32.mrb[0].mxu0
      %v8550 = vpop.f32.mrb[0].mxu0
      %v8551 = vadd.f32 %v8437, %v8550
      %v8552 = vpop.f32.mrb[0].mxu0
      %8553 = vmatprep.mubr.bf16.mxu0 0
      %8554 = vmatmul.mubr.bf16.gmra.mrb[0].mxu0 %v8461
      %v8555 = vpop.f32.mrb[0].mxu0
      %v8556 = vadd.f32 %v8437, %v8555
      %v8557 = vpop.f32.mrb[0].mxu0
      %v8558 = vpop.f32.mrb[0].mxu0
      %v8559 = vadd.f32 %v8437, %v8558
      %v8560 = vpop.f32.mrb[0].mxu0
      %8561 = vmatprep.mubr.bf16.mxu0 0
      %8562 = vmatmul.mubr.bf16.gmra.mrb[0].mxu0 %v8464
      %v8563 = vpop.f32.mrb[0].mxu0
      %v8564 = vadd.f32 %v8437, %v8563
      %v8565 = vpop.f32.mrb[0].mxu0
      %v8566 = vpop.f32.mrb[0].mxu0
      %v8567 = vadd.f32 %v8437, %v8566
      %v8568 = vpop.f32.mrb[0].mxu0
      %8569 = vmatprep.mubr.bf16.mxu0 0
      %8570 = vmatmul.mubr.bf16.gmra.mrb[0].mxu0 %v8467
      %v8571 = vpop.f32.mrb[0].mxu0
      %v8572 = vadd.f32 %v8437, %v8571
      %v8573 = vpop.f32.mrb[0].mxu0
      %v8574 = vpop.f32.mrb[0].mxu0
      %v8575 = vadd.f32 %v8437, %v8574
      %v8576 = vpop.f32.mrb[0].mxu0
      %8577 = vmatprep.mubr.bf16.mxu0 0
      %8578 = vmatmul.mubr.bf16.gmra.mrb[0].mxu0 %v8470
      %v8579 = vpop.f32.mrb[0].mxu0
      %v8580 = vadd.f32 %v8437, %v8579
      %v8581 = vpop.f32.mrb[0].mxu0
      %v8582 = vpop.f32.mrb[0].mxu0
      %v8583 = vadd.f32 %v8437, %v8582
      %v8584 = vpop.f32.mrb[0].mxu0
      %8585 = vmatprep.mubr.bf16.mxu0 0
      %8586 = vmatmul.mubr.bf16.gmra.mrb[0].mxu0 %v8473
      %v8587 = vpop.f32.mrb[0].mxu0
      %v8588 = vadd.f32 %v8437, %v8587
      %v8589 = vpop.f32.mrb[0].mxu0
      %v8590 = vpop.f32.mrb[0].mxu0
      %v8591 = vadd.f32 %v8437, %v8590
      %v8592 = vpop.f32.mrb[0].mxu0
      %8593 = vmatprep.mubr.bf16.mxu0 0
      %8594 = vmatmul.mubr.bf16.gmra.mrb[0].mxu0 %v8476
      %v8595 = vpop.f32.mrb[0].mxu0
      %v8596 = vadd.f32 %v8437, %v8595
      %v8597 = vpop.f32.mrb[0].mxu0
      %v8598 = vpop.f32.mrb[0].mxu0
      %v8599 = vadd.f32 %v8437, %v8598
      %v8600 = vpop.f32.mrb[0].mxu0
      %8601 = vmatprep.mubr.bf16.mxu0 0
      %8602 = vmatmul.mubr.bf16.gmra.mrb[0].mxu0 %v8479
      %v8603 = vpop.f32.mrb[0].mxu0
      %v8604 = vadd.f32 %v8437, %v8603
      %v8605 = vpop.f32.mrb[0].mxu0
      %v8606 = vpop.f32.mrb[0].mxu0
      %v8607 = vadd.f32 %v8437, %v8606
      %v8608 = vpop.f32.mrb[0].mxu0
      %8609 = vmatprep.mubr.bf16.mxu0 0
      %8610 = vmatmul.mubr.bf16.gmra.mrb[0].mxu0 %v8482
      %v8611 = vpop.f32.mrb[0].mxu0
      %v8612 = vadd.f32 %v8437, %v8611
      %v8613 = vpop.f32.mrb[0].mxu0
      %v8614 = vpop.f32.mrb[0].mxu0
      %v8615 = vadd.f32 %v8437, %v8614
      %v8616 = vpop.f32.mrb[0].mxu0
      %8617 = vmatprep.mubr.bf16.mxu0 0
      %8618 = vmatmul.mubr.bf16.gmra.mrb[0].mxu0 %v8485
      %v8619 = vpop.f32.mrb[0].mxu0
      %v8620 = vadd.f32 %v8437, %v8619
      %v8621 = vpop.f32.mrb[0].mxu0
      %v8622 = vpop.f32.mrb[0].mxu0
      %v8623 = vadd.f32 %v8437, %v8622
      %v8624 = vpop.f32.mrb[0].mxu0
      %8625 = vmatprep.mubr.bf16.mxu0 0
      %8626 = vmatmul.mubr.bf16.gmra.mrb[0].mxu0 %v8488
      %v8627 = vpop.f32.mrb[0].mxu0
      %v8628 = vadd.f32 %v8437, %v8627
      %v8629 = vpop.f32.mrb[0].mxu0
      %v8630 = vpop.f32.mrb[0].mxu0
      %v8631 = vadd.f32 %v8437, %v8630
      %v8632 = vpop.f32.mrb[0].mxu0
      %8633 = vmatprep.mubr.bf16.mxu0 0
      %8634 = vmatmul.mubr.bf16.gmra.mrb[0].mxu0 %v8491
      %v8635 = vpop.f32.mrb[0].mxu0
      %v8636 = vadd.f32 %v8437, %v8635
      %v8637 = vpop.f32.mrb[0].mxu0
      %v8638 = vpop.f32.mrb[0].mxu0
      %v8639 = vadd.f32 %v8437, %v8638
      %v8640 = vpop.f32.mrb[0].mxu0
      %8641 = vmatprep.mubr.bf16.mxu0 0
      %8642 = vmatmul.mubr.bf16.gmra.mrb[0].mxu0 %v8494
      %v8643 = vpop.f32.mrb[0].mxu0
      %v8644 = vadd.f32 %v8437, %v8643
      %v8645 = vpop.f32.mrb[0].mxu0
      %v8646 = vpop.f32.mrb[0].mxu0
      %v8647 = vadd.f32 %v8437, %v8646
      %v8648 = vpop.f32.mrb[0].mxu0
      %8649 = vmatprep.mubr.bf16.mxu0 0
      %8650 = vmatmul.mubr.bf16.gmra.mrb[0].mxu0 %v8497
      %v8651 = vpop.f32.mrb[0].mxu0
      %v8652 = vadd.f32 %v8437, %v8651
      %v8653 = vpop.f32.mrb[0].mxu0
      %v8654 = vpop.f32.mrb[0].mxu0
      %v8655 = vadd.f32 %v8437, %v8654
      %v8656 = vpop.f32.mrb[0].mxu0
      %8657 = vmatprep.mubr.bf16.mxu0 0
      %8658 = vmatmul.mubr.bf16.gmra.mrb[0].mxu0 %v8500
      %v8659 = vpop.f32.mrb[0].mxu0
      %v8660 = vadd.f32 %v8437, %v8659
      %v8661 = vpop.f32.mrb[0].mxu0
      %v8662 = vpop.f32.mrb[0].mxu0
      %v8663 = vadd.f32 %v8437, %v8662
      %v8664 = vpop.f32.mrb[0].mxu0
      %8665 = vdwg.mxu0
      %v8666 = vmul.f32 %v8540, 0.2
      %v8667 = vmul.f32 %v8543, 0.2
      %v8668 = vmul.f32 %v8548, 0.2
      %v8669 = vmul.f32 %v8551, 0.2
      %v8670 = vmul.f32 %v8556, 0.2
      %v8671 = vmul.f32 %v8559, 0.2
      %v8672 = vmul.f32 %v8564, 0.2
      %v8673 = vmul.f32 %v8567, 0.2
      %v8674 = vmul.f32 %v8572, 0.2
      %v8675 = vmul.f32 %v8575, 0.2
      %v8676 = vmul.f32 %v8580, 0.2
      %v8677 = vmul.f32 %v8583, 0.2
      %v8678 = vmul.f32 %v8588, 0.2
      %v8679 = vmul.f32 %v8591, 0.2
      %v8680 = vmul.f32 %v8596, 0.2
      %v8681 = vmul.f32 %v8599, 0.2
      %v8682 = vmul.f32 %v8604, 0.2
      %v8683 = vmul.f32 %v8607, 0.2
      %v8684 = vmul.f32 %v8612, 0.2
      %v8685 = vmul.f32 %v8615, 0.2
      %v8686 = vmul.f32 %v8620, 0.2
      %v8687 = vmul.f32 %v8623, 0.2
      %v8688 = vmul.f32 %v8628, 0.2
      %v8689 = vmul.f32 %v8631, 0.2
      %v8690 = vmul.f32 %v8636, 0.2
      %v8691 = vmul.f32 %v8639, 0.2
      %v8692 = vmul.f32 %v8644, 0.2
      %v8693 = vmul.f32 %v8647, 0.2
      %v8694 = vmul.f32 %v8652, 0.2
      %v8695 = vmul.f32 %v8655, 0.2
      %v8696 = vmul.f32 %v8660, 0.2
      %v8697 = vmul.f32 %v8663, 0.2
      %v8698 = vmax.f32 %v8540, %v8666
      %v8699 = vmax.f32 %v8543, %v8667
      %v8700 = vmax.f32 %v8548, %v8668
      %v8701 = vmax.f32 %v8551, %v8669
      %v8702 = vmax.f32 %v8556, %v8670
      %v8703 = vmax.f32 %v8559, %v8671
      %v8704 = vmax.f32 %v8564, %v8672
      %v8705 = vmax.f32 %v8567, %v8673
      %v8706 = vmax.f32 %v8572, %v8674
      %v8707 = vmax.f32 %v8575, %v8675
      %v8708 = vmax.f32 %v8580, %v8676
      %v8709 = vmax.f32 %v8583, %v8677
      %v8710 = vmax.f32 %v8588, %v8678
      %v8711 = vmax.f32 %v8591, %v8679
      %v8712 = vmax.f32 %v8596, %v8680
      %v8713 = vmax.f32 %v8599, %v8681
      %v8714 = vmax.f32 %v8604, %v8682
      %v8715 = vmax.f32 %v8607, %v8683
      %v8716 = vmax.f32 %v8612, %v8684
      %v8717 = vmax.f32 %v8615, %v8685
      %v8718 = vmax.f32 %v8620, %v8686
      %v8719 = vmax.f32 %v8623, %v8687
      %v8720 = vmax.f32 %v8628, %v8688
      %v8721 = vmax.f32 %v8631, %v8689
      %v8722 = vmax.f32 %v8636, %v8690
      %v8723 = vmax.f32 %v8639, %v8691
      %v8724 = vmax.f32 %v8644, %v8692
      %v8725 = vmax.f32 %v8647, %v8693
      %v8726 = vmax.f32 %v8652, %v8694
      %v8727 = vmax.f32 %v8655, %v8695
      %v8728 = vmax.f32 %v8660, %v8696
      %v8729 = vmax.f32 %v8663, %v8697
      %v8730 = vmul.f32 %v8698, 0.2
      %v8731 = vmul.f32 %v8699, 0.2
      %v8732 = vmul.f32 %v8700, 0.2
      %v8733 = vmul.f32 %v8701, 0.2
      %v8734 = vmul.f32 %v8702, 0.2
      %v8735 = vmul.f32 %v8703, 0.2
      %v8736 = vmul.f32 %v8704, 0.2
      %v8737 = vmul.f32 %v8705, 0.2
      %v8738 = vmul.f32 %v8706, 0.2
      %v8739 = vmul.f32 %v8707, 0.2
      %v8740 = vmul.f32 %v8708, 0.2
      %v8741 = vmul.f32 %v8709, 0.2
      %v8742 = vmul.f32 %v8710, 0.2
      %v8743 = vmul.f32 %v8711, 0.2
      %v8744 = vmul.f32 %v8712, 0.2
      %v8745 = vmul.f32 %v8713, 0.2
      %v8746 = vmul.f32 %v8714, 0.2
      %v8747 = vmul.f32 %v8715, 0.2
      %v8748 = vmul.f32 %v8716, 0.2
      %v8749 = vmul.f32 %v8717, 0.2
      %v8750 = vmul.f32 %v8718, 0.2
      %v8751 = vmul.f32 %v8719, 0.2
      %v8752 = vmul.f32 %v8720, 0.2
      %v8753 = vmul.f32 %v8721, 0.2
      %v8754 = vmul.f32 %v8722, 0.2
      %v8755 = vmul.f32 %v8723, 0.2
      %v8756 = vmul.f32 %v8724, 0.2
      %v8757 = vmul.f32 %v8725, 0.2
      %v8758 = vmul.f32 %v8726, 0.2
      %v8759 = vmul.f32 %v8727, 0.2
      %v8760 = vmul.f32 %v8728, 0.2
      %v8761 = vmul.f32 %v8729, 0.2
      %v8762 = vadd.f32 %v8730, %v369
      %v8763 = vadd.f32 %v8731, %v370
      %v8764 = vadd.f32 %v8732, %v371
      %v8765 = vadd.f32 %v8733, %v372
      %v8766 = vadd.f32 %v8734, %v373
      %v8767 = vadd.f32 %v8735, %v374
      %v8768 = vadd.f32 %v8736, %v375
      %v8769 = vadd.f32 %v8737, %v376
      %v8770 = vadd.f32 %v8738, %v377
      %v8771 = vadd.f32 %v8739, %v378
      %v8772 = vadd.f32 %v8740, %v379
      %v8773 = vadd.f32 %v8741, %v380
      %v8774 = vadd.f32 %v8742, %v381
      %v8775 = vadd.f32 %v8743, %v382
      %v8776 = vadd.f32 %v8744, %v383
      %v8777 = vadd.f32 %v8745, %v384
      %v8778 = vadd.f32 %v8746, %v385
      %v8779 = vadd.f32 %v8747, %v386
      %v8780 = vadd.f32 %v8748, %v387
      %v8781 = vadd.f32 %v8749, %v388
      %v8782 = vadd.f32 %v8750, %v389
      %v8783 = vadd.f32 %v8751, %v390
      %v8784 = vadd.f32 %v8752, %v391
      %v8785 = vadd.f32 %v8753, %v392
      %v8786 = vadd.f32 %v8754, %v393
      %v8787 = vadd.f32 %v8755, %v394
      %v8788 = vadd.f32 %v8756, %v395
      %v8789 = vadd.f32 %v8757, %v396
      %v8790 = vadd.f32 %v8758, %v397
      %v8791 = vadd.f32 %v8759, %v398
      %v8792 = vadd.f32 %v8760, %v399
      %v8793 = vadd.f32 %v8761, %v400
      %8794 = vst.msk [vmem:[%s278] sm:$0xff] %vm280, %v8762
      %8795 = vst.msk [vmem:[%s278 + $0x8] sm:$0xff] %vm280, %v8763
      %8796 = vst.msk [vmem:[%s278 + $0x10] sm:$0xff] %vm280, %v8764
      %8797 = vst.msk [vmem:[%s278 + $0x18] sm:$0xff] %vm280, %v8765
      %8798 = vst.msk [vmem:[%s278 + $0x20] sm:$0xff] %vm280, %v8766
      %8799 = vst.msk [vmem:[%s278 + $0x28] sm:$0xff] %vm280, %v8767
      %8800 = vst.msk [vmem:[%s278 + $0x30] sm:$0xff] %vm280, %v8768
      %8801 = vst.msk [vmem:[%s278 + $0x38] sm:$0xff] %vm280, %v8769
      %8802 = vst.msk [vmem:[%s278 + $0x40] sm:$0xff] %vm280, %v8770
      %8803 = vst.msk [vmem:[%s278 + $0x48] sm:$0xff] %vm280, %v8771
      %8804 = vst.msk [vmem:[%s278 + $0x50] sm:$0xff] %vm280, %v8772
      %8805 = vst.msk [vmem:[%s278 + $0x58] sm:$0xff] %vm280, %v8773
      %8806 = vst.msk [vmem:[%s278 + $0x60] sm:$0xff] %vm280, %v8774
      %8807 = vst.msk [vmem:[%s278 + $0x68] sm:$0xff] %vm280, %v8775
      %8808 = vst.msk [vmem:[%s278 + $0x70] sm:$0xff] %vm280, %v8776
      %8809 = vst.msk [vmem:[%s278 + $0x78] sm:$0xff] %vm280, %v8777
      %8810 = vst.msk [vmem:[%s278 + $0x80] sm:$0xff] %vm280, %v8778
      %8811 = vst.msk [vmem:[%s278 + $0x88] sm:$0xff] %vm280, %v8779
      %8812 = vst.msk [vmem:[%s278 + $0x90] sm:$0xff] %vm280, %v8780
      %8813 = vst.msk [vmem:[%s278 + $0x98] sm:$0xff] %vm280, %v8781
      %8814 = vst.msk [vmem:[%s278 + $0xa0] sm:$0xff] %vm280, %v8782
      %8815 = vst.msk [vmem:[%s278 + $0xa8] sm:$0xff] %vm280, %v8783
      %8816 = vst.msk [vmem:[%s278 + $0xb0] sm:$0xff] %vm280, %v8784
      %8817 = vst.msk [vmem:[%s278 + $0xb8] sm:$0xff] %vm280, %v8785
      %8818 = vst.msk [vmem:[%s278 + $0xc0] sm:$0xff] %vm280, %v8786
      %8819 = vst.msk [vmem:[%s278 + $0xc8] sm:$0xff] %vm280, %v8787
      %8820 = vst.msk [vmem:[%s278 + $0xd0] sm:$0xff] %vm280, %v8788
      %8821 = vst.msk [vmem:[%s278 + $0xd8] sm:$0xff] %vm280, %v8789
      %8822 = vst.msk [vmem:[%s278 + $0xe0] sm:$0xff] %vm280, %v8790
      %8823 = vst.msk [vmem:[%s278 + $0xe8] sm:$0xff] %vm280, %v8791
      %8824 = vst.msk [vmem:[%s278 + $0xf0] sm:$0xff] %vm280, %v8792
      %8825 = vst.msk [vmem:[%s278 + $0xf8] sm:$0xff] %vm280, %v8793
      %p8826 = scmp.lt.s32.totalorder %s18, 1
      %s8827 = scalar_select %p8826, %s18, 1
      %s8828 = smul.addr %s8827, 32
      %s8829 = smul.addr %s8828, 8
      %s8830 = scalar_lea.vmem %s7, %s8829
      // Predicated region
      $region49: #{tpu_custom_call.1} parent=47 // pred_check
        %p8831 = pneg %p188
      $region50: #{tpu_custom_call.1} parent=47 // pred_check_branch
        %8833 = sbr.rel (%p8831) target = $region52
      $region51: #{tpu_custom_call.1} parent=47 // pred_region
        _
      $region52: #{tpu_custom_call.1} parent=47 // pred_fallthru
        _
    $region48: #{tpu_custom_call.1} parent=5 // pred_fallthru
      _
    %p8834 = scmp.le.s32.totalorder 2, %s13
    // Predicated region
    $region53: #{tpu_custom_call.1} parent=5 // pred_check
      %p8835 = pneg %p8834
    $region54: #{tpu_custom_call.1} parent=5 // pred_check_branch
      %8837 = sbr.rel (%p8835) target = $region56
    $region55: #{tpu_custom_call.1} parent=5 // pred_region
      %s8838 = ssub.s32 %s13, 2
      // Predicated region
      $region57: #{tpu_custom_call.1} parent=55 // pred_check
        %p8839 = pneg %p194
      $region58: #{tpu_custom_call.1} parent=55 // pred_check_branch
        %8841 = sbr.rel (%p8839) target = $region60
      $region59: #{tpu_custom_call.1} parent=55 // pred_region
        %p8842 = scmp.lt.s32.totalorder %s19, 1
        %s8843 = scalar_select %p8842, %s19, 1
        %s8844 = smul.addr %s8843, 32
        %s8845 = smul.addr %s8844, 8
        %s8846 = scalar_lea.vmem %s7, %s8845
      $region60: #{tpu_custom_call.1} parent=55 // pred_fallthru
        _
    $region56: #{tpu_custom_call.1} parent=5 // pred_fallthru
      _
  $region6: #{tpu_custom_call.1} parent=0 // loop_footer
    %s17 = sadd.s32 1, %s13
  $region7: #{tpu_custom_call.1} parent=0 // loop_footer_branch
    %12 = sbr.rel target = $region3
  $region8: #{tpu_custom_call.1} parent=0 // loop_exit
    _

</llo_original>
